<compile_context>
chip_gen: v5e
topology: v5e:2x2
jax: 0.10.0
libtpu: 0.0.40
codegen_flags: <defaults>
</compile_context>

<pallas_src>
import numpy as np
import jax
import jax.numpy as jnp
from jax.experimental import pallas as pl
from jax.experimental.pallas import tpu as pltpu


# ---------------------------- helpers ----------------------------

def _pick_tile(s, max_tile=2048):
    """Largest lane tile: full dim if small, else biggest 128-multiple divisor."""
    if s <= max_tile:
        return s
    t = (max_tile // 128) * 128
    while t >= 128:
        if s % t == 0:
            return t
        t -= 128
    return s  # no aligned divisor: fall back to a single full-size block


def _sigmoid(y):
    # exp -> EUP, reciprocal(approx) -> EUP: keeps the gate off the VALU (v5e note).
    return pl.reciprocal(1.0 + jnp.exp(-y), approx=True)


# ---------------------------- Pallas kernels ----------------------------

def _branch2_kernel(x_ref, w_ref, scale_ref, shift_ref, d_ref, g_ref):
    # single fused matmul: rows [0:C2] = Wfc (gate), rows [C2:2C2] = Wdin@Wfc (d)
    c2 = d_ref.shape[1]
    y = jnp.dot(w_ref[...], x_ref[0], preferred_element_type=jnp.float32)
    g = _sigmoid(y[:c2])
    d = jnp.maximum(y[c2:] * scale_ref[...] + shift_ref[...], 0.0)
    d_ref[0] = d.astype(d_ref.dtype)
    g_ref[0] = g.astype(g_ref.dtype)


def _branch3_kernel(x_ref, w_ref, scale_ref, shift_ref, d_ref, g_ref, p_ref):
    # same as above, plus p = g*d (needed only for the high-level branch)
    c2 = d_ref.shape[1]
    y = jnp.dot(w_ref[...], x_ref[0], preferred_element_type=jnp.float32)
    g = _sigmoid(y[:c2])
    d = jnp.maximum(y[c2:] * scale_ref[...] + shift_ref[...], 0.0)
    d_ref[0] = d.astype(d_ref.dtype)
    g_ref[0] = g.astype(g_ref.dtype)
    p_ref[0] = (g * d).astype(p_ref.dtype)


def _up_combine_kernel(mt_ref, p_ref, d_ref, g_ref, new_ref, q_ref):
    # resize (matmul over spatial) fused with: new = d + d*g + (1-g)*up ; q = g*new
    up = jnp.dot(p_ref[0], mt_ref[...], preferred_element_type=jnp.float32)
    d = d_ref[0].astype(jnp.float32)
    g = g_ref[0].astype(jnp.float32)
    new = d + d * g + (1.0 - g) * up
    new_ref[0] = new.astype(new_ref.dtype)
    q_ref[0] = (g * new).astype(q_ref.dtype)


def _down_combine_kernel(mt_ref, p_ref, d_ref, g_ref, new_ref):
    up = jnp.dot(p_ref[0], mt_ref[...], preferred_element_type=jnp.float32)
    d = d_ref[0].astype(jnp.float32)
    g = g_ref[0].astype(jnp.float32)
    new_ref[0] = (d + d * g + (1.0 - g) * up).astype(new_ref.dtype)


def _resize_kernel(mt_ref, x_ref, o_ref):
    o_ref[0] = jnp.dot(x_ref[0], mt_ref[...],
                       preferred_element_type=jnp.float32).astype(o_ref.dtype)


# ---------------------------- pallas_call wrappers ----------------------------

def _branch(x, w_cat, scale, shift, want_p):
    # x: (N, C, S) bf16 ; w_cat: (2*C2, C) bf16 ; scale/shift: (C2, 1) f32
    N, C, S = x.shape
    C2 = scale.shape[0]
    ts = _pick_tile(S)
    kernel = _branch3_kernel if want_p else _branch2_kernel
    n_out = 3 if want_p else 2
    return pl.pallas_call(
        kernel,
        out_shape=tuple(jax.ShapeDtypeStruct((N, C2, S), jnp.bfloat16)
                        for _ in range(n_out)),
        grid=(N, S // ts),
        in_specs=[
            pl.BlockSpec((1, C, ts), lambda n, j: (n, 0, j)),
            pl.BlockSpec((2 * C2, C), lambda n, j: (0, 0)),
            pl.BlockSpec((C2, 1), lambda n, j: (0, 0)),
            pl.BlockSpec((C2, 1), lambda n, j: (0, 0)),
        ],
        out_specs=tuple(pl.BlockSpec((1, C2, ts), lambda n, j: (n, 0, j))
                        for _ in range(n_out)),
        compiler_params=pltpu.CompilerParams(
            dimension_semantics=("parallel", "parallel")),
    )(x, w_cat, scale, shift)


def _resize_combine(mt, p, d, g, emit_q):
    # mt: (S_in, S_out) ; p: (N, C2, S_in) ; d, g: (N, C2, S_out)
    N, C2, S_in = p.shape
    S_out = mt.shape[1]
    ts = _pick_tile(S_out)
    kernel = _up_combine_kernel if emit_q else _down_combine_kernel
    n_out = 2 if emit_q else 1
    out = pl.pallas_call(
        kernel,
        out_shape=tuple(jax.ShapeDtypeStruct((N, C2, S_out), jnp.bfloat16)
                        for _ in range(n_out)),
        grid=(N, S_out // ts),
        in_specs=[
            pl.BlockSpec((S_in, ts), lambda n, j: (0, j)),
            pl.BlockSpec((1, C2, S_in), lambda n, j: (n, 0, 0)),
            pl.BlockSpec((1, C2, ts), lambda n, j: (n, 0, j)),
            pl.BlockSpec((1, C2, ts), lambda n, j: (n, 0, j)),
        ],
        out_specs=tuple(pl.BlockSpec((1, C2, ts), lambda n, j: (n, 0, j))
                        for _ in range(n_out)),
        compiler_params=pltpu.CompilerParams(
            dimension_semantics=("parallel", "parallel")),
    )(mt, p, d, g)
    return out if emit_q else out[0]


def _resize(mt, x):
    # out (N, C2, S_out) = x (N, C2, S_in) @ mt (S_in, S_out)
    N, C2, S_in = x.shape
    S_out = mt.shape[1]
    ts = _pick_tile(S_out)
    return pl.pallas_call(
        _resize_kernel,
        out_shape=jax.ShapeDtypeStruct((N, C2, S_out), jnp.bfloat16),
        grid=(N, S_out // ts),
        in_specs=[
            pl.BlockSpec((S_in, ts), lambda n, j: (0, j)),
            pl.BlockSpec((1, C2, S_in), lambda n, j: (n, 0, 0)),
        ],
        out_specs=pl.BlockSpec((1, C2, ts), lambda n, j: (n, 0, j)),
        compiler_params=pltpu.CompilerParams(
            dimension_semantics=("parallel", "parallel")),
    )(mt, x)


def _head(xflat, w3, scale, shift, wout, sp, offsets):
    # Fused 3x3x3 conv (27 lane-shifted matmuls over a padded flat volume) +
    # eval-BN + ReLU + 1x1 output conv. xflat: (N, C, sp + 2m) bf16.
    N, C, Lp = xflat.shape
    ncls = wout.shape[0]

    def kernel(x_ref, w3_ref, scale_ref, shift_ref, wout_ref, o_ref):
        x = x_ref[0]                                   # (C, sp + 2m)
        acc = jnp.zeros((C, sp), jnp.float32)
        for k, off in enumerate(offsets):              # 27 static taps
            xs = x[:, off:off + sp]
            acc = acc + jnp.dot(w3_ref[k], xs, preferred_element_type=jnp.float32)
        y = jnp.maximum(acc * scale_ref[...] + shift_ref[...], 0.0)
        o_ref[0] = jnp.dot(wout_ref[...], y.astype(jnp.bfloat16),
                           preferred_element_type=jnp.float32)

    return pl.pallas_call(
        kernel,
        out_shape=jax.ShapeDtypeStruct((N, ncls, sp), jnp.float32),
        grid=(N,),
        in_specs=[
            pl.BlockSpec((1, C, Lp), lambda n: (n, 0, 0)),
            pl.BlockSpec((27, C, C), lambda n: (0, 0, 0)),
            pl.BlockSpec((C, 1), lambda n: (0, 0)),
            pl.BlockSpec((C, 1), lambda n: (0, 0)),
            pl.BlockSpec((ncls, C), lambda n: (0, 0)),
        ],
        out_specs=pl.BlockSpec((1, ncls, sp), lambda n: (n, 0, 0)),
        compiler_params=pltpu.CompilerParams(dimension_semantics=("parallel",)),
    )(xflat, w3, scale, shift, wout)


# ---------------------------- plain-JAX glue ----------------------------

def _interp_matrix_1d(out_size, in_size):
    # PyTorch align_corners=False linear interpolation weights along one axis.
    if out_size == in_size:
        return np.eye(out_size, dtype=np.float32)
    scale = in_size / out_size
    o = np.arange(out_size)
    src = np.maximum((o + 0.5) * scale - 0.5, 0.0)
    i0 = np.minimum(np.floor(src).astype(np.int64), in_size - 1)
    i1 = np.minimum(i0 + 1, in_size - 1)
    lam = (src - i0).astype(np.float32)
    M = np.zeros((out_size, in_size), dtype=np.float32)
    M[o, i0] += (1.0 - lam)
    M[o, i1] += lam
    return M


def _resize_matrix_T(in_dhw, out_dhw):
    # (S_in, S_out) matrix so that  x (C, S_in) @ M == trilinear resize of x.
    Md = _interp_matrix_1d(out_dhw[0], in_dhw[0])
    Mh = _interp_matrix_1d(out_dhw[1], in_dhw[1])
    Mw = _interp_matrix_1d(out_dhw[2], in_dhw[2])
    M = np.kron(Md, np.kron(Mh, Mw))            # (S_out, S_in)
    return jnp.asarray(M.T, dtype=jnp.bfloat16)


def _bn_fold(key, c):
    # deterministic eval-mode BatchNorm folded to per-channel scale/shift, (c, 1)
    eps = 1e-5
    gamma = 1.0 + 0.1 * jax.random.normal(key, (c,), jnp.float32)
    beta = 0.05 * jnp.arange(c, dtype=jnp.float32)
    running_mean = 0.01 * jnp.arange(c, dtype=jnp.float32)
    running_var = 1.0 + 0.1 * jnp.arange(c, dtype=jnp.float32) / c
    scale = gamma / jnp.sqrt(running_var + eps)
    shift = beta - running_mean * scale
    return scale.reshape(c, 1), shift.reshape(c, 1)


def init_params(key, input_dim, num_classes):
    C, C2 = input_dim, input_dim // 2
    ks = jax.random.split(key, 9)
    w_fc1 = 0.2 * jax.random.normal(ks[0], (C2, C), jnp.float32)
    w_fc2 = 0.2 * jax.random.normal(ks[1], (C2, C), jnp.float32)
    w_din1 = 0.2 * jax.random.normal(ks[2], (C2, C2), jnp.float32)
    w_din2 = 0.2 * jax.random.normal(ks[3], (C2, C2), jnp.float32)
    # algebraic fold: gate rows = Wfc ; d rows = Wdin @ Wfc  -> one (2*C2, C) weight
    w_cat1 = jnp.concatenate([w_fc1, w_din1 @ w_fc1], axis=0).astype(jnp.bfloat16)
    w_cat2 = jnp.concatenate([w_fc2, w_din2 @ w_fc2], axis=0).astype(jnp.bfloat16)
    return dict(
        w_cat1=w_cat1,
        w_cat2=w_cat2,
        bn1=_bn_fold(ks[4], C2),
        bn2=_bn_fold(ks[5], C2),
        w_conv3=(0.1 * jax.random.normal(ks[6], (27, C, C), jnp.float32)
                 ).astype(jnp.bfloat16),
        bn3=_bn_fold(ks[7], C),
        w_out=(0.2 * jax.random.normal(ks[8], (num_classes, C), jnp.float32)
               ).astype(jnp.bfloat16),
    )


def sba_forward(params, h_feature, l_feature):
    # h_feature, l_feature: NCDHW f32 with `input_dim` channels
    N, C, Dh, Hh, Wh = h_feature.shape
    _, _, Dl, Hl, Wl = l_feature.shape
    C2 = C // 2
    S_h, S_l = Dh * Hh * Wh, Dl * Hl * Wl

    h3 = h_feature.reshape(N, C, S_h).astype(jnp.bfloat16)
    l3 = l_feature.reshape(N, C, S_l).astype(jnp.bfloat16)

    # fused fc+gate+d_in branches (low branch does not emit the unused g*d)
    d_l, g_l = _branch(l3, params['w_cat1'], *params['bn1'], want_p=False)
    d_h, g_h, p_h = _branch(h3, params['w_cat2'], *params['bn2'], want_p=True)

    MT_up = _resize_matrix_T((Dh, Hh, Wh), (Dl, Hl, Wl))    # (S_h, S_l)
    MT_down = _resize_matrix_T((Dl, Hl, Wl), (Dh, Hh, Wh))  # (S_l, S_h)

    # l_new = d_l + d_l*g_l + (1-g_l)*up(g_h*d_h) ; q_l = g_l * l_new  (fused)
    l_new, q_l = _resize_combine(MT_up, p_h, d_l, g_l, emit_q=True)
    # h_new = d_h + d_h*g_h + (1-g_h)*down(q_l)                        (fused)
    h_new = _resize_combine(MT_down, q_l, d_h, g_h, emit_q=False)
    # h_up = up(h_new) to the low-level grid
    h_up = _resize(MT_up, h_new)

    # head: cat([h_up, l_new]) channels-first, zero-pad spatially, flatten, then
    # the fused 3x3x3 conv kernel works on lane shifts of the flat padded volume.
    cat = jnp.concatenate([h_up, l_new], axis=1)            # (N, C, S_l)
    Dp, Hp, Wp = Dl + 2, Hl + 2, Wl + 2
    sp = Dp * Hp * Wp
    m = Hp * Wp + Wp + 1
    xp = jnp.pad(cat.reshape(N, C, Dl, Hl, Wl),
                 ((0, 0), (0, 0), (1, 1), (1, 1), (1, 1)))
    xflat = jnp.pad(xp.reshape(N, C, sp), ((0, 0), (0, 0), (m, m)))
    offsets = [kd * Hp * Wp + kh * Wp + kw
               for kd in range(3) for kh in range(3) for kw in range(3)]

    out_pad = _head(xflat, params['w_conv3'], *params['bn3'], params['w_out'],
                    sp, offsets)
    ncls = params['w_out'].shape[0]
    out = out_pad.reshape(N, ncls, Dp, Hp, Wp)[:, :, 1:-1, 1:-1, 1:-1]
    return out  # NCDHW, float32


if __name__ == "__main__":
    key = jax.random.PRNGKey(0)
    kp, kh, kl = jax.random.split(key, 3)

    input_dim = 8
    num_classes = 3
    params = init_params(kp, input_dim, num_classes)

    # high-level feature: smaller spatial grid; low-level feature: larger grid
    h_feature = jax.random.normal(kh, (2, input_dim, 4, 4, 4), jnp.float32)
    l_feature = jax.random.normal(kl, (2, input_dim, 8, 8, 8), jnp.float32)

    out = jax.jit(sba_forward)(params, h_feature, l_feature)
    jax.block_until_ready(out)
    assert out.shape == (2, num_classes, 8, 8, 8), out.shape
    print("KERNEL_OK")
</pallas_src>

<mosaic_0001>
module attributes {stable_mosaic.version = 11 : i64} {
  func.func @_branch3_kernel(%arg0: i32, %arg1: i32, %arg2: memref<1x8x64xbf16, #tpu.memory_space<vmem>>, %arg3: memref<8x8xbf16, #tpu.memory_space<vmem>>, %arg4: memref<4x1xf32, #tpu.memory_space<vmem>>, %arg5: memref<4x1xf32, #tpu.memory_space<vmem>>, %arg6: memref<1x4x64xbf16, #tpu.memory_space<vmem>>, %arg7: memref<1x4x64xbf16, #tpu.memory_space<vmem>>, %arg8: memref<1x4x64xbf16, #tpu.memory_space<vmem>>) attributes {dimension_semantics = [#tpu.dimension_semantics<parallel>, #tpu.dimension_semantics<parallel>], iteration_bounds = array<i64: 2, 1>, scalar_prefetch = 0 : i64, scratch_operands = 0 : i64, tpu.core_type = #tpu.core_type<tc>, window_params = [{transform_indices = @transform_0, window_bounds = array<i64: 1, 8, 64>}, {pipeline_mode = #tpu.pipeline_mode<synchronous>, transform_indices = @transform_1, window_bounds = array<i64: 8, 8>}, {pipeline_mode = #tpu.pipeline_mode<synchronous>, transform_indices = @transform_2, window_bounds = array<i64: 4, 1>}, {pipeline_mode = #tpu.pipeline_mode<synchronous>, transform_indices = @transform_3, window_bounds = array<i64: 4, 1>}, {transform_indices = @transform_4, window_bounds = array<i64: 1, 4, 64>}, {transform_indices = @transform_5, window_bounds = array<i64: 1, 4, 64>}, {transform_indices = @transform_6, window_bounds = array<i64: 1, 4, 64>}]} {
    %c0 = arith.constant 0 : index
    %c0_0 = arith.constant 0 : index
    %0 = vector.load %arg3[%c0, %c0_0] : memref<8x8xbf16, #tpu.memory_space<vmem>>, vector<8x8xbf16>
    %c0_1 = arith.constant 0 : index
    %c0_2 = arith.constant 0 : index
    %c0_3 = arith.constant 0 : index
    %1 = vector.load %arg2[%c0_1, %c0_2, %c0_3] : memref<1x8x64xbf16, #tpu.memory_space<vmem>>, vector<1x8x64xbf16>
    %2 = vector.shape_cast %1 : vector<1x8x64xbf16> to vector<8x64xbf16>
    %cst = arith.constant dense<0.000000e+00> : vector<8x64xf32>
    %3 = tpu.matmul %0, %2, %cst {dimension_numbers = #tpu.dot_dimension_numbers<[1], [0], [0], [1], [0, 0, 1, 1], [], []>} : vector<8x8xbf16>, vector<8x64xbf16>, vector<8x64xf32> -> vector<8x64xf32>
    %4 = vector.extract_strided_slice %3 {offsets = [0, 0], sizes = [4, 64], strides = [1, 1]} : vector<8x64xf32> to vector<4x64xf32>
    %cst_4 = arith.constant 0.000000e+00 : f32
    %5 = vector.broadcast %cst_4 : f32 to vector<4x64xf32>
    %6 = arith.subf %5, %4 : vector<4x64xf32>
    %7 = math.exp %6 : vector<4x64xf32>
    %cst_5 = arith.constant 1.000000e+00 : f32
    %8 = vector.broadcast %cst_5 : f32 to vector<4x64xf32>
    %9 = arith.addf %8, %7 : vector<4x64xf32>
    %10 = tpu.reciprocal %9 {approx = true} : vector<4x64xf32> -> vector<4x64xf32>
    %11 = vector.extract_strided_slice %3 {offsets = [4, 0], sizes = [4, 64], strides = [1, 1]} : vector<8x64xf32> to vector<4x64xf32>
    %c0_6 = arith.constant 0 : index
    %c0_7 = arith.constant 0 : index
    %12 = vector.load %arg4[%c0_6, %c0_7] : memref<4x1xf32, #tpu.memory_space<vmem>>, vector<4x1xf32>
    %13 = vector.broadcast %12 : vector<4x1xf32> to vector<4x64xf32>
    %14 = arith.mulf %11, %13 : vector<4x64xf32>
    %c0_8 = arith.constant 0 : index
    %c0_9 = arith.constant 0 : index
    %15 = vector.load %arg5[%c0_8, %c0_9] : memref<4x1xf32, #tpu.memory_space<vmem>>, vector<4x1xf32>
    %16 = vector.broadcast %15 : vector<4x1xf32> to vector<4x64xf32>
    %17 = arith.addf %14, %16 : vector<4x64xf32>
    %cst_10 = arith.constant 0.000000e+00 : f32
    %18 = vector.broadcast %cst_10 : f32 to vector<4x64xf32>
    %19 = arith.maximumf %17, %18 : vector<4x64xf32>
    %20 = arith.truncf %19 : vector<4x64xf32> to vector<4x64xbf16>
    %c0_11 = arith.constant 0 : index
    %c0_12 = arith.constant 0 : index
    %c0_13 = arith.constant 0 : index
    %21 = vector.load %arg6[%c0_11, %c0_12, %c0_13] : memref<1x4x64xbf16, #tpu.memory_space<vmem>>, vector<1x4x64xbf16>
    %22 = vector.shape_cast %21 : vector<1x4x64xbf16> to vector<4x64xbf16>
    %23 = vector.shape_cast %20 : vector<4x64xbf16> to vector<1x4x64xbf16>
    tpu.vector_store %arg6[%c0_11, %c0_12, %c0_13], %23 {strides = array<i32>} : memref<1x4x64xbf16, #tpu.memory_space<vmem>>, vector<1x4x64xbf16>,
    %24 = arith.truncf %10 : vector<4x64xf32> to vector<4x64xbf16>
    %c0_14 = arith.constant 0 : index
    %c0_15 = arith.constant 0 : index
    %c0_16 = arith.constant 0 : index
    %25 = vector.load %arg7[%c0_14, %c0_15, %c0_16] : memref<1x4x64xbf16, #tpu.memory_space<vmem>>, vector<1x4x64xbf16>
    %26 = vector.shape_cast %25 : vector<1x4x64xbf16> to vector<4x64xbf16>
    %27 = vector.shape_cast %24 : vector<4x64xbf16> to vector<1x4x64xbf16>
    tpu.vector_store %arg7[%c0_14, %c0_15, %c0_16], %27 {strides = array<i32>} : memref<1x4x64xbf16, #tpu.memory_space<vmem>>, vector<1x4x64xbf16>,
    %28 = arith.mulf %10, %19 : vector<4x64xf32>
    %29 = arith.truncf %28 : vector<4x64xf32> to vector<4x64xbf16>
    %c0_17 = arith.constant 0 : index
    %c0_18 = arith.constant 0 : index
    %c0_19 = arith.constant 0 : index
    %30 = vector.load %arg8[%c0_17, %c0_18, %c0_19] : memref<1x4x64xbf16, #tpu.memory_space<vmem>>, vector<1x4x64xbf16>
    %31 = vector.shape_cast %30 : vector<1x4x64xbf16> to vector<4x64xbf16>
    %32 = vector.shape_cast %29 : vector<4x64xbf16> to vector<1x4x64xbf16>
    tpu.vector_store %arg8[%c0_17, %c0_18, %c0_19], %32 {strides = array<i32>} : memref<1x4x64xbf16, #tpu.memory_space<vmem>>, vector<1x4x64xbf16>,
    return
  }
  func.func @transform_0(%arg0: i32, %arg1: i32) -> (i32, i32, i32) {
    %c0_i32 = arith.constant 0 : i32
    %c0_i32_0 = arith.constant 0 : i32
    return %arg0, %c0_i32, %arg1 : i32, i32, i32
  }
  func.func @transform_1(%arg0: i32, %arg1: i32) -> (i32, i32) {
    %c0_i32 = arith.constant 0 : i32
    %c0_i32_0 = arith.constant 0 : i32
    %c0_i32_1 = arith.constant 0 : i32
    return %c0_i32, %c0_i32_0 : i32, i32
  }
  func.func @transform_2(%arg0: i32, %arg1: i32) -> (i32, i32) {
    %c0_i32 = arith.constant 0 : i32
    %c0_i32_0 = arith.constant 0 : i32
    %c0_i32_1 = arith.constant 0 : i32
    return %c0_i32, %c0_i32_0 : i32, i32
  }
  func.func @transform_3(%arg0: i32, %arg1: i32) -> (i32, i32) {
    %c0_i32 = arith.constant 0 : i32
    %c0_i32_0 = arith.constant 0 : i32
    %c0_i32_1 = arith.constant 0 : i32
    return %c0_i32, %c0_i32_0 : i32, i32
  }
  func.func @transform_4(%arg0: i32, %arg1: i32) -> (i32, i32, i32) {
    %c0_i32 = arith.constant 0 : i32
    %c0_i32_0 = arith.constant 0 : i32
    return %arg0, %c0_i32, %arg1 : i32, i32, i32
  }
  func.func @transform_5(%arg0: i32, %arg1: i32) -> (i32, i32, i32) {
    %c0_i32 = arith.constant 0 : i32
    %c0_i32_0 = arith.constant 0 : i32
    return %arg0, %c0_i32, %arg1 : i32, i32, i32
  }
  func.func @transform_6(%arg0: i32, %arg1: i32) -> (i32, i32, i32) {
    %c0_i32 = arith.constant 0 : i32
    %c0_i32_0 = arith.constant 0 : i32
    return %arg0, %c0_i32, %arg1 : i32, i32, i32
  }
}

module attributes {stable_mosaic.version = 11 : i64} {
  func.func @_branch2_kernel(%arg0: i32, %arg1: i32, %arg2: memref<1x8x512xbf16, #tpu.memory_space<vmem>>, %arg3: memref<8x8xbf16, #tpu.memory_space<vmem>>, %arg4: memref<4x1xf32, #tpu.memory_space<vmem>>, %arg5: memref<4x1xf32, #tpu.memory_space<vmem>>, %arg6: memref<1x4x512xbf16, #tpu.memory_space<vmem>>, %arg7: memref<1x4x512xbf16, #tpu.memory_space<vmem>>) attributes {dimension_semantics = [#tpu.dimension_semantics<parallel>, #tpu.dimension_semantics<parallel>], iteration_bounds = array<i64: 2, 1>, scalar_prefetch = 0 : i64, scratch_operands = 0 : i64, tpu.core_type = #tpu.core_type<tc>, window_params = [{transform_indices = @transform_0, window_bounds = array<i64: 1, 8, 512>}, {pipeline_mode = #tpu.pipeline_mode<synchronous>, transform_indices = @transform_1, window_bounds = array<i64: 8, 8>}, {pipeline_mode = #tpu.pipeline_mode<synchronous>, transform_indices = @transform_2, window_bounds = array<i64: 4, 1>}, {pipeline_mode = #tpu.pipeline_mode<synchronous>, transform_indices = @transform_3, window_bounds = array<i64: 4, 1>}, {transform_indices = @transform_4, window_bounds = array<i64: 1, 4, 512>}, {transform_indices = @transform_5, window_bounds = array<i64: 1, 4, 512>}]} {
    %c0 = arith.constant 0 : index
    %c0_0 = arith.constant 0 : index
    %0 = vector.load %arg3[%c0, %c0_0] : memref<8x8xbf16, #tpu.memory_space<vmem>>, vector<8x8xbf16>
    %c0_1 = arith.constant 0 : index
    %c0_2 = arith.constant 0 : index
    %c0_3 = arith.constant 0 : index
    %1 = vector.load %arg2[%c0_1, %c0_2, %c0_3] : memref<1x8x512xbf16, #tpu.memory_space<vmem>>, vector<1x8x512xbf16>
    %2 = vector.shape_cast %1 : vector<1x8x512xbf16> to vector<8x512xbf16>
    %cst = arith.constant dense<0.000000e+00> : vector<8x512xf32>
    %3 = tpu.matmul %0, %2, %cst {dimension_numbers = #tpu.dot_dimension_numbers<[1], [0], [0], [1], [0, 0, 1, 1], [], []>} : vector<8x8xbf16>, vector<8x512xbf16>, vector<8x512xf32> -> vector<8x512xf32>
    %4 = vector.extract_strided_slice %3 {offsets = [0, 0], sizes = [4, 512], strides = [1, 1]} : vector<8x512xf32> to vector<4x512xf32>
    %cst_4 = arith.constant 0.000000e+00 : f32
    %5 = vector.broadcast %cst_4 : f32 to vector<4x512xf32>
    %6 = arith.subf %5, %4 : vector<4x512xf32>
    %7 = math.exp %6 : vector<4x512xf32>
    %cst_5 = arith.constant 1.000000e+00 : f32
    %8 = vector.broadcast %cst_5 : f32 to vector<4x512xf32>
    %9 = arith.addf %8, %7 : vector<4x512xf32>
    %10 = tpu.reciprocal %9 {approx = true} : vector<4x512xf32> -> vector<4x512xf32>
    %11 = vector.extract_strided_slice %3 {offsets = [4, 0], sizes = [4, 512], strides = [1, 1]} : vector<8x512xf32> to vector<4x512xf32>
    %c0_6 = arith.constant 0 : index
    %c0_7 = arith.constant 0 : index
    %12 = vector.load %arg4[%c0_6, %c0_7] : memref<4x1xf32, #tpu.memory_space<vmem>>, vector<4x1xf32>
    %13 = vector.broadcast %12 : vector<4x1xf32> to vector<4x512xf32>
    %14 = arith.mulf %11, %13 : vector<4x512xf32>
    %c0_8 = arith.constant 0 : index
    %c0_9 = arith.constant 0 : index
    %15 = vector.load %arg5[%c0_8, %c0_9] : memref<4x1xf32, #tpu.memory_space<vmem>>, vector<4x1xf32>
    %16 = vector.broadcast %15 : vector<4x1xf32> to vector<4x512xf32>
    %17 = arith.addf %14, %16 : vector<4x512xf32>
    %cst_10 = arith.constant 0.000000e+00 : f32
    %18 = vector.broadcast %cst_10 : f32 to vector<4x512xf32>
    %19 = arith.maximumf %17, %18 : vector<4x512xf32>
    %20 = arith.truncf %19 : vector<4x512xf32> to vector<4x512xbf16>
    %c0_11 = arith.constant 0 : index
    %c0_12 = arith.constant 0 : index
    %c0_13 = arith.constant 0 : index
    %21 = vector.load %arg6[%c0_11, %c0_12, %c0_13] : memref<1x4x512xbf16, #tpu.memory_space<vmem>>, vector<1x4x512xbf16>
    %22 = vector.shape_cast %21 : vector<1x4x512xbf16> to vector<4x512xbf16>
    %23 = vector.shape_cast %20 : vector<4x512xbf16> to vector<1x4x512xbf16>
    tpu.vector_store %arg6[%c0_11, %c0_12, %c0_13], %23 {strides = array<i32>} : memref<1x4x512xbf16, #tpu.memory_space<vmem>>, vector<1x4x512xbf16>,
    %24 = arith.truncf %10 : vector<4x512xf32> to vector<4x512xbf16>
    %c0_14 = arith.constant 0 : index
    %c0_15 = arith.constant 0 : index
    %c0_16 = arith.constant 0 : index
    %25 = vector.load %arg7[%c0_14, %c0_15, %c0_16] : memref<1x4x512xbf16, #tpu.memory_space<vmem>>, vector<1x4x512xbf16>
    %26 = vector.shape_cast %25 : vector<1x4x512xbf16> to vector<4x512xbf16>
    %27 = vector.shape_cast %24 : vector<4x512xbf16> to vector<1x4x512xbf16>
    tpu.vector_store %arg7[%c0_14, %c0_15, %c0_16], %27 {strides = array<i32>} : memref<1x4x512xbf16, #tpu.memory_space<vmem>>, vector<1x4x512xbf16>,
    return
  }
  func.func @transform_0(%arg0: i32, %arg1: i32) -> (i32, i32, i32) {
    %c0_i32 = arith.constant 0 : i32
    %c0_i32_0 = arith.constant 0 : i32
    return %arg0, %c0_i32, %arg1 : i32, i32, i32
  }
  func.func @transform_1(%arg0: i32, %arg1: i32) -> (i32, i32) {
    %c0_i32 = arith.constant 0 : i32
    %c0_i32_0 = arith.constant 0 : i32
    %c0_i32_1 = arith.constant 0 : i32
    return %c0_i32, %c0_i32_0 : i32, i32
  }
  func.func @transform_2(%arg0: i32, %arg1: i32) -> (i32, i32) {
    %c0_i32 = arith.constant 0 : i32
    %c0_i32_0 = arith.constant 0 : i32
    %c0_i32_1 = arith.constant 0 : i32
    return %c0_i32, %c0_i32_0 : i32, i32
  }
  func.func @transform_3(%arg0: i32, %arg1: i32) -> (i32, i32) {
    %c0_i32 = arith.constant 0 : i32
    %c0_i32_0 = arith.constant 0 : i32
    %c0_i32_1 = arith.constant 0 : i32
    return %c0_i32, %c0_i32_0 : i32, i32
  }
  func.func @transform_4(%arg0: i32, %arg1: i32) -> (i32, i32, i32) {
    %c0_i32 = arith.constant 0 : i32
    %c0_i32_0 = arith.constant 0 : i32
    return %arg0, %c0_i32, %arg1 : i32, i32, i32
  }
  func.func @transform_5(%arg0: i32, %arg1: i32) -> (i32, i32, i32) {
    %c0_i32 = arith.constant 0 : i32
    %c0_i32_0 = arith.constant 0 : i32
    return %arg0, %c0_i32, %arg1 : i32, i32, i32
  }
}

module attributes {stable_mosaic.version = 11 : i64} {
  func.func @_up_combine_kernel(%arg0: i32, %arg1: i32, %arg2: memref<64x512xbf16, #tpu.memory_space<vmem>>, %arg3: memref<1x4x64xbf16, #tpu.memory_space<vmem>>, %arg4: memref<1x4x512xbf16, #tpu.memory_space<vmem>>, %arg5: memref<1x4x512xbf16, #tpu.memory_space<vmem>>, %arg6: memref<1x4x512xbf16, #tpu.memory_space<vmem>>, %arg7: memref<1x4x512xbf16, #tpu.memory_space<vmem>>) attributes {dimension_semantics = [#tpu.dimension_semantics<parallel>, #tpu.dimension_semantics<parallel>], iteration_bounds = array<i64: 2, 1>, scalar_prefetch = 0 : i64, scratch_operands = 0 : i64, tpu.core_type = #tpu.core_type<tc>, window_params = [{transform_indices = @transform_0, window_bounds = array<i64: 64, 512>}, {transform_indices = @transform_1, window_bounds = array<i64: 1, 4, 64>}, {transform_indices = @transform_2, window_bounds = array<i64: 1, 4, 512>}, {transform_indices = @transform_3, window_bounds = array<i64: 1, 4, 512>}, {transform_indices = @transform_4, window_bounds = array<i64: 1, 4, 512>}, {transform_indices = @transform_5, window_bounds = array<i64: 1, 4, 512>}]} {
    %c0 = arith.constant 0 : index
    %c0_0 = arith.constant 0 : index
    %c0_1 = arith.constant 0 : index
    %0 = vector.load %arg3[%c0, %c0_0, %c0_1] : memref<1x4x64xbf16, #tpu.memory_space<vmem>>, vector<1x4x64xbf16>
    %1 = vector.shape_cast %0 : vector<1x4x64xbf16> to vector<4x64xbf16>
    %c0_2 = arith.constant 0 : index
    %c0_3 = arith.constant 0 : index
    %2 = vector.load %arg2[%c0_2, %c0_3] : memref<64x512xbf16, #tpu.memory_space<vmem>>, vector<64x512xbf16>
    %cst = arith.constant dense<0.000000e+00> : vector<4x512xf32>
    %3 = tpu.matmul %1, %2, %cst {dimension_numbers = #tpu.dot_dimension_numbers<[1], [0], [0], [1], [0, 0, 1, 1], [], []>} : vector<4x64xbf16>, vector<64x512xbf16>, vector<4x512xf32> -> vector<4x512xf32>
    %c0_4 = arith.constant 0 : index
    %c0_5 = arith.constant 0 : index
    %c0_6 = arith.constant 0 : index
    %4 = vector.load %arg4[%c0_4, %c0_5, %c0_6] : memref<1x4x512xbf16, #tpu.memory_space<vmem>>, vector<1x4x512xbf16>
    %5 = vector.shape_cast %4 : vector<1x4x512xbf16> to vector<4x512xbf16>
    %6 = arith.extf %5 : vector<4x512xbf16> to vector<4x512xf32>
    %c0_7 = arith.constant 0 : index
    %c0_8 = arith.constant 0 : index
    %c0_9 = arith.constant 0 : index
    %7 = vector.load %arg5[%c0_7, %c0_8, %c0_9] : memref<1x4x512xbf16, #tpu.memory_space<vmem>>, vector<1x4x512xbf16>
    %8 = vector.shape_cast %7 : vector<1x4x512xbf16> to vector<4x512xbf16>
    %9 = arith.extf %8 : vector<4x512xbf16> to vector<4x512xf32>
    %10 = arith.mulf %6, %9 : vector<4x512xf32>
    %11 = arith.addf %6, %10 : vector<4x512xf32>
    %cst_10 = arith.constant 1.000000e+00 : f32
    %12 = vector.broadcast %cst_10 : f32 to vector<4x512xf32>
    %13 = arith.subf %12, %9 : vector<4x512xf32>
    %14 = arith.mulf %13, %3 : vector<4x512xf32>
    %15 = arith.addf %11, %14 : vector<4x512xf32>
    %16 = arith.truncf %15 : vector<4x512xf32> to vector<4x512xbf16>
    %c0_11 = arith.constant 0 : index
    %c0_12 = arith.constant 0 : index
    %c0_13 = arith.constant 0 : index
    %17 = vector.load %arg6[%c0_11, %c0_12, %c0_13] : memref<1x4x512xbf16, #tpu.memory_space<vmem>>, vector<1x4x512xbf16>
    %18 = vector.shape_cast %17 : vector<1x4x512xbf16> to vector<4x512xbf16>
    %19 = vector.shape_cast %16 : vector<4x512xbf16> to vector<1x4x512xbf16>
    tpu.vector_store %arg6[%c0_11, %c0_12, %c0_13], %19 {strides = array<i32>} : memref<1x4x512xbf16, #tpu.memory_space<vmem>>, vector<1x4x512xbf16>,
    %20 = arith.mulf %9, %15 : vector<4x512xf32>
    %21 = arith.truncf %20 : vector<4x512xf32> to vector<4x512xbf16>
    %c0_14 = arith.constant 0 : index
    %c0_15 = arith.constant 0 : index
    %c0_16 = arith.constant 0 : index
    %22 = vector.load %arg7[%c0_14, %c0_15, %c0_16] : memref<1x4x512xbf16, #tpu.memory_space<vmem>>, vector<1x4x512xbf16>
    %23 = vector.shape_cast %22 : vector<1x4x512xbf16> to vector<4x512xbf16>
    %24 = vector.shape_cast %21 : vector<4x512xbf16> to vector<1x4x512xbf16>
    tpu.vector_store %arg7[%c0_14, %c0_15, %c0_16], %24 {strides = array<i32>} : memref<1x4x512xbf16, #tpu.memory_space<vmem>>, vector<1x4x512xbf16>,
    return
  }
  func.func @transform_0(%arg0: i32, %arg1: i32) -> (i32, i32) {
    %c0_i32 = arith.constant 0 : i32
    %c0_i32_0 = arith.constant 0 : i32
    return %c0_i32, %arg1 : i32, i32
  }
  func.func @transform_1(%arg0: i32, %arg1: i32) -> (i32, i32, i32) {
    %c0_i32 = arith.constant 0 : i32
    %c0_i32_0 = arith.constant 0 : i32
    %c0_i32_1 = arith.constant 0 : i32
    return %arg0, %c0_i32, %c0_i32_0 : i32, i32, i32
  }
  func.func @transform_2(%arg0: i32, %arg1: i32) -> (i32, i32, i32) {
    %c0_i32 = arith.constant 0 : i32
    %c0_i32_0 = arith.constant 0 : i32
    return %arg0, %c0_i32, %arg1 : i32, i32, i32
  }
  func.func @transform_3(%arg0: i32, %arg1: i32) -> (i32, i32, i32) {
    %c0_i32 = arith.constant 0 : i32
    %c0_i32_0 = arith.constant 0 : i32
    return %arg0, %c0_i32, %arg1 : i32, i32, i32
  }
  func.func @transform_4(%arg0: i32, %arg1: i32) -> (i32, i32, i32) {
    %c0_i32 = arith.constant 0 : i32
    %c0_i32_0 = arith.constant 0 : i32
    return %arg0, %c0_i32, %arg1 : i32, i32, i32
  }
  func.func @transform_5(%arg0: i32, %arg1: i32) -> (i32, i32, i32) {
    %c0_i32 = arith.constant 0 : i32
    %c0_i32_0 = arith.constant 0 : i32
    return %arg0, %c0_i32, %arg1 : i32, i32, i32
  }
}

module attributes {stable_mosaic.version = 11 : i64} {
  func.func @_down_combine_kernel(%arg0: i32, %arg1: i32, %arg2: memref<512x64xbf16, #tpu.memory_space<vmem>>, %arg3: memref<1x4x512xbf16, #tpu.memory_space<vmem>>, %arg4: memref<1x4x64xbf16, #tpu.memory_space<vmem>>, %arg5: memref<1x4x64xbf16, #tpu.memory_space<vmem>>, %arg6: memref<1x4x64xbf16, #tpu.memory_space<vmem>>) attributes {dimension_semantics = [#tpu.dimension_semantics<parallel>, #tpu.dimension_semantics<parallel>], iteration_bounds = array<i64: 2, 1>, scalar_prefetch = 0 : i64, scratch_operands = 0 : i64, tpu.core_type = #tpu.core_type<tc>, window_params = [{transform_indices = @transform_0, window_bounds = array<i64: 512, 64>}, {transform_indices = @transform_1, window_bounds = array<i64: 1, 4, 512>}, {transform_indices = @transform_2, window_bounds = array<i64: 1, 4, 64>}, {transform_indices = @transform_3, window_bounds = array<i64: 1, 4, 64>}, {transform_indices = @transform_4, window_bounds = array<i64: 1, 4, 64>}]} {
    %c0 = arith.constant 0 : index
    %c0_0 = arith.constant 0 : index
    %c0_1 = arith.constant 0 : index
    %0 = vector.load %arg3[%c0, %c0_0, %c0_1] : memref<1x4x512xbf16, #tpu.memory_space<vmem>>, vector<1x4x512xbf16>
    %1 = vector.shape_cast %0 : vector<1x4x512xbf16> to vector<4x512xbf16>
    %c0_2 = arith.constant 0 : index
    %c0_3 = arith.constant 0 : index
    %2 = vector.load %arg2[%c0_2, %c0_3] : memref<512x64xbf16, #tpu.memory_space<vmem>>, vector<512x64xbf16>
    %cst = arith.constant dense<0.000000e+00> : vector<4x64xf32>
    %3 = tpu.matmul %1, %2, %cst {dimension_numbers = #tpu.dot_dimension_numbers<[1], [0], [0], [1], [0, 0, 1, 1], [], []>} : vector<4x512xbf16>, vector<512x64xbf16>, vector<4x64xf32> -> vector<4x64xf32>
    %c0_4 = arith.constant 0 : index
    %c0_5 = arith.constant 0 : index
    %c0_6 = arith.constant 0 : index
    %4 = vector.load %arg4[%c0_4, %c0_5, %c0_6] : memref<1x4x64xbf16, #tpu.memory_space<vmem>>, vector<1x4x64xbf16>
    %5 = vector.shape_cast %4 : vector<1x4x64xbf16> to vector<4x64xbf16>
    %6 = arith.extf %5 : vector<4x64xbf16> to vector<4x64xf32>
    %c0_7 = arith.constant 0 : index
    %c0_8 = arith.constant 0 : index
    %c0_9 = arith.constant 0 : index
    %7 = vector.load %arg5[%c0_7, %c0_8, %c0_9] : memref<1x4x64xbf16, #tpu.memory_space<vmem>>, vector<1x4x64xbf16>
    %8 = vector.shape_cast %7 : vector<1x4x64xbf16> to vector<4x64xbf16>
    %9 = arith.extf %8 : vector<4x64xbf16> to vector<4x64xf32>
    %10 = arith.mulf %6, %9 : vector<4x64xf32>
    %11 = arith.addf %6, %10 : vector<4x64xf32>
    %cst_10 = arith.constant 1.000000e+00 : f32
    %12 = vector.broadcast %cst_10 : f32 to vector<4x64xf32>
    %13 = arith.subf %12, %9 : vector<4x64xf32>
    %14 = arith.mulf %13, %3 : vector<4x64xf32>
    %15 = arith.addf %11, %14 : vector<4x64xf32>
    %16 = arith.truncf %15 : vector<4x64xf32> to vector<4x64xbf16>
    %c0_11 = arith.constant 0 : index
    %c0_12 = arith.constant 0 : index
    %c0_13 = arith.constant 0 : index
    %17 = vector.load %arg6[%c0_11, %c0_12, %c0_13] : memref<1x4x64xbf16, #tpu.memory_space<vmem>>, vector<1x4x64xbf16>
    %18 = vector.shape_cast %17 : vector<1x4x64xbf16> to vector<4x64xbf16>
    %19 = vector.shape_cast %16 : vector<4x64xbf16> to vector<1x4x64xbf16>
    tpu.vector_store %arg6[%c0_11, %c0_12, %c0_13], %19 {strides = array<i32>} : memref<1x4x64xbf16, #tpu.memory_space<vmem>>, vector<1x4x64xbf16>,
    return
  }
  func.func @transform_0(%arg0: i32, %arg1: i32) -> (i32, i32) {
    %c0_i32 = arith.constant 0 : i32
    %c0_i32_0 = arith.constant 0 : i32
    return %c0_i32, %arg1 : i32, i32
  }
  func.func @transform_1(%arg0: i32, %arg1: i32) -> (i32, i32, i32) {
    %c0_i32 = arith.constant 0 : i32
    %c0_i32_0 = arith.constant 0 : i32
    %c0_i32_1 = arith.constant 0 : i32
    return %arg0, %c0_i32, %c0_i32_0 : i32, i32, i32
  }
  func.func @transform_2(%arg0: i32, %arg1: i32) -> (i32, i32, i32) {
    %c0_i32 = arith.constant 0 : i32
    %c0_i32_0 = arith.constant 0 : i32
    return %arg0, %c0_i32, %arg1 : i32, i32, i32
  }
  func.func @transform_3(%arg0: i32, %arg1: i32) -> (i32, i32, i32) {
    %c0_i32 = arith.constant 0 : i32
    %c0_i32_0 = arith.constant 0 : i32
    return %arg0, %c0_i32, %arg1 : i32, i32, i32
  }
  func.func @transform_4(%arg0: i32, %arg1: i32) -> (i32, i32, i32) {
    %c0_i32 = arith.constant 0 : i32
    %c0_i32_0 = arith.constant 0 : i32
    return %arg0, %c0_i32, %arg1 : i32, i32, i32
  }
}

module attributes {stable_mosaic.version = 11 : i64} {
  func.func @_resize_kernel(%arg0: i32, %arg1: i32, %arg2: memref<64x512xbf16, #tpu.memory_space<vmem>>, %arg3: memref<1x4x64xbf16, #tpu.memory_space<vmem>>, %arg4: memref<1x4x512xbf16, #tpu.memory_space<vmem>>) attributes {dimension_semantics = [#tpu.dimension_semantics<parallel>, #tpu.dimension_semantics<parallel>], iteration_bounds = array<i64: 2, 1>, scalar_prefetch = 0 : i64, scratch_operands = 0 : i64, tpu.core_type = #tpu.core_type<tc>, window_params = [{transform_indices = @transform_0, window_bounds = array<i64: 64, 512>}, {transform_indices = @transform_1, window_bounds = array<i64: 1, 4, 64>}, {transform_indices = @transform_2, window_bounds = array<i64: 1, 4, 512>}]} {
    %c0 = arith.constant 0 : index
    %c0_0 = arith.constant 0 : index
    %c0_1 = arith.constant 0 : index
    %0 = vector.load %arg3[%c0, %c0_0, %c0_1] : memref<1x4x64xbf16, #tpu.memory_space<vmem>>, vector<1x4x64xbf16>
    %1 = vector.shape_cast %0 : vector<1x4x64xbf16> to vector<4x64xbf16>
    %c0_2 = arith.constant 0 : index
    %c0_3 = arith.constant 0 : index
    %2 = vector.load %arg2[%c0_2, %c0_3] : memref<64x512xbf16, #tpu.memory_space<vmem>>, vector<64x512xbf16>
    %cst = arith.constant dense<0.000000e+00> : vector<4x512xf32>
    %3 = tpu.matmul %1, %2, %cst {dimension_numbers = #tpu.dot_dimension_numbers<[1], [0], [0], [1], [0, 0, 1, 1], [], []>} : vector<4x64xbf16>, vector<64x512xbf16>, vector<4x512xf32> -> vector<4x512xf32>
    %4 = arith.truncf %3 : vector<4x512xf32> to vector<4x512xbf16>
    %c0_4 = arith.constant 0 : index
    %c0_5 = arith.constant 0 : index
    %c0_6 = arith.constant 0 : index
    %5 = vector.load %arg4[%c0_4, %c0_5, %c0_6] : memref<1x4x512xbf16, #tpu.memory_space<vmem>>, vector<1x4x512xbf16>
    %6 = vector.shape_cast %5 : vector<1x4x512xbf16> to vector<4x512xbf16>
    %7 = vector.shape_cast %4 : vector<4x512xbf16> to vector<1x4x512xbf16>
    tpu.vector_store %arg4[%c0_4, %c0_5, %c0_6], %7 {strides = array<i32>} : memref<1x4x512xbf16, #tpu.memory_space<vmem>>, vector<1x4x512xbf16>,
    return
  }
  func.func @transform_0(%arg0: i32, %arg1: i32) -> (i32, i32) {
    %c0_i32 = arith.constant 0 : i32
    %c0_i32_0 = arith.constant 0 : i32
    return %c0_i32, %arg1 : i32, i32
  }
  func.func @transform_1(%arg0: i32, %arg1: i32) -> (i32, i32, i32) {
    %c0_i32 = arith.constant 0 : i32
    %c0_i32_0 = arith.constant 0 : i32
    %c0_i32_1 = arith.constant 0 : i32
    return %arg0, %c0_i32, %c0_i32_0 : i32, i32, i32
  }
  func.func @transform_2(%arg0: i32, %arg1: i32) -> (i32, i32, i32) {
    %c0_i32 = arith.constant 0 : i32
    %c0_i32_0 = arith.constant 0 : i32
    return %arg0, %c0_i32, %arg1 : i32, i32, i32
  }
}

module attributes {stable_mosaic.version = 11 : i64} {
  func.func @kernel(%arg0: i32, %arg1: memref<1x8x1222xbf16, #tpu.memory_space<vmem>>, %arg2: memref<27x8x8xbf16, #tpu.memory_space<vmem>>, %arg3: memref<8x1xf32, #tpu.memory_space<vmem>>, %arg4: memref<8x1xf32, #tpu.memory_space<vmem>>, %arg5: memref<3x8xbf16, #tpu.memory_space<vmem>>, %arg6: memref<1x3x1000xf32, #tpu.memory_space<vmem>>) attributes {dimension_semantics = [#tpu.dimension_semantics<parallel>], iteration_bounds = array<i64: 2>, scalar_prefetch = 0 : i64, scratch_operands = 0 : i64, tpu.core_type = #tpu.core_type<tc>, window_params = [{transform_indices = @transform_0, window_bounds = array<i64: 1, 8, 1222>}, {pipeline_mode = #tpu.pipeline_mode<synchronous>, transform_indices = @transform_1, window_bounds = array<i64: 27, 8, 8>}, {pipeline_mode = #tpu.pipeline_mode<synchronous>, transform_indices = @transform_2, window_bounds = array<i64: 8, 1>}, {pipeline_mode = #tpu.pipeline_mode<synchronous>, transform_indices = @transform_3, window_bounds = array<i64: 8, 1>}, {pipeline_mode = #tpu.pipeline_mode<synchronous>, transform_indices = @transform_4, window_bounds = array<i64: 3, 8>}, {transform_indices = @transform_5, window_bounds = array<i64: 1, 3, 1000>}]} {
    %c0 = arith.constant 0 : index
    %c0_0 = arith.constant 0 : index
    %c0_1 = arith.constant 0 : index
    %0 = vector.load %arg1[%c0, %c0_0, %c0_1] : memref<1x8x1222xbf16, #tpu.memory_space<vmem>>, vector<1x8x1222xbf16>
    %1 = vector.shape_cast %0 : vector<1x8x1222xbf16> to vector<8x1222xbf16>
    %cst = arith.constant 0.000000e+00 : f32
    %2 = vector.broadcast %cst : f32 to vector<8x1000xf32>
    %3 = vector.extract_strided_slice %1 {offsets = [0, 0], sizes = [8, 1000], strides = [1, 1]} : vector<8x1222xbf16> to vector<8x1000xbf16>
    %c0_2 = arith.constant 0 : index
    %c0_3 = arith.constant 0 : index
    %c0_4 = arith.constant 0 : index
    %4 = vector.load %arg2[%c0_2, %c0_3, %c0_4] : memref<27x8x8xbf16, #tpu.memory_space<vmem>>, vector<1x8x8xbf16>
    %5 = vector.shape_cast %4 : vector<1x8x8xbf16> to vector<8x8xbf16>
    %cst_5 = arith.constant dense<0.000000e+00> : vector<8x1000xf32>
    %6 = tpu.matmul %5, %3, %cst_5 {dimension_numbers = #tpu.dot_dimension_numbers<[1], [0], [0], [1], [0, 0, 1, 1], [], []>} : vector<8x8xbf16>, vector<8x1000xbf16>, vector<8x1000xf32> -> vector<8x1000xf32>
    %7 = arith.addf %2, %6 : vector<8x1000xf32>
    %8 = vector.extract_strided_slice %1 {offsets = [0, 1], sizes = [8, 1000], strides = [1, 1]} : vector<8x1222xbf16> to vector<8x1000xbf16>
    %c1 = arith.constant 1 : index
    %c0_6 = arith.constant 0 : index
    %c0_7 = arith.constant 0 : index
    %9 = vector.load %arg2[%c1, %c0_6, %c0_7] : memref<27x8x8xbf16, #tpu.memory_space<vmem>>, vector<1x8x8xbf16>
    %10 = vector.shape_cast %9 : vector<1x8x8xbf16> to vector<8x8xbf16>
    %cst_8 = arith.constant dense<0.000000e+00> : vector<8x1000xf32>
    %11 = tpu.matmul %10, %8, %cst_8 {dimension_numbers = #tpu.dot_dimension_numbers<[1], [0], [0], [1], [0, 0, 1, 1], [], []>} : vector<8x8xbf16>, vector<8x1000xbf16>, vector<8x1000xf32> -> vector<8x1000xf32>
    %12 = arith.addf %7, %11 : vector<8x1000xf32>
    %13 = vector.extract_strided_slice %1 {offsets = [0, 2], sizes = [8, 1000], strides = [1, 1]} : vector<8x1222xbf16> to vector<8x1000xbf16>
    %c2 = arith.constant 2 : index
    %c0_9 = arith.constant 0 : index
    %c0_10 = arith.constant 0 : index
    %14 = vector.load %arg2[%c2, %c0_9, %c0_10] : memref<27x8x8xbf16, #tpu.memory_space<vmem>>, vector<1x8x8xbf16>
    %15 = vector.shape_cast %14 : vector<1x8x8xbf16> to vector<8x8xbf16>
    %cst_11 = arith.constant dense<0.000000e+00> : vector<8x1000xf32>
    %16 = tpu.matmul %15, %13, %cst_11 {dimension_numbers = #tpu.dot_dimension_numbers<[1], [0], [0], [1], [0, 0, 1, 1], [], []>} : vector<8x8xbf16>, vector<8x1000xbf16>, vector<8x1000xf32> -> vector<8x1000xf32>
    %17 = arith.addf %12, %16 : vector<8x1000xf32>
    %18 = vector.extract_strided_slice %1 {offsets = [0, 10], sizes = [8, 1000], strides = [1, 1]} : vector<8x1222xbf16> to vector<8x1000xbf16>
    %c3 = arith.constant 3 : index
    %c0_12 = arith.constant 0 : index
    %c0_13 = arith.constant 0 : index
    %19 = vector.load %arg2[%c3, %c0_12, %c0_13] : memref<27x8x8xbf16, #tpu.memory_space<vmem>>, vector<1x8x8xbf16>
    %20 = vector.shape_cast %19 : vector<1x8x8xbf16> to vector<8x8xbf16>
    %cst_14 = arith.constant dense<0.000000e+00> : vector<8x1000xf32>
    %21 = tpu.matmul %20, %18, %cst_14 {dimension_numbers = #tpu.dot_dimension_numbers<[1], [0], [0], [1], [0, 0, 1, 1], [], []>} : vector<8x8xbf16>, vector<8x1000xbf16>, vector<8x1000xf32> -> vector<8x1000xf32>
    %22 = arith.addf %17, %21 : vector<8x1000xf32>
    %23 = vector.extract_strided_slice %1 {offsets = [0, 11], sizes = [8, 1000], strides = [1, 1]} : vector<8x1222xbf16> to vector<8x1000xbf16>
    %c4 = arith.constant 4 : index
    %c0_15 = arith.constant 0 : index
    %c0_16 = arith.constant 0 : index
    %24 = vector.load %arg2[%c4, %c0_15, %c0_16] : memref<27x8x8xbf16, #tpu.memory_space<vmem>>, vector<1x8x8xbf16>
    %25 = vector.shape_cast %24 : vector<1x8x8xbf16> to vector<8x8xbf16>
    %cst_17 = arith.constant dense<0.000000e+00> : vector<8x1000xf32>
    %26 = tpu.matmul %25, %23, %cst_17 {dimension_numbers = #tpu.dot_dimension_numbers<[1], [0], [0], [1], [0, 0, 1, 1], [], []>} : vector<8x8xbf16>, vector<8x1000xbf16>, vector<8x1000xf32> -> vector<8x1000xf32>
    %27 = arith.addf %22, %26 : vector<8x1000xf32>
    %28 = vector.extract_strided_slice %1 {offsets = [0, 12], sizes = [8, 1000], strides = [1, 1]} : vector<8x1222xbf16> to vector<8x1000xbf16>
    %c5 = arith.constant 5 : index
    %c0_18 = arith.constant 0 : index
    %c0_19 = arith.constant 0 : index
    %29 = vector.load %arg2[%c5, %c0_18, %c0_19] : memref<27x8x8xbf16, #tpu.memory_space<vmem>>, vector<1x8x8xbf16>
    %30 = vector.shape_cast %29 : vector<1x8x8xbf16> to vector<8x8xbf16>
    %cst_20 = arith.constant dense<0.000000e+00> : vector<8x1000xf32>
    %31 = tpu.matmul %30, %28, %cst_20 {dimension_numbers = #tpu.dot_dimension_numbers<[1], [0], [0], [1], [0, 0, 1, 1], [], []>} : vector<8x8xbf16>, vector<8x1000xbf16>, vector<8x1000xf32> -> vector<8x1000xf32>
    %32 = arith.addf %27, %31 : vector<8x1000xf32>
    %33 = vector.extract_strided_slice %1 {offsets = [0, 20], sizes = [8, 1000], strides = [1, 1]} : vector<8x1222xbf16> to vector<8x1000xbf16>
    %c6 = arith.constant 6 : index
    %c0_21 = arith.constant 0 : index
    %c0_22 = arith.constant 0 : index
    %34 = vector.load %arg2[%c6, %c0_21, %c0_22] : memref<27x8x8xbf16, #tpu.memory_space<vmem>>, vector<1x8x8xbf16>
    %35 = vector.shape_cast %34 : vector<1x8x8xbf16> to vector<8x8xbf16>
    %cst_23 = arith.constant dense<0.000000e+00> : vector<8x1000xf32>
    %36 = tpu.matmul %35, %33, %cst_23 {dimension_numbers = #tpu.dot_dimension_numbers<[1], [0], [0], [1], [0, 0, 1, 1], [], []>} : vector<8x8xbf16>, vector<8x1000xbf16>, vector<8x1000xf32> -> vector<8x1000xf32>
    %37 = arith.addf %32, %36 : vector<8x1000xf32>
    %38 = vector.extract_strided_slice %1 {offsets = [0, 21], sizes = [8, 1000], strides = [1, 1]} : vector<8x1222xbf16> to vector<8x1000xbf16>
    %c7 = arith.constant 7 : index
    %c0_24 = arith.constant 0 : index
    %c0_25 = arith.constant 0 : index
    %39 = vector.load %arg2[%c7, %c0_24, %c0_25] : memref<27x8x8xbf16, #tpu.memory_space<vmem>>, vector<1x8x8xbf16>
    %40 = vector.shape_cast %39 : vector<1x8x8xbf16> to vector<8x8xbf16>
    %cst_26 = arith.constant dense<0.000000e+00> : vector<8x1000xf32>
    %41 = tpu.matmul %40, %38, %cst_26 {dimension_numbers = #tpu.dot_dimension_numbers<[1], [0], [0], [1], [0, 0, 1, 1], [], []>} : vector<8x8xbf16>, vector<8x1000xbf16>, vector<8x1000xf32> -> vector<8x1000xf32>
    %42 = arith.addf %37, %41 : vector<8x1000xf32>
    %43 = vector.extract_strided_slice %1 {offsets = [0, 22], sizes = [8, 1000], strides = [1, 1]} : vector<8x1222xbf16> to vector<8x1000xbf16>
    %c8 = arith.constant 8 : index
    %c0_27 = arith.constant 0 : index
    %c0_28 = arith.constant 0 : index
    %44 = vector.load %arg2[%c8, %c0_27, %c0_28] : memref<27x8x8xbf16, #tpu.memory_space<vmem>>, vector<1x8x8xbf16>
    %45 = vector.shape_cast %44 : vector<1x8x8xbf16> to vector<8x8xbf16>
    %cst_29 = arith.constant dense<0.000000e+00> : vector<8x1000xf32>
    %46 = tpu.matmul %45, %43, %cst_29 {dimension_numbers = #tpu.dot_dimension_numbers<[1], [0], [0], [1], [0, 0, 1, 1], [], []>} : vector<8x8xbf16>, vector<8x1000xbf16>, vector<8x1000xf32> -> vector<8x1000xf32>
    %47 = arith.addf %42, %46 : vector<8x1000xf32>
    %48 = vector.extract_strided_slice %1 {offsets = [0, 100], sizes = [8, 1000], strides = [1, 1]} : vector<8x1222xbf16> to vector<8x1000xbf16>
    %c9 = arith.constant 9 : index
    %c0_30 = arith.constant 0 : index
    %c0_31 = arith.constant 0 : index
    %49 = vector.load %arg2[%c9, %c0_30, %c0_31] : memref<27x8x8xbf16, #tpu.memory_space<vmem>>, vector<1x8x8xbf16>
    %50 = vector.shape_cast %49 : vector<1x8x8xbf16> to vector<8x8xbf16>
    %cst_32 = arith.constant dense<0.000000e+00> : vector<8x1000xf32>
    %51 = tpu.matmul %50, %48, %cst_32 {dimension_numbers = #tpu.dot_dimension_numbers<[1], [0], [0], [1], [0, 0, 1, 1], [], []>} : vector<8x8xbf16>, vector<8x1000xbf16>, vector<8x1000xf32> -> vector<8x1000xf32>
    %52 = arith.addf %47, %51 : vector<8x1000xf32>
    %53 = vector.extract_strided_slice %1 {offsets = [0, 101], sizes = [8, 1000], strides = [1, 1]} : vector<8x1222xbf16> to vector<8x1000xbf16>
    %c10 = arith.constant 10 : index
    %c0_33 = arith.constant 0 : index
    %c0_34 = arith.constant 0 : index
    %54 = vector.load %arg2[%c10, %c0_33, %c0_34] : memref<27x8x8xbf16, #tpu.memory_space<vmem>>, vector<1x8x8xbf16>
    %55 = vector.shape_cast %54 : vector<1x8x8xbf16> to vector<8x8xbf16>
    %cst_35 = arith.constant dense<0.000000e+00> : vector<8x1000xf32>
    %56 = tpu.matmul %55, %53, %cst_35 {dimension_numbers = #tpu.dot_dimension_numbers<[1], [0], [0], [1], [0, 0, 1, 1], [], []>} : vector<8x8xbf16>, vector<8x1000xbf16>, vector<8x1000xf32> -> vector<8x1000xf32>
    %57 = arith.addf %52, %56 : vector<8x1000xf32>
    %58 = vector.extract_strided_slice %1 {offsets = [0, 102], sizes = [8, 1000], strides = [1, 1]} : vector<8x1222xbf16> to vector<8x1000xbf16>
    %c11 = arith.constant 11 : index
    %c0_36 = arith.constant 0 : index
    %c0_37 = arith.constant 0 : index
    %59 = vector.load %arg2[%c11, %c0_36, %c0_37] : memref<27x8x8xbf16, #tpu.memory_space<vmem>>, vector<1x8x8xbf16>
    %60 = vector.shape_cast %59 : vector<1x8x8xbf16> to vector<8x8xbf16>
    %cst_38 = arith.constant dense<0.000000e+00> : vector<8x1000xf32>
    %61 = tpu.matmul %60, %58, %cst_38 {dimension_numbers = #tpu.dot_dimension_numbers<[1], [0], [0], [1], [0, 0, 1, 1], [], []>} : vector<8x8xbf16>, vector<8x1000xbf16>, vector<8x1000xf32> -> vector<8x1000xf32>
    %62 = arith.addf %57, %61 : vector<8x1000xf32>
    %63 = vector.extract_strided_slice %1 {offsets = [0, 110], sizes = [8, 1000], strides = [1, 1]} : vector<8x1222xbf16> to vector<8x1000xbf16>
    %c12 = arith.constant 12 : index
    %c0_39 = arith.constant 0 : index
    %c0_40 = arith.constant 0 : index
    %64 = vector.load %arg2[%c12, %c0_39, %c0_40] : memref<27x8x8xbf16, #tpu.memory_space<vmem>>, vector<1x8x8xbf16>
    %65 = vector.shape_cast %64 : vector<1x8x8xbf16> to vector<8x8xbf16>
    %cst_41 = arith.constant dense<0.000000e+00> : vector<8x1000xf32>
    %66 = tpu.matmul %65, %63, %cst_41 {dimension_numbers = #tpu.dot_dimension_numbers<[1], [0], [0], [1], [0, 0, 1, 1], [], []>} : vector<8x8xbf16>, vector<8x1000xbf16>, vector<8x1000xf32> -> vector<8x1000xf32>
    %67 = arith.addf %62, %66 : vector<8x1000xf32>
    %68 = vector.extract_strided_slice %1 {offsets = [0, 111], sizes = [8, 1000], strides = [1, 1]} : vector<8x1222xbf16> to vector<8x1000xbf16>
    %c13 = arith.constant 13 : index
    %c0_42 = arith.constant 0 : index
    %c0_43 = arith.constant 0 : index
    %69 = vector.load %arg2[%c13, %c0_42, %c0_43] : memref<27x8x8xbf16, #tpu.memory_space<vmem>>, vector<1x8x8xbf16>
    %70 = vector.shape_cast %69 : vector<1x8x8xbf16> to vector<8x8xbf16>
    %cst_44 = arith.constant dense<0.000000e+00> : vector<8x1000xf32>
    %71 = tpu.matmul %70, %68, %cst_44 {dimension_numbers = #tpu.dot_dimension_numbers<[1], [0], [0], [1], [0, 0, 1, 1], [], []>} : vector<8x8xbf16>, vector<8x1000xbf16>, vector<8x1000xf32> -> vector<8x1000xf32>
    %72 = arith.addf %67, %71 : vector<8x1000xf32>
    %73 = vector.extract_strided_slice %1 {offsets = [0, 112], sizes = [8, 1000], strides = [1, 1]} : vector<8x1222xbf16> to vector<8x1000xbf16>
    %c14 = arith.constant 14 : index
    %c0_45 = arith.constant 0 : index
    %c0_46 = arith.constant 0 : index
    %74 = vector.load %arg2[%c14, %c0_45, %c0_46] : memref<27x8x8xbf16, #tpu.memory_space<vmem>>, vector<1x8x8xbf16>
    %75 = vector.shape_cast %74 : vector<1x8x8xbf16> to vector<8x8xbf16>
    %cst_47 = arith.constant dense<0.000000e+00> : vector<8x1000xf32>
    %76 = tpu.matmul %75, %73, %cst_47 {dimension_numbers = #tpu.dot_dimension_numbers<[1], [0], [0], [1], [0, 0, 1, 1], [], []>} : vector<8x8xbf16>, vector<8x1000xbf16>, vector<8x1000xf32> -> vector<8x1000xf32>
    %77 = arith.addf %72, %76 : vector<8x1000xf32>
    %78 = vector.extract_strided_slice %1 {offsets = [0, 120], sizes = [8, 1000], strides = [1, 1]} : vector<8x1222xbf16> to vector<8x1000xbf16>
    %c15 = arith.constant 15 : index
    %c0_48 = arith.constant 0 : index
    %c0_49 = arith.constant 0 : index
    %79 = vector.load %arg2[%c15, %c0_48, %c0_49] : memref<27x8x8xbf16, #tpu.memory_space<vmem>>, vector<1x8x8xbf16>
    %80 = vector.shape_cast %79 : vector<1x8x8xbf16> to vector<8x8xbf16>
    %cst_50 = arith.constant dense<0.000000e+00> : vector<8x1000xf32>
    %81 = tpu.matmul %80, %78, %cst_50 {dimension_numbers = #tpu.dot_dimension_numbers<[1], [0], [0], [1], [0, 0, 1, 1], [], []>} : vector<8x8xbf16>, vector<8x1000xbf16>, vector<8x1000xf32> -> vector<8x1000xf32>
    %82 = arith.addf %77, %81 : vector<8x1000xf32>
    %83 = vector.extract_strided_slice %1 {offsets = [0, 121], sizes = [8, 1000], strides = [1, 1]} : vector<8x1222xbf16> to vector<8x1000xbf16>
    %c16 = arith.constant 16 : index
    %c0_51 = arith.constant 0 : index
    %c0_52 = arith.constant 0 : index
    %84 = vector.load %arg2[%c16, %c0_51, %c0_52] : memref<27x8x8xbf16, #tpu.memory_space<vmem>>, vector<1x8x8xbf16>
    %85 = vector.shape_cast %84 : vector<1x8x8xbf16> to vector<8x8xbf16>
    %cst_53 = arith.constant dense<0.000000e+00> : vector<8x1000xf32>
    %86 = tpu.matmul %85, %83, %cst_53 {dimension_numbers = #tpu.dot_dimension_numbers<[1], [0], [0], [1], [0, 0, 1, 1], [], []>} : vector<8x8xbf16>, vector<8x1000xbf16>, vector<8x1000xf32> -> vector<8x1000xf32>
    %87 = arith.addf %82, %86 : vector<8x1000xf32>
    %88 = vector.extract_strided_slice %1 {offsets = [0, 122], sizes = [8, 1000], strides = [1, 1]} : vector<8x1222xbf16> to vector<8x1000xbf16>
    %c17 = arith.constant 17 : index
    %c0_54 = arith.constant 0 : index
    %c0_55 = arith.constant 0 : index
    %89 = vector.load %arg2[%c17, %c0_54, %c0_55] : memref<27x8x8xbf16, #tpu.memory_space<vmem>>, vector<1x8x8xbf16>
    %90 = vector.shape_cast %89 : vector<1x8x8xbf16> to vector<8x8xbf16>
    %cst_56 = arith.constant dense<0.000000e+00> : vector<8x1000xf32>
    %91 = tpu.matmul %90, %88, %cst_56 {dimension_numbers = #tpu.dot_dimension_numbers<[1], [0], [0], [1], [0, 0, 1, 1], [], []>} : vector<8x8xbf16>, vector<8x1000xbf16>, vector<8x1000xf32> -> vector<8x1000xf32>
    %92 = arith.addf %87, %91 : vector<8x1000xf32>
    %93 = vector.extract_strided_slice %1 {offsets = [0, 200], sizes = [8, 1000], strides = [1, 1]} : vector<8x1222xbf16> to vector<8x1000xbf16>
    %c18 = arith.constant 18 : index
    %c0_57 = arith.constant 0 : index
    %c0_58 = arith.constant 0 : index
    %94 = vector.load %arg2[%c18, %c0_57, %c0_58] : memref<27x8x8xbf16, #tpu.memory_space<vmem>>, vector<1x8x8xbf16>
    %95 = vector.shape_cast %94 : vector<1x8x8xbf16> to vector<8x8xbf16>
    %cst_59 = arith.constant dense<0.000000e+00> : vector<8x1000xf32>
    %96 = tpu.matmul %95, %93, %cst_59 {dimension_numbers = #tpu.dot_dimension_numbers<[1], [0], [0], [1], [0, 0, 1, 1], [], []>} : vector<8x8xbf16>, vector<8x1000xbf16>, vector<8x1000xf32> -> vector<8x1000xf32>
    %97 = arith.addf %92, %96 : vector<8x1000xf32>
    %98 = vector.extract_strided_slice %1 {offsets = [0, 201], sizes = [8, 1000], strides = [1, 1]} : vector<8x1222xbf16> to vector<8x1000xbf16>
    %c19 = arith.constant 19 : index
    %c0_60 = arith.constant 0 : index
    %c0_61 = arith.constant 0 : index
    %99 = vector.load %arg2[%c19, %c0_60, %c0_61] : memref<27x8x8xbf16, #tpu.memory_space<vmem>>, vector<1x8x8xbf16>
    %100 = vector.shape_cast %99 : vector<1x8x8xbf16> to vector<8x8xbf16>
    %cst_62 = arith.constant dense<0.000000e+00> : vector<8x1000xf32>
    %101 = tpu.matmul %100, %98, %cst_62 {dimension_numbers = #tpu.dot_dimension_numbers<[1], [0], [0], [1], [0, 0, 1, 1], [], []>} : vector<8x8xbf16>, vector<8x1000xbf16>, vector<8x1000xf32> -> vector<8x1000xf32>
    %102 = arith.addf %97, %101 : vector<8x1000xf32>
    %103 = vector.extract_strided_slice %1 {offsets = [0, 202], sizes = [8, 1000], strides = [1, 1]} : vector<8x1222xbf16> to vector<8x1000xbf16>
    %c20 = arith.constant 20 : index
    %c0_63 = arith.constant 0 : index
    %c0_64 = arith.constant 0 : index
    %104 = vector.load %arg2[%c20, %c0_63, %c0_64] : memref<27x8x8xbf16, #tpu.memory_space<vmem>>, vector<1x8x8xbf16>
    %105 = vector.shape_cast %104 : vector<1x8x8xbf16> to vector<8x8xbf16>
    %cst_65 = arith.constant dense<0.000000e+00> : vector<8x1000xf32>
    %106 = tpu.matmul %105, %103, %cst_65 {dimension_numbers = #tpu.dot_dimension_numbers<[1], [0], [0], [1], [0, 0, 1, 1], [], []>} : vector<8x8xbf16>, vector<8x1000xbf16>, vector<8x1000xf32> -> vector<8x1000xf32>
    %107 = arith.addf %102, %106 : vector<8x1000xf32>
    %108 = vector.extract_strided_slice %1 {offsets = [0, 210], sizes = [8, 1000], strides = [1, 1]} : vector<8x1222xbf16> to vector<8x1000xbf16>
    %c21 = arith.constant 21 : index
    %c0_66 = arith.constant 0 : index
    %c0_67 = arith.constant 0 : index
    %109 = vector.load %arg2[%c21, %c0_66, %c0_67] : memref<27x8x8xbf16, #tpu.memory_space<vmem>>, vector<1x8x8xbf16>
    %110 = vector.shape_cast %109 : vector<1x8x8xbf16> to vector<8x8xbf16>
    %cst_68 = arith.constant dense<0.000000e+00> : vector<8x1000xf32>
    %111 = tpu.matmul %110, %108, %cst_68 {dimension_numbers = #tpu.dot_dimension_numbers<[1], [0], [0], [1], [0, 0, 1, 1], [], []>} : vector<8x8xbf16>, vector<8x1000xbf16>, vector<8x1000xf32> -> vector<8x1000xf32>
    %112 = arith.addf %107, %111 : vector<8x1000xf32>
    %113 = vector.extract_strided_slice %1 {offsets = [0, 211], sizes = [8, 1000], strides = [1, 1]} : vector<8x1222xbf16> to vector<8x1000xbf16>
    %c22 = arith.constant 22 : index
    %c0_69 = arith.constant 0 : index
    %c0_70 = arith.constant 0 : index
    %114 = vector.load %arg2[%c22, %c0_69, %c0_70] : memref<27x8x8xbf16, #tpu.memory_space<vmem>>, vector<1x8x8xbf16>
    %115 = vector.shape_cast %114 : vector<1x8x8xbf16> to vector<8x8xbf16>
    %cst_71 = arith.constant dense<0.000000e+00> : vector<8x1000xf32>
    %116 = tpu.matmul %115, %113, %cst_71 {dimension_numbers = #tpu.dot_dimension_numbers<[1], [0], [0], [1], [0, 0, 1, 1], [], []>} : vector<8x8xbf16>, vector<8x1000xbf16>, vector<8x1000xf32> -> vector<8x1000xf32>
    %117 = arith.addf %112, %116 : vector<8x1000xf32>
    %118 = vector.extract_strided_slice %1 {offsets = [0, 212], sizes = [8, 1000], strides = [1, 1]} : vector<8x1222xbf16> to vector<8x1000xbf16>
    %c23 = arith.constant 23 : index
    %c0_72 = arith.constant 0 : index
    %c0_73 = arith.constant 0 : index
    %119 = vector.load %arg2[%c23, %c0_72, %c0_73] : memref<27x8x8xbf16, #tpu.memory_space<vmem>>, vector<1x8x8xbf16>
    %120 = vector.shape_cast %119 : vector<1x8x8xbf16> to vector<8x8xbf16>
    %cst_74 = arith.constant dense<0.000000e+00> : vector<8x1000xf32>
    %121 = tpu.matmul %120, %118, %cst_74 {dimension_numbers = #tpu.dot_dimension_numbers<[1], [0], [0], [1], [0, 0, 1, 1], [], []>} : vector<8x8xbf16>, vector<8x1000xbf16>, vector<8x1000xf32> -> vector<8x1000xf32>
    %122 = arith.addf %117, %121 : vector<8x1000xf32>
    %123 = vector.extract_strided_slice %1 {offsets = [0, 220], sizes = [8, 1000], strides = [1, 1]} : vector<8x1222xbf16> to vector<8x1000xbf16>
    %c24 = arith.constant 24 : index
    %c0_75 = arith.constant 0 : index
    %c0_76 = arith.constant 0 : index
    %124 = vector.load %arg2[%c24, %c0_75, %c0_76] : memref<27x8x8xbf16, #tpu.memory_space<vmem>>, vector<1x8x8xbf16>
    %125 = vector.shape_cast %124 : vector<1x8x8xbf16> to vector<8x8xbf16>
    %cst_77 = arith.constant dense<0.000000e+00> : vector<8x1000xf32>
    %126 = tpu.matmul %125, %123, %cst_77 {dimension_numbers = #tpu.dot_dimension_numbers<[1], [0], [0], [1], [0, 0, 1, 1], [], []>} : vector<8x8xbf16>, vector<8x1000xbf16>, vector<8x1000xf32> -> vector<8x1000xf32>
    %127 = arith.addf %122, %126 : vector<8x1000xf32>
    %128 = vector.extract_strided_slice %1 {offsets = [0, 221], sizes = [8, 1000], strides = [1, 1]} : vector<8x1222xbf16> to vector<8x1000xbf16>
    %c25 = arith.constant 25 : index
    %c0_78 = arith.constant 0 : index
    %c0_79 = arith.constant 0 : index
    %129 = vector.load %arg2[%c25, %c0_78, %c0_79] : memref<27x8x8xbf16, #tpu.memory_space<vmem>>, vector<1x8x8xbf16>
    %130 = vector.shape_cast %129 : vector<1x8x8xbf16> to vector<8x8xbf16>
    %cst_80 = arith.constant dense<0.000000e+00> : vector<8x1000xf32>
    %131 = tpu.matmul %130, %128, %cst_80 {dimension_numbers = #tpu.dot_dimension_numbers<[1], [0], [0], [1], [0, 0, 1, 1], [], []>} : vector<8x8xbf16>, vector<8x1000xbf16>, vector<8x1000xf32> -> vector<8x1000xf32>
    %132 = arith.addf %127, %131 : vector<8x1000xf32>
    %133 = vector.extract_strided_slice %1 {offsets = [0, 222], sizes = [8, 1000], strides = [1, 1]} : vector<8x1222xbf16> to vector<8x1000xbf16>
    %c26 = arith.constant 26 : index
    %c0_81 = arith.constant 0 : index
    %c0_82 = arith.constant 0 : index
    %134 = vector.load %arg2[%c26, %c0_81, %c0_82] : memref<27x8x8xbf16, #tpu.memory_space<vmem>>, vector<1x8x8xbf16>
    %135 = vector.shape_cast %134 : vector<1x8x8xbf16> to vector<8x8xbf16>
    %cst_83 = arith.constant dense<0.000000e+00> : vector<8x1000xf32>
    %136 = tpu.matmul %135, %133, %cst_83 {dimension_numbers = #tpu.dot_dimension_numbers<[1], [0], [0], [1], [0, 0, 1, 1], [], []>} : vector<8x8xbf16>, vector<8x1000xbf16>, vector<8x1000xf32> -> vector<8x1000xf32>
    %137 = arith.addf %132, %136 : vector<8x1000xf32>
    %c0_84 = arith.constant 0 : index
    %c0_85 = arith.constant 0 : index
    %138 = vector.load %arg3[%c0_84, %c0_85] : memref<8x1xf32, #tpu.memory_space<vmem>>, vector<8x1xf32>
    %139 = vector.broadcast %138 : vector<8x1xf32> to vector<8x1000xf32>
    %140 = arith.mulf %137, %139 : vector<8x1000xf32>
    %c0_86 = arith.constant 0 : index
    %c0_87 = arith.constant 0 : index
    %141 = vector.load %arg4[%c0_86, %c0_87] : memref<8x1xf32, #tpu.memory_space<vmem>>, vector<8x1xf32>
    %142 = vector.broadcast %141 : vector<8x1xf32> to vector<8x1000xf32>
    %143 = arith.addf %140, %142 : vector<8x1000xf32>
    %cst_88 = arith.constant 0.000000e+00 : f32
    %144 = vector.broadcast %cst_88 : f32 to vector<8x1000xf32>
    %145 = arith.maximumf %143, %144 : vector<8x1000xf32>
    %c0_89 = arith.constant 0 : index
    %c0_90 = arith.constant 0 : index
    %146 = vector.load %arg5[%c0_89, %c0_90] : memref<3x8xbf16, #tpu.memory_space<vmem>>, vector<3x8xbf16>
    %147 = arith.truncf %145 : vector<8x1000xf32> to vector<8x1000xbf16>
    %cst_91 = arith.constant dense<0.000000e+00> : vector<3x1000xf32>
    %148 = tpu.matmul %146, %147, %cst_91 {dimension_numbers = #tpu.dot_dimension_numbers<[1], [0], [0], [1], [0, 0, 1, 1], [], []>} : vector<3x8xbf16>, vector<8x1000xbf16>, vector<3x1000xf32> -> vector<3x1000xf32>
    %c0_92 = arith.constant 0 : index
    %c0_93 = arith.constant 0 : index
    %c0_94 = arith.constant 0 : index
    %149 = vector.load %arg6[%c0_92, %c0_93, %c0_94] : memref<1x3x1000xf32, #tpu.memory_space<vmem>>, vector<1x3x1000xf32>
    %150 = vector.shape_cast %149 : vector<1x3x1000xf32> to vector<3x1000xf32>
    %151 = vector.shape_cast %148 : vector<3x1000xf32> to vector<1x3x1000xf32>
    tpu.vector_store %arg6[%c0_92, %c0_93, %c0_94], %151 {strides = array<i32>} : memref<1x3x1000xf32, #tpu.memory_space<vmem>>, vector<1x3x1000xf32>,
    return
  }
  func.func @transform_0(%arg0: i32) -> (i32, i32, i32) {
    %c0_i32 = arith.constant 0 : i32
    %c0_i32_0 = arith.constant 0 : i32
    %c0_i32_1 = arith.constant 0 : i32
    return %arg0, %c0_i32, %c0_i32_0 : i32, i32, i32
  }
  func.func @transform_1(%arg0: i32) -> (i32, i32, i32) {
    %c0_i32 = arith.constant 0 : i32
    %c0_i32_0 = arith.constant 0 : i32
    %c0_i32_1 = arith.constant 0 : i32
    %c0_i32_2 = arith.constant 0 : i32
    return %c0_i32, %c0_i32_0, %c0_i32_1 : i32, i32, i32
  }
  func.func @transform_2(%arg0: i32) -> (i32, i32) {
    %c0_i32 = arith.constant 0 : i32
    %c0_i32_0 = arith.constant 0 : i32
    %c0_i32_1 = arith.constant 0 : i32
    return %c0_i32, %c0_i32_0 : i32, i32
  }
  func.func @transform_3(%arg0: i32) -> (i32, i32) {
    %c0_i32 = arith.constant 0 : i32
    %c0_i32_0 = arith.constant 0 : i32
    %c0_i32_1 = arith.constant 0 : i32
    return %c0_i32, %c0_i32_0 : i32, i32
  }
  func.func @transform_4(%arg0: i32) -> (i32, i32) {
    %c0_i32 = arith.constant 0 : i32
    %c0_i32_0 = arith.constant 0 : i32
    %c0_i32_1 = arith.constant 0 : i32
    return %c0_i32, %c0_i32_0 : i32, i32
  }
  func.func @transform_5(%arg0: i32) -> (i32, i32, i32) {
    %c0_i32 = arith.constant 0 : i32
    %c0_i32_0 = arith.constant 0 : i32
    %c0_i32_1 = arith.constant 0 : i32
    return %arg0, %c0_i32, %c0_i32_0 : i32, i32, i32
  }
}

</mosaic_0001>

<llo_original>
// kernel: sba_forward.7
$region0: #{sba_forward.7}
  #allocation0 [shape = 'u32[]', space=smem, size = 0x4, offset = 0x4, fixed_abs, tag = 'smem constant byte address 0x4 - core index']
  #allocation1 [shape = 'u32[72,128]{1,0:T(1,128)}', space=vmem, size = 0x9000, scoped, tag = 'internal scratch']
  %s0 = inlined_call_operand.vmem [shape: bf16[2,8,64], index: 0, kind: input, shape index: {}]
  %s1 = inlined_call_operand.vmem [shape: bf16[8,8], index: 1, kind: input, shape index: {}]
  %s2 = inlined_call_operand.vmem [shape: f32[4,1], index: 2, kind: input, shape index: {}]
  %s3 = inlined_call_operand.vmem [shape: f32[4,1], index: 3, kind: input, shape index: {}]
  %s4 = inlined_call_operand.vmem [shape: bf16[2,4,64], index: 4, kind: output, shape index: {0}]
  %s5 = inlined_call_operand.vmem [shape: bf16[2,4,64], index: 5, kind: output, shape index: {1}]
  %s6 = inlined_call_operand.vmem [shape: bf16[2,4,64], index: 6, kind: output, shape index: {2}]
  %7 = xla_tuple %s4, %s5, %s6
  %s8 = sld [smem:[#allocation0]]
  $region65: #{sba_forward.7} parent=0
    _
  %s10 = ssub.s32 1, %s8
  %s11 = scalar_select 0, %s10, %s8
  loop: start=0, step=1, limit=4
  $region2: #{sba_forward.7} parent=0 // loop_pre_header
    _
  $region3: #{sba_forward.7} parent=0 // loop_header
    %s13 = sphi 0, %s17
    %p14 = scmp.ge.s32.totalorder %s13, 4
    %s20 = sphi 0, %s32
    %s21 = sphi 0, %s28
    %s22 = sphi 0, %s20
    %s23 = sphi 0, %s21
    %s24 = sphi 0, %s22
    %s25 = sphi 0, %s23
    %s37 = sphi 0, %s39
    %s40 = sphi 0, %s37
    %s41 = sphi 0, %s40
    %s57 = sphi 0, %s41
    %s61 = sphi 0, %s61
    %s63 = sphi 0, %s61
    %s64 = sphi 0, %s63
    %s78 = sphi 0, %s64
    %s82 = sphi 0, %s82
    %s84 = sphi 0, %s82
    %s85 = sphi 0, %s84
    %s99 = sphi 0, %s85
    %s103 = sphi 0, %s103
    %s105 = sphi 0, %s103
    %s106 = sphi 0, %s105
    %s120 = sphi 0, %s106
    %s128 = sphi 0, %s130
    %s131 = sphi 0, %s128
    %s132 = sphi 0, %s131
    %s148 = sphi 0, %s132
    %s156 = sphi 0, %s158
    %s159 = sphi 0, %s156
    %s160 = sphi 0, %s159
    %s176 = sphi 0, %s160
    %s184 = sphi 0, %s186
    %s187 = sphi 0, %s184
    %s188 = sphi 0, %s187
    %s204 = sphi 0, %s188
  $region4: #{sba_forward.7} parent=0 // loop_header_branch
    %16 = sbr.rel (%p14) target = $region8
  $region5: #{sba_forward.7} parent=0 // loop_body
    %s18 = ssub.s32 %s13, 1
    %s19 = ssub.s32 %s13, 2
    %s26 = sadd.s32 1, %s21
    %p27 = scmp.ge.s32.totalorder %s26, 1
    %s28 = scalar_select %p27, 0, %s26
    %s29 = sadd.s32 1, %s20
    %s30 = scalar_select %p27, %s29, %s20
    %p31 = scmp.ge.s32.totalorder %s30, 2
    %s32 = scalar_select %p31, 0, %s30
    %s33 = ssub.s32 %s20, %s32
    %s34 = ssub.s32 %s21, %s28
    %s35 = sor.u32 %s33, %s34
    %p36 = scmp.eq.s32.totalorder %s35, 0
    %s38 = sadd.s32 %s37, 1
    %s39 = scalar_select %p36, %s37, %s38
    %p42 = pneg %p36
    %p43 = scmp.eq.s32.totalorder %s13, 1
    %p44 = por %p42, %p43
    %p45 = scmp.ne.s32.totalorder %s37, %s40
    %p46 = scmp.eq.s32.totalorder %s13, 0
    %p47 = por %p45, %p46
    %p48 = scmp.ne.s32.totalorder %s37, %s40
    %p49 = scmp.eq.s32.totalorder %s18, 1
    %p50 = por %p48, %p49
    %p51 = scmp.ne.s32.totalorder %s40, %s41
    %p52 = scmp.eq.s32.totalorder %s18, 0
    %p53 = por %p51, %p52
    %p54 = scmp.ne.s32.totalorder %s40, %s41
    %p55 = scmp.eq.s32.totalorder %s19, 1
    %p56 = por %p54, %p55
    %p58 = scmp.ne.s32.totalorder %s41, %s57
    %p59 = scmp.eq.s32.totalorder %s19, 0
    %p60 = por %p58, %p59
    %s62 = sadd.s32 %s61, 1
    %p65 = scmp.eq.s32.totalorder %s13, 1
    %p66 = scmp.ne.s32.totalorder %s61, %s63
    %p67 = scmp.eq.s32.totalorder %s13, 0
    %p68 = por %p66, %p67
    %p69 = scmp.ne.s32.totalorder %s61, %s63
    %p70 = scmp.eq.s32.totalorder %s18, 1
    %p71 = por %p69, %p70
    %p72 = scmp.ne.s32.totalorder %s63, %s64
    %p73 = scmp.eq.s32.totalorder %s18, 0
    %p74 = por %p72, %p73
    %p75 = scmp.ne.s32.totalorder %s63, %s64
    %p76 = scmp.eq.s32.totalorder %s19, 1
    %p77 = por %p75, %p76
    %p79 = scmp.ne.s32.totalorder %s64, %s78
    %p80 = scmp.eq.s32.totalorder %s19, 0
    %p81 = por %p79, %p80
    %s83 = sadd.s32 %s82, 1
    %p86 = scmp.eq.s32.totalorder %s13, 1
    %p87 = scmp.ne.s32.totalorder %s82, %s84
    %p88 = scmp.eq.s32.totalorder %s13, 0
    %p89 = por %p87, %p88
    %p90 = scmp.ne.s32.totalorder %s82, %s84
    %p91 = scmp.eq.s32.totalorder %s18, 1
    %p92 = por %p90, %p91
    %p93 = scmp.ne.s32.totalorder %s84, %s85
    %p94 = scmp.eq.s32.totalorder %s18, 0
    %p95 = por %p93, %p94
    %p96 = scmp.ne.s32.totalorder %s84, %s85
    %p97 = scmp.eq.s32.totalorder %s19, 1
    %p98 = por %p96, %p97
    %p100 = scmp.ne.s32.totalorder %s85, %s99
    %p101 = scmp.eq.s32.totalorder %s19, 0
    %p102 = por %p100, %p101
    %s104 = sadd.s32 %s103, 1
    %p107 = scmp.eq.s32.totalorder %s13, 1
    %p108 = scmp.ne.s32.totalorder %s103, %s105
    %p109 = scmp.eq.s32.totalorder %s13, 0
    %p110 = por %p108, %p109
    %p111 = scmp.ne.s32.totalorder %s103, %s105
    %p112 = scmp.eq.s32.totalorder %s18, 1
    %p113 = por %p111, %p112
    %p114 = scmp.ne.s32.totalorder %s105, %s106
    %p115 = scmp.eq.s32.totalorder %s18, 0
    %p116 = por %p114, %p115
    %p117 = scmp.ne.s32.totalorder %s105, %s106
    %p118 = scmp.eq.s32.totalorder %s19, 1
    %p119 = por %p117, %p118
    %p121 = scmp.ne.s32.totalorder %s106, %s120
    %p122 = scmp.eq.s32.totalorder %s19, 0
    %p123 = por %p121, %p122
    %s124 = ssub.s32 %s20, %s32
    %s125 = ssub.s32 %s21, %s28
    %s126 = sor.u32 %s124, %s125
    %p127 = scmp.eq.s32.totalorder %s126, 0
    %s129 = sadd.s32 %s128, 1
    %s130 = scalar_select %p127, %s128, %s129
    %p133 = pneg %p127
    %p134 = scmp.eq.s32.totalorder %s13, 1
    %p135 = por %p133, %p134
    %p136 = scmp.ne.s32.totalorder %s128, %s131
    %p137 = scmp.eq.s32.totalorder %s13, 0
    %p138 = por %p136, %p137
    %p139 = scmp.ne.s32.totalorder %s128, %s131
    %p140 = scmp.eq.s32.totalorder %s18, 1
    %p141 = por %p139, %p140
    %p142 = scmp.ne.s32.totalorder %s131, %s132
    %p143 = scmp.eq.s32.totalorder %s18, 0
    %p144 = por %p142, %p143
    %p145 = scmp.ne.s32.totalorder %s131, %s132
    %p146 = scmp.eq.s32.totalorder %s19, 1
    %p147 = por %p145, %p146
    %p149 = scmp.ne.s32.totalorder %s132, %s148
    %p150 = scmp.eq.s32.totalorder %s19, 0
    %p151 = por %p149, %p150
    %s152 = ssub.s32 %s20, %s32
    %s153 = ssub.s32 %s21, %s28
    %s154 = sor.u32 %s152, %s153
    %p155 = scmp.eq.s32.totalorder %s154, 0
    %s157 = sadd.s32 %s156, 1
    %s158 = scalar_select %p155, %s156, %s157
    %p161 = pneg %p155
    %p162 = scmp.eq.s32.totalorder %s13, 1
    %p163 = por %p161, %p162
    %p164 = scmp.ne.s32.totalorder %s156, %s159
    %p165 = scmp.eq.s32.totalorder %s13, 0
    %p166 = por %p164, %p165
    %p167 = scmp.ne.s32.totalorder %s156, %s159
    %p168 = scmp.eq.s32.totalorder %s18, 1
    %p169 = por %p167, %p168
    %p170 = scmp.ne.s32.totalorder %s159, %s160
    %p171 = scmp.eq.s32.totalorder %s18, 0
    %p172 = por %p170, %p171
    %p173 = scmp.ne.s32.totalorder %s159, %s160
    %p174 = scmp.eq.s32.totalorder %s19, 1
    %p175 = por %p173, %p174
    %p177 = scmp.ne.s32.totalorder %s160, %s176
    %p178 = scmp.eq.s32.totalorder %s19, 0
    %p179 = por %p177, %p178
    %s180 = ssub.s32 %s20, %s32
    %s181 = ssub.s32 %s21, %s28
    %s182 = sor.u32 %s180, %s181
    %p183 = scmp.eq.s32.totalorder %s182, 0
    %s185 = sadd.s32 %s184, 1
    %s186 = scalar_select %p183, %s184, %s185
    %p189 = pneg %p183
    %p190 = scmp.eq.s32.totalorder %s13, 1
    %p191 = por %p189, %p190
    %p192 = scmp.ne.s32.totalorder %s184, %s187
    %p193 = scmp.eq.s32.totalorder %s13, 0
    %p194 = por %p192, %p193
    %p195 = scmp.ne.s32.totalorder %s184, %s187
    %p196 = scmp.eq.s32.totalorder %s18, 1
    %p197 = por %p195, %p196
    %p198 = scmp.ne.s32.totalorder %s187, %s188
    %p199 = scmp.eq.s32.totalorder %s18, 0
    %p200 = por %p198, %p199
    %p201 = scmp.ne.s32.totalorder %s187, %s188
    %p202 = scmp.eq.s32.totalorder %s19, 1
    %p203 = por %p201, %p202
    %p205 = scmp.ne.s32.totalorder %s188, %s204
    %p206 = scmp.eq.s32.totalorder %s19, 0
    %p207 = por %p205, %p206
    %p208 = scmp.le.s32.totalorder 1, %s13
    %p209 = scmp.lt.s32.totalorder %s13, 3
    %p210 = pnand %p208, %p209
    %p211 = pneg %p210
    // Predicated region
    $region9: #{sba_forward.7} parent=5 // pred_check
      _
    $region10: #{sba_forward.7} parent=5 // pred_check_branch
      %213 = sbr.rel (%p210) target = $region12
    $region11: #{sba_forward.7} parent=5 // pred_region
      %s214 = ssub.s32 %s13, 1
      // Predicated region
      $region13: #{sba_forward.7} parent=11 // pred_check
        %p215 = pneg %p74
      $region14: #{sba_forward.7} parent=11 // pred_check_branch
        %217 = sbr.rel (%p215) target = $region16
      $region15: #{sba_forward.7} parent=11 // pred_region
        _
      $region16: #{sba_forward.7} parent=11 // pred_fallthru
        _
      // Predicated region
      $region17: #{sba_forward.7} parent=11 // pred_check
        %p218 = pneg %p95
      $region18: #{sba_forward.7} parent=11 // pred_check_branch
        %220 = sbr.rel (%p218) target = $region20
      $region19: #{sba_forward.7} parent=11 // pred_region
        _
      $region20: #{sba_forward.7} parent=11 // pred_fallthru
        _
      // Predicated region
      $region21: #{sba_forward.7} parent=11 // pred_check
        %p221 = pneg %p116
      $region22: #{sba_forward.7} parent=11 // pred_check_branch
        %223 = sbr.rel (%p221) target = $region24
      $region23: #{sba_forward.7} parent=11 // pred_region
        _
      $region24: #{sba_forward.7} parent=11 // pred_fallthru
        _
    $region12: #{sba_forward.7} parent=5 // pred_fallthru
      _
    %p224 = scmp.lt.s32.totalorder %s13, 2
    // Predicated region
    $region25: #{sba_forward.7} parent=5 // pred_check
      %p225 = pneg %p224
    $region26: #{sba_forward.7} parent=5 // pred_check_branch
      %227 = sbr.rel (%p225) target = $region28
    $region27: #{sba_forward.7} parent=5 // pred_region
      // Predicated region
      $region29: #{sba_forward.7} parent=27 // pred_check
        %p228 = pneg %p47
      $region30: #{sba_forward.7} parent=27 // pred_check_branch
        %230 = sbr.rel (%p228) target = $region32
      $region31: #{sba_forward.7} parent=27 // pred_region
        %p231 = scmp.lt.s32.totalorder %s20, 1
        %s232 = scalar_select %p231, %s20, 1
        %p233 = scmp.lt.s32.totalorder %s21, 0
        %s234 = scalar_select %p233, %s21, 0
        %s235 = sadd.s32 %s234, %s232
        %s236 = smul.addr %s235, 4
        %s237 = scalar_lea.vmem %s0, %s236
      $region32: #{sba_forward.7} parent=27 // pred_fallthru
        _
    $region28: #{sba_forward.7} parent=5 // pred_fallthru
      _
    %p238 = scmp.le.s32.totalorder 1, %s13
    %p239 = scmp.lt.s32.totalorder %s13, 3
    %p240 = pnand %p238, %p239
    %p241 = pneg %p240
    // Predicated region
    $region33: #{sba_forward.7} parent=5 // pred_check
      _
    $region34: #{sba_forward.7} parent=5 // pred_check_branch
      %243 = sbr.rel (%p240) target = $region36
    $region35: #{sba_forward.7} parent=5 // pred_region
      %s244 = ssub.s32 %s13, 1
      %p245 = scmp.lt.s32.totalorder %s22, 1
      %s246 = scalar_select %p245, %s22, 1
      %p247 = scmp.lt.s32.totalorder %s23, 0
      %s248 = scalar_select %p247, %s23, 0
      %s249 = sadd.s32 %s248, %s246
      %s250 = smul.addr %s249, 4
      %s251 = scalar_lea.vmem %s0, %s250
      %p252 = pneg %p53
      %p253 = pneg %p50
      %p254 = pneg %p74
      %p255 = pneg %p71
      %p256 = pneg %p95
      %p257 = pneg %p92
      %p258 = pneg %p116
      %p259 = pneg %p113
      %p260 = pneg %p144
      %p261 = pneg %p141
      %p262 = scmp.lt.s32.totalorder %s22, 1
      %s263 = scalar_select %p262, %s22, 1
      %p264 = scmp.lt.s32.totalorder %s23, 0
      %s265 = scalar_select %p264, %s23, 0
      %s266 = sadd.s32 %s265, %s263
      %s267 = smul.addr %s266, 2
      %s268 = scalar_lea.vmem %s4, %s267
      %p269 = pneg %p172
      %p270 = pneg %p169
      %p271 = scmp.lt.s32.totalorder %s22, 1
      %s272 = scalar_select %p271, %s22, 1
      %p273 = scmp.lt.s32.totalorder %s23, 0
      %s274 = scalar_select %p273, %s23, 0
      %s275 = sadd.s32 %s274, %s272
      %s276 = smul.addr %s275, 2
      %s277 = scalar_lea.vmem %s5, %s276
      %p278 = pneg %p200
      %p279 = pneg %p197
      %p280 = scmp.lt.s32.totalorder %s22, 1
      %s281 = scalar_select %p280, %s22, 1
      %p282 = scmp.lt.s32.totalorder %s23, 0
      %s283 = scalar_select %p282, %s23, 0
      %s284 = sadd.s32 %s283, %s281
      %s285 = smul.addr %s284, 2
      %s286 = scalar_lea.vmem %s6, %s285
      %p287 = scmp.lt.s32.totalorder %s22, 1
      %s288 = scalar_select %p287, %s22, 1
      %p289 = scmp.lt.s32.totalorder %s23, 0
      %s290 = scalar_select %p289, %s23, 0
      %s291 = sadd.s32 %s290, %s288
      %s292 = smul.addr %s291, 4
      %s293 = scalar_lea.vmem %s0, %s292
      %p294 = scmp.lt.s32.totalorder %s22, 1
      %s295 = scalar_select %p294, %s22, 1
      %p296 = scmp.lt.s32.totalorder %s23, 0
      %s297 = scalar_select %p296, %s23, 0
      %s298 = sadd.s32 %s297, %s295
      %s299 = smul.addr %s298, 2
      %s300 = scalar_lea.vmem %s4, %s299
      %p301 = scmp.lt.s32.totalorder %s22, 1
      %s302 = scalar_select %p301, %s22, 1
      %p303 = scmp.lt.s32.totalorder %s23, 0
      %s304 = scalar_select %p303, %s23, 0
      %s305 = sadd.s32 %s304, %s302
      %s306 = smul.addr %s305, 2
      %s307 = scalar_lea.vmem %s5, %s306
      %p308 = scmp.lt.s32.totalorder %s22, 1
      %s309 = scalar_select %p308, %s22, 1
      %p310 = scmp.lt.s32.totalorder %s23, 0
      %s311 = scalar_select %p310, %s23, 0
      %s312 = sadd.s32 %s311, %s309
      %s313 = smul.addr %s312, 2
      %s314 = scalar_lea.vmem %s6, %s313
      %v316 = vld [vmem:[%s1] sm:$0xf]
      %v317 = vld [vmem:[%s293] sm:$0xf]
      %vm318 = vcmask 64512
      %v320 = vsel %vm318, %v316, 0
      %vm322 = vcmask 1043456
      %v324 = vsel %vm322, %v317, 0
      %326 = vmatpush.bf16.msra.mxu0 0
      %327 = vmatpush.bf16.msra.mxu0 0
      %328 = vmatpush.bf16.msra.mxu0 0
      %329 = vmatpush.bf16.msra.mxu0 0
      %330 = vmatpush.bf16.msra.mxu0 0
      %331 = vmatpush.bf16.msra.mxu0 0
      %332 = vmatpush.bf16.msra.mxu0 0
      %333 = vmatpush.bf16.msra.mxu0 %v324
      %334 = vmatmul.bf16.gmra.mxu0 %v320
      %v335 = vpop.f32.mrf.mxu0
      %v336 = vadd.f32 0.0, %v335
      %v337 = vpop.f32.mrf.mxu0
      %338 = vdwg.mxu0
      %v339 = vsub.f32 0.0, %v336
      %v340 = vmul.f32 %v339, 1.442695
      %v341 = vpow.pop %v340
      %v342 = vadd.f32 %v341, 1.0
      %v343 = vrcp.pop %v342
      %v344 = vld [vmem:[%s2] sm:$0xf]
      %346 = vset.pattern.permute.xlu0 0
      %347 = vperm.xlu0 %346, %v344
      %v348 = vpop.permute.xlu0 %347
      %v349 = vrot.slane %v348, 4
      %v351 = vmul.f32 %v336, %v349
      %v352 = vld [vmem:[%s3] sm:$0xf]
      %354 = vset.pattern.permute.xlu0 0
      %355 = vperm.xlu0 %354, %v352
      %v356 = vpop.permute.xlu0 %355
      %v357 = vrot.slane %v356, 4
      %v359 = vadd.f32 %v351, %v357
      %v360 = vmax.f32 %v359, 0.0
      %v361 = vpack.c.bf16 %v360, %v360
      %363 = vst.sshfl [vmem:[#allocation1] sm:$0xff pattern:$0x75643120] %v361
      %s364 = scalar_lea.vmem [#allocation1], 1
      %v365 = vld [vmem:[%s364] ss:$2 sm:$0xff]
      %vm367 = vcmask 517120
      %368 = vst.msk [vmem:[%s300] sm:$0x3] %vm367, %v365
      %v369 = vpack.c.bf16 %v343, %v343
      %370 = vst.msk [vmem:[%s307] sm:$0x3] %vm367, %v369
      %v372 = vrot.slane %v360, 4
      %v374 = vmul.f32 %v343, %v372
      %v375 = vpack.c.bf16 %v374, %v374
      %376 = vst.msk [vmem:[%s314] sm:$0x3] %vm367, %v375
      %p377 = scmp.lt.s32.totalorder %s22, 1
      %s378 = scalar_select %p377, %s22, 1
      %p379 = scmp.lt.s32.totalorder %s23, 0
      %s380 = scalar_select %p379, %s23, 0
      %s381 = sadd.s32 %s380, %s378
      %s382 = smul.addr %s381, 2
      %s383 = scalar_lea.vmem %s4, %s382
      %p384 = scmp.lt.s32.totalorder %s22, 1
      %s385 = scalar_select %p384, %s22, 1
      %p386 = scmp.lt.s32.totalorder %s23, 0
      %s387 = scalar_select %p386, %s23, 0
      %s388 = sadd.s32 %s387, %s385
      %s389 = smul.addr %s388, 2
      %s390 = scalar_lea.vmem %s5, %s389
      %p391 = scmp.lt.s32.totalorder %s22, 1
      %s392 = scalar_select %p391, %s22, 1
      %p393 = scmp.lt.s32.totalorder %s23, 0
      %s394 = scalar_select %p393, %s23, 0
      %s395 = sadd.s32 %s394, %s392
      %s396 = smul.addr %s395, 2
      %s397 = scalar_lea.vmem %s6, %s396
      // Predicated region
      $region37: #{sba_forward.7} parent=35 // pred_check
        %p398 = pneg %p141
      $region38: #{sba_forward.7} parent=35 // pred_check_branch
        %400 = sbr.rel (%p398) target = $region40
      $region39: #{sba_forward.7} parent=35 // pred_region
        _
      $region40: #{sba_forward.7} parent=35 // pred_fallthru
        _
      // Predicated region
      $region41: #{sba_forward.7} parent=35 // pred_check
        %p401 = pneg %p169
      $region42: #{sba_forward.7} parent=35 // pred_check_branch
        %403 = sbr.rel (%p401) target = $region44
      $region43: #{sba_forward.7} parent=35 // pred_region
        _
      $region44: #{sba_forward.7} parent=35 // pred_fallthru
        _
      // Predicated region
      $region45: #{sba_forward.7} parent=35 // pred_check
        %p404 = pneg %p197
      $region46: #{sba_forward.7} parent=35 // pred_check_branch
        %406 = sbr.rel (%p404) target = $region48
      $region47: #{sba_forward.7} parent=35 // pred_region
        _
      $region48: #{sba_forward.7} parent=35 // pred_fallthru
        _
    $region36: #{sba_forward.7} parent=5 // pred_fallthru
      _
    %p407 = scmp.le.s32.totalorder 2, %s13
    // Predicated region
    $region49: #{sba_forward.7} parent=5 // pred_check
      %p408 = pneg %p407
    $region50: #{sba_forward.7} parent=5 // pred_check_branch
      %410 = sbr.rel (%p408) target = $region52
    $region51: #{sba_forward.7} parent=5 // pred_region
      %s411 = ssub.s32 %s13, 2
      // Predicated region
      $region53: #{sba_forward.7} parent=51 // pred_check
        %p412 = pneg %p147
      $region54: #{sba_forward.7} parent=51 // pred_check_branch
        %414 = sbr.rel (%p412) target = $region56
      $region55: #{sba_forward.7} parent=51 // pred_region
        %p415 = scmp.lt.s32.totalorder %s24, 1
        %s416 = scalar_select %p415, %s24, 1
        %p417 = scmp.lt.s32.totalorder %s25, 0
        %s418 = scalar_select %p417, %s25, 0
        %s419 = sadd.s32 %s418, %s416
        %s420 = smul.addr %s419, 2
        %s421 = scalar_lea.vmem %s4, %s420
      $region56: #{sba_forward.7} parent=51 // pred_fallthru
        _
      // Predicated region
      $region57: #{sba_forward.7} parent=51 // pred_check
        %p422 = pneg %p175
      $region58: #{sba_forward.7} parent=51 // pred_check_branch
        %424 = sbr.rel (%p422) target = $region60
      $region59: #{sba_forward.7} parent=51 // pred_region
        %p425 = scmp.lt.s32.totalorder %s24, 1
        %s426 = scalar_select %p425, %s24, 1
        %p427 = scmp.lt.s32.totalorder %s25, 0
        %s428 = scalar_select %p427, %s25, 0
        %s429 = sadd.s32 %s428, %s426
        %s430 = smul.addr %s429, 2
        %s431 = scalar_lea.vmem %s5, %s430
      $region60: #{sba_forward.7} parent=51 // pred_fallthru
        _
      // Predicated region
      $region61: #{sba_forward.7} parent=51 // pred_check
        %p432 = pneg %p203
      $region62: #{sba_forward.7} parent=51 // pred_check_branch
        %434 = sbr.rel (%p432) target = $region64
      $region63: #{sba_forward.7} parent=51 // pred_region
        %p435 = scmp.lt.s32.totalorder %s24, 1
        %s436 = scalar_select %p435, %s24, 1
        %p437 = scmp.lt.s32.totalorder %s25, 0
        %s438 = scalar_select %p437, %s25, 0
        %s439 = sadd.s32 %s438, %s436
        %s440 = smul.addr %s439, 2
        %s441 = scalar_lea.vmem %s6, %s440
      $region64: #{sba_forward.7} parent=51 // pred_fallthru
        _
    $region52: #{sba_forward.7} parent=5 // pred_fallthru
      _
  $region6: #{sba_forward.7} parent=0 // loop_footer
    %s17 = sadd.s32 1, %s13
  $region7: #{sba_forward.7} parent=0 // loop_footer_branch
    %12 = sbr.rel target = $region3
  $region8: #{sba_forward.7} parent=0 // loop_exit
    _

// kernel: sba_forward.6
$region0: #{sba_forward.6}
  #allocation0 [shape = 'u32[]', space=smem, size = 0x4, offset = 0x4, fixed_abs, tag = 'smem constant byte address 0x4 - core index']
  #allocation1 [shape = 'u32[72,128]{1,0:T(1,128)}', space=vmem, size = 0x9000, scoped, tag = 'internal scratch']
  %s0 = inlined_call_operand.vmem [shape: bf16[2,8,512], index: 0, kind: input, shape index: {}]
  %s1 = inlined_call_operand.vmem [shape: bf16[8,8], index: 1, kind: input, shape index: {}]
  %s2 = inlined_call_operand.vmem [shape: f32[4,1], index: 2, kind: input, shape index: {}]
  %s3 = inlined_call_operand.vmem [shape: f32[4,1], index: 3, kind: input, shape index: {}]
  %s4 = inlined_call_operand.vmem [shape: bf16[2,4,512], index: 4, kind: output, shape index: {0}]
  %s5 = inlined_call_operand.vmem [shape: bf16[2,4,512], index: 5, kind: output, shape index: {1}]
  %6 = xla_tuple %s4, %s5
  %s7 = sld [smem:[#allocation0]]
  $region57: #{sba_forward.6} parent=0
    _
  %s9 = ssub.s32 1, %s7
  %s10 = scalar_select 0, %s9, %s7
  loop: start=0, step=1, limit=4
  $region2: #{sba_forward.6} parent=0 // loop_pre_header
    _
  $region3: #{sba_forward.6} parent=0 // loop_header
    %s12 = sphi 0, %s16
    %p13 = scmp.ge.s32.totalorder %s12, 4
    %s19 = sphi 0, %s31
    %s20 = sphi 0, %s27
    %s21 = sphi 0, %s19
    %s22 = sphi 0, %s20
    %s23 = sphi 0, %s21
    %s24 = sphi 0, %s22
    %s36 = sphi 0, %s38
    %s39 = sphi 0, %s36
    %s40 = sphi 0, %s39
    %s56 = sphi 0, %s40
    %s60 = sphi 0, %s60
    %s62 = sphi 0, %s60
    %s63 = sphi 0, %s62
    %s77 = sphi 0, %s63
    %s81 = sphi 0, %s81
    %s83 = sphi 0, %s81
    %s84 = sphi 0, %s83
    %s98 = sphi 0, %s84
    %s102 = sphi 0, %s102
    %s104 = sphi 0, %s102
    %s105 = sphi 0, %s104
    %s119 = sphi 0, %s105
    %s127 = sphi 0, %s129
    %s130 = sphi 0, %s127
    %s131 = sphi 0, %s130
    %s147 = sphi 0, %s131
    %s155 = sphi 0, %s157
    %s158 = sphi 0, %s155
    %s159 = sphi 0, %s158
    %s175 = sphi 0, %s159
  $region4: #{sba_forward.6} parent=0 // loop_header_branch
    %15 = sbr.rel (%p13) target = $region8
  $region5: #{sba_forward.6} parent=0 // loop_body
    %s17 = ssub.s32 %s12, 1
    %s18 = ssub.s32 %s12, 2
    %s25 = sadd.s32 1, %s20
    %p26 = scmp.ge.s32.totalorder %s25, 1
    %s27 = scalar_select %p26, 0, %s25
    %s28 = sadd.s32 1, %s19
    %s29 = scalar_select %p26, %s28, %s19
    %p30 = scmp.ge.s32.totalorder %s29, 2
    %s31 = scalar_select %p30, 0, %s29
    %s32 = ssub.s32 %s19, %s31
    %s33 = ssub.s32 %s20, %s27
    %s34 = sor.u32 %s32, %s33
    %p35 = scmp.eq.s32.totalorder %s34, 0
    %s37 = sadd.s32 %s36, 1
    %s38 = scalar_select %p35, %s36, %s37
    %p41 = pneg %p35
    %p42 = scmp.eq.s32.totalorder %s12, 1
    %p43 = por %p41, %p42
    %p44 = scmp.ne.s32.totalorder %s36, %s39
    %p45 = scmp.eq.s32.totalorder %s12, 0
    %p46 = por %p44, %p45
    %p47 = scmp.ne.s32.totalorder %s36, %s39
    %p48 = scmp.eq.s32.totalorder %s17, 1
    %p49 = por %p47, %p48
    %p50 = scmp.ne.s32.totalorder %s39, %s40
    %p51 = scmp.eq.s32.totalorder %s17, 0
    %p52 = por %p50, %p51
    %p53 = scmp.ne.s32.totalorder %s39, %s40
    %p54 = scmp.eq.s32.totalorder %s18, 1
    %p55 = por %p53, %p54
    %p57 = scmp.ne.s32.totalorder %s40, %s56
    %p58 = scmp.eq.s32.totalorder %s18, 0
    %p59 = por %p57, %p58
    %s61 = sadd.s32 %s60, 1
    %p64 = scmp.eq.s32.totalorder %s12, 1
    %p65 = scmp.ne.s32.totalorder %s60, %s62
    %p66 = scmp.eq.s32.totalorder %s12, 0
    %p67 = por %p65, %p66
    %p68 = scmp.ne.s32.totalorder %s60, %s62
    %p69 = scmp.eq.s32.totalorder %s17, 1
    %p70 = por %p68, %p69
    %p71 = scmp.ne.s32.totalorder %s62, %s63
    %p72 = scmp.eq.s32.totalorder %s17, 0
    %p73 = por %p71, %p72
    %p74 = scmp.ne.s32.totalorder %s62, %s63
    %p75 = scmp.eq.s32.totalorder %s18, 1
    %p76 = por %p74, %p75
    %p78 = scmp.ne.s32.totalorder %s63, %s77
    %p79 = scmp.eq.s32.totalorder %s18, 0
    %p80 = por %p78, %p79
    %s82 = sadd.s32 %s81, 1
    %p85 = scmp.eq.s32.totalorder %s12, 1
    %p86 = scmp.ne.s32.totalorder %s81, %s83
    %p87 = scmp.eq.s32.totalorder %s12, 0
    %p88 = por %p86, %p87
    %p89 = scmp.ne.s32.totalorder %s81, %s83
    %p90 = scmp.eq.s32.totalorder %s17, 1
    %p91 = por %p89, %p90
    %p92 = scmp.ne.s32.totalorder %s83, %s84
    %p93 = scmp.eq.s32.totalorder %s17, 0
    %p94 = por %p92, %p93
    %p95 = scmp.ne.s32.totalorder %s83, %s84
    %p96 = scmp.eq.s32.totalorder %s18, 1
    %p97 = por %p95, %p96
    %p99 = scmp.ne.s32.totalorder %s84, %s98
    %p100 = scmp.eq.s32.totalorder %s18, 0
    %p101 = por %p99, %p100
    %s103 = sadd.s32 %s102, 1
    %p106 = scmp.eq.s32.totalorder %s12, 1
    %p107 = scmp.ne.s32.totalorder %s102, %s104
    %p108 = scmp.eq.s32.totalorder %s12, 0
    %p109 = por %p107, %p108
    %p110 = scmp.ne.s32.totalorder %s102, %s104
    %p111 = scmp.eq.s32.totalorder %s17, 1
    %p112 = por %p110, %p111
    %p113 = scmp.ne.s32.totalorder %s104, %s105
    %p114 = scmp.eq.s32.totalorder %s17, 0
    %p115 = por %p113, %p114
    %p116 = scmp.ne.s32.totalorder %s104, %s105
    %p117 = scmp.eq.s32.totalorder %s18, 1
    %p118 = por %p116, %p117
    %p120 = scmp.ne.s32.totalorder %s105, %s119
    %p121 = scmp.eq.s32.totalorder %s18, 0
    %p122 = por %p120, %p121
    %s123 = ssub.s32 %s19, %s31
    %s124 = ssub.s32 %s20, %s27
    %s125 = sor.u32 %s123, %s124
    %p126 = scmp.eq.s32.totalorder %s125, 0
    %s128 = sadd.s32 %s127, 1
    %s129 = scalar_select %p126, %s127, %s128
    %p132 = pneg %p126
    %p133 = scmp.eq.s32.totalorder %s12, 1
    %p134 = por %p132, %p133
    %p135 = scmp.ne.s32.totalorder %s127, %s130
    %p136 = scmp.eq.s32.totalorder %s12, 0
    %p137 = por %p135, %p136
    %p138 = scmp.ne.s32.totalorder %s127, %s130
    %p139 = scmp.eq.s32.totalorder %s17, 1
    %p140 = por %p138, %p139
    %p141 = scmp.ne.s32.totalorder %s130, %s131
    %p142 = scmp.eq.s32.totalorder %s17, 0
    %p143 = por %p141, %p142
    %p144 = scmp.ne.s32.totalorder %s130, %s131
    %p145 = scmp.eq.s32.totalorder %s18, 1
    %p146 = por %p144, %p145
    %p148 = scmp.ne.s32.totalorder %s131, %s147
    %p149 = scmp.eq.s32.totalorder %s18, 0
    %p150 = por %p148, %p149
    %s151 = ssub.s32 %s19, %s31
    %s152 = ssub.s32 %s20, %s27
    %s153 = sor.u32 %s151, %s152
    %p154 = scmp.eq.s32.totalorder %s153, 0
    %s156 = sadd.s32 %s155, 1
    %s157 = scalar_select %p154, %s155, %s156
    %p160 = pneg %p154
    %p161 = scmp.eq.s32.totalorder %s12, 1
    %p162 = por %p160, %p161
    %p163 = scmp.ne.s32.totalorder %s155, %s158
    %p164 = scmp.eq.s32.totalorder %s12, 0
    %p165 = por %p163, %p164
    %p166 = scmp.ne.s32.totalorder %s155, %s158
    %p167 = scmp.eq.s32.totalorder %s17, 1
    %p168 = por %p166, %p167
    %p169 = scmp.ne.s32.totalorder %s158, %s159
    %p170 = scmp.eq.s32.totalorder %s17, 0
    %p171 = por %p169, %p170
    %p172 = scmp.ne.s32.totalorder %s158, %s159
    %p173 = scmp.eq.s32.totalorder %s18, 1
    %p174 = por %p172, %p173
    %p176 = scmp.ne.s32.totalorder %s159, %s175
    %p177 = scmp.eq.s32.totalorder %s18, 0
    %p178 = por %p176, %p177
    %p179 = scmp.le.s32.totalorder 1, %s12
    %p180 = scmp.lt.s32.totalorder %s12, 3
    %p181 = pnand %p179, %p180
    %p182 = pneg %p181
    // Predicated region
    $region9: #{sba_forward.6} parent=5 // pred_check
      _
    $region10: #{sba_forward.6} parent=5 // pred_check_branch
      %184 = sbr.rel (%p181) target = $region12
    $region11: #{sba_forward.6} parent=5 // pred_region
      %s185 = ssub.s32 %s12, 1
      // Predicated region
      $region13: #{sba_forward.6} parent=11 // pred_check
        %p186 = pneg %p73
      $region14: #{sba_forward.6} parent=11 // pred_check_branch
        %188 = sbr.rel (%p186) target = $region16
      $region15: #{sba_forward.6} parent=11 // pred_region
        _
      $region16: #{sba_forward.6} parent=11 // pred_fallthru
        _
      // Predicated region
      $region17: #{sba_forward.6} parent=11 // pred_check
        %p189 = pneg %p94
      $region18: #{sba_forward.6} parent=11 // pred_check_branch
        %191 = sbr.rel (%p189) target = $region20
      $region19: #{sba_forward.6} parent=11 // pred_region
        _
      $region20: #{sba_forward.6} parent=11 // pred_fallthru
        _
      // Predicated region
      $region21: #{sba_forward.6} parent=11 // pred_check
        %p192 = pneg %p115
      $region22: #{sba_forward.6} parent=11 // pred_check_branch
        %194 = sbr.rel (%p192) target = $region24
      $region23: #{sba_forward.6} parent=11 // pred_region
        _
      $region24: #{sba_forward.6} parent=11 // pred_fallthru
        _
    $region12: #{sba_forward.6} parent=5 // pred_fallthru
      _
    %p195 = scmp.lt.s32.totalorder %s12, 2
    // Predicated region
    $region25: #{sba_forward.6} parent=5 // pred_check
      %p196 = pneg %p195
    $region26: #{sba_forward.6} parent=5 // pred_check_branch
      %198 = sbr.rel (%p196) target = $region28
    $region27: #{sba_forward.6} parent=5 // pred_region
      // Predicated region
      $region29: #{sba_forward.6} parent=27 // pred_check
        %p199 = pneg %p46
      $region30: #{sba_forward.6} parent=27 // pred_check_branch
        %201 = sbr.rel (%p199) target = $region32
      $region31: #{sba_forward.6} parent=27 // pred_region
        %s202 = smul.u32 4, %s20
        %p203 = scmp.lt.s32.totalorder %s19, 1
        %s204 = scalar_select %p203, %s19, 1
        %p205 = scmp.lt.s32.totalorder %s202, 3
        %s206 = scalar_select %p205, %s202, 3
        %s207 = smul.addr %s204, 4
        %s208 = sadd.s32 %s206, %s207
        %s209 = smul.addr %s208, 4
        %s210 = scalar_lea.vmem %s0, %s209
        %s211 = smul.u32 4, %s20
      $region32: #{sba_forward.6} parent=27 // pred_fallthru
        _
    $region28: #{sba_forward.6} parent=5 // pred_fallthru
      _
    %p212 = scmp.le.s32.totalorder 1, %s12
    %p213 = scmp.lt.s32.totalorder %s12, 3
    %p214 = pnand %p212, %p213
    %p215 = pneg %p214
    // Predicated region
    $region33: #{sba_forward.6} parent=5 // pred_check
      _
    $region34: #{sba_forward.6} parent=5 // pred_check_branch
      %217 = sbr.rel (%p214) target = $region36
    $region35: #{sba_forward.6} parent=5 // pred_region
      %s218 = ssub.s32 %s12, 1
      %s219 = smul.u32 4, %s22
      %p220 = scmp.lt.s32.totalorder %s21, 1
      %s221 = scalar_select %p220, %s21, 1
      %p222 = scmp.lt.s32.totalorder %s219, 3
      %s223 = scalar_select %p222, %s219, 3
      %s224 = smul.addr %s221, 4
      %s225 = sadd.s32 %s223, %s224
      %s226 = smul.addr %s225, 4
      %s227 = scalar_lea.vmem %s0, %s226
      %p228 = pneg %p52
      %p229 = pneg %p49
      %p230 = pneg %p73
      %p231 = pneg %p70
      %p232 = pneg %p94
      %p233 = pneg %p91
      %p234 = pneg %p115
      %p235 = pneg %p112
      %p236 = pneg %p143
      %p237 = pneg %p140
      %s238 = smul.u32 4, %s22
      %p239 = scmp.lt.s32.totalorder %s21, 1
      %s240 = scalar_select %p239, %s21, 1
      %p241 = scmp.lt.s32.totalorder %s238, 3
      %s242 = scalar_select %p241, %s238, 3
      %s243 = smul.addr %s240, 4
      %s244 = sadd.s32 %s242, %s243
      %s245 = smul.addr %s244, 2
      %s246 = scalar_lea.vmem %s4, %s245
      %p247 = pneg %p171
      %p248 = pneg %p168
      %s249 = smul.u32 4, %s22
      %p250 = scmp.lt.s32.totalorder %s21, 1
      %s251 = scalar_select %p250, %s21, 1
      %p252 = scmp.lt.s32.totalorder %s249, 3
      %s253 = scalar_select %p252, %s249, 3
      %s254 = smul.addr %s251, 4
      %s255 = sadd.s32 %s253, %s254
      %s256 = smul.addr %s255, 2
      %s257 = scalar_lea.vmem %s5, %s256
      %s258 = smul.u32 4, %s22
      %p259 = scmp.lt.s32.totalorder %s21, 1
      %s260 = scalar_select %p259, %s21, 1
      %p261 = scmp.lt.s32.totalorder %s258, 3
      %s262 = scalar_select %p261, %s258, 3
      %s263 = smul.addr %s260, 4
      %s264 = sadd.s32 %s262, %s263
      %s265 = smul.addr %s264, 4
      %s266 = scalar_lea.vmem %s0, %s265
      %s267 = smul.u32 4, %s22
      %s268 = smul.u32 4, %s22
      %p269 = scmp.lt.s32.totalorder %s21, 1
      %s270 = scalar_select %p269, %s21, 1
      %p271 = scmp.lt.s32.totalorder %s268, 3
      %s272 = scalar_select %p271, %s268, 3
      %s273 = smul.addr %s270, 4
      %s274 = sadd.s32 %s272, %s273
      %s275 = smul.addr %s274, 2
      %s276 = scalar_lea.vmem %s4, %s275
      %s277 = smul.u32 4, %s22
      %s278 = smul.u32 4, %s22
      %p279 = scmp.lt.s32.totalorder %s21, 1
      %s280 = scalar_select %p279, %s21, 1
      %p281 = scmp.lt.s32.totalorder %s278, 3
      %s282 = scalar_select %p281, %s278, 3
      %s283 = smul.addr %s280, 4
      %s284 = sadd.s32 %s282, %s283
      %s285 = smul.addr %s284, 2
      %s286 = scalar_lea.vmem %s5, %s285
      %s287 = smul.u32 4, %s22
      %v289 = vld [vmem:[%s1] sm:$0xf]
      %v290 = vld [vmem:[%s266] sm:$0xff]
      %v291 = vld [vmem:[%s266 + $0x8] sm:$0xff]
      %v294 = vunpack.c.l.b16 %v290
      %v295 = vunpack.c.h.b16 %v290
      %v296 = vunpack.c.l.b16 %v291
      %v297 = vunpack.c.h.b16 %v291
      %v298 = vpack.c.b16 %v294, %v294
      %v299 = vpack.c.b16 %v295, %v295
      %v300 = vpack.c.b16 %v296, %v296
      %v301 = vpack.c.b16 %v297, %v297
      %vm302 = vcmask 64512
      %v304 = vsel %vm302, %v289, 0
      %vm306 = vcmask 1043456
      %v308 = vsel %vm306, %v298, 0
      %v311 = vsel %vm306, %v299, 0
      %v314 = vsel %vm306, %v300, 0
      %v317 = vsel %vm306, %v301, 0
      %319 = vmatpush.bf16.msra.mxu0 0
      %320 = vmatpush.bf16.msra.mxu0 0
      %321 = vmatpush.bf16.msra.mxu0 0
      %322 = vmatpush.bf16.msra.mxu0 0
      %323 = vmatpush.bf16.msra.mxu0 0
      %324 = vmatpush.bf16.msra.mxu0 0
      %325 = vmatpush.bf16.msra.mxu0 0
      %326 = vmatpush.bf16.msra.mxu0 %v308
      %327 = vmatmul.bf16.gmra.mxu0 %v304
      %v328 = vpop.f32.mrf.mxu0
      %v329 = vadd.f32 0.0, %v328
      %v330 = vpop.f32.mrf.mxu0
      %331 = vdwg.mxu0
      %332 = vmatpush.bf16.msra.mxu0 0
      %333 = vmatpush.bf16.msra.mxu0 0
      %334 = vmatpush.bf16.msra.mxu0 0
      %335 = vmatpush.bf16.msra.mxu0 0
      %336 = vmatpush.bf16.msra.mxu0 0
      %337 = vmatpush.bf16.msra.mxu0 0
      %338 = vmatpush.bf16.msra.mxu0 0
      %339 = vmatpush.bf16.msra.mxu0 %v311
      %340 = vmatmul.bf16.gmra.mxu0 %v304
      %v341 = vpop.f32.mrf.mxu0
      %v342 = vadd.f32 0.0, %v341
      %v343 = vpop.f32.mrf.mxu0
      %344 = vdwg.mxu0
      %345 = vmatpush.bf16.msra.mxu0 0
      %346 = vmatpush.bf16.msra.mxu0 0
      %347 = vmatpush.bf16.msra.mxu0 0
      %348 = vmatpush.bf16.msra.mxu0 0
      %349 = vmatpush.bf16.msra.mxu0 0
      %350 = vmatpush.bf16.msra.mxu0 0
      %351 = vmatpush.bf16.msra.mxu0 0
      %352 = vmatpush.bf16.msra.mxu0 %v314
      %353 = vmatmul.bf16.gmra.mxu0 %v304
      %v354 = vpop.f32.mrf.mxu0
      %v355 = vadd.f32 0.0, %v354
      %v356 = vpop.f32.mrf.mxu0
      %357 = vdwg.mxu0
      %358 = vmatpush.bf16.msra.mxu0 0
      %359 = vmatpush.bf16.msra.mxu0 0
      %360 = vmatpush.bf16.msra.mxu0 0
      %361 = vmatpush.bf16.msra.mxu0 0
      %362 = vmatpush.bf16.msra.mxu0 0
      %363 = vmatpush.bf16.msra.mxu0 0
      %364 = vmatpush.bf16.msra.mxu0 0
      %365 = vmatpush.bf16.msra.mxu0 %v317
      %366 = vmatmul.bf16.gmra.mxu0 %v304
      %v367 = vpop.f32.mrf.mxu0
      %v368 = vadd.f32 0.0, %v367
      %v369 = vpop.f32.mrf.mxu0
      %370 = vdwg.mxu0
      %v371 = vsub.f32 0.0, %v329
      %v372 = vsub.f32 0.0, %v342
      %v373 = vsub.f32 0.0, %v355
      %v374 = vsub.f32 0.0, %v368
      %v375 = vmul.f32 %v371, 1.442695
      %v376 = vpow.pop %v375
      %v377 = vmul.f32 %v372, 1.442695
      %v378 = vpow.pop %v377
      %v379 = vmul.f32 %v373, 1.442695
      %v380 = vpow.pop %v379
      %v381 = vmul.f32 %v374, 1.442695
      %v382 = vpow.pop %v381
      %v383 = vadd.f32 %v376, 1.0
      %v384 = vadd.f32 %v378, 1.0
      %v385 = vadd.f32 %v380, 1.0
      %v386 = vadd.f32 %v382, 1.0
      %v387 = vrcp.pop %v383
      %v388 = vrcp.pop %v384
      %v389 = vrcp.pop %v385
      %v390 = vrcp.pop %v386
      %v391 = vld [vmem:[%s2] sm:$0xf]
      %393 = vset.pattern.permute.xlu0 0
      %394 = vperm.xlu0 %393, %v391
      %v395 = vpop.permute.xlu0 %394
      %v396 = vrot.slane %v395, 4
      %v398 = vmul.f32 %v329, %v396
      %v399 = vmul.f32 %v342, %v396
      %v400 = vmul.f32 %v355, %v396
      %v401 = vmul.f32 %v368, %v396
      %v402 = vld [vmem:[%s3] sm:$0xf]
      %404 = vset.pattern.permute.xlu0 0
      %405 = vperm.xlu0 %404, %v402
      %v406 = vpop.permute.xlu0 %405
      %v407 = vrot.slane %v406, 4
      %v409 = vadd.f32 %v398, %v407
      %v410 = vadd.f32 %v399, %v407
      %v411 = vadd.f32 %v400, %v407
      %v412 = vadd.f32 %v401, %v407
      %v413 = vmax.f32 %v409, 0.0
      %v414 = vmax.f32 %v410, 0.0
      %v415 = vmax.f32 %v411, 0.0
      %v416 = vmax.f32 %v412, 0.0
      %v417 = vpack.c.bf16 %v414, %v413
      %v418 = vpack.c.bf16 %v416, %v415
      %420 = vst.sshfl [vmem:[#allocation1] sm:$0xff pattern:$0x75643120] %v417
      %422 = vst.sshfl [vmem:[#allocation1 + $0x8] sm:$0xff pattern:$0x75643120] %v418
      %s423 = scalar_lea.vmem [#allocation1], 1
      %v424 = vld [vmem:[%s423] ss:$2 sm:$0xff]
      %426 = vst [vmem:[%s276] sm:$0xff] %v424
      %v427 = vpack.c.bf16 %v388, %v387
      %v428 = vpack.c.bf16 %v390, %v389
      %v431 = vrot.slane %v427, 2
      %v432 = vrot.slane %v428, 4
      %v433 = vrot.slane %v428, 6
      %vm434 = vcmask 1041408
      %v437 = vsel %vm434, %v427, %v431
      %vm438 = vcmask 1045508
      %v441 = vsel %vm438, %v432, %v433
      %v442 = vsel %vm306, %v437, %v441
      %444 = vst [vmem:[%s286] sm:$0xff] %v442
      %s445 = smul.u32 4, %s22
      %p446 = scmp.lt.s32.totalorder %s21, 1
      %s447 = scalar_select %p446, %s21, 1
      %p448 = scmp.lt.s32.totalorder %s445, 3
      %s449 = scalar_select %p448, %s445, 3
      %s450 = smul.addr %s447, 4
      %s451 = sadd.s32 %s449, %s450
      %s452 = smul.addr %s451, 2
      %s453 = scalar_lea.vmem %s4, %s452
      %s454 = smul.u32 4, %s22
      %p455 = scmp.lt.s32.totalorder %s21, 1
      %s456 = scalar_select %p455, %s21, 1
      %p457 = scmp.lt.s32.totalorder %s454, 3
      %s458 = scalar_select %p457, %s454, 3
      %s459 = smul.addr %s456, 4
      %s460 = sadd.s32 %s458, %s459
      %s461 = smul.addr %s460, 2
      %s462 = scalar_lea.vmem %s5, %s461
      // Predicated region
      $region37: #{sba_forward.6} parent=35 // pred_check
        %p463 = pneg %p140
      $region38: #{sba_forward.6} parent=35 // pred_check_branch
        %465 = sbr.rel (%p463) target = $region40
      $region39: #{sba_forward.6} parent=35 // pred_region
        %s466 = smul.u32 4, %s22
      $region40: #{sba_forward.6} parent=35 // pred_fallthru
        _
      // Predicated region
      $region41: #{sba_forward.6} parent=35 // pred_check
        %p467 = pneg %p168
      $region42: #{sba_forward.6} parent=35 // pred_check_branch
        %469 = sbr.rel (%p467) target = $region44
      $region43: #{sba_forward.6} parent=35 // pred_region
        %s470 = smul.u32 4, %s22
      $region44: #{sba_forward.6} parent=35 // pred_fallthru
        _
    $region36: #{sba_forward.6} parent=5 // pred_fallthru
      _
    %p471 = scmp.le.s32.totalorder 2, %s12
    // Predicated region
    $region45: #{sba_forward.6} parent=5 // pred_check
      %p472 = pneg %p471
    $region46: #{sba_forward.6} parent=5 // pred_check_branch
      %474 = sbr.rel (%p472) target = $region48
    $region47: #{sba_forward.6} parent=5 // pred_region
      %s475 = ssub.s32 %s12, 2
      // Predicated region
      $region49: #{sba_forward.6} parent=47 // pred_check
        %p476 = pneg %p146
      $region50: #{sba_forward.6} parent=47 // pred_check_branch
        %478 = sbr.rel (%p476) target = $region52
      $region51: #{sba_forward.6} parent=47 // pred_region
        %s479 = smul.u32 4, %s24
        %p480 = scmp.lt.s32.totalorder %s23, 1
        %s481 = scalar_select %p480, %s23, 1
        %p482 = scmp.lt.s32.totalorder %s479, 3
        %s483 = scalar_select %p482, %s479, 3
        %s484 = smul.addr %s481, 4
        %s485 = sadd.s32 %s483, %s484
        %s486 = smul.addr %s485, 2
        %s487 = scalar_lea.vmem %s4, %s486
      $region52: #{sba_forward.6} parent=47 // pred_fallthru
        _
      // Predicated region
      $region53: #{sba_forward.6} parent=47 // pred_check
        %p488 = pneg %p174
      $region54: #{sba_forward.6} parent=47 // pred_check_branch
        %490 = sbr.rel (%p488) target = $region56
      $region55: #{sba_forward.6} parent=47 // pred_region
        %s491 = smul.u32 4, %s24
        %p492 = scmp.lt.s32.totalorder %s23, 1
        %s493 = scalar_select %p492, %s23, 1
        %p494 = scmp.lt.s32.totalorder %s491, 3
        %s495 = scalar_select %p494, %s491, 3
        %s496 = smul.addr %s493, 4
        %s497 = sadd.s32 %s495, %s496
        %s498 = smul.addr %s497, 2
        %s499 = scalar_lea.vmem %s5, %s498
      $region56: #{sba_forward.6} parent=47 // pred_fallthru
        _
    $region48: #{sba_forward.6} parent=5 // pred_fallthru
      _
  $region6: #{sba_forward.6} parent=0 // loop_footer
    %s16 = sadd.s32 1, %s12
  $region7: #{sba_forward.6} parent=0 // loop_footer_branch
    %11 = sbr.rel target = $region3
  $region8: #{sba_forward.6} parent=0 // loop_exit
    _

// kernel: sba_forward.8
$region0: #{sba_forward.8}
  #allocation0 [shape = 'u32[]', space=smem, size = 0x4, offset = 0x4, fixed_abs, tag = 'smem constant byte address 0x4 - core index']
  #allocation1 [shape = 'u32[72,128]{1,0:T(1,128)}', space=vmem, size = 0x9000, scoped, tag = 'internal scratch']
  %s0 = inlined_call_operand.vmem [shape: bf16[64,512], index: 0, kind: input, shape index: {}]
  %s1 = inlined_call_operand.vmem [shape: bf16[2,4,64], index: 1, kind: input, shape index: {}]
  %s2 = inlined_call_operand.vmem [shape: bf16[2,4,512], index: 2, kind: input, shape index: {}]
  %s3 = inlined_call_operand.vmem [shape: bf16[2,4,512], index: 3, kind: input, shape index: {}]
  %s4 = inlined_call_operand.vmem [shape: bf16[2,4,512], index: 4, kind: output, shape index: {0}]
  %s5 = inlined_call_operand.vmem [shape: bf16[2,4,512], index: 5, kind: output, shape index: {1}]
  %6 = xla_tuple %s4, %s5
  %s7 = sld [smem:[#allocation0]]
  $region57: #{sba_forward.8} parent=0
    _
  %s9 = ssub.s32 1, %s7
  %s10 = scalar_select 0, %s9, %s7
  loop: start=0, step=1, limit=4
  $region2: #{sba_forward.8} parent=0 // loop_pre_header
    _
  $region3: #{sba_forward.8} parent=0 // loop_header
    %s12 = sphi 0, %s16
    %p13 = scmp.ge.s32.totalorder %s12, 4
    %s19 = sphi 0, %s31
    %s20 = sphi 0, %s27
    %s21 = sphi 0, %s19
    %s22 = sphi 0, %s20
    %s23 = sphi 0, %s21
    %s24 = sphi 0, %s22
    %s34 = sphi 0, %s36
    %s37 = sphi 0, %s34
    %s38 = sphi 0, %s37
    %s54 = sphi 0, %s38
    %s60 = sphi 0, %s62
    %s63 = sphi 0, %s60
    %s64 = sphi 0, %s63
    %s80 = sphi 0, %s64
    %s88 = sphi 0, %s90
    %s91 = sphi 0, %s88
    %s92 = sphi 0, %s91
    %s108 = sphi 0, %s92
    %s116 = sphi 0, %s118
    %s119 = sphi 0, %s116
    %s120 = sphi 0, %s119
    %s136 = sphi 0, %s120
    %s144 = sphi 0, %s146
    %s147 = sphi 0, %s144
    %s148 = sphi 0, %s147
    %s164 = sphi 0, %s148
    %s172 = sphi 0, %s174
    %s175 = sphi 0, %s172
    %s176 = sphi 0, %s175
    %s192 = sphi 0, %s176
  $region4: #{sba_forward.8} parent=0 // loop_header_branch
    %15 = sbr.rel (%p13) target = $region8
  $region5: #{sba_forward.8} parent=0 // loop_body
    %s17 = ssub.s32 %s12, 1
    %s18 = ssub.s32 %s12, 2
    %s25 = sadd.s32 1, %s20
    %p26 = scmp.ge.s32.totalorder %s25, 1
    %s27 = scalar_select %p26, 0, %s25
    %s28 = sadd.s32 1, %s19
    %s29 = scalar_select %p26, %s28, %s19
    %p30 = scmp.ge.s32.totalorder %s29, 2
    %s31 = scalar_select %p30, 0, %s29
    %s32 = ssub.s32 %s20, %s27
    %p33 = scmp.eq.s32.totalorder %s32, 0
    %s35 = sadd.s32 %s34, 1
    %s36 = scalar_select %p33, %s34, %s35
    %p39 = pneg %p33
    %p40 = scmp.eq.s32.totalorder %s12, 1
    %p41 = por %p39, %p40
    %p42 = scmp.ne.s32.totalorder %s34, %s37
    %p43 = scmp.eq.s32.totalorder %s12, 0
    %p44 = por %p42, %p43
    %p45 = scmp.ne.s32.totalorder %s34, %s37
    %p46 = scmp.eq.s32.totalorder %s17, 1
    %p47 = por %p45, %p46
    %p48 = scmp.ne.s32.totalorder %s37, %s38
    %p49 = scmp.eq.s32.totalorder %s17, 0
    %p50 = por %p48, %p49
    %p51 = scmp.ne.s32.totalorder %s37, %s38
    %p52 = scmp.eq.s32.totalorder %s18, 1
    %p53 = por %p51, %p52
    %p55 = scmp.ne.s32.totalorder %s38, %s54
    %p56 = scmp.eq.s32.totalorder %s18, 0
    %p57 = por %p55, %p56
    %s58 = ssub.s32 %s19, %s31
    %p59 = scmp.eq.s32.totalorder %s58, 0
    %s61 = sadd.s32 %s60, 1
    %s62 = scalar_select %p59, %s60, %s61
    %p65 = pneg %p59
    %p66 = scmp.eq.s32.totalorder %s12, 1
    %p67 = por %p65, %p66
    %p68 = scmp.ne.s32.totalorder %s60, %s63
    %p69 = scmp.eq.s32.totalorder %s12, 0
    %p70 = por %p68, %p69
    %p71 = scmp.ne.s32.totalorder %s60, %s63
    %p72 = scmp.eq.s32.totalorder %s17, 1
    %p73 = por %p71, %p72
    %p74 = scmp.ne.s32.totalorder %s63, %s64
    %p75 = scmp.eq.s32.totalorder %s17, 0
    %p76 = por %p74, %p75
    %p77 = scmp.ne.s32.totalorder %s63, %s64
    %p78 = scmp.eq.s32.totalorder %s18, 1
    %p79 = por %p77, %p78
    %p81 = scmp.ne.s32.totalorder %s64, %s80
    %p82 = scmp.eq.s32.totalorder %s18, 0
    %p83 = por %p81, %p82
    %s84 = ssub.s32 %s19, %s31
    %s85 = ssub.s32 %s20, %s27
    %s86 = sor.u32 %s84, %s85
    %p87 = scmp.eq.s32.totalorder %s86, 0
    %s89 = sadd.s32 %s88, 1
    %s90 = scalar_select %p87, %s88, %s89
    %p93 = pneg %p87
    %p94 = scmp.eq.s32.totalorder %s12, 1
    %p95 = por %p93, %p94
    %p96 = scmp.ne.s32.totalorder %s88, %s91
    %p97 = scmp.eq.s32.totalorder %s12, 0
    %p98 = por %p96, %p97
    %p99 = scmp.ne.s32.totalorder %s88, %s91
    %p100 = scmp.eq.s32.totalorder %s17, 1
    %p101 = por %p99, %p100
    %p102 = scmp.ne.s32.totalorder %s91, %s92
    %p103 = scmp.eq.s32.totalorder %s17, 0
    %p104 = por %p102, %p103
    %p105 = scmp.ne.s32.totalorder %s91, %s92
    %p106 = scmp.eq.s32.totalorder %s18, 1
    %p107 = por %p105, %p106
    %p109 = scmp.ne.s32.totalorder %s92, %s108
    %p110 = scmp.eq.s32.totalorder %s18, 0
    %p111 = por %p109, %p110
    %s112 = ssub.s32 %s19, %s31
    %s113 = ssub.s32 %s20, %s27
    %s114 = sor.u32 %s112, %s113
    %p115 = scmp.eq.s32.totalorder %s114, 0
    %s117 = sadd.s32 %s116, 1
    %s118 = scalar_select %p115, %s116, %s117
    %p121 = pneg %p115
    %p122 = scmp.eq.s32.totalorder %s12, 1
    %p123 = por %p121, %p122
    %p124 = scmp.ne.s32.totalorder %s116, %s119
    %p125 = scmp.eq.s32.totalorder %s12, 0
    %p126 = por %p124, %p125
    %p127 = scmp.ne.s32.totalorder %s116, %s119
    %p128 = scmp.eq.s32.totalorder %s17, 1
    %p129 = por %p127, %p128
    %p130 = scmp.ne.s32.totalorder %s119, %s120
    %p131 = scmp.eq.s32.totalorder %s17, 0
    %p132 = por %p130, %p131
    %p133 = scmp.ne.s32.totalorder %s119, %s120
    %p134 = scmp.eq.s32.totalorder %s18, 1
    %p135 = por %p133, %p134
    %p137 = scmp.ne.s32.totalorder %s120, %s136
    %p138 = scmp.eq.s32.totalorder %s18, 0
    %p139 = por %p137, %p138
    %s140 = ssub.s32 %s19, %s31
    %s141 = ssub.s32 %s20, %s27
    %s142 = sor.u32 %s140, %s141
    %p143 = scmp.eq.s32.totalorder %s142, 0
    %s145 = sadd.s32 %s144, 1
    %s146 = scalar_select %p143, %s144, %s145
    %p149 = pneg %p143
    %p150 = scmp.eq.s32.totalorder %s12, 1
    %p151 = por %p149, %p150
    %p152 = scmp.ne.s32.totalorder %s144, %s147
    %p153 = scmp.eq.s32.totalorder %s12, 0
    %p154 = por %p152, %p153
    %p155 = scmp.ne.s32.totalorder %s144, %s147
    %p156 = scmp.eq.s32.totalorder %s17, 1
    %p157 = por %p155, %p156
    %p158 = scmp.ne.s32.totalorder %s147, %s148
    %p159 = scmp.eq.s32.totalorder %s17, 0
    %p160 = por %p158, %p159
    %p161 = scmp.ne.s32.totalorder %s147, %s148
    %p162 = scmp.eq.s32.totalorder %s18, 1
    %p163 = por %p161, %p162
    %p165 = scmp.ne.s32.totalorder %s148, %s164
    %p166 = scmp.eq.s32.totalorder %s18, 0
    %p167 = por %p165, %p166
    %s168 = ssub.s32 %s19, %s31
    %s169 = ssub.s32 %s20, %s27
    %s170 = sor.u32 %s168, %s169
    %p171 = scmp.eq.s32.totalorder %s170, 0
    %s173 = sadd.s32 %s172, 1
    %s174 = scalar_select %p171, %s172, %s173
    %p177 = pneg %p171
    %p178 = scmp.eq.s32.totalorder %s12, 1
    %p179 = por %p177, %p178
    %p180 = scmp.ne.s32.totalorder %s172, %s175
    %p181 = scmp.eq.s32.totalorder %s12, 0
    %p182 = por %p180, %p181
    %p183 = scmp.ne.s32.totalorder %s172, %s175
    %p184 = scmp.eq.s32.totalorder %s17, 1
    %p185 = por %p183, %p184
    %p186 = scmp.ne.s32.totalorder %s175, %s176
    %p187 = scmp.eq.s32.totalorder %s17, 0
    %p188 = por %p186, %p187
    %p189 = scmp.ne.s32.totalorder %s175, %s176
    %p190 = scmp.eq.s32.totalorder %s18, 1
    %p191 = por %p189, %p190
    %p193 = scmp.ne.s32.totalorder %s176, %s192
    %p194 = scmp.eq.s32.totalorder %s18, 0
    %p195 = por %p193, %p194
    %p196 = scmp.le.s32.totalorder 1, %s12
    %p197 = scmp.lt.s32.totalorder %s12, 3
    %p198 = pnand %p196, %p197
    %p199 = pneg %p198
    // Predicated region
    $region9: #{sba_forward.8} parent=5 // pred_check
      _
    $region10: #{sba_forward.8} parent=5 // pred_check_branch
      %201 = sbr.rel (%p198) target = $region12
    $region11: #{sba_forward.8} parent=5 // pred_region
      %s202 = ssub.s32 %s12, 1
      // Predicated region
      $region13: #{sba_forward.8} parent=11 // pred_check
        %p203 = pneg %p50
      $region14: #{sba_forward.8} parent=11 // pred_check_branch
        %205 = sbr.rel (%p203) target = $region16
      $region15: #{sba_forward.8} parent=11 // pred_region
        %s206 = smul.u32 4, %s22
        %p207 = scmp.lt.s32.totalorder %s206, 3
        %s208 = scalar_select %p207, %s206, 3
        %s209 = smul.addr %s208, 4
        %s210 = scalar_lea.vmem %s0, %s209
        %s211 = smul.u32 4, %s22
      $region16: #{sba_forward.8} parent=11 // pred_fallthru
        _
    $region12: #{sba_forward.8} parent=5 // pred_fallthru
      _
    %p212 = scmp.lt.s32.totalorder %s12, 2
    // Predicated region
    $region17: #{sba_forward.8} parent=5 // pred_check
      %p213 = pneg %p212
    $region18: #{sba_forward.8} parent=5 // pred_check_branch
      %215 = sbr.rel (%p213) target = $region20
    $region19: #{sba_forward.8} parent=5 // pred_region
      // Predicated region
      $region21: #{sba_forward.8} parent=19 // pred_check
        %p216 = pneg %p70
      $region22: #{sba_forward.8} parent=19 // pred_check_branch
        %218 = sbr.rel (%p216) target = $region24
      $region23: #{sba_forward.8} parent=19 // pred_region
        %p219 = scmp.lt.s32.totalorder %s19, 1
        %s220 = scalar_select %p219, %s19, 1
        %s221 = smul.addr %s220, 2
        %s222 = scalar_lea.vmem %s1, %s221
      $region24: #{sba_forward.8} parent=19 // pred_fallthru
        _
      // Predicated region
      $region25: #{sba_forward.8} parent=19 // pred_check
        %p223 = pneg %p98
      $region26: #{sba_forward.8} parent=19 // pred_check_branch
        %225 = sbr.rel (%p223) target = $region28
      $region27: #{sba_forward.8} parent=19 // pred_region
        %s226 = smul.u32 4, %s20
        %p227 = scmp.lt.s32.totalorder %s19, 1
        %s228 = scalar_select %p227, %s19, 1
        %p229 = scmp.lt.s32.totalorder %s226, 3
        %s230 = scalar_select %p229, %s226, 3
        %s231 = smul.addr %s228, 4
        %s232 = sadd.s32 %s230, %s231
        %s233 = smul.addr %s232, 2
        %s234 = scalar_lea.vmem %s2, %s233
        %s235 = smul.u32 4, %s20
      $region28: #{sba_forward.8} parent=19 // pred_fallthru
        _
      // Predicated region
      $region29: #{sba_forward.8} parent=19 // pred_check
        %p236 = pneg %p126
      $region30: #{sba_forward.8} parent=19 // pred_check_branch
        %238 = sbr.rel (%p236) target = $region32
      $region31: #{sba_forward.8} parent=19 // pred_region
        %s239 = smul.u32 4, %s20
        %p240 = scmp.lt.s32.totalorder %s19, 1
        %s241 = scalar_select %p240, %s19, 1
        %p242 = scmp.lt.s32.totalorder %s239, 3
        %s243 = scalar_select %p242, %s239, 3
        %s244 = smul.addr %s241, 4
        %s245 = sadd.s32 %s243, %s244
        %s246 = smul.addr %s245, 2
        %s247 = scalar_lea.vmem %s3, %s246
        %s248 = smul.u32 4, %s20
      $region32: #{sba_forward.8} parent=19 // pred_fallthru
        _
    $region20: #{sba_forward.8} parent=5 // pred_fallthru
      _
    %p249 = scmp.le.s32.totalorder 1, %s12
    %p250 = scmp.lt.s32.totalorder %s12, 3
    %p251 = pnand %p249, %p250
    %p252 = pneg %p251
    // Predicated region
    $region33: #{sba_forward.8} parent=5 // pred_check
      _
    $region34: #{sba_forward.8} parent=5 // pred_check_branch
      %254 = sbr.rel (%p251) target = $region36
    $region35: #{sba_forward.8} parent=5 // pred_region
      %s255 = ssub.s32 %s12, 1
      %s256 = smul.u32 4, %s22
      %p257 = scmp.lt.s32.totalorder %s256, 3
      %s258 = scalar_select %p257, %s256, 3
      %s259 = smul.addr %s258, 4
      %s260 = scalar_lea.vmem %s0, %s259
      %p261 = pneg %p50
      %p262 = pneg %p47
      %p263 = scmp.lt.s32.totalorder %s21, 1
      %s264 = scalar_select %p263, %s21, 1
      %s265 = smul.addr %s264, 2
      %s266 = scalar_lea.vmem %s1, %s265
      %p267 = pneg %p76
      %p268 = pneg %p73
      %s269 = smul.u32 4, %s22
      %p270 = scmp.lt.s32.totalorder %s21, 1
      %s271 = scalar_select %p270, %s21, 1
      %p272 = scmp.lt.s32.totalorder %s269, 3
      %s273 = scalar_select %p272, %s269, 3
      %s274 = smul.addr %s271, 4
      %s275 = sadd.s32 %s273, %s274
      %s276 = smul.addr %s275, 2
      %s277 = scalar_lea.vmem %s2, %s276
      %p278 = pneg %p104
      %p279 = pneg %p101
      %s280 = smul.u32 4, %s22
      %p281 = scmp.lt.s32.totalorder %s21, 1
      %s282 = scalar_select %p281, %s21, 1
      %p283 = scmp.lt.s32.totalorder %s280, 3
      %s284 = scalar_select %p283, %s280, 3
      %s285 = smul.addr %s282, 4
      %s286 = sadd.s32 %s284, %s285
      %s287 = smul.addr %s286, 2
      %s288 = scalar_lea.vmem %s3, %s287
      %p289 = pneg %p132
      %p290 = pneg %p129
      %p291 = pneg %p160
      %p292 = pneg %p157
      %s293 = smul.u32 4, %s22
      %p294 = scmp.lt.s32.totalorder %s21, 1
      %s295 = scalar_select %p294, %s21, 1
      %p296 = scmp.lt.s32.totalorder %s293, 3
      %s297 = scalar_select %p296, %s293, 3
      %s298 = smul.addr %s295, 4
      %s299 = sadd.s32 %s297, %s298
      %s300 = smul.addr %s299, 2
      %s301 = scalar_lea.vmem %s4, %s300
      %p302 = pneg %p188
      %p303 = pneg %p185
      %s304 = smul.u32 4, %s22
      %p305 = scmp.lt.s32.totalorder %s21, 1
      %s306 = scalar_select %p305, %s21, 1
      %p307 = scmp.lt.s32.totalorder %s304, 3
      %s308 = scalar_select %p307, %s304, 3
      %s309 = smul.addr %s306, 4
      %s310 = sadd.s32 %s308, %s309
      %s311 = smul.addr %s310, 2
      %s312 = scalar_lea.vmem %s5, %s311
      %s313 = smul.u32 4, %s22
      %p314 = scmp.lt.s32.totalorder %s313, 3
      %s315 = scalar_select %p314, %s313, 3
      %s316 = smul.addr %s315, 4
      %s317 = scalar_lea.vmem %s0, %s316
      %s318 = smul.u32 4, %s22
      %p319 = scmp.lt.s32.totalorder %s21, 1
      %s320 = scalar_select %p319, %s21, 1
      %s321 = smul.addr %s320, 2
      %s322 = scalar_lea.vmem %s1, %s321
      %s323 = smul.u32 4, %s22
      %p324 = scmp.lt.s32.totalorder %s21, 1
      %s325 = scalar_select %p324, %s21, 1
      %p326 = scmp.lt.s32.totalorder %s323, 3
      %s327 = scalar_select %p326, %s323, 3
      %s328 = smul.addr %s325, 4
      %s329 = sadd.s32 %s327, %s328
      %s330 = smul.addr %s329, 2
      %s331 = scalar_lea.vmem %s2, %s330
      %s332 = smul.u32 4, %s22
      %s333 = smul.u32 4, %s22
      %p334 = scmp.lt.s32.totalorder %s21, 1
      %s335 = scalar_select %p334, %s21, 1
      %p336 = scmp.lt.s32.totalorder %s333, 3
      %s337 = scalar_select %p336, %s333, 3
      %s338 = smul.addr %s335, 4
      %s339 = sadd.s32 %s337, %s338
      %s340 = smul.addr %s339, 2
      %s341 = scalar_lea.vmem %s3, %s340
      %s342 = smul.u32 4, %s22
      %s343 = smul.u32 4, %s22
      %p344 = scmp.lt.s32.totalorder %s21, 1
      %s345 = scalar_select %p344, %s21, 1
      %p346 = scmp.lt.s32.totalorder %s343, 3
      %s347 = scalar_select %p346, %s343, 3
      %s348 = smul.addr %s345, 4
      %s349 = sadd.s32 %s347, %s348
      %s350 = smul.addr %s349, 2
      %s351 = scalar_lea.vmem %s4, %s350
      %s352 = smul.u32 4, %s22
      %s353 = smul.u32 4, %s22
      %p354 = scmp.lt.s32.totalorder %s21, 1
      %s355 = scalar_select %p354, %s21, 1
      %p356 = scmp.lt.s32.totalorder %s353, 3
      %s357 = scalar_select %p356, %s353, 3
      %s358 = smul.addr %s355, 4
      %s359 = sadd.s32 %s357, %s358
      %s360 = smul.addr %s359, 2
      %s361 = scalar_lea.vmem %s5, %s360
      %s362 = smul.u32 4, %s22
      %v364 = vld [vmem:[%s322] sm:$0x3]
      %v365 = vld [vmem:[%s317] sm:$0xff]
      %v366 = vld [vmem:[%s317 + $0x8] sm:$0xff]
      %v367 = vld [vmem:[%s317 + $0x10] sm:$0xff]
      %v368 = vld [vmem:[%s317 + $0x18] sm:$0xff]
      %v369 = vld [vmem:[%s317 + $0x20] sm:$0xff]
      %v370 = vld [vmem:[%s317 + $0x28] sm:$0xff]
      %v371 = vld [vmem:[%s317 + $0x30] sm:$0xff]
      %v372 = vld [vmem:[%s317 + $0x38] sm:$0xff]
      %v373 = vld [vmem:[%s317 + $0x40] sm:$0xff]
      %v374 = vld [vmem:[%s317 + $0x48] sm:$0xff]
      %v375 = vld [vmem:[%s317 + $0x50] sm:$0xff]
      %v376 = vld [vmem:[%s317 + $0x58] sm:$0xff]
      %v377 = vld [vmem:[%s317 + $0x60] sm:$0xff]
      %v378 = vld [vmem:[%s317 + $0x68] sm:$0xff]
      %v379 = vld [vmem:[%s317 + $0x70] sm:$0xff]
      %v380 = vld [vmem:[%s317 + $0x78] sm:$0xff]
      %v397 = vunpack.c.l.b16 %v365
      %v398 = vunpack.c.h.b16 %v365
      %v399 = vunpack.c.l.b16 %v366
      %v400 = vunpack.c.h.b16 %v366
      %v401 = vunpack.c.l.b16 %v367
      %v402 = vunpack.c.h.b16 %v367
      %v403 = vunpack.c.l.b16 %v368
      %v404 = vunpack.c.h.b16 %v368
      %v405 = vunpack.c.l.b16 %v369
      %v406 = vunpack.c.h.b16 %v369
      %v407 = vunpack.c.l.b16 %v370
      %v408 = vunpack.c.h.b16 %v370
      %v409 = vunpack.c.l.b16 %v371
      %v410 = vunpack.c.h.b16 %v371
      %v411 = vunpack.c.l.b16 %v372
      %v412 = vunpack.c.h.b16 %v372
      %v413 = vunpack.c.l.b16 %v373
      %v414 = vunpack.c.h.b16 %v373
      %v415 = vunpack.c.l.b16 %v374
      %v416 = vunpack.c.h.b16 %v374
      %v417 = vunpack.c.l.b16 %v375
      %v418 = vunpack.c.h.b16 %v375
      %v419 = vunpack.c.l.b16 %v376
      %v420 = vunpack.c.h.b16 %v376
      %v421 = vunpack.c.l.b16 %v377
      %v422 = vunpack.c.h.b16 %v377
      %v423 = vunpack.c.l.b16 %v378
      %v424 = vunpack.c.h.b16 %v378
      %v425 = vunpack.c.l.b16 %v379
      %v426 = vunpack.c.h.b16 %v379
      %v427 = vunpack.c.l.b16 %v380
      %v428 = vunpack.c.h.b16 %v380
      %v429 = vpack.c.b16 %v401, %v397
      %v430 = vpack.c.b16 %v402, %v398
      %v431 = vpack.c.b16 %v403, %v399
      %v432 = vpack.c.b16 %v404, %v400
      %v433 = vpack.c.b16 %v409, %v405
      %v434 = vpack.c.b16 %v410, %v406
      %v435 = vpack.c.b16 %v411, %v407
      %v436 = vpack.c.b16 %v412, %v408
      %v437 = vpack.c.b16 %v417, %v413
      %v438 = vpack.c.b16 %v418, %v414
      %v439 = vpack.c.b16 %v419, %v415
      %v440 = vpack.c.b16 %v420, %v416
      %v441 = vpack.c.b16 %v425, %v421
      %v442 = vpack.c.b16 %v426, %v422
      %v443 = vpack.c.b16 %v427, %v423
      %v444 = vpack.c.b16 %v428, %v424
      %vm461 = vcmask 523264
      %v463 = vsel %vm461, %v364, 0
      %465 = vmatpush.bf16.msra.mxu0 0
      %466 = vmatpush.bf16.msra.mxu0 0
      %467 = vmatpush.bf16.msra.mxu0 0
      %468 = vmatpush.bf16.msra.mxu0 0
      %469 = vmatpush.bf16.msra.mxu0 %v441
      %470 = vmatpush.bf16.msra.mxu0 %v437
      %471 = vmatpush.bf16.msra.mxu0 %v433
      %472 = vmatpush.bf16.msra.mxu0 %v429
      %473 = vmatmul.bf16.gmra.mxu0 %v463
      %v474 = vpop.f32.mrf.mxu0
      %v475 = vadd.f32 0.0, %v474
      %v476 = vpop.f32.mrf.mxu0
      %477 = vdwg.mxu0
      %478 = vmatpush.bf16.msra.mxu0 0
      %479 = vmatpush.bf16.msra.mxu0 0
      %480 = vmatpush.bf16.msra.mxu0 0
      %481 = vmatpush.bf16.msra.mxu0 0
      %482 = vmatpush.bf16.msra.mxu0 %v442
      %483 = vmatpush.bf16.msra.mxu0 %v438
      %484 = vmatpush.bf16.msra.mxu0 %v434
      %485 = vmatpush.bf16.msra.mxu0 %v430
      %486 = vmatmul.bf16.gmra.mxu0 %v463
      %v487 = vpop.f32.mrf.mxu0
      %v488 = vadd.f32 0.0, %v487
      %v489 = vpop.f32.mrf.mxu0
      %490 = vdwg.mxu0
      %491 = vmatpush.bf16.msra.mxu0 0
      %492 = vmatpush.bf16.msra.mxu0 0
      %493 = vmatpush.bf16.msra.mxu0 0
      %494 = vmatpush.bf16.msra.mxu0 0
      %495 = vmatpush.bf16.msra.mxu0 %v443
      %496 = vmatpush.bf16.msra.mxu0 %v439
      %497 = vmatpush.bf16.msra.mxu0 %v435
      %498 = vmatpush.bf16.msra.mxu0 %v431
      %499 = vmatmul.bf16.gmra.mxu0 %v463
      %v500 = vpop.f32.mrf.mxu0
      %v501 = vadd.f32 0.0, %v500
      %v502 = vpop.f32.mrf.mxu0
      %503 = vdwg.mxu0
      %504 = vmatpush.bf16.msra.mxu0 0
      %505 = vmatpush.bf16.msra.mxu0 0
      %506 = vmatpush.bf16.msra.mxu0 0
      %507 = vmatpush.bf16.msra.mxu0 0
      %508 = vmatpush.bf16.msra.mxu0 %v444
      %509 = vmatpush.bf16.msra.mxu0 %v440
      %510 = vmatpush.bf16.msra.mxu0 %v436
      %511 = vmatpush.bf16.msra.mxu0 %v432
      %512 = vmatmul.bf16.gmra.mxu0 %v463
      %v513 = vpop.f32.mrf.mxu0
      %v514 = vadd.f32 0.0, %v513
      %v515 = vpop.f32.mrf.mxu0
      %516 = vdwg.mxu0
      %v517 = vld [vmem:[%s331] sm:$0xff]
      %v518 = vunpack.c.l.bf16 %v517
      %v519 = vunpack.c.h.bf16 %v517
      %v520 = vld [vmem:[%s341] sm:$0xff]
      %v521 = vunpack.c.l.bf16 %v520
      %v522 = vunpack.c.h.bf16 %v520
      %v523 = vmul.f32 %v518, %v521
      %v524 = vmul.f32 %v519, %v522
      %v525 = vadd.f32 %v518, %v523
      %v526 = vadd.f32 %v519, %v524
      %v527 = vsub.f32 1.0, %v521
      %v528 = vsub.f32 1.0, %v522
      %v533 = vrot.slane %v488, 4
      %v534 = vrot.slane %v514, 4
      %vm535 = vcmask 1043456
      %v536 = vsel %vm535, %v475, %v533
      %v537 = vsel %vm535, %v501, %v534
      %v540 = vmul.f32 %v527, %v536
      %v541 = vmul.f32 %v528, %v537
      %v542 = vadd.f32 %v525, %v540
      %v543 = vadd.f32 %v526, %v541
      %546 = vst [vmem:[#allocation1] ss:$2 sm:$0xff] %v542
      %s547 = scalar_lea.vmem [#allocation1], 16
      %548 = vst [vmem:[%s547] ss:$2 sm:$0xff] %v543
      %v549 = vld.sshfl [vmem:[#allocation1] sm:$0xff pattern:$0x75316420]
      %v550 = vld.sshfl [vmem:[#allocation1 + $0x8] sm:$0xff pattern:$0x75316420]
      %v551 = vld.sshfl [vmem:[#allocation1 + $0x10] sm:$0xff pattern:$0x75316420]
      %v552 = vld.sshfl [vmem:[#allocation1 + $0x18] sm:$0xff pattern:$0x75316420]
      %v557 = vpack.c.bf16 %v550, %v549
      %v558 = vpack.c.bf16 %v552, %v551
      %v561 = vrot.slane %v557, 2
      %v562 = vrot.slane %v558, 4
      %v563 = vrot.slane %v558, 6
      %vm564 = vcmask 1041408
      %v567 = vsel %vm564, %v557, %v561
      %vm568 = vcmask 1045508
      %v571 = vsel %vm568, %v562, %v563
      %v572 = vsel %vm535, %v567, %v571
      %574 = vst [vmem:[%s351] sm:$0xff] %v572
      %v575 = vmul.f32 %v521, %v542
      %v576 = vmul.f32 %v522, %v543
      %579 = vst [vmem:[#allocation1] ss:$2 sm:$0xff] %v575
      %s580 = scalar_lea.vmem [#allocation1], 16
      %581 = vst [vmem:[%s580] ss:$2 sm:$0xff] %v576
      %v582 = vld.sshfl [vmem:[#allocation1] sm:$0xff pattern:$0x75316420]
      %v583 = vld.sshfl [vmem:[#allocation1 + $0x8] sm:$0xff pattern:$0x75316420]
      %v584 = vld.sshfl [vmem:[#allocation1 + $0x10] sm:$0xff pattern:$0x75316420]
      %v585 = vld.sshfl [vmem:[#allocation1 + $0x18] sm:$0xff pattern:$0x75316420]
      %v590 = vpack.c.bf16 %v583, %v582
      %v591 = vpack.c.bf16 %v585, %v584
      %v594 = vrot.slane %v590, 2
      %v595 = vrot.slane %v591, 4
      %v596 = vrot.slane %v591, 6
      %v599 = vsel %vm564, %v590, %v594
      %v602 = vsel %vm568, %v595, %v596
      %v603 = vsel %vm535, %v599, %v602
      %605 = vst [vmem:[%s361] sm:$0xff] %v603
      %s606 = smul.u32 4, %s22
      %p607 = scmp.lt.s32.totalorder %s21, 1
      %s608 = scalar_select %p607, %s21, 1
      %p609 = scmp.lt.s32.totalorder %s606, 3
      %s610 = scalar_select %p609, %s606, 3
      %s611 = smul.addr %s608, 4
      %s612 = sadd.s32 %s610, %s611
      %s613 = smul.addr %s612, 2
      %s614 = scalar_lea.vmem %s4, %s613
      %s615 = smul.u32 4, %s22
      %p616 = scmp.lt.s32.totalorder %s21, 1
      %s617 = scalar_select %p616, %s21, 1
      %p618 = scmp.lt.s32.totalorder %s615, 3
      %s619 = scalar_select %p618, %s615, 3
      %s620 = smul.addr %s617, 4
      %s621 = sadd.s32 %s619, %s620
      %s622 = smul.addr %s621, 2
      %s623 = scalar_lea.vmem %s5, %s622
      // Predicated region
      $region37: #{sba_forward.8} parent=35 // pred_check
        %p624 = pneg %p157
      $region38: #{sba_forward.8} parent=35 // pred_check_branch
        %626 = sbr.rel (%p624) target = $region40
      $region39: #{sba_forward.8} parent=35 // pred_region
        %s627 = smul.u32 4, %s22
      $region40: #{sba_forward.8} parent=35 // pred_fallthru
        _
      // Predicated region
      $region41: #{sba_forward.8} parent=35 // pred_check
        %p628 = pneg %p185
      $region42: #{sba_forward.8} parent=35 // pred_check_branch
        %630 = sbr.rel (%p628) target = $region44
      $region43: #{sba_forward.8} parent=35 // pred_region
        %s631 = smul.u32 4, %s22
      $region44: #{sba_forward.8} parent=35 // pred_fallthru
        _
    $region36: #{sba_forward.8} parent=5 // pred_fallthru
      _
    %p632 = scmp.le.s32.totalorder 2, %s12
    // Predicated region
    $region45: #{sba_forward.8} parent=5 // pred_check
      %p633 = pneg %p632
    $region46: #{sba_forward.8} parent=5 // pred_check_branch
      %635 = sbr.rel (%p633) target = $region48
    $region47: #{sba_forward.8} parent=5 // pred_region
      %s636 = ssub.s32 %s12, 2
      // Predicated region
      $region49: #{sba_forward.8} parent=47 // pred_check
        %p637 = pneg %p163
      $region50: #{sba_forward.8} parent=47 // pred_check_branch
        %639 = sbr.rel (%p637) target = $region52
      $region51: #{sba_forward.8} parent=47 // pred_region
        %s640 = smul.u32 4, %s24
        %p641 = scmp.lt.s32.totalorder %s23, 1
        %s642 = scalar_select %p641, %s23, 1
        %p643 = scmp.lt.s32.totalorder %s640, 3
        %s644 = scalar_select %p643, %s640, 3
        %s645 = smul.addr %s642, 4
        %s646 = sadd.s32 %s644, %s645
        %s647 = smul.addr %s646, 2
        %s648 = scalar_lea.vmem %s4, %s647
      $region52: #{sba_forward.8} parent=47 // pred_fallthru
        _
      // Predicated region
      $region53: #{sba_forward.8} parent=47 // pred_check
        %p649 = pneg %p191
      $region54: #{sba_forward.8} parent=47 // pred_check_branch
        %651 = sbr.rel (%p649) target = $region56
      $region55: #{sba_forward.8} parent=47 // pred_region
        %s652 = smul.u32 4, %s24
        %p653 = scmp.lt.s32.totalorder %s23, 1
        %s654 = scalar_select %p653, %s23, 1
        %p655 = scmp.lt.s32.totalorder %s652, 3
        %s656 = scalar_select %p655, %s652, 3
        %s657 = smul.addr %s654, 4
        %s658 = sadd.s32 %s656, %s657
        %s659 = smul.addr %s658, 2
        %s660 = scalar_lea.vmem %s5, %s659
      $region56: #{sba_forward.8} parent=47 // pred_fallthru
        _
    $region48: #{sba_forward.8} parent=5 // pred_fallthru
      _
  $region6: #{sba_forward.8} parent=0 // loop_footer
    %s16 = sadd.s32 1, %s12
  $region7: #{sba_forward.8} parent=0 // loop_footer_branch
    %11 = sbr.rel target = $region3
  $region8: #{sba_forward.8} parent=0 // loop_exit
    _

// kernel: sba_forward.9
$region0: #{sba_forward.9}
  #allocation0 [shape = 'u32[]', space=smem, size = 0x4, offset = 0x4, fixed_abs, tag = 'smem constant byte address 0x4 - core index']
  #allocation1 [shape = 'u32[72,128]{1,0:T(1,128)}', space=vmem, size = 0x9000, scoped, tag = 'internal scratch']
  %s0 = inlined_call_operand.vmem [shape: bf16[512,64], index: 0, kind: input, shape index: {}]
  %s1 = inlined_call_operand.vmem [shape: bf16[2,4,512], index: 1, kind: input, shape index: {}]
  %s2 = inlined_call_operand.vmem [shape: bf16[2,4,64], index: 2, kind: input, shape index: {}]
  %s3 = inlined_call_operand.vmem [shape: bf16[2,4,64], index: 3, kind: input, shape index: {}]
  %s4 = inlined_call_operand.vmem [shape: bf16[2,4,64], index: 4, kind: output, shape index: {}]
  %s5 = sld [smem:[#allocation0]]
  $region49: #{sba_forward.9} parent=0
    _
  %s7 = ssub.s32 1, %s5
  %s8 = scalar_select 0, %s7, %s5
  loop: start=0, step=1, limit=4
  $region2: #{sba_forward.9} parent=0 // loop_pre_header
    _
  $region3: #{sba_forward.9} parent=0 // loop_header
    %s10 = sphi 0, %s14
    %p11 = scmp.ge.s32.totalorder %s10, 4
    %s17 = sphi 0, %s29
    %s18 = sphi 0, %s25
    %s19 = sphi 0, %s17
    %s20 = sphi 0, %s18
    %s21 = sphi 0, %s19
    %s22 = sphi 0, %s20
    %s32 = sphi 0, %s34
    %s35 = sphi 0, %s32
    %s36 = sphi 0, %s35
    %s52 = sphi 0, %s36
    %s58 = sphi 0, %s60
    %s61 = sphi 0, %s58
    %s62 = sphi 0, %s61
    %s78 = sphi 0, %s62
    %s86 = sphi 0, %s88
    %s89 = sphi 0, %s86
    %s90 = sphi 0, %s89
    %s106 = sphi 0, %s90
    %s114 = sphi 0, %s116
    %s117 = sphi 0, %s114
    %s118 = sphi 0, %s117
    %s134 = sphi 0, %s118
    %s142 = sphi 0, %s144
    %s145 = sphi 0, %s142
    %s146 = sphi 0, %s145
    %s162 = sphi 0, %s146
  $region4: #{sba_forward.9} parent=0 // loop_header_branch
    %13 = sbr.rel (%p11) target = $region8
  $region5: #{sba_forward.9} parent=0 // loop_body
    %s15 = ssub.s32 %s10, 1
    %s16 = ssub.s32 %s10, 2
    %s23 = sadd.s32 1, %s18
    %p24 = scmp.ge.s32.totalorder %s23, 1
    %s25 = scalar_select %p24, 0, %s23
    %s26 = sadd.s32 1, %s17
    %s27 = scalar_select %p24, %s26, %s17
    %p28 = scmp.ge.s32.totalorder %s27, 2
    %s29 = scalar_select %p28, 0, %s27
    %s30 = ssub.s32 %s18, %s25
    %p31 = scmp.eq.s32.totalorder %s30, 0
    %s33 = sadd.s32 %s32, 1
    %s34 = scalar_select %p31, %s32, %s33
    %p37 = pneg %p31
    %p38 = scmp.eq.s32.totalorder %s10, 1
    %p39 = por %p37, %p38
    %p40 = scmp.ne.s32.totalorder %s32, %s35
    %p41 = scmp.eq.s32.totalorder %s10, 0
    %p42 = por %p40, %p41
    %p43 = scmp.ne.s32.totalorder %s32, %s35
    %p44 = scmp.eq.s32.totalorder %s15, 1
    %p45 = por %p43, %p44
    %p46 = scmp.ne.s32.totalorder %s35, %s36
    %p47 = scmp.eq.s32.totalorder %s15, 0
    %p48 = por %p46, %p47
    %p49 = scmp.ne.s32.totalorder %s35, %s36
    %p50 = scmp.eq.s32.totalorder %s16, 1
    %p51 = por %p49, %p50
    %p53 = scmp.ne.s32.totalorder %s36, %s52
    %p54 = scmp.eq.s32.totalorder %s16, 0
    %p55 = por %p53, %p54
    %s56 = ssub.s32 %s17, %s29
    %p57 = scmp.eq.s32.totalorder %s56, 0
    %s59 = sadd.s32 %s58, 1
    %s60 = scalar_select %p57, %s58, %s59
    %p63 = pneg %p57
    %p64 = scmp.eq.s32.totalorder %s10, 1
    %p65 = por %p63, %p64
    %p66 = scmp.ne.s32.totalorder %s58, %s61
    %p67 = scmp.eq.s32.totalorder %s10, 0
    %p68 = por %p66, %p67
    %p69 = scmp.ne.s32.totalorder %s58, %s61
    %p70 = scmp.eq.s32.totalorder %s15, 1
    %p71 = por %p69, %p70
    %p72 = scmp.ne.s32.totalorder %s61, %s62
    %p73 = scmp.eq.s32.totalorder %s15, 0
    %p74 = por %p72, %p73
    %p75 = scmp.ne.s32.totalorder %s61, %s62
    %p76 = scmp.eq.s32.totalorder %s16, 1
    %p77 = por %p75, %p76
    %p79 = scmp.ne.s32.totalorder %s62, %s78
    %p80 = scmp.eq.s32.totalorder %s16, 0
    %p81 = por %p79, %p80
    %s82 = ssub.s32 %s17, %s29
    %s83 = ssub.s32 %s18, %s25
    %s84 = sor.u32 %s82, %s83
    %p85 = scmp.eq.s32.totalorder %s84, 0
    %s87 = sadd.s32 %s86, 1
    %s88 = scalar_select %p85, %s86, %s87
    %p91 = pneg %p85
    %p92 = scmp.eq.s32.totalorder %s10, 1
    %p93 = por %p91, %p92
    %p94 = scmp.ne.s32.totalorder %s86, %s89
    %p95 = scmp.eq.s32.totalorder %s10, 0
    %p96 = por %p94, %p95
    %p97 = scmp.ne.s32.totalorder %s86, %s89
    %p98 = scmp.eq.s32.totalorder %s15, 1
    %p99 = por %p97, %p98
    %p100 = scmp.ne.s32.totalorder %s89, %s90
    %p101 = scmp.eq.s32.totalorder %s15, 0
    %p102 = por %p100, %p101
    %p103 = scmp.ne.s32.totalorder %s89, %s90
    %p104 = scmp.eq.s32.totalorder %s16, 1
    %p105 = por %p103, %p104
    %p107 = scmp.ne.s32.totalorder %s90, %s106
    %p108 = scmp.eq.s32.totalorder %s16, 0
    %p109 = por %p107, %p108
    %s110 = ssub.s32 %s17, %s29
    %s111 = ssub.s32 %s18, %s25
    %s112 = sor.u32 %s110, %s111
    %p113 = scmp.eq.s32.totalorder %s112, 0
    %s115 = sadd.s32 %s114, 1
    %s116 = scalar_select %p113, %s114, %s115
    %p119 = pneg %p113
    %p120 = scmp.eq.s32.totalorder %s10, 1
    %p121 = por %p119, %p120
    %p122 = scmp.ne.s32.totalorder %s114, %s117
    %p123 = scmp.eq.s32.totalorder %s10, 0
    %p124 = por %p122, %p123
    %p125 = scmp.ne.s32.totalorder %s114, %s117
    %p126 = scmp.eq.s32.totalorder %s15, 1
    %p127 = por %p125, %p126
    %p128 = scmp.ne.s32.totalorder %s117, %s118
    %p129 = scmp.eq.s32.totalorder %s15, 0
    %p130 = por %p128, %p129
    %p131 = scmp.ne.s32.totalorder %s117, %s118
    %p132 = scmp.eq.s32.totalorder %s16, 1
    %p133 = por %p131, %p132
    %p135 = scmp.ne.s32.totalorder %s118, %s134
    %p136 = scmp.eq.s32.totalorder %s16, 0
    %p137 = por %p135, %p136
    %s138 = ssub.s32 %s17, %s29
    %s139 = ssub.s32 %s18, %s25
    %s140 = sor.u32 %s138, %s139
    %p141 = scmp.eq.s32.totalorder %s140, 0
    %s143 = sadd.s32 %s142, 1
    %s144 = scalar_select %p141, %s142, %s143
    %p147 = pneg %p141
    %p148 = scmp.eq.s32.totalorder %s10, 1
    %p149 = por %p147, %p148
    %p150 = scmp.ne.s32.totalorder %s142, %s145
    %p151 = scmp.eq.s32.totalorder %s10, 0
    %p152 = por %p150, %p151
    %p153 = scmp.ne.s32.totalorder %s142, %s145
    %p154 = scmp.eq.s32.totalorder %s15, 1
    %p155 = por %p153, %p154
    %p156 = scmp.ne.s32.totalorder %s145, %s146
    %p157 = scmp.eq.s32.totalorder %s15, 0
    %p158 = por %p156, %p157
    %p159 = scmp.ne.s32.totalorder %s145, %s146
    %p160 = scmp.eq.s32.totalorder %s16, 1
    %p161 = por %p159, %p160
    %p163 = scmp.ne.s32.totalorder %s146, %s162
    %p164 = scmp.eq.s32.totalorder %s16, 0
    %p165 = por %p163, %p164
    %p166 = scmp.le.s32.totalorder 1, %s10
    %p167 = scmp.lt.s32.totalorder %s10, 3
    %p168 = pnand %p166, %p167
    %p169 = pneg %p168
    // Predicated region
    $region9: #{sba_forward.9} parent=5 // pred_check
      _
    $region10: #{sba_forward.9} parent=5 // pred_check_branch
      %171 = sbr.rel (%p168) target = $region12
    $region11: #{sba_forward.9} parent=5 // pred_region
      %s172 = ssub.s32 %s10, 1
      // Predicated region
      $region13: #{sba_forward.9} parent=11 // pred_check
        %p173 = pneg %p48
      $region14: #{sba_forward.9} parent=11 // pred_check_branch
        %175 = sbr.rel (%p173) target = $region16
      $region15: #{sba_forward.9} parent=11 // pred_region
        %p176 = scmp.lt.s32.totalorder %s20, 0
        %s177 = scalar_select %p176, %s20, 0
        %s178 = smul.addr %s177, 4
        %s179 = scalar_lea.vmem %s0, %s178
      $region16: #{sba_forward.9} parent=11 // pred_fallthru
        _
    $region12: #{sba_forward.9} parent=5 // pred_fallthru
      _
    %p180 = scmp.lt.s32.totalorder %s10, 2
    // Predicated region
    $region17: #{sba_forward.9} parent=5 // pred_check
      %p181 = pneg %p180
    $region18: #{sba_forward.9} parent=5 // pred_check_branch
      %183 = sbr.rel (%p181) target = $region20
    $region19: #{sba_forward.9} parent=5 // pred_region
      // Predicated region
      $region21: #{sba_forward.9} parent=19 // pred_check
        %p184 = pneg %p68
      $region22: #{sba_forward.9} parent=19 // pred_check_branch
        %186 = sbr.rel (%p184) target = $region24
      $region23: #{sba_forward.9} parent=19 // pred_region
        %p187 = scmp.lt.s32.totalorder %s17, 1
        %s188 = scalar_select %p187, %s17, 1
        %s189 = smul.addr %s188, 4
        %s190 = smul.addr %s189, 2
        %s191 = scalar_lea.vmem %s1, %s190
      $region24: #{sba_forward.9} parent=19 // pred_fallthru
        _
      // Predicated region
      $region25: #{sba_forward.9} parent=19 // pred_check
        %p192 = pneg %p96
      $region26: #{sba_forward.9} parent=19 // pred_check_branch
        %194 = sbr.rel (%p192) target = $region28
      $region27: #{sba_forward.9} parent=19 // pred_region
        %p195 = scmp.lt.s32.totalorder %s17, 1
        %s196 = scalar_select %p195, %s17, 1
        %p197 = scmp.lt.s32.totalorder %s18, 0
        %s198 = scalar_select %p197, %s18, 0
        %s199 = sadd.s32 %s198, %s196
        %s200 = smul.addr %s199, 2
        %s201 = scalar_lea.vmem %s2, %s200
      $region28: #{sba_forward.9} parent=19 // pred_fallthru
        _
      // Predicated region
      $region29: #{sba_forward.9} parent=19 // pred_check
        %p202 = pneg %p124
      $region30: #{sba_forward.9} parent=19 // pred_check_branch
        %204 = sbr.rel (%p202) target = $region32
      $region31: #{sba_forward.9} parent=19 // pred_region
        %p205 = scmp.lt.s32.totalorder %s17, 1
        %s206 = scalar_select %p205, %s17, 1
        %p207 = scmp.lt.s32.totalorder %s18, 0
        %s208 = scalar_select %p207, %s18, 0
        %s209 = sadd.s32 %s208, %s206
        %s210 = smul.addr %s209, 2
        %s211 = scalar_lea.vmem %s3, %s210
      $region32: #{sba_forward.9} parent=19 // pred_fallthru
        _
    $region20: #{sba_forward.9} parent=5 // pred_fallthru
      _
    %p212 = scmp.le.s32.totalorder 1, %s10
    %p213 = scmp.lt.s32.totalorder %s10, 3
    %p214 = pnand %p212, %p213
    %p215 = pneg %p214
    // Predicated region
    $region33: #{sba_forward.9} parent=5 // pred_check
      _
    $region34: #{sba_forward.9} parent=5 // pred_check_branch
      %217 = sbr.rel (%p214) target = $region36
    $region35: #{sba_forward.9} parent=5 // pred_region
      %s218 = ssub.s32 %s10, 1
      %p219 = scmp.lt.s32.totalorder %s20, 0
      %s220 = scalar_select %p219, %s20, 0
      %s221 = smul.addr %s220, 4
      %s222 = scalar_lea.vmem %s0, %s221
      %p223 = pneg %p48
      %p224 = pneg %p45
      %p225 = scmp.lt.s32.totalorder %s19, 1
      %s226 = scalar_select %p225, %s19, 1
      %s227 = smul.addr %s226, 4
      %s228 = smul.addr %s227, 2
      %s229 = scalar_lea.vmem %s1, %s228
      %p230 = pneg %p74
      %p231 = pneg %p71
      %p232 = scmp.lt.s32.totalorder %s19, 1
      %s233 = scalar_select %p232, %s19, 1
      %p234 = scmp.lt.s32.totalorder %s20, 0
      %s235 = scalar_select %p234, %s20, 0
      %s236 = sadd.s32 %s235, %s233
      %s237 = smul.addr %s236, 2
      %s238 = scalar_lea.vmem %s2, %s237
      %p239 = pneg %p102
      %p240 = pneg %p99
      %p241 = scmp.lt.s32.totalorder %s19, 1
      %s242 = scalar_select %p241, %s19, 1
      %p243 = scmp.lt.s32.totalorder %s20, 0
      %s244 = scalar_select %p243, %s20, 0
      %s245 = sadd.s32 %s244, %s242
      %s246 = smul.addr %s245, 2
      %s247 = scalar_lea.vmem %s3, %s246
      %p248 = pneg %p130
      %p249 = pneg %p127
      %p250 = pneg %p158
      %p251 = pneg %p155
      %p252 = scmp.lt.s32.totalorder %s19, 1
      %s253 = scalar_select %p252, %s19, 1
      %p254 = scmp.lt.s32.totalorder %s20, 0
      %s255 = scalar_select %p254, %s20, 0
      %s256 = sadd.s32 %s255, %s253
      %s257 = smul.addr %s256, 2
      %s258 = scalar_lea.vmem %s4, %s257
      %p259 = scmp.lt.s32.totalorder %s20, 0
      %s260 = scalar_select %p259, %s20, 0
      %s261 = smul.addr %s260, 4
      %s262 = scalar_lea.vmem %s0, %s261
      %p263 = scmp.lt.s32.totalorder %s19, 1
      %s264 = scalar_select %p263, %s19, 1
      %s265 = smul.addr %s264, 4
      %s266 = smul.addr %s265, 2
      %s267 = scalar_lea.vmem %s1, %s266
      %p268 = scmp.lt.s32.totalorder %s19, 1
      %s269 = scalar_select %p268, %s19, 1
      %p270 = scmp.lt.s32.totalorder %s20, 0
      %s271 = scalar_select %p270, %s20, 0
      %s272 = sadd.s32 %s271, %s269
      %s273 = smul.addr %s272, 2
      %s274 = scalar_lea.vmem %s2, %s273
      %p275 = scmp.lt.s32.totalorder %s19, 1
      %s276 = scalar_select %p275, %s19, 1
      %p277 = scmp.lt.s32.totalorder %s20, 0
      %s278 = scalar_select %p277, %s20, 0
      %s279 = sadd.s32 %s278, %s276
      %s280 = smul.addr %s279, 2
      %s281 = scalar_lea.vmem %s3, %s280
      %p282 = scmp.lt.s32.totalorder %s19, 1
      %s283 = scalar_select %p282, %s19, 1
      %p284 = scmp.lt.s32.totalorder %s20, 0
      %s285 = scalar_select %p284, %s20, 0
      %s286 = sadd.s32 %s285, %s283
      %s287 = smul.addr %s286, 2
      %s288 = scalar_lea.vmem %s4, %s287
      %v289 = vld [vmem:[%s267] sm:$0xff]
      %v290 = vld [vmem:[%s262] sm:$0xf]
      %v291 = vld [vmem:[%s262 + $0x4] sm:$0xf]
      %v292 = vld [vmem:[%s262 + $0x8] sm:$0xf]
      %v293 = vld [vmem:[%s262 + $0xc] sm:$0xf]
      %v294 = vld [vmem:[%s262 + $0x10] sm:$0xf]
      %v295 = vld [vmem:[%s262 + $0x14] sm:$0xf]
      %v296 = vld [vmem:[%s262 + $0x18] sm:$0xf]
      %v297 = vld [vmem:[%s262 + $0x1c] sm:$0xf]
      %v298 = vld [vmem:[%s262 + $0x20] sm:$0xf]
      %v299 = vld [vmem:[%s262 + $0x24] sm:$0xf]
      %v300 = vld [vmem:[%s262 + $0x28] sm:$0xf]
      %v301 = vld [vmem:[%s262 + $0x2c] sm:$0xf]
      %v302 = vld [vmem:[%s262 + $0x30] sm:$0xf]
      %v303 = vld [vmem:[%s262 + $0x34] sm:$0xf]
      %v304 = vld [vmem:[%s262 + $0x38] sm:$0xf]
      %v305 = vld [vmem:[%s262 + $0x3c] sm:$0xf]
      %v306 = vld [vmem:[%s262 + $0x40] sm:$0xf]
      %v307 = vld [vmem:[%s262 + $0x44] sm:$0xf]
      %v308 = vld [vmem:[%s262 + $0x48] sm:$0xf]
      %v309 = vld [vmem:[%s262 + $0x4c] sm:$0xf]
      %v310 = vld [vmem:[%s262 + $0x50] sm:$0xf]
      %v311 = vld [vmem:[%s262 + $0x54] sm:$0xf]
      %v312 = vld [vmem:[%s262 + $0x58] sm:$0xf]
      %v313 = vld [vmem:[%s262 + $0x5c] sm:$0xf]
      %v314 = vld [vmem:[%s262 + $0x60] sm:$0xf]
      %v315 = vld [vmem:[%s262 + $0x64] sm:$0xf]
      %v316 = vld [vmem:[%s262 + $0x68] sm:$0xf]
      %v317 = vld [vmem:[%s262 + $0x6c] sm:$0xf]
      %v318 = vld [vmem:[%s262 + $0x70] sm:$0xf]
      %v319 = vld [vmem:[%s262 + $0x74] sm:$0xf]
      %v320 = vld [vmem:[%s262 + $0x78] sm:$0xf]
      %v321 = vld [vmem:[%s262 + $0x7c] sm:$0xf]
      %v322 = vld [vmem:[%s262 + $0x80] sm:$0xf]
      %v323 = vld [vmem:[%s262 + $0x84] sm:$0xf]
      %v324 = vld [vmem:[%s262 + $0x88] sm:$0xf]
      %v325 = vld [vmem:[%s262 + $0x8c] sm:$0xf]
      %v326 = vld [vmem:[%s262 + $0x90] sm:$0xf]
      %v327 = vld [vmem:[%s262 + $0x94] sm:$0xf]
      %v328 = vld [vmem:[%s262 + $0x98] sm:$0xf]
      %v329 = vld [vmem:[%s262 + $0x9c] sm:$0xf]
      %v330 = vld [vmem:[%s262 + $0xa0] sm:$0xf]
      %v331 = vld [vmem:[%s262 + $0xa4] sm:$0xf]
      %v332 = vld [vmem:[%s262 + $0xa8] sm:$0xf]
      %v333 = vld [vmem:[%s262 + $0xac] sm:$0xf]
      %v334 = vld [vmem:[%s262 + $0xb0] sm:$0xf]
      %v335 = vld [vmem:[%s262 + $0xb4] sm:$0xf]
      %v336 = vld [vmem:[%s262 + $0xb8] sm:$0xf]
      %v337 = vld [vmem:[%s262 + $0xbc] sm:$0xf]
      %v338 = vld [vmem:[%s262 + $0xc0] sm:$0xf]
      %v339 = vld [vmem:[%s262 + $0xc4] sm:$0xf]
      %v340 = vld [vmem:[%s262 + $0xc8] sm:$0xf]
      %v341 = vld [vmem:[%s262 + $0xcc] sm:$0xf]
      %v342 = vld [vmem:[%s262 + $0xd0] sm:$0xf]
      %v343 = vld [vmem:[%s262 + $0xd4] sm:$0xf]
      %v344 = vld [vmem:[%s262 + $0xd8] sm:$0xf]
      %v345 = vld [vmem:[%s262 + $0xdc] sm:$0xf]
      %v346 = vld [vmem:[%s262 + $0xe0] sm:$0xf]
      %v347 = vld [vmem:[%s262 + $0xe4] sm:$0xf]
      %v348 = vld [vmem:[%s262 + $0xe8] sm:$0xf]
      %v349 = vld [vmem:[%s262 + $0xec] sm:$0xf]
      %v350 = vld [vmem:[%s262 + $0xf0] sm:$0xf]
      %v351 = vld [vmem:[%s262 + $0xf4] sm:$0xf]
      %v352 = vld [vmem:[%s262 + $0xf8] sm:$0xf]
      %v353 = vld [vmem:[%s262 + $0xfc] sm:$0xf]
      %355 = vst [vmem:[#allocation1] ss:$4 sm:$0xff] %v289
      %v356 = vld.sshfl [vmem:[#allocation1] sm:$0xff pattern:$0x73625140]
      %v357 = vld.sshfl [vmem:[#allocation1 + $0x8] sm:$0xff pattern:$0x73625140]
      %v358 = vld.sshfl [vmem:[#allocation1 + $0x10] sm:$0xff pattern:$0x73625140]
      %v359 = vld.sshfl [vmem:[#allocation1 + $0x18] sm:$0xff pattern:$0x73625140]
      %v428 = vunpack.c.l.b16 %v290
      %v429 = vunpack.c.l.b16 %v291
      %v430 = vunpack.c.l.b16 %v292
      %v431 = vunpack.c.l.b16 %v293
      %v432 = vunpack.c.l.b16 %v294
      %v433 = vunpack.c.l.b16 %v295
      %v434 = vunpack.c.l.b16 %v296
      %v435 = vunpack.c.l.b16 %v297
      %v436 = vunpack.c.l.b16 %v298
      %v437 = vunpack.c.l.b16 %v299
      %v438 = vunpack.c.l.b16 %v300
      %v439 = vunpack.c.l.b16 %v301
      %v440 = vunpack.c.l.b16 %v302
      %v441 = vunpack.c.l.b16 %v303
      %v442 = vunpack.c.l.b16 %v304
      %v443 = vunpack.c.l.b16 %v305
      %v444 = vunpack.c.l.b16 %v306
      %v445 = vunpack.c.l.b16 %v307
      %v446 = vunpack.c.l.b16 %v308
      %v447 = vunpack.c.l.b16 %v309
      %v448 = vunpack.c.l.b16 %v310
      %v449 = vunpack.c.l.b16 %v311
      %v450 = vunpack.c.l.b16 %v312
      %v451 = vunpack.c.l.b16 %v313
      %v452 = vunpack.c.l.b16 %v314
      %v453 = vunpack.c.l.b16 %v315
      %v454 = vunpack.c.l.b16 %v316
      %v455 = vunpack.c.l.b16 %v317
      %v456 = vunpack.c.l.b16 %v318
      %v457 = vunpack.c.l.b16 %v319
      %v458 = vunpack.c.l.b16 %v320
      %v459 = vunpack.c.l.b16 %v321
      %v460 = vunpack.c.l.b16 %v322
      %v461 = vunpack.c.l.b16 %v323
      %v462 = vunpack.c.l.b16 %v324
      %v463 = vunpack.c.l.b16 %v325
      %v464 = vunpack.c.l.b16 %v326
      %v465 = vunpack.c.l.b16 %v327
      %v466 = vunpack.c.l.b16 %v328
      %v467 = vunpack.c.l.b16 %v329
      %v468 = vunpack.c.l.b16 %v330
      %v469 = vunpack.c.l.b16 %v331
      %v470 = vunpack.c.l.b16 %v332
      %v471 = vunpack.c.l.b16 %v333
      %v472 = vunpack.c.l.b16 %v334
      %v473 = vunpack.c.l.b16 %v335
      %v474 = vunpack.c.l.b16 %v336
      %v475 = vunpack.c.l.b16 %v337
      %v476 = vunpack.c.l.b16 %v338
      %v477 = vunpack.c.l.b16 %v339
      %v478 = vunpack.c.l.b16 %v340
      %v479 = vunpack.c.l.b16 %v341
      %v480 = vunpack.c.l.b16 %v342
      %v481 = vunpack.c.l.b16 %v343
      %v482 = vunpack.c.l.b16 %v344
      %v483 = vunpack.c.l.b16 %v345
      %v484 = vunpack.c.l.b16 %v346
      %v485 = vunpack.c.l.b16 %v347
      %v486 = vunpack.c.l.b16 %v348
      %v487 = vunpack.c.l.b16 %v349
      %v488 = vunpack.c.l.b16 %v350
      %v489 = vunpack.c.l.b16 %v351
      %v490 = vunpack.c.l.b16 %v352
      %v491 = vunpack.c.l.b16 %v353
      %v492 = vpack.c.b16 %v429, %v428
      %v493 = vpack.c.b16 %v431, %v430
      %v494 = vpack.c.b16 %v433, %v432
      %v495 = vpack.c.b16 %v435, %v434
      %v496 = vpack.c.b16 %v437, %v436
      %v497 = vpack.c.b16 %v439, %v438
      %v498 = vpack.c.b16 %v441, %v440
      %v499 = vpack.c.b16 %v443, %v442
      %v500 = vpack.c.b16 %v445, %v444
      %v501 = vpack.c.b16 %v447, %v446
      %v502 = vpack.c.b16 %v449, %v448
      %v503 = vpack.c.b16 %v451, %v450
      %v504 = vpack.c.b16 %v453, %v452
      %v505 = vpack.c.b16 %v455, %v454
      %v506 = vpack.c.b16 %v457, %v456
      %v507 = vpack.c.b16 %v459, %v458
      %v508 = vpack.c.b16 %v461, %v460
      %v509 = vpack.c.b16 %v463, %v462
      %v510 = vpack.c.b16 %v465, %v464
      %v511 = vpack.c.b16 %v467, %v466
      %v512 = vpack.c.b16 %v469, %v468
      %v513 = vpack.c.b16 %v471, %v470
      %v514 = vpack.c.b16 %v473, %v472
      %v515 = vpack.c.b16 %v475, %v474
      %v516 = vpack.c.b16 %v477, %v476
      %v517 = vpack.c.b16 %v479, %v478
      %v518 = vpack.c.b16 %v481, %v480
      %v519 = vpack.c.b16 %v483, %v482
      %v520 = vpack.c.b16 %v485, %v484
      %v521 = vpack.c.b16 %v487, %v486
      %v522 = vpack.c.b16 %v489, %v488
      %v523 = vpack.c.b16 %v491, %v490
      %556 = vmatpush.bf16.msra.mxu0 %v499
      %557 = vmatpush.bf16.msra.mxu0 %v498
      %558 = vmatpush.bf16.msra.mxu0 %v497
      %559 = vmatpush.bf16.msra.mxu0 %v496
      %560 = vmatpush.bf16.msra.mxu0 %v495
      %561 = vmatpush.bf16.msra.mxu0 %v494
      %562 = vmatpush.bf16.msra.mxu0 %v493
      %563 = vmatpush.bf16.msra.mxu0 %v492
      %564 = vmatmul.bf16.gmra.mxu0 %v356
      %v565 = vpop.f32.mrf.mxu0
      %v566 = vadd.f32 0.0, %v565
      %v567 = vpop.f32.mrf.mxu0
      %568 = vdwg.mxu0
      %569 = vmatpush.bf16.msra.mxu0 %v507
      %570 = vmatpush.bf16.msra.mxu0 %v506
      %571 = vmatpush.bf16.msra.mxu0 %v505
      %572 = vmatpush.bf16.msra.mxu0 %v504
      %573 = vmatpush.bf16.msra.mxu0 %v503
      %574 = vmatpush.bf16.msra.mxu0 %v502
      %575 = vmatpush.bf16.msra.mxu0 %v501
      %576 = vmatpush.bf16.msra.mxu0 %v500
      %577 = vmatmul.bf16.gmra.mxu0 %v357
      %v578 = vpop.f32.mrf.mxu0
      %v579 = vadd.f32 %v566, %v578
      %v580 = vpop.f32.mrf.mxu0
      %581 = vdwg.mxu0
      %582 = vmatpush.bf16.msra.mxu0 %v515
      %583 = vmatpush.bf16.msra.mxu0 %v514
      %584 = vmatpush.bf16.msra.mxu0 %v513
      %585 = vmatpush.bf16.msra.mxu0 %v512
      %586 = vmatpush.bf16.msra.mxu0 %v511
      %587 = vmatpush.bf16.msra.mxu0 %v510
      %588 = vmatpush.bf16.msra.mxu0 %v509
      %589 = vmatpush.bf16.msra.mxu0 %v508
      %590 = vmatmul.bf16.gmra.mxu0 %v358
      %v591 = vpop.f32.mrf.mxu0
      %v592 = vadd.f32 %v579, %v591
      %v593 = vpop.f32.mrf.mxu0
      %594 = vdwg.mxu0
      %595 = vmatpush.bf16.msra.mxu0 %v523
      %596 = vmatpush.bf16.msra.mxu0 %v522
      %597 = vmatpush.bf16.msra.mxu0 %v521
      %598 = vmatpush.bf16.msra.mxu0 %v520
      %599 = vmatpush.bf16.msra.mxu0 %v519
      %600 = vmatpush.bf16.msra.mxu0 %v518
      %601 = vmatpush.bf16.msra.mxu0 %v517
      %602 = vmatpush.bf16.msra.mxu0 %v516
      %603 = vmatmul.bf16.gmra.mxu0 %v359
      %v604 = vpop.f32.mrf.mxu0
      %v605 = vadd.f32 %v592, %v604
      %v606 = vpop.f32.mrf.mxu0
      %607 = vdwg.mxu0
      %v608 = vld [vmem:[%s274] sm:$0x3]
      %v609 = vunpack.c.l.bf16 %v608
      %v610 = vld [vmem:[%s281] sm:$0x3]
      %v611 = vunpack.c.l.bf16 %v610
      %v612 = vmul.f32 %v609, %v611
      %v613 = vadd.f32 %v609, %v612
      %v614 = vsub.f32 1.0, %v611
      %v615 = vmul.f32 %v614, %v605
      %v616 = vadd.f32 %v613, %v615
      %v617 = vpack.c.bf16 %v616, %v616
      %vm618 = vcmask 517120
      %619 = vst.msk [vmem:[%s288] sm:$0x3] %vm618, %v617
      %p620 = scmp.lt.s32.totalorder %s19, 1
      %s621 = scalar_select %p620, %s19, 1
      %p622 = scmp.lt.s32.totalorder %s20, 0
      %s623 = scalar_select %p622, %s20, 0
      %s624 = sadd.s32 %s623, %s621
      %s625 = smul.addr %s624, 2
      %s626 = scalar_lea.vmem %s4, %s625
      // Predicated region
      $region37: #{sba_forward.9} parent=35 // pred_check
        %p627 = pneg %p155
      $region38: #{sba_forward.9} parent=35 // pred_check_branch
        %629 = sbr.rel (%p627) target = $region40
      $region39: #{sba_forward.9} parent=35 // pred_region
        _
      $region40: #{sba_forward.9} parent=35 // pred_fallthru
        _
    $region36: #{sba_forward.9} parent=5 // pred_fallthru
      _
    %p630 = scmp.le.s32.totalorder 2, %s10
    // Predicated region
    $region41: #{sba_forward.9} parent=5 // pred_check
      %p631 = pneg %p630
    $region42: #{sba_forward.9} parent=5 // pred_check_branch
      %633 = sbr.rel (%p631) target = $region44
    $region43: #{sba_forward.9} parent=5 // pred_region
      %s634 = ssub.s32 %s10, 2
      // Predicated region
      $region45: #{sba_forward.9} parent=43 // pred_check
        %p635 = pneg %p161
      $region46: #{sba_forward.9} parent=43 // pred_check_branch
        %637 = sbr.rel (%p635) target = $region48
      $region47: #{sba_forward.9} parent=43 // pred_region
        %p638 = scmp.lt.s32.totalorder %s21, 1
        %s639 = scalar_select %p638, %s21, 1
        %p640 = scmp.lt.s32.totalorder %s22, 0
        %s641 = scalar_select %p640, %s22, 0
        %s642 = sadd.s32 %s641, %s639
        %s643 = smul.addr %s642, 2
        %s644 = scalar_lea.vmem %s4, %s643
      $region48: #{sba_forward.9} parent=43 // pred_fallthru
        _
    $region44: #{sba_forward.9} parent=5 // pred_fallthru
      _
  $region6: #{sba_forward.9} parent=0 // loop_footer
    %s14 = sadd.s32 1, %s10
  $region7: #{sba_forward.9} parent=0 // loop_footer_branch
    %9 = sbr.rel target = $region3
  $region8: #{sba_forward.9} parent=0 // loop_exit
    _

// kernel: sba_forward.10
$region0: #{sba_forward.10}
  #allocation0 [shape = 'u32[]', space=smem, size = 0x4, offset = 0x4, fixed_abs, tag = 'smem constant byte address 0x4 - core index']
  #allocation1 [shape = 'u32[72,128]{1,0:T(1,128)}', space=vmem, size = 0x9000, scoped, tag = 'internal scratch']
  %s0 = inlined_call_operand.vmem [shape: bf16[64,512], index: 0, kind: input, shape index: {}]
  %s1 = inlined_call_operand.vmem [shape: bf16[2,4,64], index: 1, kind: input, shape index: {}]
  %s2 = inlined_call_operand.vmem [shape: bf16[2,4,512], index: 2, kind: output, shape index: {}]
  %s3 = sld [smem:[#allocation0]]
  $region41: #{sba_forward.10} parent=0
    _
  %s5 = ssub.s32 1, %s3
  %s6 = scalar_select 0, %s5, %s3
  loop: start=0, step=1, limit=4
  $region2: #{sba_forward.10} parent=0 // loop_pre_header
    _
  $region3: #{sba_forward.10} parent=0 // loop_header
    %s8 = sphi 0, %s12
    %p9 = scmp.ge.s32.totalorder %s8, 4
    %s15 = sphi 0, %s27
    %s16 = sphi 0, %s23
    %s17 = sphi 0, %s15
    %s18 = sphi 0, %s16
    %s19 = sphi 0, %s17
    %s20 = sphi 0, %s18
    %s30 = sphi 0, %s32
    %s33 = sphi 0, %s30
    %s34 = sphi 0, %s33
    %s50 = sphi 0, %s34
    %s56 = sphi 0, %s58
    %s59 = sphi 0, %s56
    %s60 = sphi 0, %s59
    %s76 = sphi 0, %s60
    %s84 = sphi 0, %s86
    %s87 = sphi 0, %s84
    %s88 = sphi 0, %s87
    %s104 = sphi 0, %s88
  $region4: #{sba_forward.10} parent=0 // loop_header_branch
    %11 = sbr.rel (%p9) target = $region8
  $region5: #{sba_forward.10} parent=0 // loop_body
    %s13 = ssub.s32 %s8, 1
    %s14 = ssub.s32 %s8, 2
    %s21 = sadd.s32 1, %s16
    %p22 = scmp.ge.s32.totalorder %s21, 1
    %s23 = scalar_select %p22, 0, %s21
    %s24 = sadd.s32 1, %s15
    %s25 = scalar_select %p22, %s24, %s15
    %p26 = scmp.ge.s32.totalorder %s25, 2
    %s27 = scalar_select %p26, 0, %s25
    %s28 = ssub.s32 %s16, %s23
    %p29 = scmp.eq.s32.totalorder %s28, 0
    %s31 = sadd.s32 %s30, 1
    %s32 = scalar_select %p29, %s30, %s31
    %p35 = pneg %p29
    %p36 = scmp.eq.s32.totalorder %s8, 1
    %p37 = por %p35, %p36
    %p38 = scmp.ne.s32.totalorder %s30, %s33
    %p39 = scmp.eq.s32.totalorder %s8, 0
    %p40 = por %p38, %p39
    %p41 = scmp.ne.s32.totalorder %s30, %s33
    %p42 = scmp.eq.s32.totalorder %s13, 1
    %p43 = por %p41, %p42
    %p44 = scmp.ne.s32.totalorder %s33, %s34
    %p45 = scmp.eq.s32.totalorder %s13, 0
    %p46 = por %p44, %p45
    %p47 = scmp.ne.s32.totalorder %s33, %s34
    %p48 = scmp.eq.s32.totalorder %s14, 1
    %p49 = por %p47, %p48
    %p51 = scmp.ne.s32.totalorder %s34, %s50
    %p52 = scmp.eq.s32.totalorder %s14, 0
    %p53 = por %p51, %p52
    %s54 = ssub.s32 %s15, %s27
    %p55 = scmp.eq.s32.totalorder %s54, 0
    %s57 = sadd.s32 %s56, 1
    %s58 = scalar_select %p55, %s56, %s57
    %p61 = pneg %p55
    %p62 = scmp.eq.s32.totalorder %s8, 1
    %p63 = por %p61, %p62
    %p64 = scmp.ne.s32.totalorder %s56, %s59
    %p65 = scmp.eq.s32.totalorder %s8, 0
    %p66 = por %p64, %p65
    %p67 = scmp.ne.s32.totalorder %s56, %s59
    %p68 = scmp.eq.s32.totalorder %s13, 1
    %p69 = por %p67, %p68
    %p70 = scmp.ne.s32.totalorder %s59, %s60
    %p71 = scmp.eq.s32.totalorder %s13, 0
    %p72 = por %p70, %p71
    %p73 = scmp.ne.s32.totalorder %s59, %s60
    %p74 = scmp.eq.s32.totalorder %s14, 1
    %p75 = por %p73, %p74
    %p77 = scmp.ne.s32.totalorder %s60, %s76
    %p78 = scmp.eq.s32.totalorder %s14, 0
    %p79 = por %p77, %p78
    %s80 = ssub.s32 %s15, %s27
    %s81 = ssub.s32 %s16, %s23
    %s82 = sor.u32 %s80, %s81
    %p83 = scmp.eq.s32.totalorder %s82, 0
    %s85 = sadd.s32 %s84, 1
    %s86 = scalar_select %p83, %s84, %s85
    %p89 = pneg %p83
    %p90 = scmp.eq.s32.totalorder %s8, 1
    %p91 = por %p89, %p90
    %p92 = scmp.ne.s32.totalorder %s84, %s87
    %p93 = scmp.eq.s32.totalorder %s8, 0
    %p94 = por %p92, %p93
    %p95 = scmp.ne.s32.totalorder %s84, %s87
    %p96 = scmp.eq.s32.totalorder %s13, 1
    %p97 = por %p95, %p96
    %p98 = scmp.ne.s32.totalorder %s87, %s88
    %p99 = scmp.eq.s32.totalorder %s13, 0
    %p100 = por %p98, %p99
    %p101 = scmp.ne.s32.totalorder %s87, %s88
    %p102 = scmp.eq.s32.totalorder %s14, 1
    %p103 = por %p101, %p102
    %p105 = scmp.ne.s32.totalorder %s88, %s104
    %p106 = scmp.eq.s32.totalorder %s14, 0
    %p107 = por %p105, %p106
    %p108 = scmp.le.s32.totalorder 1, %s8
    %p109 = scmp.lt.s32.totalorder %s8, 3
    %p110 = pnand %p108, %p109
    %p111 = pneg %p110
    // Predicated region
    $region9: #{sba_forward.10} parent=5 // pred_check
      _
    $region10: #{sba_forward.10} parent=5 // pred_check_branch
      %113 = sbr.rel (%p110) target = $region12
    $region11: #{sba_forward.10} parent=5 // pred_region
      %s114 = ssub.s32 %s8, 1
      // Predicated region
      $region13: #{sba_forward.10} parent=11 // pred_check
        %p115 = pneg %p46
      $region14: #{sba_forward.10} parent=11 // pred_check_branch
        %117 = sbr.rel (%p115) target = $region16
      $region15: #{sba_forward.10} parent=11 // pred_region
        %s118 = smul.u32 4, %s18
        %p119 = scmp.lt.s32.totalorder %s118, 3
        %s120 = scalar_select %p119, %s118, 3
        %s121 = smul.addr %s120, 4
        %s122 = scalar_lea.vmem %s0, %s121
        %s123 = smul.u32 4, %s18
      $region16: #{sba_forward.10} parent=11 // pred_fallthru
        _
    $region12: #{sba_forward.10} parent=5 // pred_fallthru
      _
    %p124 = scmp.lt.s32.totalorder %s8, 2
    // Predicated region
    $region17: #{sba_forward.10} parent=5 // pred_check
      %p125 = pneg %p124
    $region18: #{sba_forward.10} parent=5 // pred_check_branch
      %127 = sbr.rel (%p125) target = $region20
    $region19: #{sba_forward.10} parent=5 // pred_region
      // Predicated region
      $region21: #{sba_forward.10} parent=19 // pred_check
        %p128 = pneg %p66
      $region22: #{sba_forward.10} parent=19 // pred_check_branch
        %130 = sbr.rel (%p128) target = $region24
      $region23: #{sba_forward.10} parent=19 // pred_region
        %p131 = scmp.lt.s32.totalorder %s15, 1
        %s132 = scalar_select %p131, %s15, 1
        %s133 = smul.addr %s132, 2
        %s134 = scalar_lea.vmem %s1, %s133
      $region24: #{sba_forward.10} parent=19 // pred_fallthru
        _
    $region20: #{sba_forward.10} parent=5 // pred_fallthru
      _
    %p135 = scmp.le.s32.totalorder 1, %s8
    %p136 = scmp.lt.s32.totalorder %s8, 3
    %p137 = pnand %p135, %p136
    %p138 = pneg %p137
    // Predicated region
    $region25: #{sba_forward.10} parent=5 // pred_check
      _
    $region26: #{sba_forward.10} parent=5 // pred_check_branch
      %140 = sbr.rel (%p137) target = $region28
    $region27: #{sba_forward.10} parent=5 // pred_region
      %s141 = ssub.s32 %s8, 1
      %s142 = smul.u32 4, %s18
      %p143 = scmp.lt.s32.totalorder %s142, 3
      %s144 = scalar_select %p143, %s142, 3
      %s145 = smul.addr %s144, 4
      %s146 = scalar_lea.vmem %s0, %s145
      %p147 = pneg %p46
      %p148 = pneg %p43
      %p149 = scmp.lt.s32.totalorder %s17, 1
      %s150 = scalar_select %p149, %s17, 1
      %s151 = smul.addr %s150, 2
      %s152 = scalar_lea.vmem %s1, %s151
      %p153 = pneg %p72
      %p154 = pneg %p69
      %p155 = pneg %p100
      %p156 = pneg %p97
      %s157 = smul.u32 4, %s18
      %p158 = scmp.lt.s32.totalorder %s17, 1
      %s159 = scalar_select %p158, %s17, 1
      %p160 = scmp.lt.s32.totalorder %s157, 3
      %s161 = scalar_select %p160, %s157, 3
      %s162 = smul.addr %s159, 4
      %s163 = sadd.s32 %s161, %s162
      %s164 = smul.addr %s163, 2
      %s165 = scalar_lea.vmem %s2, %s164
      %s166 = smul.u32 4, %s18
      %p167 = scmp.lt.s32.totalorder %s166, 3
      %s168 = scalar_select %p167, %s166, 3
      %s169 = smul.addr %s168, 4
      %s170 = scalar_lea.vmem %s0, %s169
      %s171 = smul.u32 4, %s18
      %p172 = scmp.lt.s32.totalorder %s17, 1
      %s173 = scalar_select %p172, %s17, 1
      %s174 = smul.addr %s173, 2
      %s175 = scalar_lea.vmem %s1, %s174
      %s176 = smul.u32 4, %s18
      %p177 = scmp.lt.s32.totalorder %s17, 1
      %s178 = scalar_select %p177, %s17, 1
      %p179 = scmp.lt.s32.totalorder %s176, 3
      %s180 = scalar_select %p179, %s176, 3
      %s181 = smul.addr %s178, 4
      %s182 = sadd.s32 %s180, %s181
      %s183 = smul.addr %s182, 2
      %s184 = scalar_lea.vmem %s2, %s183
      %s185 = smul.u32 4, %s18
      %v187 = vld [vmem:[%s175] sm:$0x3]
      %v188 = vld [vmem:[%s170] sm:$0xff]
      %v189 = vld [vmem:[%s170 + $0x8] sm:$0xff]
      %v190 = vld [vmem:[%s170 + $0x10] sm:$0xff]
      %v191 = vld [vmem:[%s170 + $0x18] sm:$0xff]
      %v192 = vld [vmem:[%s170 + $0x20] sm:$0xff]
      %v193 = vld [vmem:[%s170 + $0x28] sm:$0xff]
      %v194 = vld [vmem:[%s170 + $0x30] sm:$0xff]
      %v195 = vld [vmem:[%s170 + $0x38] sm:$0xff]
      %v196 = vld [vmem:[%s170 + $0x40] sm:$0xff]
      %v197 = vld [vmem:[%s170 + $0x48] sm:$0xff]
      %v198 = vld [vmem:[%s170 + $0x50] sm:$0xff]
      %v199 = vld [vmem:[%s170 + $0x58] sm:$0xff]
      %v200 = vld [vmem:[%s170 + $0x60] sm:$0xff]
      %v201 = vld [vmem:[%s170 + $0x68] sm:$0xff]
      %v202 = vld [vmem:[%s170 + $0x70] sm:$0xff]
      %v203 = vld [vmem:[%s170 + $0x78] sm:$0xff]
      %v220 = vunpack.c.l.b16 %v188
      %v221 = vunpack.c.h.b16 %v188
      %v222 = vunpack.c.l.b16 %v189
      %v223 = vunpack.c.h.b16 %v189
      %v224 = vunpack.c.l.b16 %v190
      %v225 = vunpack.c.h.b16 %v190
      %v226 = vunpack.c.l.b16 %v191
      %v227 = vunpack.c.h.b16 %v191
      %v228 = vunpack.c.l.b16 %v192
      %v229 = vunpack.c.h.b16 %v192
      %v230 = vunpack.c.l.b16 %v193
      %v231 = vunpack.c.h.b16 %v193
      %v232 = vunpack.c.l.b16 %v194
      %v233 = vunpack.c.h.b16 %v194
      %v234 = vunpack.c.l.b16 %v195
      %v235 = vunpack.c.h.b16 %v195
      %v236 = vunpack.c.l.b16 %v196
      %v237 = vunpack.c.h.b16 %v196
      %v238 = vunpack.c.l.b16 %v197
      %v239 = vunpack.c.h.b16 %v197
      %v240 = vunpack.c.l.b16 %v198
      %v241 = vunpack.c.h.b16 %v198
      %v242 = vunpack.c.l.b16 %v199
      %v243 = vunpack.c.h.b16 %v199
      %v244 = vunpack.c.l.b16 %v200
      %v245 = vunpack.c.h.b16 %v200
      %v246 = vunpack.c.l.b16 %v201
      %v247 = vunpack.c.h.b16 %v201
      %v248 = vunpack.c.l.b16 %v202
      %v249 = vunpack.c.h.b16 %v202
      %v250 = vunpack.c.l.b16 %v203
      %v251 = vunpack.c.h.b16 %v203
      %v252 = vpack.c.b16 %v224, %v220
      %v253 = vpack.c.b16 %v225, %v221
      %v254 = vpack.c.b16 %v226, %v222
      %v255 = vpack.c.b16 %v227, %v223
      %v256 = vpack.c.b16 %v232, %v228
      %v257 = vpack.c.b16 %v233, %v229
      %v258 = vpack.c.b16 %v234, %v230
      %v259 = vpack.c.b16 %v235, %v231
      %v260 = vpack.c.b16 %v240, %v236
      %v261 = vpack.c.b16 %v241, %v237
      %v262 = vpack.c.b16 %v242, %v238
      %v263 = vpack.c.b16 %v243, %v239
      %v264 = vpack.c.b16 %v248, %v244
      %v265 = vpack.c.b16 %v249, %v245
      %v266 = vpack.c.b16 %v250, %v246
      %v267 = vpack.c.b16 %v251, %v247
      %vm284 = vcmask 523264
      %v286 = vsel %vm284, %v187, 0
      %288 = vmatpush.bf16.msra.mxu0 0
      %289 = vmatpush.bf16.msra.mxu0 0
      %290 = vmatpush.bf16.msra.mxu0 0
      %291 = vmatpush.bf16.msra.mxu0 0
      %292 = vmatpush.bf16.msra.mxu0 %v264
      %293 = vmatpush.bf16.msra.mxu0 %v260
      %294 = vmatpush.bf16.msra.mxu0 %v256
      %295 = vmatpush.bf16.msra.mxu0 %v252
      %296 = vmatmul.bf16.gmra.mxu0 %v286
      %v297 = vpop.f32.mrf.mxu0
      %v298 = vadd.f32 0.0, %v297
      %v299 = vpop.f32.mrf.mxu0
      %300 = vdwg.mxu0
      %301 = vmatpush.bf16.msra.mxu0 0
      %302 = vmatpush.bf16.msra.mxu0 0
      %303 = vmatpush.bf16.msra.mxu0 0
      %304 = vmatpush.bf16.msra.mxu0 0
      %305 = vmatpush.bf16.msra.mxu0 %v265
      %306 = vmatpush.bf16.msra.mxu0 %v261
      %307 = vmatpush.bf16.msra.mxu0 %v257
      %308 = vmatpush.bf16.msra.mxu0 %v253
      %309 = vmatmul.bf16.gmra.mxu0 %v286
      %v310 = vpop.f32.mrf.mxu0
      %v311 = vadd.f32 0.0, %v310
      %v312 = vpop.f32.mrf.mxu0
      %313 = vdwg.mxu0
      %314 = vmatpush.bf16.msra.mxu0 0
      %315 = vmatpush.bf16.msra.mxu0 0
      %316 = vmatpush.bf16.msra.mxu0 0
      %317 = vmatpush.bf16.msra.mxu0 0
      %318 = vmatpush.bf16.msra.mxu0 %v266
      %319 = vmatpush.bf16.msra.mxu0 %v262
      %320 = vmatpush.bf16.msra.mxu0 %v258
      %321 = vmatpush.bf16.msra.mxu0 %v254
      %322 = vmatmul.bf16.gmra.mxu0 %v286
      %v323 = vpop.f32.mrf.mxu0
      %v324 = vadd.f32 0.0, %v323
      %v325 = vpop.f32.mrf.mxu0
      %326 = vdwg.mxu0
      %327 = vmatpush.bf16.msra.mxu0 0
      %328 = vmatpush.bf16.msra.mxu0 0
      %329 = vmatpush.bf16.msra.mxu0 0
      %330 = vmatpush.bf16.msra.mxu0 0
      %331 = vmatpush.bf16.msra.mxu0 %v267
      %332 = vmatpush.bf16.msra.mxu0 %v263
      %333 = vmatpush.bf16.msra.mxu0 %v259
      %334 = vmatpush.bf16.msra.mxu0 %v255
      %335 = vmatmul.bf16.gmra.mxu0 %v286
      %v336 = vpop.f32.mrf.mxu0
      %v337 = vadd.f32 0.0, %v336
      %v338 = vpop.f32.mrf.mxu0
      %339 = vdwg.mxu0
      %v340 = vpack.c.bf16 %v311, %v298
      %v341 = vpack.c.bf16 %v337, %v324
      %v344 = vrot.slane %v340, 2
      %v345 = vrot.slane %v341, 4
      %v346 = vrot.slane %v341, 6
      %vm347 = vcmask 1041408
      %v350 = vsel %vm347, %v340, %v344
      %vm351 = vcmask 1045508
      %v354 = vsel %vm351, %v345, %v346
      %vm355 = vcmask 1043456
      %v356 = vsel %vm355, %v350, %v354
      %358 = vst [vmem:[%s184] sm:$0xff] %v356
      %s359 = smul.u32 4, %s18
      %p360 = scmp.lt.s32.totalorder %s17, 1
      %s361 = scalar_select %p360, %s17, 1
      %p362 = scmp.lt.s32.totalorder %s359, 3
      %s363 = scalar_select %p362, %s359, 3
      %s364 = smul.addr %s361, 4
      %s365 = sadd.s32 %s363, %s364
      %s366 = smul.addr %s365, 2
      %s367 = scalar_lea.vmem %s2, %s366
      // Predicated region
      $region29: #{sba_forward.10} parent=27 // pred_check
        %p368 = pneg %p97
      $region30: #{sba_forward.10} parent=27 // pred_check_branch
        %370 = sbr.rel (%p368) target = $region32
      $region31: #{sba_forward.10} parent=27 // pred_region
        %s371 = smul.u32 4, %s18
      $region32: #{sba_forward.10} parent=27 // pred_fallthru
        _
    $region28: #{sba_forward.10} parent=5 // pred_fallthru
      _
    %p372 = scmp.le.s32.totalorder 2, %s8
    // Predicated region
    $region33: #{sba_forward.10} parent=5 // pred_check
      %p373 = pneg %p372
    $region34: #{sba_forward.10} parent=5 // pred_check_branch
      %375 = sbr.rel (%p373) target = $region36
    $region35: #{sba_forward.10} parent=5 // pred_region
      %s376 = ssub.s32 %s8, 2
      // Predicated region
      $region37: #{sba_forward.10} parent=35 // pred_check
        %p377 = pneg %p103
      $region38: #{sba_forward.10} parent=35 // pred_check_branch
        %379 = sbr.rel (%p377) target = $region40
      $region39: #{sba_forward.10} parent=35 // pred_region
        %s380 = smul.u32 4, %s20
        %p381 = scmp.lt.s32.totalorder %s19, 1
        %s382 = scalar_select %p381, %s19, 1
        %p383 = scmp.lt.s32.totalorder %s380, 3
        %s384 = scalar_select %p383, %s380, 3
        %s385 = smul.addr %s382, 4
        %s386 = sadd.s32 %s384, %s385
        %s387 = smul.addr %s386, 2
        %s388 = scalar_lea.vmem %s2, %s387
      $region40: #{sba_forward.10} parent=35 // pred_fallthru
        _
    $region36: #{sba_forward.10} parent=5 // pred_fallthru
      _
  $region6: #{sba_forward.10} parent=0 // loop_footer
    %s12 = sadd.s32 1, %s8
  $region7: #{sba_forward.10} parent=0 // loop_footer_branch
    %7 = sbr.rel target = $region3
  $region8: #{sba_forward.10} parent=0 // loop_exit
    _

// kernel: sba_forward.11
$region0: #{sba_forward.11}
  #allocation0 [shape = 'u32[]', space=smem, size = 0x4, offset = 0x4, fixed_abs, tag = 'smem constant byte address 0x4 - core index']
  #allocation1 [shape = 'u32[72,128]{1,0:T(1,128)}', space=vmem, size = 0x9000, scoped, tag = 'internal scratch']
  %s0 = inlined_call_operand.vmem [shape: bf16[2,8,1222], index: 0, kind: input, shape index: {}]
  %s1 = inlined_call_operand.vmem [shape: bf16[27,8,8], index: 1, kind: input, shape index: {}]
  %s2 = inlined_call_operand.vmem [shape: f32[8,1], index: 2, kind: input, shape index: {}]
  %s3 = inlined_call_operand.vmem [shape: f32[8,1], index: 3, kind: input, shape index: {}]
  %s4 = inlined_call_operand.vmem [shape: bf16[3,8], index: 4, kind: input, shape index: {}]
  %s5 = inlined_call_operand.vmem [shape: f32[2,3,1000], index: 5, kind: output, shape index: {}]
  %s6 = sld [smem:[#allocation0]]
  $region53: #{sba_forward.11} parent=0
    _
  %s8 = ssub.s32 1, %s6
  %s9 = scalar_select 0, %s8, %s6
  loop: start=0, step=1, limit=4
  $region2: #{sba_forward.11} parent=0 // loop_pre_header
    _
  $region3: #{sba_forward.11} parent=0 // loop_header
    %s11 = sphi 0, %s15
    %p12 = scmp.ge.s32.totalorder %s11, 4
    %s21 = sphi 0, %s23
    %s24 = sphi 0, %s21
    %s25 = sphi 0, %s24
    %s41 = sphi 0, %s25
    %s45 = sphi 0, %s45
    %s47 = sphi 0, %s45
    %s48 = sphi 0, %s47
    %s62 = sphi 0, %s48
    %s66 = sphi 0, %s66
    %s68 = sphi 0, %s66
    %s69 = sphi 0, %s68
    %s83 = sphi 0, %s69
    %s87 = sphi 0, %s87
    %s89 = sphi 0, %s87
    %s90 = sphi 0, %s89
    %s104 = sphi 0, %s90
    %s108 = sphi 0, %s108
    %s110 = sphi 0, %s108
    %s111 = sphi 0, %s110
    %s125 = sphi 0, %s111
    %s131 = sphi 0, %s133
    %s134 = sphi 0, %s131
    %s135 = sphi 0, %s134
    %s151 = sphi 0, %s135
  $region4: #{sba_forward.11} parent=0 // loop_header_branch
    %14 = sbr.rel (%p12) target = $region8
  $region5: #{sba_forward.11} parent=0 // loop_body
    %s16 = ssub.s32 %s11, 1
    %s17 = ssub.s32 %s11, 2
    %s18 = sadd.s32 %s11, 1
    %s19 = ssub.s32 %s11, %s18
    %p20 = scmp.eq.s32.totalorder %s19, 0
    %s22 = sadd.s32 %s21, 1
    %s23 = scalar_select %p20, %s21, %s22
    %p26 = pneg %p20
    %p27 = scmp.eq.s32.totalorder %s11, 1
    %p28 = por %p26, %p27
    %p29 = scmp.ne.s32.totalorder %s21, %s24
    %p30 = scmp.eq.s32.totalorder %s11, 0
    %p31 = por %p29, %p30
    %p32 = scmp.ne.s32.totalorder %s21, %s24
    %p33 = scmp.eq.s32.totalorder %s16, 1
    %p34 = por %p32, %p33
    %p35 = scmp.ne.s32.totalorder %s24, %s25
    %p36 = scmp.eq.s32.totalorder %s16, 0
    %p37 = por %p35, %p36
    %p38 = scmp.ne.s32.totalorder %s24, %s25
    %p39 = scmp.eq.s32.totalorder %s17, 1
    %p40 = por %p38, %p39
    %p42 = scmp.ne.s32.totalorder %s25, %s41
    %p43 = scmp.eq.s32.totalorder %s17, 0
    %p44 = por %p42, %p43
    %s46 = sadd.s32 %s45, 1
    %p49 = scmp.eq.s32.totalorder %s11, 1
    %p50 = scmp.ne.s32.totalorder %s45, %s47
    %p51 = scmp.eq.s32.totalorder %s11, 0
    %p52 = por %p50, %p51
    %p53 = scmp.ne.s32.totalorder %s45, %s47
    %p54 = scmp.eq.s32.totalorder %s16, 1
    %p55 = por %p53, %p54
    %p56 = scmp.ne.s32.totalorder %s47, %s48
    %p57 = scmp.eq.s32.totalorder %s16, 0
    %p58 = por %p56, %p57
    %p59 = scmp.ne.s32.totalorder %s47, %s48
    %p60 = scmp.eq.s32.totalorder %s17, 1
    %p61 = por %p59, %p60
    %p63 = scmp.ne.s32.totalorder %s48, %s62
    %p64 = scmp.eq.s32.totalorder %s17, 0
    %p65 = por %p63, %p64
    %s67 = sadd.s32 %s66, 1
    %p70 = scmp.eq.s32.totalorder %s11, 1
    %p71 = scmp.ne.s32.totalorder %s66, %s68
    %p72 = scmp.eq.s32.totalorder %s11, 0
    %p73 = por %p71, %p72
    %p74 = scmp.ne.s32.totalorder %s66, %s68
    %p75 = scmp.eq.s32.totalorder %s16, 1
    %p76 = por %p74, %p75
    %p77 = scmp.ne.s32.totalorder %s68, %s69
    %p78 = scmp.eq.s32.totalorder %s16, 0
    %p79 = por %p77, %p78
    %p80 = scmp.ne.s32.totalorder %s68, %s69
    %p81 = scmp.eq.s32.totalorder %s17, 1
    %p82 = por %p80, %p81
    %p84 = scmp.ne.s32.totalorder %s69, %s83
    %p85 = scmp.eq.s32.totalorder %s17, 0
    %p86 = por %p84, %p85
    %s88 = sadd.s32 %s87, 1
    %p91 = scmp.eq.s32.totalorder %s11, 1
    %p92 = scmp.ne.s32.totalorder %s87, %s89
    %p93 = scmp.eq.s32.totalorder %s11, 0
    %p94 = por %p92, %p93
    %p95 = scmp.ne.s32.totalorder %s87, %s89
    %p96 = scmp.eq.s32.totalorder %s16, 1
    %p97 = por %p95, %p96
    %p98 = scmp.ne.s32.totalorder %s89, %s90
    %p99 = scmp.eq.s32.totalorder %s16, 0
    %p100 = por %p98, %p99
    %p101 = scmp.ne.s32.totalorder %s89, %s90
    %p102 = scmp.eq.s32.totalorder %s17, 1
    %p103 = por %p101, %p102
    %p105 = scmp.ne.s32.totalorder %s90, %s104
    %p106 = scmp.eq.s32.totalorder %s17, 0
    %p107 = por %p105, %p106
    %s109 = sadd.s32 %s108, 1
    %p112 = scmp.eq.s32.totalorder %s11, 1
    %p113 = scmp.ne.s32.totalorder %s108, %s110
    %p114 = scmp.eq.s32.totalorder %s11, 0
    %p115 = por %p113, %p114
    %p116 = scmp.ne.s32.totalorder %s108, %s110
    %p117 = scmp.eq.s32.totalorder %s16, 1
    %p118 = por %p116, %p117
    %p119 = scmp.ne.s32.totalorder %s110, %s111
    %p120 = scmp.eq.s32.totalorder %s16, 0
    %p121 = por %p119, %p120
    %p122 = scmp.ne.s32.totalorder %s110, %s111
    %p123 = scmp.eq.s32.totalorder %s17, 1
    %p124 = por %p122, %p123
    %p126 = scmp.ne.s32.totalorder %s111, %s125
    %p127 = scmp.eq.s32.totalorder %s17, 0
    %p128 = por %p126, %p127
    %s129 = ssub.s32 %s11, %s18
    %p130 = scmp.eq.s32.totalorder %s129, 0
    %s132 = sadd.s32 %s131, 1
    %s133 = scalar_select %p130, %s131, %s132
    %p136 = pneg %p130
    %p137 = scmp.eq.s32.totalorder %s11, 1
    %p138 = por %p136, %p137
    %p139 = scmp.ne.s32.totalorder %s131, %s134
    %p140 = scmp.eq.s32.totalorder %s11, 0
    %p141 = por %p139, %p140
    %p142 = scmp.ne.s32.totalorder %s131, %s134
    %p143 = scmp.eq.s32.totalorder %s16, 1
    %p144 = por %p142, %p143
    %p145 = scmp.ne.s32.totalorder %s134, %s135
    %p146 = scmp.eq.s32.totalorder %s16, 0
    %p147 = por %p145, %p146
    %p148 = scmp.ne.s32.totalorder %s134, %s135
    %p149 = scmp.eq.s32.totalorder %s17, 1
    %p150 = por %p148, %p149
    %p152 = scmp.ne.s32.totalorder %s135, %s151
    %p153 = scmp.eq.s32.totalorder %s17, 0
    %p154 = por %p152, %p153
    %p155 = scmp.le.s32.totalorder 1, %s11
    %p156 = scmp.lt.s32.totalorder %s11, 3
    %p157 = pnand %p155, %p156
    %p158 = pneg %p157
    // Predicated region
    $region9: #{sba_forward.11} parent=5 // pred_check
      _
    $region10: #{sba_forward.11} parent=5 // pred_check_branch
      %160 = sbr.rel (%p157) target = $region12
    $region11: #{sba_forward.11} parent=5 // pred_region
      %s161 = ssub.s32 %s11, 1
      // Predicated region
      $region13: #{sba_forward.11} parent=11 // pred_check
        %p162 = pneg %p58
      $region14: #{sba_forward.11} parent=11 // pred_check_branch
        %164 = sbr.rel (%p162) target = $region16
      $region15: #{sba_forward.11} parent=11 // pred_region
        _
      $region16: #{sba_forward.11} parent=11 // pred_fallthru
        _
      // Predicated region
      $region17: #{sba_forward.11} parent=11 // pred_check
        %p165 = pneg %p79
      $region18: #{sba_forward.11} parent=11 // pred_check_branch
        %167 = sbr.rel (%p165) target = $region20
      $region19: #{sba_forward.11} parent=11 // pred_region
        _
      $region20: #{sba_forward.11} parent=11 // pred_fallthru
        _
      // Predicated region
      $region21: #{sba_forward.11} parent=11 // pred_check
        %p168 = pneg %p100
      $region22: #{sba_forward.11} parent=11 // pred_check_branch
        %170 = sbr.rel (%p168) target = $region24
      $region23: #{sba_forward.11} parent=11 // pred_region
        _
      $region24: #{sba_forward.11} parent=11 // pred_fallthru
        _
      // Predicated region
      $region25: #{sba_forward.11} parent=11 // pred_check
        %p171 = pneg %p121
      $region26: #{sba_forward.11} parent=11 // pred_check_branch
        %173 = sbr.rel (%p171) target = $region28
      $region27: #{sba_forward.11} parent=11 // pred_region
        _
      $region28: #{sba_forward.11} parent=11 // pred_fallthru
        _
    $region12: #{sba_forward.11} parent=5 // pred_fallthru
      _
    %p174 = scmp.lt.s32.totalorder %s11, 2
    // Predicated region
    $region29: #{sba_forward.11} parent=5 // pred_check
      %p175 = pneg %p174
    $region30: #{sba_forward.11} parent=5 // pred_check_branch
      %177 = sbr.rel (%p175) target = $region32
    $region31: #{sba_forward.11} parent=5 // pred_region
      // Predicated region
      $region33: #{sba_forward.11} parent=31 // pred_check
        %p178 = pneg %p31
      $region34: #{sba_forward.11} parent=31 // pred_check_branch
        %180 = sbr.rel (%p178) target = $region36
      $region35: #{sba_forward.11} parent=31 // pred_region
        %p181 = scmp.lt.s32.totalorder %s11, 1
        %s182 = scalar_select %p181, %s11, 1
        %s183 = smul.addr %s182, 10
        %s184 = smul.addr %s183, 4
        %s185 = scalar_lea.vmem %s0, %s184
      $region36: #{sba_forward.11} parent=31 // pred_fallthru
        _
    $region32: #{sba_forward.11} parent=5 // pred_fallthru
      _
    %p186 = scmp.le.s32.totalorder 1, %s11
    %p187 = scmp.lt.s32.totalorder %s11, 3
    %p188 = pnand %p186, %p187
    %p189 = pneg %p188
    // Predicated region
    $region37: #{sba_forward.11} parent=5 // pred_check
      _
    $region38: #{sba_forward.11} parent=5 // pred_check_branch
      %191 = sbr.rel (%p188) target = $region40
    $region39: #{sba_forward.11} parent=5 // pred_region
      %s192 = ssub.s32 %s11, 1
      %p193 = scmp.lt.s32.totalorder %s16, 1
      %s194 = scalar_select %p193, %s16, 1
      %s195 = smul.addr %s194, 10
      %s196 = smul.addr %s195, 4
      %s197 = scalar_lea.vmem %s0, %s196
      %p198 = pneg %p37
      %p199 = pneg %p34
      %p200 = pneg %p58
      %p201 = pneg %p55
      %p202 = pneg %p79
      %p203 = pneg %p76
      %p204 = pneg %p100
      %p205 = pneg %p97
      %p206 = pneg %p121
      %p207 = pneg %p118
      %p208 = pneg %p147
      %p209 = pneg %p144
      %p210 = scmp.lt.s32.totalorder %s16, 1
      %s211 = scalar_select %p210, %s16, 1
      %s212 = smul.addr %s211, 8
      %s213 = smul.addr %s212, 4
      %s214 = scalar_lea.vmem %s5, %s213
      %p215 = scmp.lt.s32.totalorder %s16, 1
      %s216 = scalar_select %p215, %s16, 1
      %s217 = smul.addr %s216, 10
      %s218 = smul.addr %s217, 4
      %s219 = scalar_lea.vmem %s0, %s218
      %p220 = scmp.lt.s32.totalorder %s16, 1
      %s221 = scalar_select %p220, %s16, 1
      %s222 = smul.addr %s221, 8
      %s223 = smul.addr %s222, 4
      %s224 = scalar_lea.vmem %s5, %s223
      %v226 = vld [vmem:[%s219] sm:$0xff]
      %v227 = vld [vmem:[%s219 + $0x8] sm:$0xff]
      %v228 = vld [vmem:[%s219 + $0x10] sm:$0xff]
      %v229 = vld [vmem:[%s219 + $0x18] sm:$0xff]
      %v230 = vld [vmem:[%s219 + $0x20] sm:$0xff]
      %v231 = vld [vmem:[%s1] sm:$0xf]
      %s232 = scalar_lea.vmem %s1, 4
      %v233 = vld [vmem:[%s232] sm:$0xf]
      %v238 = vunpack.c.l.b16 %v226
      %v239 = vunpack.c.h.b16 %v226
      %v240 = vunpack.c.l.b16 %v227
      %v241 = vunpack.c.h.b16 %v227
      %v242 = vunpack.c.l.b16 %v228
      %v243 = vunpack.c.h.b16 %v228
      %v244 = vunpack.c.l.b16 %v229
      %v245 = vunpack.c.h.b16 %v229
      %v246 = vpack.c.b16 %v238, %v238
      %v247 = vpack.c.b16 %v239, %v239
      %v248 = vpack.c.b16 %v240, %v240
      %v249 = vpack.c.b16 %v241, %v241
      %v250 = vpack.c.b16 %v242, %v242
      %v251 = vpack.c.b16 %v243, %v243
      %v252 = vpack.c.b16 %v244, %v244
      %v253 = vpack.c.b16 %v245, %v245
      %254 = vrot.lane.b32.xlu0 %v246, 127
      %v255 = vpop.permute.xlu0 %254
      %256 = vrot.lane.b32.xlu0 %v247, 127
      %v257 = vpop.permute.xlu0 %256
      %258 = vrot.lane.b32.xlu0 %v248, 127
      %v259 = vpop.permute.xlu0 %258
      %260 = vrot.lane.b32.xlu0 %v249, 127
      %v261 = vpop.permute.xlu0 %260
      %262 = vrot.lane.b32.xlu0 %v250, 127
      %v263 = vpop.permute.xlu0 %262
      %264 = vrot.lane.b32.xlu0 %v251, 127
      %v265 = vpop.permute.xlu0 %264
      %266 = vrot.lane.b32.xlu0 %v252, 127
      %v267 = vpop.permute.xlu0 %266
      %268 = vrot.lane.b32.xlu0 %v253, 127
      %v269 = vpop.permute.xlu0 %268
      %vm270 = vcmask 1039360
      %v271 = vsel %vm270, %v255, %v257
      %v272 = vsel %vm270, %v257, %v259
      %v273 = vsel %vm270, %v259, %v261
      %v274 = vsel %vm270, %v261, %v263
      %v275 = vsel %vm270, %v263, %v265
      %v276 = vsel %vm270, %v265, %v267
      %v277 = vsel %vm270, %v267, %v269
      %vm278 = vcmask 64512
      %v280 = vsel %vm278, %v233, 0
      %vm282 = vcmask 1043456
      %v284 = vsel %vm282, %v271, 0
      %v287 = vsel %vm282, %v272, 0
      %v290 = vsel %vm282, %v273, 0
      %v293 = vsel %vm282, %v274, 0
      %v296 = vsel %vm282, %v275, 0
      %v299 = vsel %vm282, %v276, 0
      %v302 = vsel %vm282, %v277, 0
      %v305 = vsel %vm282, %v269, 0
      %307 = vmatpush.bf16.msra.mxu0 0
      %308 = vmatpush.bf16.msra.mxu0 0
      %309 = vmatpush.bf16.msra.mxu0 0
      %310 = vmatpush.bf16.msra.mxu0 0
      %311 = vmatpush.bf16.msra.mxu0 0
      %312 = vmatpush.bf16.msra.mxu0 0
      %313 = vmatpush.bf16.msra.mxu0 0
      %314 = vmatpush.bf16.msra.mxu0 %v284
      %315 = vmatmul.bf16.gmra.mxu0 %v280
      %v316 = vpop.f32.mrf.mxu0
      %v317 = vadd.f32 0.0, %v316
      %v318 = vpop.f32.mrf.mxu0
      %319 = vdwg.mxu0
      %320 = vmatpush.bf16.msra.mxu0 0
      %321 = vmatpush.bf16.msra.mxu0 0
      %322 = vmatpush.bf16.msra.mxu0 0
      %323 = vmatpush.bf16.msra.mxu0 0
      %324 = vmatpush.bf16.msra.mxu0 0
      %325 = vmatpush.bf16.msra.mxu0 0
      %326 = vmatpush.bf16.msra.mxu0 0
      %327 = vmatpush.bf16.msra.mxu0 %v287
      %328 = vmatmul.bf16.gmra.mxu0 %v280
      %v329 = vpop.f32.mrf.mxu0
      %v330 = vadd.f32 0.0, %v329
      %v331 = vpop.f32.mrf.mxu0
      %332 = vdwg.mxu0
      %333 = vmatpush.bf16.msra.mxu0 0
      %334 = vmatpush.bf16.msra.mxu0 0
      %335 = vmatpush.bf16.msra.mxu0 0
      %336 = vmatpush.bf16.msra.mxu0 0
      %337 = vmatpush.bf16.msra.mxu0 0
      %338 = vmatpush.bf16.msra.mxu0 0
      %339 = vmatpush.bf16.msra.mxu0 0
      %340 = vmatpush.bf16.msra.mxu0 %v290
      %341 = vmatmul.bf16.gmra.mxu0 %v280
      %v342 = vpop.f32.mrf.mxu0
      %v343 = vadd.f32 0.0, %v342
      %v344 = vpop.f32.mrf.mxu0
      %345 = vdwg.mxu0
      %346 = vmatpush.bf16.msra.mxu0 0
      %347 = vmatpush.bf16.msra.mxu0 0
      %348 = vmatpush.bf16.msra.mxu0 0
      %349 = vmatpush.bf16.msra.mxu0 0
      %350 = vmatpush.bf16.msra.mxu0 0
      %351 = vmatpush.bf16.msra.mxu0 0
      %352 = vmatpush.bf16.msra.mxu0 0
      %353 = vmatpush.bf16.msra.mxu0 %v293
      %354 = vmatmul.bf16.gmra.mxu0 %v280
      %v355 = vpop.f32.mrf.mxu0
      %v356 = vadd.f32 0.0, %v355
      %v357 = vpop.f32.mrf.mxu0
      %358 = vdwg.mxu0
      %359 = vmatpush.bf16.msra.mxu0 0
      %360 = vmatpush.bf16.msra.mxu0 0
      %361 = vmatpush.bf16.msra.mxu0 0
      %362 = vmatpush.bf16.msra.mxu0 0
      %363 = vmatpush.bf16.msra.mxu0 0
      %364 = vmatpush.bf16.msra.mxu0 0
      %365 = vmatpush.bf16.msra.mxu0 0
      %366 = vmatpush.bf16.msra.mxu0 %v296
      %367 = vmatmul.bf16.gmra.mxu0 %v280
      %v368 = vpop.f32.mrf.mxu0
      %v369 = vadd.f32 0.0, %v368
      %v370 = vpop.f32.mrf.mxu0
      %371 = vdwg.mxu0
      %372 = vmatpush.bf16.msra.mxu0 0
      %373 = vmatpush.bf16.msra.mxu0 0
      %374 = vmatpush.bf16.msra.mxu0 0
      %375 = vmatpush.bf16.msra.mxu0 0
      %376 = vmatpush.bf16.msra.mxu0 0
      %377 = vmatpush.bf16.msra.mxu0 0
      %378 = vmatpush.bf16.msra.mxu0 0
      %379 = vmatpush.bf16.msra.mxu0 %v299
      %380 = vmatmul.bf16.gmra.mxu0 %v280
      %v381 = vpop.f32.mrf.mxu0
      %v382 = vadd.f32 0.0, %v381
      %v383 = vpop.f32.mrf.mxu0
      %384 = vdwg.mxu0
      %385 = vmatpush.bf16.msra.mxu0 0
      %386 = vmatpush.bf16.msra.mxu0 0
      %387 = vmatpush.bf16.msra.mxu0 0
      %388 = vmatpush.bf16.msra.mxu0 0
      %389 = vmatpush.bf16.msra.mxu0 0
      %390 = vmatpush.bf16.msra.mxu0 0
      %391 = vmatpush.bf16.msra.mxu0 0
      %392 = vmatpush.bf16.msra.mxu0 %v302
      %393 = vmatmul.bf16.gmra.mxu0 %v280
      %v394 = vpop.f32.mrf.mxu0
      %v395 = vadd.f32 0.0, %v394
      %v396 = vpop.f32.mrf.mxu0
      %397 = vdwg.mxu0
      %398 = vmatpush.bf16.msra.mxu0 0
      %399 = vmatpush.bf16.msra.mxu0 0
      %400 = vmatpush.bf16.msra.mxu0 0
      %401 = vmatpush.bf16.msra.mxu0 0
      %402 = vmatpush.bf16.msra.mxu0 0
      %403 = vmatpush.bf16.msra.mxu0 0
      %404 = vmatpush.bf16.msra.mxu0 0
      %405 = vmatpush.bf16.msra.mxu0 %v305
      %406 = vmatmul.bf16.gmra.mxu0 %v280
      %v407 = vpop.f32.mrf.mxu0
      %v408 = vadd.f32 0.0, %v407
      %v409 = vpop.f32.mrf.mxu0
      %410 = vdwg.mxu0
      %v412 = vsel %vm278, %v231, 0
      %v415 = vsel %vm282, %v246, 0
      %v418 = vsel %vm282, %v247, 0
      %v421 = vsel %vm282, %v248, 0
      %v424 = vsel %vm282, %v249, 0
      %v427 = vsel %vm282, %v250, 0
      %v430 = vsel %vm282, %v251, 0
      %v433 = vsel %vm282, %v252, 0
      %v436 = vsel %vm282, %v253, 0
      %438 = vmatpush.bf16.msra.mxu0 0
      %439 = vmatpush.bf16.msra.mxu0 0
      %440 = vmatpush.bf16.msra.mxu0 0
      %441 = vmatpush.bf16.msra.mxu0 0
      %442 = vmatpush.bf16.msra.mxu0 0
      %443 = vmatpush.bf16.msra.mxu0 0
      %444 = vmatpush.bf16.msra.mxu0 0
      %445 = vmatpush.bf16.msra.mxu0 %v415
      %446 = vmatmul.bf16.gmra.mxu0 %v412
      %v447 = vpop.f32.mrf.mxu0
      %v448 = vadd.f32 %v317, %v447
      %v449 = vpop.f32.mrf.mxu0
      %450 = vdwg.mxu0
      %451 = vmatpush.bf16.msra.mxu0 0
      %452 = vmatpush.bf16.msra.mxu0 0
      %453 = vmatpush.bf16.msra.mxu0 0
      %454 = vmatpush.bf16.msra.mxu0 0
      %455 = vmatpush.bf16.msra.mxu0 0
      %456 = vmatpush.bf16.msra.mxu0 0
      %457 = vmatpush.bf16.msra.mxu0 0
      %458 = vmatpush.bf16.msra.mxu0 %v418
      %459 = vmatmul.bf16.gmra.mxu0 %v412
      %v460 = vpop.f32.mrf.mxu0
      %v461 = vadd.f32 %v330, %v460
      %v462 = vpop.f32.mrf.mxu0
      %463 = vdwg.mxu0
      %464 = vmatpush.bf16.msra.mxu0 0
      %465 = vmatpush.bf16.msra.mxu0 0
      %466 = vmatpush.bf16.msra.mxu0 0
      %467 = vmatpush.bf16.msra.mxu0 0
      %468 = vmatpush.bf16.msra.mxu0 0
      %469 = vmatpush.bf16.msra.mxu0 0
      %470 = vmatpush.bf16.msra.mxu0 0
      %471 = vmatpush.bf16.msra.mxu0 %v421
      %472 = vmatmul.bf16.gmra.mxu0 %v412
      %v473 = vpop.f32.mrf.mxu0
      %v474 = vadd.f32 %v343, %v473
      %v475 = vpop.f32.mrf.mxu0
      %476 = vdwg.mxu0
      %477 = vmatpush.bf16.msra.mxu0 0
      %478 = vmatpush.bf16.msra.mxu0 0
      %479 = vmatpush.bf16.msra.mxu0 0
      %480 = vmatpush.bf16.msra.mxu0 0
      %481 = vmatpush.bf16.msra.mxu0 0
      %482 = vmatpush.bf16.msra.mxu0 0
      %483 = vmatpush.bf16.msra.mxu0 0
      %484 = vmatpush.bf16.msra.mxu0 %v424
      %485 = vmatmul.bf16.gmra.mxu0 %v412
      %v486 = vpop.f32.mrf.mxu0
      %v487 = vadd.f32 %v356, %v486
      %v488 = vpop.f32.mrf.mxu0
      %489 = vdwg.mxu0
      %490 = vmatpush.bf16.msra.mxu0 0
      %491 = vmatpush.bf16.msra.mxu0 0
      %492 = vmatpush.bf16.msra.mxu0 0
      %493 = vmatpush.bf16.msra.mxu0 0
      %494 = vmatpush.bf16.msra.mxu0 0
      %495 = vmatpush.bf16.msra.mxu0 0
      %496 = vmatpush.bf16.msra.mxu0 0
      %497 = vmatpush.bf16.msra.mxu0 %v427
      %498 = vmatmul.bf16.gmra.mxu0 %v412
      %v499 = vpop.f32.mrf.mxu0
      %v500 = vadd.f32 %v369, %v499
      %v501 = vpop.f32.mrf.mxu0
      %502 = vdwg.mxu0
      %503 = vmatpush.bf16.msra.mxu0 0
      %504 = vmatpush.bf16.msra.mxu0 0
      %505 = vmatpush.bf16.msra.mxu0 0
      %506 = vmatpush.bf16.msra.mxu0 0
      %507 = vmatpush.bf16.msra.mxu0 0
      %508 = vmatpush.bf16.msra.mxu0 0
      %509 = vmatpush.bf16.msra.mxu0 0
      %510 = vmatpush.bf16.msra.mxu0 %v430
      %511 = vmatmul.bf16.gmra.mxu0 %v412
      %v512 = vpop.f32.mrf.mxu0
      %v513 = vadd.f32 %v382, %v512
      %v514 = vpop.f32.mrf.mxu0
      %515 = vdwg.mxu0
      %516 = vmatpush.bf16.msra.mxu0 0
      %517 = vmatpush.bf16.msra.mxu0 0
      %518 = vmatpush.bf16.msra.mxu0 0
      %519 = vmatpush.bf16.msra.mxu0 0
      %520 = vmatpush.bf16.msra.mxu0 0
      %521 = vmatpush.bf16.msra.mxu0 0
      %522 = vmatpush.bf16.msra.mxu0 0
      %523 = vmatpush.bf16.msra.mxu0 %v433
      %524 = vmatmul.bf16.gmra.mxu0 %v412
      %v525 = vpop.f32.mrf.mxu0
      %v526 = vadd.f32 %v395, %v525
      %v527 = vpop.f32.mrf.mxu0
      %528 = vdwg.mxu0
      %529 = vmatpush.bf16.msra.mxu0 0
      %530 = vmatpush.bf16.msra.mxu0 0
      %531 = vmatpush.bf16.msra.mxu0 0
      %532 = vmatpush.bf16.msra.mxu0 0
      %533 = vmatpush.bf16.msra.mxu0 0
      %534 = vmatpush.bf16.msra.mxu0 0
      %535 = vmatpush.bf16.msra.mxu0 0
      %536 = vmatpush.bf16.msra.mxu0 %v436
      %537 = vmatmul.bf16.gmra.mxu0 %v412
      %v538 = vpop.f32.mrf.mxu0
      %v539 = vadd.f32 %v408, %v538
      %v540 = vpop.f32.mrf.mxu0
      %541 = vdwg.mxu0
      %s542 = scalar_lea.vmem %s1, 8
      %v543 = vld [vmem:[%s542] sm:$0xf]
      %544 = vrot.lane.b32.xlu0 %v246, 126
      %v545 = vpop.permute.xlu0 %544
      %546 = vrot.lane.b32.xlu0 %v247, 126
      %v547 = vpop.permute.xlu0 %546
      %548 = vrot.lane.b32.xlu0 %v248, 126
      %v549 = vpop.permute.xlu0 %548
      %550 = vrot.lane.b32.xlu0 %v249, 126
      %v551 = vpop.permute.xlu0 %550
      %552 = vrot.lane.b32.xlu0 %v250, 126
      %v553 = vpop.permute.xlu0 %552
      %554 = vrot.lane.b32.xlu0 %v251, 126
      %v555 = vpop.permute.xlu0 %554
      %556 = vrot.lane.b32.xlu0 %v252, 126
      %v557 = vpop.permute.xlu0 %556
      %558 = vrot.lane.b32.xlu0 %v253, 126
      %v559 = vpop.permute.xlu0 %558
      %vm560 = vcmask 1031168
      %v561 = vsel %vm560, %v545, %v547
      %v562 = vsel %vm560, %v547, %v549
      %v563 = vsel %vm560, %v549, %v551
      %v564 = vsel %vm560, %v551, %v553
      %v565 = vsel %vm560, %v553, %v555
      %v566 = vsel %vm560, %v555, %v557
      %v567 = vsel %vm560, %v557, %v559
      %v569 = vsel %vm278, %v543, 0
      %v572 = vsel %vm282, %v561, 0
      %v575 = vsel %vm282, %v562, 0
      %v578 = vsel %vm282, %v563, 0
      %v581 = vsel %vm282, %v564, 0
      %v584 = vsel %vm282, %v565, 0
      %v587 = vsel %vm282, %v566, 0
      %v590 = vsel %vm282, %v567, 0
      %v593 = vsel %vm282, %v559, 0
      %595 = vmatpush.bf16.msra.mxu0 0
      %596 = vmatpush.bf16.msra.mxu0 0
      %597 = vmatpush.bf16.msra.mxu0 0
      %598 = vmatpush.bf16.msra.mxu0 0
      %599 = vmatpush.bf16.msra.mxu0 0
      %600 = vmatpush.bf16.msra.mxu0 0
      %601 = vmatpush.bf16.msra.mxu0 0
      %602 = vmatpush.bf16.msra.mxu0 %v572
      %603 = vmatmul.bf16.gmra.mxu0 %v569
      %v604 = vpop.f32.mrf.mxu0
      %v605 = vadd.f32 0.0, %v604
      %v606 = vpop.f32.mrf.mxu0
      %607 = vdwg.mxu0
      %608 = vmatpush.bf16.msra.mxu0 0
      %609 = vmatpush.bf16.msra.mxu0 0
      %610 = vmatpush.bf16.msra.mxu0 0
      %611 = vmatpush.bf16.msra.mxu0 0
      %612 = vmatpush.bf16.msra.mxu0 0
      %613 = vmatpush.bf16.msra.mxu0 0
      %614 = vmatpush.bf16.msra.mxu0 0
      %615 = vmatpush.bf16.msra.mxu0 %v575
      %616 = vmatmul.bf16.gmra.mxu0 %v569
      %v617 = vpop.f32.mrf.mxu0
      %v618 = vadd.f32 0.0, %v617
      %v619 = vpop.f32.mrf.mxu0
      %620 = vdwg.mxu0
      %621 = vmatpush.bf16.msra.mxu0 0
      %622 = vmatpush.bf16.msra.mxu0 0
      %623 = vmatpush.bf16.msra.mxu0 0
      %624 = vmatpush.bf16.msra.mxu0 0
      %625 = vmatpush.bf16.msra.mxu0 0
      %626 = vmatpush.bf16.msra.mxu0 0
      %627 = vmatpush.bf16.msra.mxu0 0
      %628 = vmatpush.bf16.msra.mxu0 %v578
      %629 = vmatmul.bf16.gmra.mxu0 %v569
      %v630 = vpop.f32.mrf.mxu0
      %v631 = vadd.f32 0.0, %v630
      %v632 = vpop.f32.mrf.mxu0
      %633 = vdwg.mxu0
      %634 = vmatpush.bf16.msra.mxu0 0
      %635 = vmatpush.bf16.msra.mxu0 0
      %636 = vmatpush.bf16.msra.mxu0 0
      %637 = vmatpush.bf16.msra.mxu0 0
      %638 = vmatpush.bf16.msra.mxu0 0
      %639 = vmatpush.bf16.msra.mxu0 0
      %640 = vmatpush.bf16.msra.mxu0 0
      %641 = vmatpush.bf16.msra.mxu0 %v581
      %642 = vmatmul.bf16.gmra.mxu0 %v569
      %v643 = vpop.f32.mrf.mxu0
      %v644 = vadd.f32 0.0, %v643
      %v645 = vpop.f32.mrf.mxu0
      %646 = vdwg.mxu0
      %647 = vmatpush.bf16.msra.mxu0 0
      %648 = vmatpush.bf16.msra.mxu0 0
      %649 = vmatpush.bf16.msra.mxu0 0
      %650 = vmatpush.bf16.msra.mxu0 0
      %651 = vmatpush.bf16.msra.mxu0 0
      %652 = vmatpush.bf16.msra.mxu0 0
      %653 = vmatpush.bf16.msra.mxu0 0
      %654 = vmatpush.bf16.msra.mxu0 %v584
      %655 = vmatmul.bf16.gmra.mxu0 %v569
      %v656 = vpop.f32.mrf.mxu0
      %v657 = vadd.f32 0.0, %v656
      %v658 = vpop.f32.mrf.mxu0
      %659 = vdwg.mxu0
      %660 = vmatpush.bf16.msra.mxu0 0
      %661 = vmatpush.bf16.msra.mxu0 0
      %662 = vmatpush.bf16.msra.mxu0 0
      %663 = vmatpush.bf16.msra.mxu0 0
      %664 = vmatpush.bf16.msra.mxu0 0
      %665 = vmatpush.bf16.msra.mxu0 0
      %666 = vmatpush.bf16.msra.mxu0 0
      %667 = vmatpush.bf16.msra.mxu0 %v587
      %668 = vmatmul.bf16.gmra.mxu0 %v569
      %v669 = vpop.f32.mrf.mxu0
      %v670 = vadd.f32 0.0, %v669
      %v671 = vpop.f32.mrf.mxu0
      %672 = vdwg.mxu0
      %673 = vmatpush.bf16.msra.mxu0 0
      %674 = vmatpush.bf16.msra.mxu0 0
      %675 = vmatpush.bf16.msra.mxu0 0
      %676 = vmatpush.bf16.msra.mxu0 0
      %677 = vmatpush.bf16.msra.mxu0 0
      %678 = vmatpush.bf16.msra.mxu0 0
      %679 = vmatpush.bf16.msra.mxu0 0
      %680 = vmatpush.bf16.msra.mxu0 %v590
      %681 = vmatmul.bf16.gmra.mxu0 %v569
      %v682 = vpop.f32.mrf.mxu0
      %v683 = vadd.f32 0.0, %v682
      %v684 = vpop.f32.mrf.mxu0
      %685 = vdwg.mxu0
      %686 = vmatpush.bf16.msra.mxu0 0
      %687 = vmatpush.bf16.msra.mxu0 0
      %688 = vmatpush.bf16.msra.mxu0 0
      %689 = vmatpush.bf16.msra.mxu0 0
      %690 = vmatpush.bf16.msra.mxu0 0
      %691 = vmatpush.bf16.msra.mxu0 0
      %692 = vmatpush.bf16.msra.mxu0 0
      %693 = vmatpush.bf16.msra.mxu0 %v593
      %694 = vmatmul.bf16.gmra.mxu0 %v569
      %v695 = vpop.f32.mrf.mxu0
      %v696 = vadd.f32 0.0, %v695
      %v697 = vpop.f32.mrf.mxu0
      %698 = vdwg.mxu0
      %v699 = vadd.f32 %v448, %v605
      %v700 = vadd.f32 %v461, %v618
      %v701 = vadd.f32 %v474, %v631
      %v702 = vadd.f32 %v487, %v644
      %v703 = vadd.f32 %v500, %v657
      %v704 = vadd.f32 %v513, %v670
      %v705 = vadd.f32 %v526, %v683
      %v706 = vadd.f32 %v539, %v696
      %s707 = scalar_lea.vmem %s1, 12
      %v708 = vld [vmem:[%s707] sm:$0xf]
      %709 = vrot.lane.b32.xlu0 %v246, 118
      %v710 = vpop.permute.xlu0 %709
      %711 = vrot.lane.b32.xlu0 %v247, 118
      %v712 = vpop.permute.xlu0 %711
      %713 = vrot.lane.b32.xlu0 %v248, 118
      %v714 = vpop.permute.xlu0 %713
      %715 = vrot.lane.b32.xlu0 %v249, 118
      %v716 = vpop.permute.xlu0 %715
      %717 = vrot.lane.b32.xlu0 %v250, 118
      %v718 = vpop.permute.xlu0 %717
      %719 = vrot.lane.b32.xlu0 %v251, 118
      %v720 = vpop.permute.xlu0 %719
      %721 = vrot.lane.b32.xlu0 %v252, 118
      %v722 = vpop.permute.xlu0 %721
      %723 = vrot.lane.b32.xlu0 %v253, 118
      %v724 = vpop.permute.xlu0 %723
      %vm725 = vcmask 965632
      %v726 = vsel %vm725, %v710, %v712
      %v727 = vsel %vm725, %v712, %v714
      %v728 = vsel %vm725, %v714, %v716
      %v729 = vsel %vm725, %v716, %v718
      %v730 = vsel %vm725, %v718, %v720
      %v731 = vsel %vm725, %v720, %v722
      %v732 = vsel %vm725, %v722, %v724
      %v734 = vsel %vm278, %v708, 0
      %v737 = vsel %vm282, %v726, 0
      %v740 = vsel %vm282, %v727, 0
      %v743 = vsel %vm282, %v728, 0
      %v746 = vsel %vm282, %v729, 0
      %v749 = vsel %vm282, %v730, 0
      %v752 = vsel %vm282, %v731, 0
      %v755 = vsel %vm282, %v732, 0
      %v758 = vsel %vm282, %v724, 0
      %760 = vmatpush.bf16.msra.mxu0 0
      %761 = vmatpush.bf16.msra.mxu0 0
      %762 = vmatpush.bf16.msra.mxu0 0
      %763 = vmatpush.bf16.msra.mxu0 0
      %764 = vmatpush.bf16.msra.mxu0 0
      %765 = vmatpush.bf16.msra.mxu0 0
      %766 = vmatpush.bf16.msra.mxu0 0
      %767 = vmatpush.bf16.msra.mxu0 %v737
      %768 = vmatmul.bf16.gmra.mxu0 %v734
      %v769 = vpop.f32.mrf.mxu0
      %v770 = vadd.f32 0.0, %v769
      %v771 = vpop.f32.mrf.mxu0
      %772 = vdwg.mxu0
      %773 = vmatpush.bf16.msra.mxu0 0
      %774 = vmatpush.bf16.msra.mxu0 0
      %775 = vmatpush.bf16.msra.mxu0 0
      %776 = vmatpush.bf16.msra.mxu0 0
      %777 = vmatpush.bf16.msra.mxu0 0
      %778 = vmatpush.bf16.msra.mxu0 0
      %779 = vmatpush.bf16.msra.mxu0 0
      %780 = vmatpush.bf16.msra.mxu0 %v740
      %781 = vmatmul.bf16.gmra.mxu0 %v734
      %v782 = vpop.f32.mrf.mxu0
      %v783 = vadd.f32 0.0, %v782
      %v784 = vpop.f32.mrf.mxu0
      %785 = vdwg.mxu0
      %786 = vmatpush.bf16.msra.mxu0 0
      %787 = vmatpush.bf16.msra.mxu0 0
      %788 = vmatpush.bf16.msra.mxu0 0
      %789 = vmatpush.bf16.msra.mxu0 0
      %790 = vmatpush.bf16.msra.mxu0 0
      %791 = vmatpush.bf16.msra.mxu0 0
      %792 = vmatpush.bf16.msra.mxu0 0
      %793 = vmatpush.bf16.msra.mxu0 %v743
      %794 = vmatmul.bf16.gmra.mxu0 %v734
      %v795 = vpop.f32.mrf.mxu0
      %v796 = vadd.f32 0.0, %v795
      %v797 = vpop.f32.mrf.mxu0
      %798 = vdwg.mxu0
      %799 = vmatpush.bf16.msra.mxu0 0
      %800 = vmatpush.bf16.msra.mxu0 0
      %801 = vmatpush.bf16.msra.mxu0 0
      %802 = vmatpush.bf16.msra.mxu0 0
      %803 = vmatpush.bf16.msra.mxu0 0
      %804 = vmatpush.bf16.msra.mxu0 0
      %805 = vmatpush.bf16.msra.mxu0 0
      %806 = vmatpush.bf16.msra.mxu0 %v746
      %807 = vmatmul.bf16.gmra.mxu0 %v734
      %v808 = vpop.f32.mrf.mxu0
      %v809 = vadd.f32 0.0, %v808
      %v810 = vpop.f32.mrf.mxu0
      %811 = vdwg.mxu0
      %812 = vmatpush.bf16.msra.mxu0 0
      %813 = vmatpush.bf16.msra.mxu0 0
      %814 = vmatpush.bf16.msra.mxu0 0
      %815 = vmatpush.bf16.msra.mxu0 0
      %816 = vmatpush.bf16.msra.mxu0 0
      %817 = vmatpush.bf16.msra.mxu0 0
      %818 = vmatpush.bf16.msra.mxu0 0
      %819 = vmatpush.bf16.msra.mxu0 %v749
      %820 = vmatmul.bf16.gmra.mxu0 %v734
      %v821 = vpop.f32.mrf.mxu0
      %v822 = vadd.f32 0.0, %v821
      %v823 = vpop.f32.mrf.mxu0
      %824 = vdwg.mxu0
      %825 = vmatpush.bf16.msra.mxu0 0
      %826 = vmatpush.bf16.msra.mxu0 0
      %827 = vmatpush.bf16.msra.mxu0 0
      %828 = vmatpush.bf16.msra.mxu0 0
      %829 = vmatpush.bf16.msra.mxu0 0
      %830 = vmatpush.bf16.msra.mxu0 0
      %831 = vmatpush.bf16.msra.mxu0 0
      %832 = vmatpush.bf16.msra.mxu0 %v752
      %833 = vmatmul.bf16.gmra.mxu0 %v734
      %v834 = vpop.f32.mrf.mxu0
      %v835 = vadd.f32 0.0, %v834
      %v836 = vpop.f32.mrf.mxu0
      %837 = vdwg.mxu0
      %838 = vmatpush.bf16.msra.mxu0 0
      %839 = vmatpush.bf16.msra.mxu0 0
      %840 = vmatpush.bf16.msra.mxu0 0
      %841 = vmatpush.bf16.msra.mxu0 0
      %842 = vmatpush.bf16.msra.mxu0 0
      %843 = vmatpush.bf16.msra.mxu0 0
      %844 = vmatpush.bf16.msra.mxu0 0
      %845 = vmatpush.bf16.msra.mxu0 %v755
      %846 = vmatmul.bf16.gmra.mxu0 %v734
      %v847 = vpop.f32.mrf.mxu0
      %v848 = vadd.f32 0.0, %v847
      %v849 = vpop.f32.mrf.mxu0
      %850 = vdwg.mxu0
      %851 = vmatpush.bf16.msra.mxu0 0
      %852 = vmatpush.bf16.msra.mxu0 0
      %853 = vmatpush.bf16.msra.mxu0 0
      %854 = vmatpush.bf16.msra.mxu0 0
      %855 = vmatpush.bf16.msra.mxu0 0
      %856 = vmatpush.bf16.msra.mxu0 0
      %857 = vmatpush.bf16.msra.mxu0 0
      %858 = vmatpush.bf16.msra.mxu0 %v758
      %859 = vmatmul.bf16.gmra.mxu0 %v734
      %v860 = vpop.f32.mrf.mxu0
      %v861 = vadd.f32 0.0, %v860
      %v862 = vpop.f32.mrf.mxu0
      %863 = vdwg.mxu0
      %v864 = vadd.f32 %v699, %v770
      %v865 = vadd.f32 %v700, %v783
      %v866 = vadd.f32 %v701, %v796
      %v867 = vadd.f32 %v702, %v809
      %v868 = vadd.f32 %v703, %v822
      %v869 = vadd.f32 %v704, %v835
      %v870 = vadd.f32 %v705, %v848
      %v871 = vadd.f32 %v706, %v861
      %s872 = scalar_lea.vmem %s1, 16
      %v873 = vld [vmem:[%s872] sm:$0xf]
      %874 = vrot.lane.b32.xlu0 %v246, 117
      %v875 = vpop.permute.xlu0 %874
      %876 = vrot.lane.b32.xlu0 %v247, 117
      %v877 = vpop.permute.xlu0 %876
      %878 = vrot.lane.b32.xlu0 %v248, 117
      %v879 = vpop.permute.xlu0 %878
      %880 = vrot.lane.b32.xlu0 %v249, 117
      %v881 = vpop.permute.xlu0 %880
      %882 = vrot.lane.b32.xlu0 %v250, 117
      %v883 = vpop.permute.xlu0 %882
      %884 = vrot.lane.b32.xlu0 %v251, 117
      %v885 = vpop.permute.xlu0 %884
      %886 = vrot.lane.b32.xlu0 %v252, 117
      %v887 = vpop.permute.xlu0 %886
      %888 = vrot.lane.b32.xlu0 %v253, 117
      %v889 = vpop.permute.xlu0 %888
      %vm890 = vcmask 957440
      %v891 = vsel %vm890, %v875, %v877
      %v892 = vsel %vm890, %v877, %v879
      %v893 = vsel %vm890, %v879, %v881
      %v894 = vsel %vm890, %v881, %v883
      %v895 = vsel %vm890, %v883, %v885
      %v896 = vsel %vm890, %v885, %v887
      %v897 = vsel %vm890, %v887, %v889
      %v899 = vsel %vm278, %v873, 0
      %v902 = vsel %vm282, %v891, 0
      %v905 = vsel %vm282, %v892, 0
      %v908 = vsel %vm282, %v893, 0
      %v911 = vsel %vm282, %v894, 0
      %v914 = vsel %vm282, %v895, 0
      %v917 = vsel %vm282, %v896, 0
      %v920 = vsel %vm282, %v897, 0
      %v923 = vsel %vm282, %v889, 0
      %925 = vmatpush.bf16.msra.mxu0 0
      %926 = vmatpush.bf16.msra.mxu0 0
      %927 = vmatpush.bf16.msra.mxu0 0
      %928 = vmatpush.bf16.msra.mxu0 0
      %929 = vmatpush.bf16.msra.mxu0 0
      %930 = vmatpush.bf16.msra.mxu0 0
      %931 = vmatpush.bf16.msra.mxu0 0
      %932 = vmatpush.bf16.msra.mxu0 %v902
      %933 = vmatmul.bf16.gmra.mxu0 %v899
      %v934 = vpop.f32.mrf.mxu0
      %v935 = vadd.f32 0.0, %v934
      %v936 = vpop.f32.mrf.mxu0
      %937 = vdwg.mxu0
      %938 = vmatpush.bf16.msra.mxu0 0
      %939 = vmatpush.bf16.msra.mxu0 0
      %940 = vmatpush.bf16.msra.mxu0 0
      %941 = vmatpush.bf16.msra.mxu0 0
      %942 = vmatpush.bf16.msra.mxu0 0
      %943 = vmatpush.bf16.msra.mxu0 0
      %944 = vmatpush.bf16.msra.mxu0 0
      %945 = vmatpush.bf16.msra.mxu0 %v905
      %946 = vmatmul.bf16.gmra.mxu0 %v899
      %v947 = vpop.f32.mrf.mxu0
      %v948 = vadd.f32 0.0, %v947
      %v949 = vpop.f32.mrf.mxu0
      %950 = vdwg.mxu0
      %951 = vmatpush.bf16.msra.mxu0 0
      %952 = vmatpush.bf16.msra.mxu0 0
      %953 = vmatpush.bf16.msra.mxu0 0
      %954 = vmatpush.bf16.msra.mxu0 0
      %955 = vmatpush.bf16.msra.mxu0 0
      %956 = vmatpush.bf16.msra.mxu0 0
      %957 = vmatpush.bf16.msra.mxu0 0
      %958 = vmatpush.bf16.msra.mxu0 %v908
      %959 = vmatmul.bf16.gmra.mxu0 %v899
      %v960 = vpop.f32.mrf.mxu0
      %v961 = vadd.f32 0.0, %v960
      %v962 = vpop.f32.mrf.mxu0
      %963 = vdwg.mxu0
      %964 = vmatpush.bf16.msra.mxu0 0
      %965 = vmatpush.bf16.msra.mxu0 0
      %966 = vmatpush.bf16.msra.mxu0 0
      %967 = vmatpush.bf16.msra.mxu0 0
      %968 = vmatpush.bf16.msra.mxu0 0
      %969 = vmatpush.bf16.msra.mxu0 0
      %970 = vmatpush.bf16.msra.mxu0 0
      %971 = vmatpush.bf16.msra.mxu0 %v911
      %972 = vmatmul.bf16.gmra.mxu0 %v899
      %v973 = vpop.f32.mrf.mxu0
      %v974 = vadd.f32 0.0, %v973
      %v975 = vpop.f32.mrf.mxu0
      %976 = vdwg.mxu0
      %977 = vmatpush.bf16.msra.mxu0 0
      %978 = vmatpush.bf16.msra.mxu0 0
      %979 = vmatpush.bf16.msra.mxu0 0
      %980 = vmatpush.bf16.msra.mxu0 0
      %981 = vmatpush.bf16.msra.mxu0 0
      %982 = vmatpush.bf16.msra.mxu0 0
      %983 = vmatpush.bf16.msra.mxu0 0
      %984 = vmatpush.bf16.msra.mxu0 %v914
      %985 = vmatmul.bf16.gmra.mxu0 %v899
      %v986 = vpop.f32.mrf.mxu0
      %v987 = vadd.f32 0.0, %v986
      %v988 = vpop.f32.mrf.mxu0
      %989 = vdwg.mxu0
      %990 = vmatpush.bf16.msra.mxu0 0
      %991 = vmatpush.bf16.msra.mxu0 0
      %992 = vmatpush.bf16.msra.mxu0 0
      %993 = vmatpush.bf16.msra.mxu0 0
      %994 = vmatpush.bf16.msra.mxu0 0
      %995 = vmatpush.bf16.msra.mxu0 0
      %996 = vmatpush.bf16.msra.mxu0 0
      %997 = vmatpush.bf16.msra.mxu0 %v917
      %998 = vmatmul.bf16.gmra.mxu0 %v899
      %v999 = vpop.f32.mrf.mxu0
      %v1000 = vadd.f32 0.0, %v999
      %v1001 = vpop.f32.mrf.mxu0
      %1002 = vdwg.mxu0
      %1003 = vmatpush.bf16.msra.mxu0 0
      %1004 = vmatpush.bf16.msra.mxu0 0
      %1005 = vmatpush.bf16.msra.mxu0 0
      %1006 = vmatpush.bf16.msra.mxu0 0
      %1007 = vmatpush.bf16.msra.mxu0 0
      %1008 = vmatpush.bf16.msra.mxu0 0
      %1009 = vmatpush.bf16.msra.mxu0 0
      %1010 = vmatpush.bf16.msra.mxu0 %v920
      %1011 = vmatmul.bf16.gmra.mxu0 %v899
      %v1012 = vpop.f32.mrf.mxu0
      %v1013 = vadd.f32 0.0, %v1012
      %v1014 = vpop.f32.mrf.mxu0
      %1015 = vdwg.mxu0
      %1016 = vmatpush.bf16.msra.mxu0 0
      %1017 = vmatpush.bf16.msra.mxu0 0
      %1018 = vmatpush.bf16.msra.mxu0 0
      %1019 = vmatpush.bf16.msra.mxu0 0
      %1020 = vmatpush.bf16.msra.mxu0 0
      %1021 = vmatpush.bf16.msra.mxu0 0
      %1022 = vmatpush.bf16.msra.mxu0 0
      %1023 = vmatpush.bf16.msra.mxu0 %v923
      %1024 = vmatmul.bf16.gmra.mxu0 %v899
      %v1025 = vpop.f32.mrf.mxu0
      %v1026 = vadd.f32 0.0, %v1025
      %v1027 = vpop.f32.mrf.mxu0
      %1028 = vdwg.mxu0
      %v1029 = vadd.f32 %v864, %v935
      %v1030 = vadd.f32 %v865, %v948
      %v1031 = vadd.f32 %v866, %v961
      %v1032 = vadd.f32 %v867, %v974
      %v1033 = vadd.f32 %v868, %v987
      %v1034 = vadd.f32 %v869, %v1000
      %v1035 = vadd.f32 %v870, %v1013
      %v1036 = vadd.f32 %v871, %v1026
      %s1037 = scalar_lea.vmem %s1, 20
      %v1038 = vld [vmem:[%s1037] sm:$0xf]
      %1039 = vrot.lane.b32.xlu0 %v246, 116
      %v1040 = vpop.permute.xlu0 %1039
      %1041 = vrot.lane.b32.xlu0 %v247, 116
      %v1042 = vpop.permute.xlu0 %1041
      %1043 = vrot.lane.b32.xlu0 %v248, 116
      %v1044 = vpop.permute.xlu0 %1043
      %1045 = vrot.lane.b32.xlu0 %v249, 116
      %v1046 = vpop.permute.xlu0 %1045
      %1047 = vrot.lane.b32.xlu0 %v250, 116
      %v1048 = vpop.permute.xlu0 %1047
      %1049 = vrot.lane.b32.xlu0 %v251, 116
      %v1050 = vpop.permute.xlu0 %1049
      %1051 = vrot.lane.b32.xlu0 %v252, 116
      %v1052 = vpop.permute.xlu0 %1051
      %1053 = vrot.lane.b32.xlu0 %v253, 116
      %v1054 = vpop.permute.xlu0 %1053
      %vm1055 = vcmask 949248
      %v1056 = vsel %vm1055, %v1040, %v1042
      %v1057 = vsel %vm1055, %v1042, %v1044
      %v1058 = vsel %vm1055, %v1044, %v1046
      %v1059 = vsel %vm1055, %v1046, %v1048
      %v1060 = vsel %vm1055, %v1048, %v1050
      %v1061 = vsel %vm1055, %v1050, %v1052
      %v1062 = vsel %vm1055, %v1052, %v1054
      %v1064 = vsel %vm278, %v1038, 0
      %v1067 = vsel %vm282, %v1056, 0
      %v1070 = vsel %vm282, %v1057, 0
      %v1073 = vsel %vm282, %v1058, 0
      %v1076 = vsel %vm282, %v1059, 0
      %v1079 = vsel %vm282, %v1060, 0
      %v1082 = vsel %vm282, %v1061, 0
      %v1085 = vsel %vm282, %v1062, 0
      %v1088 = vsel %vm282, %v1054, 0
      %1090 = vmatpush.bf16.msra.mxu0 0
      %1091 = vmatpush.bf16.msra.mxu0 0
      %1092 = vmatpush.bf16.msra.mxu0 0
      %1093 = vmatpush.bf16.msra.mxu0 0
      %1094 = vmatpush.bf16.msra.mxu0 0
      %1095 = vmatpush.bf16.msra.mxu0 0
      %1096 = vmatpush.bf16.msra.mxu0 0
      %1097 = vmatpush.bf16.msra.mxu0 %v1067
      %1098 = vmatmul.bf16.gmra.mxu0 %v1064
      %v1099 = vpop.f32.mrf.mxu0
      %v1100 = vadd.f32 0.0, %v1099
      %v1101 = vpop.f32.mrf.mxu0
      %1102 = vdwg.mxu0
      %1103 = vmatpush.bf16.msra.mxu0 0
      %1104 = vmatpush.bf16.msra.mxu0 0
      %1105 = vmatpush.bf16.msra.mxu0 0
      %1106 = vmatpush.bf16.msra.mxu0 0
      %1107 = vmatpush.bf16.msra.mxu0 0
      %1108 = vmatpush.bf16.msra.mxu0 0
      %1109 = vmatpush.bf16.msra.mxu0 0
      %1110 = vmatpush.bf16.msra.mxu0 %v1070
      %1111 = vmatmul.bf16.gmra.mxu0 %v1064
      %v1112 = vpop.f32.mrf.mxu0
      %v1113 = vadd.f32 0.0, %v1112
      %v1114 = vpop.f32.mrf.mxu0
      %1115 = vdwg.mxu0
      %1116 = vmatpush.bf16.msra.mxu0 0
      %1117 = vmatpush.bf16.msra.mxu0 0
      %1118 = vmatpush.bf16.msra.mxu0 0
      %1119 = vmatpush.bf16.msra.mxu0 0
      %1120 = vmatpush.bf16.msra.mxu0 0
      %1121 = vmatpush.bf16.msra.mxu0 0
      %1122 = vmatpush.bf16.msra.mxu0 0
      %1123 = vmatpush.bf16.msra.mxu0 %v1073
      %1124 = vmatmul.bf16.gmra.mxu0 %v1064
      %v1125 = vpop.f32.mrf.mxu0
      %v1126 = vadd.f32 0.0, %v1125
      %v1127 = vpop.f32.mrf.mxu0
      %1128 = vdwg.mxu0
      %1129 = vmatpush.bf16.msra.mxu0 0
      %1130 = vmatpush.bf16.msra.mxu0 0
      %1131 = vmatpush.bf16.msra.mxu0 0
      %1132 = vmatpush.bf16.msra.mxu0 0
      %1133 = vmatpush.bf16.msra.mxu0 0
      %1134 = vmatpush.bf16.msra.mxu0 0
      %1135 = vmatpush.bf16.msra.mxu0 0
      %1136 = vmatpush.bf16.msra.mxu0 %v1076
      %1137 = vmatmul.bf16.gmra.mxu0 %v1064
      %v1138 = vpop.f32.mrf.mxu0
      %v1139 = vadd.f32 0.0, %v1138
      %v1140 = vpop.f32.mrf.mxu0
      %1141 = vdwg.mxu0
      %1142 = vmatpush.bf16.msra.mxu0 0
      %1143 = vmatpush.bf16.msra.mxu0 0
      %1144 = vmatpush.bf16.msra.mxu0 0
      %1145 = vmatpush.bf16.msra.mxu0 0
      %1146 = vmatpush.bf16.msra.mxu0 0
      %1147 = vmatpush.bf16.msra.mxu0 0
      %1148 = vmatpush.bf16.msra.mxu0 0
      %1149 = vmatpush.bf16.msra.mxu0 %v1079
      %1150 = vmatmul.bf16.gmra.mxu0 %v1064
      %v1151 = vpop.f32.mrf.mxu0
      %v1152 = vadd.f32 0.0, %v1151
      %v1153 = vpop.f32.mrf.mxu0
      %1154 = vdwg.mxu0
      %1155 = vmatpush.bf16.msra.mxu0 0
      %1156 = vmatpush.bf16.msra.mxu0 0
      %1157 = vmatpush.bf16.msra.mxu0 0
      %1158 = vmatpush.bf16.msra.mxu0 0
      %1159 = vmatpush.bf16.msra.mxu0 0
      %1160 = vmatpush.bf16.msra.mxu0 0
      %1161 = vmatpush.bf16.msra.mxu0 0
      %1162 = vmatpush.bf16.msra.mxu0 %v1082
      %1163 = vmatmul.bf16.gmra.mxu0 %v1064
      %v1164 = vpop.f32.mrf.mxu0
      %v1165 = vadd.f32 0.0, %v1164
      %v1166 = vpop.f32.mrf.mxu0
      %1167 = vdwg.mxu0
      %1168 = vmatpush.bf16.msra.mxu0 0
      %1169 = vmatpush.bf16.msra.mxu0 0
      %1170 = vmatpush.bf16.msra.mxu0 0
      %1171 = vmatpush.bf16.msra.mxu0 0
      %1172 = vmatpush.bf16.msra.mxu0 0
      %1173 = vmatpush.bf16.msra.mxu0 0
      %1174 = vmatpush.bf16.msra.mxu0 0
      %1175 = vmatpush.bf16.msra.mxu0 %v1085
      %1176 = vmatmul.bf16.gmra.mxu0 %v1064
      %v1177 = vpop.f32.mrf.mxu0
      %v1178 = vadd.f32 0.0, %v1177
      %v1179 = vpop.f32.mrf.mxu0
      %1180 = vdwg.mxu0
      %1181 = vmatpush.bf16.msra.mxu0 0
      %1182 = vmatpush.bf16.msra.mxu0 0
      %1183 = vmatpush.bf16.msra.mxu0 0
      %1184 = vmatpush.bf16.msra.mxu0 0
      %1185 = vmatpush.bf16.msra.mxu0 0
      %1186 = vmatpush.bf16.msra.mxu0 0
      %1187 = vmatpush.bf16.msra.mxu0 0
      %1188 = vmatpush.bf16.msra.mxu0 %v1088
      %1189 = vmatmul.bf16.gmra.mxu0 %v1064
      %v1190 = vpop.f32.mrf.mxu0
      %v1191 = vadd.f32 0.0, %v1190
      %v1192 = vpop.f32.mrf.mxu0
      %1193 = vdwg.mxu0
      %v1194 = vadd.f32 %v1029, %v1100
      %v1195 = vadd.f32 %v1030, %v1113
      %v1196 = vadd.f32 %v1031, %v1126
      %v1197 = vadd.f32 %v1032, %v1139
      %v1198 = vadd.f32 %v1033, %v1152
      %v1199 = vadd.f32 %v1034, %v1165
      %v1200 = vadd.f32 %v1035, %v1178
      %v1201 = vadd.f32 %v1036, %v1191
      %s1202 = scalar_lea.vmem %s1, 24
      %v1203 = vld [vmem:[%s1202] sm:$0xf]
      %1204 = vrot.lane.b32.xlu0 %v246, 108
      %v1205 = vpop.permute.xlu0 %1204
      %1206 = vrot.lane.b32.xlu0 %v247, 108
      %v1207 = vpop.permute.xlu0 %1206
      %1208 = vrot.lane.b32.xlu0 %v248, 108
      %v1209 = vpop.permute.xlu0 %1208
      %1210 = vrot.lane.b32.xlu0 %v249, 108
      %v1211 = vpop.permute.xlu0 %1210
      %1212 = vrot.lane.b32.xlu0 %v250, 108
      %v1213 = vpop.permute.xlu0 %1212
      %1214 = vrot.lane.b32.xlu0 %v251, 108
      %v1215 = vpop.permute.xlu0 %1214
      %1216 = vrot.lane.b32.xlu0 %v252, 108
      %v1217 = vpop.permute.xlu0 %1216
      %1218 = vrot.lane.b32.xlu0 %v253, 108
      %v1219 = vpop.permute.xlu0 %1218
      %vm1220 = vcmask 883712
      %v1221 = vsel %vm1220, %v1205, %v1207
      %v1222 = vsel %vm1220, %v1207, %v1209
      %v1223 = vsel %vm1220, %v1209, %v1211
      %v1224 = vsel %vm1220, %v1211, %v1213
      %v1225 = vsel %vm1220, %v1213, %v1215
      %v1226 = vsel %vm1220, %v1215, %v1217
      %v1227 = vsel %vm1220, %v1217, %v1219
      %v1229 = vsel %vm278, %v1203, 0
      %v1232 = vsel %vm282, %v1221, 0
      %v1235 = vsel %vm282, %v1222, 0
      %v1238 = vsel %vm282, %v1223, 0
      %v1241 = vsel %vm282, %v1224, 0
      %v1244 = vsel %vm282, %v1225, 0
      %v1247 = vsel %vm282, %v1226, 0
      %v1250 = vsel %vm282, %v1227, 0
      %v1253 = vsel %vm282, %v1219, 0
      %1255 = vmatpush.bf16.msra.mxu0 0
      %1256 = vmatpush.bf16.msra.mxu0 0
      %1257 = vmatpush.bf16.msra.mxu0 0
      %1258 = vmatpush.bf16.msra.mxu0 0
      %1259 = vmatpush.bf16.msra.mxu0 0
      %1260 = vmatpush.bf16.msra.mxu0 0
      %1261 = vmatpush.bf16.msra.mxu0 0
      %1262 = vmatpush.bf16.msra.mxu0 %v1232
      %1263 = vmatmul.bf16.gmra.mxu0 %v1229
      %v1264 = vpop.f32.mrf.mxu0
      %v1265 = vadd.f32 0.0, %v1264
      %v1266 = vpop.f32.mrf.mxu0
      %1267 = vdwg.mxu0
      %1268 = vmatpush.bf16.msra.mxu0 0
      %1269 = vmatpush.bf16.msra.mxu0 0
      %1270 = vmatpush.bf16.msra.mxu0 0
      %1271 = vmatpush.bf16.msra.mxu0 0
      %1272 = vmatpush.bf16.msra.mxu0 0
      %1273 = vmatpush.bf16.msra.mxu0 0
      %1274 = vmatpush.bf16.msra.mxu0 0
      %1275 = vmatpush.bf16.msra.mxu0 %v1235
      %1276 = vmatmul.bf16.gmra.mxu0 %v1229
      %v1277 = vpop.f32.mrf.mxu0
      %v1278 = vadd.f32 0.0, %v1277
      %v1279 = vpop.f32.mrf.mxu0
      %1280 = vdwg.mxu0
      %1281 = vmatpush.bf16.msra.mxu0 0
      %1282 = vmatpush.bf16.msra.mxu0 0
      %1283 = vmatpush.bf16.msra.mxu0 0
      %1284 = vmatpush.bf16.msra.mxu0 0
      %1285 = vmatpush.bf16.msra.mxu0 0
      %1286 = vmatpush.bf16.msra.mxu0 0
      %1287 = vmatpush.bf16.msra.mxu0 0
      %1288 = vmatpush.bf16.msra.mxu0 %v1238
      %1289 = vmatmul.bf16.gmra.mxu0 %v1229
      %v1290 = vpop.f32.mrf.mxu0
      %v1291 = vadd.f32 0.0, %v1290
      %v1292 = vpop.f32.mrf.mxu0
      %1293 = vdwg.mxu0
      %1294 = vmatpush.bf16.msra.mxu0 0
      %1295 = vmatpush.bf16.msra.mxu0 0
      %1296 = vmatpush.bf16.msra.mxu0 0
      %1297 = vmatpush.bf16.msra.mxu0 0
      %1298 = vmatpush.bf16.msra.mxu0 0
      %1299 = vmatpush.bf16.msra.mxu0 0
      %1300 = vmatpush.bf16.msra.mxu0 0
      %1301 = vmatpush.bf16.msra.mxu0 %v1241
      %1302 = vmatmul.bf16.gmra.mxu0 %v1229
      %v1303 = vpop.f32.mrf.mxu0
      %v1304 = vadd.f32 0.0, %v1303
      %v1305 = vpop.f32.mrf.mxu0
      %1306 = vdwg.mxu0
      %1307 = vmatpush.bf16.msra.mxu0 0
      %1308 = vmatpush.bf16.msra.mxu0 0
      %1309 = vmatpush.bf16.msra.mxu0 0
      %1310 = vmatpush.bf16.msra.mxu0 0
      %1311 = vmatpush.bf16.msra.mxu0 0
      %1312 = vmatpush.bf16.msra.mxu0 0
      %1313 = vmatpush.bf16.msra.mxu0 0
      %1314 = vmatpush.bf16.msra.mxu0 %v1244
      %1315 = vmatmul.bf16.gmra.mxu0 %v1229
      %v1316 = vpop.f32.mrf.mxu0
      %v1317 = vadd.f32 0.0, %v1316
      %v1318 = vpop.f32.mrf.mxu0
      %1319 = vdwg.mxu0
      %1320 = vmatpush.bf16.msra.mxu0 0
      %1321 = vmatpush.bf16.msra.mxu0 0
      %1322 = vmatpush.bf16.msra.mxu0 0
      %1323 = vmatpush.bf16.msra.mxu0 0
      %1324 = vmatpush.bf16.msra.mxu0 0
      %1325 = vmatpush.bf16.msra.mxu0 0
      %1326 = vmatpush.bf16.msra.mxu0 0
      %1327 = vmatpush.bf16.msra.mxu0 %v1247
      %1328 = vmatmul.bf16.gmra.mxu0 %v1229
      %v1329 = vpop.f32.mrf.mxu0
      %v1330 = vadd.f32 0.0, %v1329
      %v1331 = vpop.f32.mrf.mxu0
      %1332 = vdwg.mxu0
      %1333 = vmatpush.bf16.msra.mxu0 0
      %1334 = vmatpush.bf16.msra.mxu0 0
      %1335 = vmatpush.bf16.msra.mxu0 0
      %1336 = vmatpush.bf16.msra.mxu0 0
      %1337 = vmatpush.bf16.msra.mxu0 0
      %1338 = vmatpush.bf16.msra.mxu0 0
      %1339 = vmatpush.bf16.msra.mxu0 0
      %1340 = vmatpush.bf16.msra.mxu0 %v1250
      %1341 = vmatmul.bf16.gmra.mxu0 %v1229
      %v1342 = vpop.f32.mrf.mxu0
      %v1343 = vadd.f32 0.0, %v1342
      %v1344 = vpop.f32.mrf.mxu0
      %1345 = vdwg.mxu0
      %1346 = vmatpush.bf16.msra.mxu0 0
      %1347 = vmatpush.bf16.msra.mxu0 0
      %1348 = vmatpush.bf16.msra.mxu0 0
      %1349 = vmatpush.bf16.msra.mxu0 0
      %1350 = vmatpush.bf16.msra.mxu0 0
      %1351 = vmatpush.bf16.msra.mxu0 0
      %1352 = vmatpush.bf16.msra.mxu0 0
      %1353 = vmatpush.bf16.msra.mxu0 %v1253
      %1354 = vmatmul.bf16.gmra.mxu0 %v1229
      %v1355 = vpop.f32.mrf.mxu0
      %v1356 = vadd.f32 0.0, %v1355
      %v1357 = vpop.f32.mrf.mxu0
      %1358 = vdwg.mxu0
      %v1359 = vadd.f32 %v1194, %v1265
      %v1360 = vadd.f32 %v1195, %v1278
      %v1361 = vadd.f32 %v1196, %v1291
      %v1362 = vadd.f32 %v1197, %v1304
      %v1363 = vadd.f32 %v1198, %v1317
      %v1364 = vadd.f32 %v1199, %v1330
      %v1365 = vadd.f32 %v1200, %v1343
      %v1366 = vadd.f32 %v1201, %v1356
      %s1367 = scalar_lea.vmem %s1, 28
      %v1368 = vld [vmem:[%s1367] sm:$0xf]
      %1369 = vrot.lane.b32.xlu0 %v246, 107
      %v1370 = vpop.permute.xlu0 %1369
      %1371 = vrot.lane.b32.xlu0 %v247, 107
      %v1372 = vpop.permute.xlu0 %1371
      %1373 = vrot.lane.b32.xlu0 %v248, 107
      %v1374 = vpop.permute.xlu0 %1373
      %1375 = vrot.lane.b32.xlu0 %v249, 107
      %v1376 = vpop.permute.xlu0 %1375
      %1377 = vrot.lane.b32.xlu0 %v250, 107
      %v1378 = vpop.permute.xlu0 %1377
      %1379 = vrot.lane.b32.xlu0 %v251, 107
      %v1380 = vpop.permute.xlu0 %1379
      %1381 = vrot.lane.b32.xlu0 %v252, 107
      %v1382 = vpop.permute.xlu0 %1381
      %1383 = vrot.lane.b32.xlu0 %v253, 107
      %v1384 = vpop.permute.xlu0 %1383
      %vm1385 = vcmask 875520
      %v1386 = vsel %vm1385, %v1370, %v1372
      %v1387 = vsel %vm1385, %v1372, %v1374
      %v1388 = vsel %vm1385, %v1374, %v1376
      %v1389 = vsel %vm1385, %v1376, %v1378
      %v1390 = vsel %vm1385, %v1378, %v1380
      %v1391 = vsel %vm1385, %v1380, %v1382
      %v1392 = vsel %vm1385, %v1382, %v1384
      %v1394 = vsel %vm278, %v1368, 0
      %v1397 = vsel %vm282, %v1386, 0
      %v1400 = vsel %vm282, %v1387, 0
      %v1403 = vsel %vm282, %v1388, 0
      %v1406 = vsel %vm282, %v1389, 0
      %v1409 = vsel %vm282, %v1390, 0
      %v1412 = vsel %vm282, %v1391, 0
      %v1415 = vsel %vm282, %v1392, 0
      %v1418 = vsel %vm282, %v1384, 0
      %1420 = vmatpush.bf16.msra.mxu0 0
      %1421 = vmatpush.bf16.msra.mxu0 0
      %1422 = vmatpush.bf16.msra.mxu0 0
      %1423 = vmatpush.bf16.msra.mxu0 0
      %1424 = vmatpush.bf16.msra.mxu0 0
      %1425 = vmatpush.bf16.msra.mxu0 0
      %1426 = vmatpush.bf16.msra.mxu0 0
      %1427 = vmatpush.bf16.msra.mxu0 %v1397
      %1428 = vmatmul.bf16.gmra.mxu0 %v1394
      %v1429 = vpop.f32.mrf.mxu0
      %v1430 = vadd.f32 0.0, %v1429
      %v1431 = vpop.f32.mrf.mxu0
      %1432 = vdwg.mxu0
      %1433 = vmatpush.bf16.msra.mxu0 0
      %1434 = vmatpush.bf16.msra.mxu0 0
      %1435 = vmatpush.bf16.msra.mxu0 0
      %1436 = vmatpush.bf16.msra.mxu0 0
      %1437 = vmatpush.bf16.msra.mxu0 0
      %1438 = vmatpush.bf16.msra.mxu0 0
      %1439 = vmatpush.bf16.msra.mxu0 0
      %1440 = vmatpush.bf16.msra.mxu0 %v1400
      %1441 = vmatmul.bf16.gmra.mxu0 %v1394
      %v1442 = vpop.f32.mrf.mxu0
      %v1443 = vadd.f32 0.0, %v1442
      %v1444 = vpop.f32.mrf.mxu0
      %1445 = vdwg.mxu0
      %1446 = vmatpush.bf16.msra.mxu0 0
      %1447 = vmatpush.bf16.msra.mxu0 0
      %1448 = vmatpush.bf16.msra.mxu0 0
      %1449 = vmatpush.bf16.msra.mxu0 0
      %1450 = vmatpush.bf16.msra.mxu0 0
      %1451 = vmatpush.bf16.msra.mxu0 0
      %1452 = vmatpush.bf16.msra.mxu0 0
      %1453 = vmatpush.bf16.msra.mxu0 %v1403
      %1454 = vmatmul.bf16.gmra.mxu0 %v1394
      %v1455 = vpop.f32.mrf.mxu0
      %v1456 = vadd.f32 0.0, %v1455
      %v1457 = vpop.f32.mrf.mxu0
      %1458 = vdwg.mxu0
      %1459 = vmatpush.bf16.msra.mxu0 0
      %1460 = vmatpush.bf16.msra.mxu0 0
      %1461 = vmatpush.bf16.msra.mxu0 0
      %1462 = vmatpush.bf16.msra.mxu0 0
      %1463 = vmatpush.bf16.msra.mxu0 0
      %1464 = vmatpush.bf16.msra.mxu0 0
      %1465 = vmatpush.bf16.msra.mxu0 0
      %1466 = vmatpush.bf16.msra.mxu0 %v1406
      %1467 = vmatmul.bf16.gmra.mxu0 %v1394
      %v1468 = vpop.f32.mrf.mxu0
      %v1469 = vadd.f32 0.0, %v1468
      %v1470 = vpop.f32.mrf.mxu0
      %1471 = vdwg.mxu0
      %1472 = vmatpush.bf16.msra.mxu0 0
      %1473 = vmatpush.bf16.msra.mxu0 0
      %1474 = vmatpush.bf16.msra.mxu0 0
      %1475 = vmatpush.bf16.msra.mxu0 0
      %1476 = vmatpush.bf16.msra.mxu0 0
      %1477 = vmatpush.bf16.msra.mxu0 0
      %1478 = vmatpush.bf16.msra.mxu0 0
      %1479 = vmatpush.bf16.msra.mxu0 %v1409
      %1480 = vmatmul.bf16.gmra.mxu0 %v1394
      %v1481 = vpop.f32.mrf.mxu0
      %v1482 = vadd.f32 0.0, %v1481
      %v1483 = vpop.f32.mrf.mxu0
      %1484 = vdwg.mxu0
      %1485 = vmatpush.bf16.msra.mxu0 0
      %1486 = vmatpush.bf16.msra.mxu0 0
      %1487 = vmatpush.bf16.msra.mxu0 0
      %1488 = vmatpush.bf16.msra.mxu0 0
      %1489 = vmatpush.bf16.msra.mxu0 0
      %1490 = vmatpush.bf16.msra.mxu0 0
      %1491 = vmatpush.bf16.msra.mxu0 0
      %1492 = vmatpush.bf16.msra.mxu0 %v1412
      %1493 = vmatmul.bf16.gmra.mxu0 %v1394
      %v1494 = vpop.f32.mrf.mxu0
      %v1495 = vadd.f32 0.0, %v1494
      %v1496 = vpop.f32.mrf.mxu0
      %1497 = vdwg.mxu0
      %1498 = vmatpush.bf16.msra.mxu0 0
      %1499 = vmatpush.bf16.msra.mxu0 0
      %1500 = vmatpush.bf16.msra.mxu0 0
      %1501 = vmatpush.bf16.msra.mxu0 0
      %1502 = vmatpush.bf16.msra.mxu0 0
      %1503 = vmatpush.bf16.msra.mxu0 0
      %1504 = vmatpush.bf16.msra.mxu0 0
      %1505 = vmatpush.bf16.msra.mxu0 %v1415
      %1506 = vmatmul.bf16.gmra.mxu0 %v1394
      %v1507 = vpop.f32.mrf.mxu0
      %v1508 = vadd.f32 0.0, %v1507
      %v1509 = vpop.f32.mrf.mxu0
      %1510 = vdwg.mxu0
      %1511 = vmatpush.bf16.msra.mxu0 0
      %1512 = vmatpush.bf16.msra.mxu0 0
      %1513 = vmatpush.bf16.msra.mxu0 0
      %1514 = vmatpush.bf16.msra.mxu0 0
      %1515 = vmatpush.bf16.msra.mxu0 0
      %1516 = vmatpush.bf16.msra.mxu0 0
      %1517 = vmatpush.bf16.msra.mxu0 0
      %1518 = vmatpush.bf16.msra.mxu0 %v1418
      %1519 = vmatmul.bf16.gmra.mxu0 %v1394
      %v1520 = vpop.f32.mrf.mxu0
      %v1521 = vadd.f32 0.0, %v1520
      %v1522 = vpop.f32.mrf.mxu0
      %1523 = vdwg.mxu0
      %v1524 = vadd.f32 %v1359, %v1430
      %v1525 = vadd.f32 %v1360, %v1443
      %v1526 = vadd.f32 %v1361, %v1456
      %v1527 = vadd.f32 %v1362, %v1469
      %v1528 = vadd.f32 %v1363, %v1482
      %v1529 = vadd.f32 %v1364, %v1495
      %v1530 = vadd.f32 %v1365, %v1508
      %v1531 = vadd.f32 %v1366, %v1521
      %s1532 = scalar_lea.vmem %s1, 32
      %v1533 = vld [vmem:[%s1532] sm:$0xf]
      %1534 = vrot.lane.b32.xlu0 %v246, 106
      %v1535 = vpop.permute.xlu0 %1534
      %1536 = vrot.lane.b32.xlu0 %v247, 106
      %v1537 = vpop.permute.xlu0 %1536
      %1538 = vrot.lane.b32.xlu0 %v248, 106
      %v1539 = vpop.permute.xlu0 %1538
      %1540 = vrot.lane.b32.xlu0 %v249, 106
      %v1541 = vpop.permute.xlu0 %1540
      %1542 = vrot.lane.b32.xlu0 %v250, 106
      %v1543 = vpop.permute.xlu0 %1542
      %1544 = vrot.lane.b32.xlu0 %v251, 106
      %v1545 = vpop.permute.xlu0 %1544
      %1546 = vrot.lane.b32.xlu0 %v252, 106
      %v1547 = vpop.permute.xlu0 %1546
      %1548 = vrot.lane.b32.xlu0 %v253, 106
      %v1549 = vpop.permute.xlu0 %1548
      %vm1550 = vcmask 867328
      %v1551 = vsel %vm1550, %v1535, %v1537
      %v1552 = vsel %vm1550, %v1537, %v1539
      %v1553 = vsel %vm1550, %v1539, %v1541
      %v1554 = vsel %vm1550, %v1541, %v1543
      %v1555 = vsel %vm1550, %v1543, %v1545
      %v1556 = vsel %vm1550, %v1545, %v1547
      %v1557 = vsel %vm1550, %v1547, %v1549
      %v1559 = vsel %vm278, %v1533, 0
      %v1562 = vsel %vm282, %v1551, 0
      %v1565 = vsel %vm282, %v1552, 0
      %v1568 = vsel %vm282, %v1553, 0
      %v1571 = vsel %vm282, %v1554, 0
      %v1574 = vsel %vm282, %v1555, 0
      %v1577 = vsel %vm282, %v1556, 0
      %v1580 = vsel %vm282, %v1557, 0
      %v1583 = vsel %vm282, %v1549, 0
      %1585 = vmatpush.bf16.msra.mxu0 0
      %1586 = vmatpush.bf16.msra.mxu0 0
      %1587 = vmatpush.bf16.msra.mxu0 0
      %1588 = vmatpush.bf16.msra.mxu0 0
      %1589 = vmatpush.bf16.msra.mxu0 0
      %1590 = vmatpush.bf16.msra.mxu0 0
      %1591 = vmatpush.bf16.msra.mxu0 0
      %1592 = vmatpush.bf16.msra.mxu0 %v1562
      %1593 = vmatmul.bf16.gmra.mxu0 %v1559
      %v1594 = vpop.f32.mrf.mxu0
      %v1595 = vadd.f32 0.0, %v1594
      %v1596 = vpop.f32.mrf.mxu0
      %1597 = vdwg.mxu0
      %1598 = vmatpush.bf16.msra.mxu0 0
      %1599 = vmatpush.bf16.msra.mxu0 0
      %1600 = vmatpush.bf16.msra.mxu0 0
      %1601 = vmatpush.bf16.msra.mxu0 0
      %1602 = vmatpush.bf16.msra.mxu0 0
      %1603 = vmatpush.bf16.msra.mxu0 0
      %1604 = vmatpush.bf16.msra.mxu0 0
      %1605 = vmatpush.bf16.msra.mxu0 %v1565
      %1606 = vmatmul.bf16.gmra.mxu0 %v1559
      %v1607 = vpop.f32.mrf.mxu0
      %v1608 = vadd.f32 0.0, %v1607
      %v1609 = vpop.f32.mrf.mxu0
      %1610 = vdwg.mxu0
      %1611 = vmatpush.bf16.msra.mxu0 0
      %1612 = vmatpush.bf16.msra.mxu0 0
      %1613 = vmatpush.bf16.msra.mxu0 0
      %1614 = vmatpush.bf16.msra.mxu0 0
      %1615 = vmatpush.bf16.msra.mxu0 0
      %1616 = vmatpush.bf16.msra.mxu0 0
      %1617 = vmatpush.bf16.msra.mxu0 0
      %1618 = vmatpush.bf16.msra.mxu0 %v1568
      %1619 = vmatmul.bf16.gmra.mxu0 %v1559
      %v1620 = vpop.f32.mrf.mxu0
      %v1621 = vadd.f32 0.0, %v1620
      %v1622 = vpop.f32.mrf.mxu0
      %1623 = vdwg.mxu0
      %1624 = vmatpush.bf16.msra.mxu0 0
      %1625 = vmatpush.bf16.msra.mxu0 0
      %1626 = vmatpush.bf16.msra.mxu0 0
      %1627 = vmatpush.bf16.msra.mxu0 0
      %1628 = vmatpush.bf16.msra.mxu0 0
      %1629 = vmatpush.bf16.msra.mxu0 0
      %1630 = vmatpush.bf16.msra.mxu0 0
      %1631 = vmatpush.bf16.msra.mxu0 %v1571
      %1632 = vmatmul.bf16.gmra.mxu0 %v1559
      %v1633 = vpop.f32.mrf.mxu0
      %v1634 = vadd.f32 0.0, %v1633
      %v1635 = vpop.f32.mrf.mxu0
      %1636 = vdwg.mxu0
      %1637 = vmatpush.bf16.msra.mxu0 0
      %1638 = vmatpush.bf16.msra.mxu0 0
      %1639 = vmatpush.bf16.msra.mxu0 0
      %1640 = vmatpush.bf16.msra.mxu0 0
      %1641 = vmatpush.bf16.msra.mxu0 0
      %1642 = vmatpush.bf16.msra.mxu0 0
      %1643 = vmatpush.bf16.msra.mxu0 0
      %1644 = vmatpush.bf16.msra.mxu0 %v1574
      %1645 = vmatmul.bf16.gmra.mxu0 %v1559
      %v1646 = vpop.f32.mrf.mxu0
      %v1647 = vadd.f32 0.0, %v1646
      %v1648 = vpop.f32.mrf.mxu0
      %1649 = vdwg.mxu0
      %1650 = vmatpush.bf16.msra.mxu0 0
      %1651 = vmatpush.bf16.msra.mxu0 0
      %1652 = vmatpush.bf16.msra.mxu0 0
      %1653 = vmatpush.bf16.msra.mxu0 0
      %1654 = vmatpush.bf16.msra.mxu0 0
      %1655 = vmatpush.bf16.msra.mxu0 0
      %1656 = vmatpush.bf16.msra.mxu0 0
      %1657 = vmatpush.bf16.msra.mxu0 %v1577
      %1658 = vmatmul.bf16.gmra.mxu0 %v1559
      %v1659 = vpop.f32.mrf.mxu0
      %v1660 = vadd.f32 0.0, %v1659
      %v1661 = vpop.f32.mrf.mxu0
      %1662 = vdwg.mxu0
      %1663 = vmatpush.bf16.msra.mxu0 0
      %1664 = vmatpush.bf16.msra.mxu0 0
      %1665 = vmatpush.bf16.msra.mxu0 0
      %1666 = vmatpush.bf16.msra.mxu0 0
      %1667 = vmatpush.bf16.msra.mxu0 0
      %1668 = vmatpush.bf16.msra.mxu0 0
      %1669 = vmatpush.bf16.msra.mxu0 0
      %1670 = vmatpush.bf16.msra.mxu0 %v1580
      %1671 = vmatmul.bf16.gmra.mxu0 %v1559
      %v1672 = vpop.f32.mrf.mxu0
      %v1673 = vadd.f32 0.0, %v1672
      %v1674 = vpop.f32.mrf.mxu0
      %1675 = vdwg.mxu0
      %1676 = vmatpush.bf16.msra.mxu0 0
      %1677 = vmatpush.bf16.msra.mxu0 0
      %1678 = vmatpush.bf16.msra.mxu0 0
      %1679 = vmatpush.bf16.msra.mxu0 0
      %1680 = vmatpush.bf16.msra.mxu0 0
      %1681 = vmatpush.bf16.msra.mxu0 0
      %1682 = vmatpush.bf16.msra.mxu0 0
      %1683 = vmatpush.bf16.msra.mxu0 %v1583
      %1684 = vmatmul.bf16.gmra.mxu0 %v1559
      %v1685 = vpop.f32.mrf.mxu0
      %v1686 = vadd.f32 0.0, %v1685
      %v1687 = vpop.f32.mrf.mxu0
      %1688 = vdwg.mxu0
      %v1689 = vadd.f32 %v1524, %v1595
      %v1690 = vadd.f32 %v1525, %v1608
      %v1691 = vadd.f32 %v1526, %v1621
      %v1692 = vadd.f32 %v1527, %v1634
      %v1693 = vadd.f32 %v1528, %v1647
      %v1694 = vadd.f32 %v1529, %v1660
      %v1695 = vadd.f32 %v1530, %v1673
      %v1696 = vadd.f32 %v1531, %v1686
      %s1697 = scalar_lea.vmem %s1, 36
      %v1698 = vld [vmem:[%s1697] sm:$0xf]
      %v1700 = vunpack.c.l.b16 %v230
      %v1701 = vpack.c.b16 %v1700, %v1700
      %1702 = vrot.lane.b32.xlu0 %v246, 28
      %v1703 = vpop.permute.xlu0 %1702
      %1704 = vrot.lane.b32.xlu0 %v247, 28
      %v1705 = vpop.permute.xlu0 %1704
      %1706 = vrot.lane.b32.xlu0 %v248, 28
      %v1707 = vpop.permute.xlu0 %1706
      %1708 = vrot.lane.b32.xlu0 %v249, 28
      %v1709 = vpop.permute.xlu0 %1708
      %1710 = vrot.lane.b32.xlu0 %v250, 28
      %v1711 = vpop.permute.xlu0 %1710
      %1712 = vrot.lane.b32.xlu0 %v251, 28
      %v1713 = vpop.permute.xlu0 %1712
      %1714 = vrot.lane.b32.xlu0 %v252, 28
      %v1715 = vpop.permute.xlu0 %1714
      %1716 = vrot.lane.b32.xlu0 %v253, 28
      %v1717 = vpop.permute.xlu0 %1716
      %1718 = vrot.lane.b32.xlu0 %v1701, 28
      %v1719 = vpop.permute.xlu0 %1718
      %vm1720 = vcmask 228352
      %v1721 = vsel %vm1720, %v1703, %v1705
      %v1722 = vsel %vm1720, %v1705, %v1707
      %v1723 = vsel %vm1720, %v1707, %v1709
      %v1724 = vsel %vm1720, %v1709, %v1711
      %v1725 = vsel %vm1720, %v1711, %v1713
      %v1726 = vsel %vm1720, %v1713, %v1715
      %v1727 = vsel %vm1720, %v1715, %v1717
      %v1728 = vsel %vm1720, %v1717, %v1719
      %v1730 = vsel %vm278, %v1698, 0
      %v1733 = vsel %vm282, %v1721, 0
      %v1736 = vsel %vm282, %v1722, 0
      %v1739 = vsel %vm282, %v1723, 0
      %v1742 = vsel %vm282, %v1724, 0
      %v1745 = vsel %vm282, %v1725, 0
      %v1748 = vsel %vm282, %v1726, 0
      %v1751 = vsel %vm282, %v1727, 0
      %v1754 = vsel %vm282, %v1728, 0
      %1756 = vmatpush.bf16.msra.mxu0 0
      %1757 = vmatpush.bf16.msra.mxu0 0
      %1758 = vmatpush.bf16.msra.mxu0 0
      %1759 = vmatpush.bf16.msra.mxu0 0
      %1760 = vmatpush.bf16.msra.mxu0 0
      %1761 = vmatpush.bf16.msra.mxu0 0
      %1762 = vmatpush.bf16.msra.mxu0 0
      %1763 = vmatpush.bf16.msra.mxu0 %v1733
      %1764 = vmatmul.bf16.gmra.mxu0 %v1730
      %v1765 = vpop.f32.mrf.mxu0
      %v1766 = vadd.f32 0.0, %v1765
      %v1767 = vpop.f32.mrf.mxu0
      %1768 = vdwg.mxu0
      %1769 = vmatpush.bf16.msra.mxu0 0
      %1770 = vmatpush.bf16.msra.mxu0 0
      %1771 = vmatpush.bf16.msra.mxu0 0
      %1772 = vmatpush.bf16.msra.mxu0 0
      %1773 = vmatpush.bf16.msra.mxu0 0
      %1774 = vmatpush.bf16.msra.mxu0 0
      %1775 = vmatpush.bf16.msra.mxu0 0
      %1776 = vmatpush.bf16.msra.mxu0 %v1736
      %1777 = vmatmul.bf16.gmra.mxu0 %v1730
      %v1778 = vpop.f32.mrf.mxu0
      %v1779 = vadd.f32 0.0, %v1778
      %v1780 = vpop.f32.mrf.mxu0
      %1781 = vdwg.mxu0
      %1782 = vmatpush.bf16.msra.mxu0 0
      %1783 = vmatpush.bf16.msra.mxu0 0
      %1784 = vmatpush.bf16.msra.mxu0 0
      %1785 = vmatpush.bf16.msra.mxu0 0
      %1786 = vmatpush.bf16.msra.mxu0 0
      %1787 = vmatpush.bf16.msra.mxu0 0
      %1788 = vmatpush.bf16.msra.mxu0 0
      %1789 = vmatpush.bf16.msra.mxu0 %v1739
      %1790 = vmatmul.bf16.gmra.mxu0 %v1730
      %v1791 = vpop.f32.mrf.mxu0
      %v1792 = vadd.f32 0.0, %v1791
      %v1793 = vpop.f32.mrf.mxu0
      %1794 = vdwg.mxu0
      %1795 = vmatpush.bf16.msra.mxu0 0
      %1796 = vmatpush.bf16.msra.mxu0 0
      %1797 = vmatpush.bf16.msra.mxu0 0
      %1798 = vmatpush.bf16.msra.mxu0 0
      %1799 = vmatpush.bf16.msra.mxu0 0
      %1800 = vmatpush.bf16.msra.mxu0 0
      %1801 = vmatpush.bf16.msra.mxu0 0
      %1802 = vmatpush.bf16.msra.mxu0 %v1742
      %1803 = vmatmul.bf16.gmra.mxu0 %v1730
      %v1804 = vpop.f32.mrf.mxu0
      %v1805 = vadd.f32 0.0, %v1804
      %v1806 = vpop.f32.mrf.mxu0
      %1807 = vdwg.mxu0
      %1808 = vmatpush.bf16.msra.mxu0 0
      %1809 = vmatpush.bf16.msra.mxu0 0
      %1810 = vmatpush.bf16.msra.mxu0 0
      %1811 = vmatpush.bf16.msra.mxu0 0
      %1812 = vmatpush.bf16.msra.mxu0 0
      %1813 = vmatpush.bf16.msra.mxu0 0
      %1814 = vmatpush.bf16.msra.mxu0 0
      %1815 = vmatpush.bf16.msra.mxu0 %v1745
      %1816 = vmatmul.bf16.gmra.mxu0 %v1730
      %v1817 = vpop.f32.mrf.mxu0
      %v1818 = vadd.f32 0.0, %v1817
      %v1819 = vpop.f32.mrf.mxu0
      %1820 = vdwg.mxu0
      %1821 = vmatpush.bf16.msra.mxu0 0
      %1822 = vmatpush.bf16.msra.mxu0 0
      %1823 = vmatpush.bf16.msra.mxu0 0
      %1824 = vmatpush.bf16.msra.mxu0 0
      %1825 = vmatpush.bf16.msra.mxu0 0
      %1826 = vmatpush.bf16.msra.mxu0 0
      %1827 = vmatpush.bf16.msra.mxu0 0
      %1828 = vmatpush.bf16.msra.mxu0 %v1748
      %1829 = vmatmul.bf16.gmra.mxu0 %v1730
      %v1830 = vpop.f32.mrf.mxu0
      %v1831 = vadd.f32 0.0, %v1830
      %v1832 = vpop.f32.mrf.mxu0
      %1833 = vdwg.mxu0
      %1834 = vmatpush.bf16.msra.mxu0 0
      %1835 = vmatpush.bf16.msra.mxu0 0
      %1836 = vmatpush.bf16.msra.mxu0 0
      %1837 = vmatpush.bf16.msra.mxu0 0
      %1838 = vmatpush.bf16.msra.mxu0 0
      %1839 = vmatpush.bf16.msra.mxu0 0
      %1840 = vmatpush.bf16.msra.mxu0 0
      %1841 = vmatpush.bf16.msra.mxu0 %v1751
      %1842 = vmatmul.bf16.gmra.mxu0 %v1730
      %v1843 = vpop.f32.mrf.mxu0
      %v1844 = vadd.f32 0.0, %v1843
      %v1845 = vpop.f32.mrf.mxu0
      %1846 = vdwg.mxu0
      %1847 = vmatpush.bf16.msra.mxu0 0
      %1848 = vmatpush.bf16.msra.mxu0 0
      %1849 = vmatpush.bf16.msra.mxu0 0
      %1850 = vmatpush.bf16.msra.mxu0 0
      %1851 = vmatpush.bf16.msra.mxu0 0
      %1852 = vmatpush.bf16.msra.mxu0 0
      %1853 = vmatpush.bf16.msra.mxu0 0
      %1854 = vmatpush.bf16.msra.mxu0 %v1754
      %1855 = vmatmul.bf16.gmra.mxu0 %v1730
      %v1856 = vpop.f32.mrf.mxu0
      %v1857 = vadd.f32 0.0, %v1856
      %v1858 = vpop.f32.mrf.mxu0
      %1859 = vdwg.mxu0
      %v1860 = vadd.f32 %v1689, %v1766
      %v1861 = vadd.f32 %v1690, %v1779
      %v1862 = vadd.f32 %v1691, %v1792
      %v1863 = vadd.f32 %v1692, %v1805
      %v1864 = vadd.f32 %v1693, %v1818
      %v1865 = vadd.f32 %v1694, %v1831
      %v1866 = vadd.f32 %v1695, %v1844
      %v1867 = vadd.f32 %v1696, %v1857
      %s1868 = scalar_lea.vmem %s1, 40
      %v1869 = vld [vmem:[%s1868] sm:$0xf]
      %1870 = vrot.lane.b32.xlu0 %v246, 27
      %v1871 = vpop.permute.xlu0 %1870
      %1872 = vrot.lane.b32.xlu0 %v247, 27
      %v1873 = vpop.permute.xlu0 %1872
      %1874 = vrot.lane.b32.xlu0 %v248, 27
      %v1875 = vpop.permute.xlu0 %1874
      %1876 = vrot.lane.b32.xlu0 %v249, 27
      %v1877 = vpop.permute.xlu0 %1876
      %1878 = vrot.lane.b32.xlu0 %v250, 27
      %v1879 = vpop.permute.xlu0 %1878
      %1880 = vrot.lane.b32.xlu0 %v251, 27
      %v1881 = vpop.permute.xlu0 %1880
      %1882 = vrot.lane.b32.xlu0 %v252, 27
      %v1883 = vpop.permute.xlu0 %1882
      %1884 = vrot.lane.b32.xlu0 %v253, 27
      %v1885 = vpop.permute.xlu0 %1884
      %1886 = vrot.lane.b32.xlu0 %v1701, 27
      %v1887 = vpop.permute.xlu0 %1886
      %vm1888 = vcmask 220160
      %v1889 = vsel %vm1888, %v1871, %v1873
      %v1890 = vsel %vm1888, %v1873, %v1875
      %v1891 = vsel %vm1888, %v1875, %v1877
      %v1892 = vsel %vm1888, %v1877, %v1879
      %v1893 = vsel %vm1888, %v1879, %v1881
      %v1894 = vsel %vm1888, %v1881, %v1883
      %v1895 = vsel %vm1888, %v1883, %v1885
      %v1896 = vsel %vm1888, %v1885, %v1887
      %v1898 = vsel %vm278, %v1869, 0
      %v1901 = vsel %vm282, %v1889, 0
      %v1904 = vsel %vm282, %v1890, 0
      %v1907 = vsel %vm282, %v1891, 0
      %v1910 = vsel %vm282, %v1892, 0
      %v1913 = vsel %vm282, %v1893, 0
      %v1916 = vsel %vm282, %v1894, 0
      %v1919 = vsel %vm282, %v1895, 0
      %v1922 = vsel %vm282, %v1896, 0
      %1924 = vmatpush.bf16.msra.mxu0 0
      %1925 = vmatpush.bf16.msra.mxu0 0
      %1926 = vmatpush.bf16.msra.mxu0 0
      %1927 = vmatpush.bf16.msra.mxu0 0
      %1928 = vmatpush.bf16.msra.mxu0 0
      %1929 = vmatpush.bf16.msra.mxu0 0
      %1930 = vmatpush.bf16.msra.mxu0 0
      %1931 = vmatpush.bf16.msra.mxu0 %v1901
      %1932 = vmatmul.bf16.gmra.mxu0 %v1898
      %v1933 = vpop.f32.mrf.mxu0
      %v1934 = vadd.f32 0.0, %v1933
      %v1935 = vpop.f32.mrf.mxu0
      %1936 = vdwg.mxu0
      %1937 = vmatpush.bf16.msra.mxu0 0
      %1938 = vmatpush.bf16.msra.mxu0 0
      %1939 = vmatpush.bf16.msra.mxu0 0
      %1940 = vmatpush.bf16.msra.mxu0 0
      %1941 = vmatpush.bf16.msra.mxu0 0
      %1942 = vmatpush.bf16.msra.mxu0 0
      %1943 = vmatpush.bf16.msra.mxu0 0
      %1944 = vmatpush.bf16.msra.mxu0 %v1904
      %1945 = vmatmul.bf16.gmra.mxu0 %v1898
      %v1946 = vpop.f32.mrf.mxu0
      %v1947 = vadd.f32 0.0, %v1946
      %v1948 = vpop.f32.mrf.mxu0
      %1949 = vdwg.mxu0
      %1950 = vmatpush.bf16.msra.mxu0 0
      %1951 = vmatpush.bf16.msra.mxu0 0
      %1952 = vmatpush.bf16.msra.mxu0 0
      %1953 = vmatpush.bf16.msra.mxu0 0
      %1954 = vmatpush.bf16.msra.mxu0 0
      %1955 = vmatpush.bf16.msra.mxu0 0
      %1956 = vmatpush.bf16.msra.mxu0 0
      %1957 = vmatpush.bf16.msra.mxu0 %v1907
      %1958 = vmatmul.bf16.gmra.mxu0 %v1898
      %v1959 = vpop.f32.mrf.mxu0
      %v1960 = vadd.f32 0.0, %v1959
      %v1961 = vpop.f32.mrf.mxu0
      %1962 = vdwg.mxu0
      %1963 = vmatpush.bf16.msra.mxu0 0
      %1964 = vmatpush.bf16.msra.mxu0 0
      %1965 = vmatpush.bf16.msra.mxu0 0
      %1966 = vmatpush.bf16.msra.mxu0 0
      %1967 = vmatpush.bf16.msra.mxu0 0
      %1968 = vmatpush.bf16.msra.mxu0 0
      %1969 = vmatpush.bf16.msra.mxu0 0
      %1970 = vmatpush.bf16.msra.mxu0 %v1910
      %1971 = vmatmul.bf16.gmra.mxu0 %v1898
      %v1972 = vpop.f32.mrf.mxu0
      %v1973 = vadd.f32 0.0, %v1972
      %v1974 = vpop.f32.mrf.mxu0
      %1975 = vdwg.mxu0
      %1976 = vmatpush.bf16.msra.mxu0 0
      %1977 = vmatpush.bf16.msra.mxu0 0
      %1978 = vmatpush.bf16.msra.mxu0 0
      %1979 = vmatpush.bf16.msra.mxu0 0
      %1980 = vmatpush.bf16.msra.mxu0 0
      %1981 = vmatpush.bf16.msra.mxu0 0
      %1982 = vmatpush.bf16.msra.mxu0 0
      %1983 = vmatpush.bf16.msra.mxu0 %v1913
      %1984 = vmatmul.bf16.gmra.mxu0 %v1898
      %v1985 = vpop.f32.mrf.mxu0
      %v1986 = vadd.f32 0.0, %v1985
      %v1987 = vpop.f32.mrf.mxu0
      %1988 = vdwg.mxu0
      %1989 = vmatpush.bf16.msra.mxu0 0
      %1990 = vmatpush.bf16.msra.mxu0 0
      %1991 = vmatpush.bf16.msra.mxu0 0
      %1992 = vmatpush.bf16.msra.mxu0 0
      %1993 = vmatpush.bf16.msra.mxu0 0
      %1994 = vmatpush.bf16.msra.mxu0 0
      %1995 = vmatpush.bf16.msra.mxu0 0
      %1996 = vmatpush.bf16.msra.mxu0 %v1916
      %1997 = vmatmul.bf16.gmra.mxu0 %v1898
      %v1998 = vpop.f32.mrf.mxu0
      %v1999 = vadd.f32 0.0, %v1998
      %v2000 = vpop.f32.mrf.mxu0
      %2001 = vdwg.mxu0
      %2002 = vmatpush.bf16.msra.mxu0 0
      %2003 = vmatpush.bf16.msra.mxu0 0
      %2004 = vmatpush.bf16.msra.mxu0 0
      %2005 = vmatpush.bf16.msra.mxu0 0
      %2006 = vmatpush.bf16.msra.mxu0 0
      %2007 = vmatpush.bf16.msra.mxu0 0
      %2008 = vmatpush.bf16.msra.mxu0 0
      %2009 = vmatpush.bf16.msra.mxu0 %v1919
      %2010 = vmatmul.bf16.gmra.mxu0 %v1898
      %v2011 = vpop.f32.mrf.mxu0
      %v2012 = vadd.f32 0.0, %v2011
      %v2013 = vpop.f32.mrf.mxu0
      %2014 = vdwg.mxu0
      %2015 = vmatpush.bf16.msra.mxu0 0
      %2016 = vmatpush.bf16.msra.mxu0 0
      %2017 = vmatpush.bf16.msra.mxu0 0
      %2018 = vmatpush.bf16.msra.mxu0 0
      %2019 = vmatpush.bf16.msra.mxu0 0
      %2020 = vmatpush.bf16.msra.mxu0 0
      %2021 = vmatpush.bf16.msra.mxu0 0
      %2022 = vmatpush.bf16.msra.mxu0 %v1922
      %2023 = vmatmul.bf16.gmra.mxu0 %v1898
      %v2024 = vpop.f32.mrf.mxu0
      %v2025 = vadd.f32 0.0, %v2024
      %v2026 = vpop.f32.mrf.mxu0
      %2027 = vdwg.mxu0
      %v2028 = vadd.f32 %v1860, %v1934
      %v2029 = vadd.f32 %v1861, %v1947
      %v2030 = vadd.f32 %v1862, %v1960
      %v2031 = vadd.f32 %v1863, %v1973
      %v2032 = vadd.f32 %v1864, %v1986
      %v2033 = vadd.f32 %v1865, %v1999
      %v2034 = vadd.f32 %v1866, %v2012
      %v2035 = vadd.f32 %v1867, %v2025
      %s2036 = scalar_lea.vmem %s1, 44
      %v2037 = vld [vmem:[%s2036] sm:$0xf]
      %2038 = vrot.lane.b32.xlu0 %v246, 26
      %v2039 = vpop.permute.xlu0 %2038
      %2040 = vrot.lane.b32.xlu0 %v247, 26
      %v2041 = vpop.permute.xlu0 %2040
      %2042 = vrot.lane.b32.xlu0 %v248, 26
      %v2043 = vpop.permute.xlu0 %2042
      %2044 = vrot.lane.b32.xlu0 %v249, 26
      %v2045 = vpop.permute.xlu0 %2044
      %2046 = vrot.lane.b32.xlu0 %v250, 26
      %v2047 = vpop.permute.xlu0 %2046
      %2048 = vrot.lane.b32.xlu0 %v251, 26
      %v2049 = vpop.permute.xlu0 %2048
      %2050 = vrot.lane.b32.xlu0 %v252, 26
      %v2051 = vpop.permute.xlu0 %2050
      %2052 = vrot.lane.b32.xlu0 %v253, 26
      %v2053 = vpop.permute.xlu0 %2052
      %2054 = vrot.lane.b32.xlu0 %v1701, 26
      %v2055 = vpop.permute.xlu0 %2054
      %vm2056 = vcmask 211968
      %v2057 = vsel %vm2056, %v2039, %v2041
      %v2058 = vsel %vm2056, %v2041, %v2043
      %v2059 = vsel %vm2056, %v2043, %v2045
      %v2060 = vsel %vm2056, %v2045, %v2047
      %v2061 = vsel %vm2056, %v2047, %v2049
      %v2062 = vsel %vm2056, %v2049, %v2051
      %v2063 = vsel %vm2056, %v2051, %v2053
      %v2064 = vsel %vm2056, %v2053, %v2055
      %v2066 = vsel %vm278, %v2037, 0
      %v2069 = vsel %vm282, %v2057, 0
      %v2072 = vsel %vm282, %v2058, 0
      %v2075 = vsel %vm282, %v2059, 0
      %v2078 = vsel %vm282, %v2060, 0
      %v2081 = vsel %vm282, %v2061, 0
      %v2084 = vsel %vm282, %v2062, 0
      %v2087 = vsel %vm282, %v2063, 0
      %v2090 = vsel %vm282, %v2064, 0
      %2092 = vmatpush.bf16.msra.mxu0 0
      %2093 = vmatpush.bf16.msra.mxu0 0
      %2094 = vmatpush.bf16.msra.mxu0 0
      %2095 = vmatpush.bf16.msra.mxu0 0
      %2096 = vmatpush.bf16.msra.mxu0 0
      %2097 = vmatpush.bf16.msra.mxu0 0
      %2098 = vmatpush.bf16.msra.mxu0 0
      %2099 = vmatpush.bf16.msra.mxu0 %v2069
      %2100 = vmatmul.bf16.gmra.mxu0 %v2066
      %v2101 = vpop.f32.mrf.mxu0
      %v2102 = vadd.f32 0.0, %v2101
      %v2103 = vpop.f32.mrf.mxu0
      %2104 = vdwg.mxu0
      %2105 = vmatpush.bf16.msra.mxu0 0
      %2106 = vmatpush.bf16.msra.mxu0 0
      %2107 = vmatpush.bf16.msra.mxu0 0
      %2108 = vmatpush.bf16.msra.mxu0 0
      %2109 = vmatpush.bf16.msra.mxu0 0
      %2110 = vmatpush.bf16.msra.mxu0 0
      %2111 = vmatpush.bf16.msra.mxu0 0
      %2112 = vmatpush.bf16.msra.mxu0 %v2072
      %2113 = vmatmul.bf16.gmra.mxu0 %v2066
      %v2114 = vpop.f32.mrf.mxu0
      %v2115 = vadd.f32 0.0, %v2114
      %v2116 = vpop.f32.mrf.mxu0
      %2117 = vdwg.mxu0
      %2118 = vmatpush.bf16.msra.mxu0 0
      %2119 = vmatpush.bf16.msra.mxu0 0
      %2120 = vmatpush.bf16.msra.mxu0 0
      %2121 = vmatpush.bf16.msra.mxu0 0
      %2122 = vmatpush.bf16.msra.mxu0 0
      %2123 = vmatpush.bf16.msra.mxu0 0
      %2124 = vmatpush.bf16.msra.mxu0 0
      %2125 = vmatpush.bf16.msra.mxu0 %v2075
      %2126 = vmatmul.bf16.gmra.mxu0 %v2066
      %v2127 = vpop.f32.mrf.mxu0
      %v2128 = vadd.f32 0.0, %v2127
      %v2129 = vpop.f32.mrf.mxu0
      %2130 = vdwg.mxu0
      %2131 = vmatpush.bf16.msra.mxu0 0
      %2132 = vmatpush.bf16.msra.mxu0 0
      %2133 = vmatpush.bf16.msra.mxu0 0
      %2134 = vmatpush.bf16.msra.mxu0 0
      %2135 = vmatpush.bf16.msra.mxu0 0
      %2136 = vmatpush.bf16.msra.mxu0 0
      %2137 = vmatpush.bf16.msra.mxu0 0
      %2138 = vmatpush.bf16.msra.mxu0 %v2078
      %2139 = vmatmul.bf16.gmra.mxu0 %v2066
      %v2140 = vpop.f32.mrf.mxu0
      %v2141 = vadd.f32 0.0, %v2140
      %v2142 = vpop.f32.mrf.mxu0
      %2143 = vdwg.mxu0
      %2144 = vmatpush.bf16.msra.mxu0 0
      %2145 = vmatpush.bf16.msra.mxu0 0
      %2146 = vmatpush.bf16.msra.mxu0 0
      %2147 = vmatpush.bf16.msra.mxu0 0
      %2148 = vmatpush.bf16.msra.mxu0 0
      %2149 = vmatpush.bf16.msra.mxu0 0
      %2150 = vmatpush.bf16.msra.mxu0 0
      %2151 = vmatpush.bf16.msra.mxu0 %v2081
      %2152 = vmatmul.bf16.gmra.mxu0 %v2066
      %v2153 = vpop.f32.mrf.mxu0
      %v2154 = vadd.f32 0.0, %v2153
      %v2155 = vpop.f32.mrf.mxu0
      %2156 = vdwg.mxu0
      %2157 = vmatpush.bf16.msra.mxu0 0
      %2158 = vmatpush.bf16.msra.mxu0 0
      %2159 = vmatpush.bf16.msra.mxu0 0
      %2160 = vmatpush.bf16.msra.mxu0 0
      %2161 = vmatpush.bf16.msra.mxu0 0
      %2162 = vmatpush.bf16.msra.mxu0 0
      %2163 = vmatpush.bf16.msra.mxu0 0
      %2164 = vmatpush.bf16.msra.mxu0 %v2084
      %2165 = vmatmul.bf16.gmra.mxu0 %v2066
      %v2166 = vpop.f32.mrf.mxu0
      %v2167 = vadd.f32 0.0, %v2166
      %v2168 = vpop.f32.mrf.mxu0
      %2169 = vdwg.mxu0
      %2170 = vmatpush.bf16.msra.mxu0 0
      %2171 = vmatpush.bf16.msra.mxu0 0
      %2172 = vmatpush.bf16.msra.mxu0 0
      %2173 = vmatpush.bf16.msra.mxu0 0
      %2174 = vmatpush.bf16.msra.mxu0 0
      %2175 = vmatpush.bf16.msra.mxu0 0
      %2176 = vmatpush.bf16.msra.mxu0 0
      %2177 = vmatpush.bf16.msra.mxu0 %v2087
      %2178 = vmatmul.bf16.gmra.mxu0 %v2066
      %v2179 = vpop.f32.mrf.mxu0
      %v2180 = vadd.f32 0.0, %v2179
      %v2181 = vpop.f32.mrf.mxu0
      %2182 = vdwg.mxu0
      %2183 = vmatpush.bf16.msra.mxu0 0
      %2184 = vmatpush.bf16.msra.mxu0 0
      %2185 = vmatpush.bf16.msra.mxu0 0
      %2186 = vmatpush.bf16.msra.mxu0 0
      %2187 = vmatpush.bf16.msra.mxu0 0
      %2188 = vmatpush.bf16.msra.mxu0 0
      %2189 = vmatpush.bf16.msra.mxu0 0
      %2190 = vmatpush.bf16.msra.mxu0 %v2090
      %2191 = vmatmul.bf16.gmra.mxu0 %v2066
      %v2192 = vpop.f32.mrf.mxu0
      %v2193 = vadd.f32 0.0, %v2192
      %v2194 = vpop.f32.mrf.mxu0
      %2195 = vdwg.mxu0
      %v2196 = vadd.f32 %v2028, %v2102
      %v2197 = vadd.f32 %v2029, %v2115
      %v2198 = vadd.f32 %v2030, %v2128
      %v2199 = vadd.f32 %v2031, %v2141
      %v2200 = vadd.f32 %v2032, %v2154
      %v2201 = vadd.f32 %v2033, %v2167
      %v2202 = vadd.f32 %v2034, %v2180
      %v2203 = vadd.f32 %v2035, %v2193
      %s2204 = scalar_lea.vmem %s1, 48
      %v2205 = vld [vmem:[%s2204] sm:$0xf]
      %2206 = vrot.lane.b32.xlu0 %v246, 18
      %v2207 = vpop.permute.xlu0 %2206
      %2208 = vrot.lane.b32.xlu0 %v247, 18
      %v2209 = vpop.permute.xlu0 %2208
      %2210 = vrot.lane.b32.xlu0 %v248, 18
      %v2211 = vpop.permute.xlu0 %2210
      %2212 = vrot.lane.b32.xlu0 %v249, 18
      %v2213 = vpop.permute.xlu0 %2212
      %2214 = vrot.lane.b32.xlu0 %v250, 18
      %v2215 = vpop.permute.xlu0 %2214
      %2216 = vrot.lane.b32.xlu0 %v251, 18
      %v2217 = vpop.permute.xlu0 %2216
      %2218 = vrot.lane.b32.xlu0 %v252, 18
      %v2219 = vpop.permute.xlu0 %2218
      %2220 = vrot.lane.b32.xlu0 %v253, 18
      %v2221 = vpop.permute.xlu0 %2220
      %2222 = vrot.lane.b32.xlu0 %v1701, 18
      %v2223 = vpop.permute.xlu0 %2222
      %vm2224 = vcmask 146432
      %v2225 = vsel %vm2224, %v2207, %v2209
      %v2226 = vsel %vm2224, %v2209, %v2211
      %v2227 = vsel %vm2224, %v2211, %v2213
      %v2228 = vsel %vm2224, %v2213, %v2215
      %v2229 = vsel %vm2224, %v2215, %v2217
      %v2230 = vsel %vm2224, %v2217, %v2219
      %v2231 = vsel %vm2224, %v2219, %v2221
      %v2232 = vsel %vm2224, %v2221, %v2223
      %v2234 = vsel %vm278, %v2205, 0
      %v2237 = vsel %vm282, %v2225, 0
      %v2240 = vsel %vm282, %v2226, 0
      %v2243 = vsel %vm282, %v2227, 0
      %v2246 = vsel %vm282, %v2228, 0
      %v2249 = vsel %vm282, %v2229, 0
      %v2252 = vsel %vm282, %v2230, 0
      %v2255 = vsel %vm282, %v2231, 0
      %v2258 = vsel %vm282, %v2232, 0
      %2260 = vmatpush.bf16.msra.mxu0 0
      %2261 = vmatpush.bf16.msra.mxu0 0
      %2262 = vmatpush.bf16.msra.mxu0 0
      %2263 = vmatpush.bf16.msra.mxu0 0
      %2264 = vmatpush.bf16.msra.mxu0 0
      %2265 = vmatpush.bf16.msra.mxu0 0
      %2266 = vmatpush.bf16.msra.mxu0 0
      %2267 = vmatpush.bf16.msra.mxu0 %v2237
      %2268 = vmatmul.bf16.gmra.mxu0 %v2234
      %v2269 = vpop.f32.mrf.mxu0
      %v2270 = vadd.f32 0.0, %v2269
      %v2271 = vpop.f32.mrf.mxu0
      %2272 = vdwg.mxu0
      %2273 = vmatpush.bf16.msra.mxu0 0
      %2274 = vmatpush.bf16.msra.mxu0 0
      %2275 = vmatpush.bf16.msra.mxu0 0
      %2276 = vmatpush.bf16.msra.mxu0 0
      %2277 = vmatpush.bf16.msra.mxu0 0
      %2278 = vmatpush.bf16.msra.mxu0 0
      %2279 = vmatpush.bf16.msra.mxu0 0
      %2280 = vmatpush.bf16.msra.mxu0 %v2240
      %2281 = vmatmul.bf16.gmra.mxu0 %v2234
      %v2282 = vpop.f32.mrf.mxu0
      %v2283 = vadd.f32 0.0, %v2282
      %v2284 = vpop.f32.mrf.mxu0
      %2285 = vdwg.mxu0
      %2286 = vmatpush.bf16.msra.mxu0 0
      %2287 = vmatpush.bf16.msra.mxu0 0
      %2288 = vmatpush.bf16.msra.mxu0 0
      %2289 = vmatpush.bf16.msra.mxu0 0
      %2290 = vmatpush.bf16.msra.mxu0 0
      %2291 = vmatpush.bf16.msra.mxu0 0
      %2292 = vmatpush.bf16.msra.mxu0 0
      %2293 = vmatpush.bf16.msra.mxu0 %v2243
      %2294 = vmatmul.bf16.gmra.mxu0 %v2234
      %v2295 = vpop.f32.mrf.mxu0
      %v2296 = vadd.f32 0.0, %v2295
      %v2297 = vpop.f32.mrf.mxu0
      %2298 = vdwg.mxu0
      %2299 = vmatpush.bf16.msra.mxu0 0
      %2300 = vmatpush.bf16.msra.mxu0 0
      %2301 = vmatpush.bf16.msra.mxu0 0
      %2302 = vmatpush.bf16.msra.mxu0 0
      %2303 = vmatpush.bf16.msra.mxu0 0
      %2304 = vmatpush.bf16.msra.mxu0 0
      %2305 = vmatpush.bf16.msra.mxu0 0
      %2306 = vmatpush.bf16.msra.mxu0 %v2246
      %2307 = vmatmul.bf16.gmra.mxu0 %v2234
      %v2308 = vpop.f32.mrf.mxu0
      %v2309 = vadd.f32 0.0, %v2308
      %v2310 = vpop.f32.mrf.mxu0
      %2311 = vdwg.mxu0
      %2312 = vmatpush.bf16.msra.mxu0 0
      %2313 = vmatpush.bf16.msra.mxu0 0
      %2314 = vmatpush.bf16.msra.mxu0 0
      %2315 = vmatpush.bf16.msra.mxu0 0
      %2316 = vmatpush.bf16.msra.mxu0 0
      %2317 = vmatpush.bf16.msra.mxu0 0
      %2318 = vmatpush.bf16.msra.mxu0 0
      %2319 = vmatpush.bf16.msra.mxu0 %v2249
      %2320 = vmatmul.bf16.gmra.mxu0 %v2234
      %v2321 = vpop.f32.mrf.mxu0
      %v2322 = vadd.f32 0.0, %v2321
      %v2323 = vpop.f32.mrf.mxu0
      %2324 = vdwg.mxu0
      %2325 = vmatpush.bf16.msra.mxu0 0
      %2326 = vmatpush.bf16.msra.mxu0 0
      %2327 = vmatpush.bf16.msra.mxu0 0
      %2328 = vmatpush.bf16.msra.mxu0 0
      %2329 = vmatpush.bf16.msra.mxu0 0
      %2330 = vmatpush.bf16.msra.mxu0 0
      %2331 = vmatpush.bf16.msra.mxu0 0
      %2332 = vmatpush.bf16.msra.mxu0 %v2252
      %2333 = vmatmul.bf16.gmra.mxu0 %v2234
      %v2334 = vpop.f32.mrf.mxu0
      %v2335 = vadd.f32 0.0, %v2334
      %v2336 = vpop.f32.mrf.mxu0
      %2337 = vdwg.mxu0
      %2338 = vmatpush.bf16.msra.mxu0 0
      %2339 = vmatpush.bf16.msra.mxu0 0
      %2340 = vmatpush.bf16.msra.mxu0 0
      %2341 = vmatpush.bf16.msra.mxu0 0
      %2342 = vmatpush.bf16.msra.mxu0 0
      %2343 = vmatpush.bf16.msra.mxu0 0
      %2344 = vmatpush.bf16.msra.mxu0 0
      %2345 = vmatpush.bf16.msra.mxu0 %v2255
      %2346 = vmatmul.bf16.gmra.mxu0 %v2234
      %v2347 = vpop.f32.mrf.mxu0
      %v2348 = vadd.f32 0.0, %v2347
      %v2349 = vpop.f32.mrf.mxu0
      %2350 = vdwg.mxu0
      %2351 = vmatpush.bf16.msra.mxu0 0
      %2352 = vmatpush.bf16.msra.mxu0 0
      %2353 = vmatpush.bf16.msra.mxu0 0
      %2354 = vmatpush.bf16.msra.mxu0 0
      %2355 = vmatpush.bf16.msra.mxu0 0
      %2356 = vmatpush.bf16.msra.mxu0 0
      %2357 = vmatpush.bf16.msra.mxu0 0
      %2358 = vmatpush.bf16.msra.mxu0 %v2258
      %2359 = vmatmul.bf16.gmra.mxu0 %v2234
      %v2360 = vpop.f32.mrf.mxu0
      %v2361 = vadd.f32 0.0, %v2360
      %v2362 = vpop.f32.mrf.mxu0
      %2363 = vdwg.mxu0
      %v2364 = vadd.f32 %v2196, %v2270
      %v2365 = vadd.f32 %v2197, %v2283
      %v2366 = vadd.f32 %v2198, %v2296
      %v2367 = vadd.f32 %v2199, %v2309
      %v2368 = vadd.f32 %v2200, %v2322
      %v2369 = vadd.f32 %v2201, %v2335
      %v2370 = vadd.f32 %v2202, %v2348
      %v2371 = vadd.f32 %v2203, %v2361
      %s2372 = scalar_lea.vmem %s1, 52
      %v2373 = vld [vmem:[%s2372] sm:$0xf]
      %2374 = vrot.lane.b32.xlu0 %v246, 17
      %v2375 = vpop.permute.xlu0 %2374
      %2376 = vrot.lane.b32.xlu0 %v247, 17
      %v2377 = vpop.permute.xlu0 %2376
      %2378 = vrot.lane.b32.xlu0 %v248, 17
      %v2379 = vpop.permute.xlu0 %2378
      %2380 = vrot.lane.b32.xlu0 %v249, 17
      %v2381 = vpop.permute.xlu0 %2380
      %2382 = vrot.lane.b32.xlu0 %v250, 17
      %v2383 = vpop.permute.xlu0 %2382
      %2384 = vrot.lane.b32.xlu0 %v251, 17
      %v2385 = vpop.permute.xlu0 %2384
      %2386 = vrot.lane.b32.xlu0 %v252, 17
      %v2387 = vpop.permute.xlu0 %2386
      %2388 = vrot.lane.b32.xlu0 %v253, 17
      %v2389 = vpop.permute.xlu0 %2388
      %2390 = vrot.lane.b32.xlu0 %v1701, 17
      %v2391 = vpop.permute.xlu0 %2390
      %vm2392 = vcmask 138240
      %v2393 = vsel %vm2392, %v2375, %v2377
      %v2394 = vsel %vm2392, %v2377, %v2379
      %v2395 = vsel %vm2392, %v2379, %v2381
      %v2396 = vsel %vm2392, %v2381, %v2383
      %v2397 = vsel %vm2392, %v2383, %v2385
      %v2398 = vsel %vm2392, %v2385, %v2387
      %v2399 = vsel %vm2392, %v2387, %v2389
      %v2400 = vsel %vm2392, %v2389, %v2391
      %v2402 = vsel %vm278, %v2373, 0
      %v2405 = vsel %vm282, %v2393, 0
      %v2408 = vsel %vm282, %v2394, 0
      %v2411 = vsel %vm282, %v2395, 0
      %v2414 = vsel %vm282, %v2396, 0
      %v2417 = vsel %vm282, %v2397, 0
      %v2420 = vsel %vm282, %v2398, 0
      %v2423 = vsel %vm282, %v2399, 0
      %v2426 = vsel %vm282, %v2400, 0
      %2428 = vmatpush.bf16.msra.mxu0 0
      %2429 = vmatpush.bf16.msra.mxu0 0
      %2430 = vmatpush.bf16.msra.mxu0 0
      %2431 = vmatpush.bf16.msra.mxu0 0
      %2432 = vmatpush.bf16.msra.mxu0 0
      %2433 = vmatpush.bf16.msra.mxu0 0
      %2434 = vmatpush.bf16.msra.mxu0 0
      %2435 = vmatpush.bf16.msra.mxu0 %v2405
      %2436 = vmatmul.bf16.gmra.mxu0 %v2402
      %v2437 = vpop.f32.mrf.mxu0
      %v2438 = vadd.f32 0.0, %v2437
      %v2439 = vpop.f32.mrf.mxu0
      %2440 = vdwg.mxu0
      %2441 = vmatpush.bf16.msra.mxu0 0
      %2442 = vmatpush.bf16.msra.mxu0 0
      %2443 = vmatpush.bf16.msra.mxu0 0
      %2444 = vmatpush.bf16.msra.mxu0 0
      %2445 = vmatpush.bf16.msra.mxu0 0
      %2446 = vmatpush.bf16.msra.mxu0 0
      %2447 = vmatpush.bf16.msra.mxu0 0
      %2448 = vmatpush.bf16.msra.mxu0 %v2408
      %2449 = vmatmul.bf16.gmra.mxu0 %v2402
      %v2450 = vpop.f32.mrf.mxu0
      %v2451 = vadd.f32 0.0, %v2450
      %v2452 = vpop.f32.mrf.mxu0
      %2453 = vdwg.mxu0
      %2454 = vmatpush.bf16.msra.mxu0 0
      %2455 = vmatpush.bf16.msra.mxu0 0
      %2456 = vmatpush.bf16.msra.mxu0 0
      %2457 = vmatpush.bf16.msra.mxu0 0
      %2458 = vmatpush.bf16.msra.mxu0 0
      %2459 = vmatpush.bf16.msra.mxu0 0
      %2460 = vmatpush.bf16.msra.mxu0 0
      %2461 = vmatpush.bf16.msra.mxu0 %v2411
      %2462 = vmatmul.bf16.gmra.mxu0 %v2402
      %v2463 = vpop.f32.mrf.mxu0
      %v2464 = vadd.f32 0.0, %v2463
      %v2465 = vpop.f32.mrf.mxu0
      %2466 = vdwg.mxu0
      %2467 = vmatpush.bf16.msra.mxu0 0
      %2468 = vmatpush.bf16.msra.mxu0 0
      %2469 = vmatpush.bf16.msra.mxu0 0
      %2470 = vmatpush.bf16.msra.mxu0 0
      %2471 = vmatpush.bf16.msra.mxu0 0
      %2472 = vmatpush.bf16.msra.mxu0 0
      %2473 = vmatpush.bf16.msra.mxu0 0
      %2474 = vmatpush.bf16.msra.mxu0 %v2414
      %2475 = vmatmul.bf16.gmra.mxu0 %v2402
      %v2476 = vpop.f32.mrf.mxu0
      %v2477 = vadd.f32 0.0, %v2476
      %v2478 = vpop.f32.mrf.mxu0
      %2479 = vdwg.mxu0
      %2480 = vmatpush.bf16.msra.mxu0 0
      %2481 = vmatpush.bf16.msra.mxu0 0
      %2482 = vmatpush.bf16.msra.mxu0 0
      %2483 = vmatpush.bf16.msra.mxu0 0
      %2484 = vmatpush.bf16.msra.mxu0 0
      %2485 = vmatpush.bf16.msra.mxu0 0
      %2486 = vmatpush.bf16.msra.mxu0 0
      %2487 = vmatpush.bf16.msra.mxu0 %v2417
      %2488 = vmatmul.bf16.gmra.mxu0 %v2402
      %v2489 = vpop.f32.mrf.mxu0
      %v2490 = vadd.f32 0.0, %v2489
      %v2491 = vpop.f32.mrf.mxu0
      %2492 = vdwg.mxu0
      %2493 = vmatpush.bf16.msra.mxu0 0
      %2494 = vmatpush.bf16.msra.mxu0 0
      %2495 = vmatpush.bf16.msra.mxu0 0
      %2496 = vmatpush.bf16.msra.mxu0 0
      %2497 = vmatpush.bf16.msra.mxu0 0
      %2498 = vmatpush.bf16.msra.mxu0 0
      %2499 = vmatpush.bf16.msra.mxu0 0
      %2500 = vmatpush.bf16.msra.mxu0 %v2420
      %2501 = vmatmul.bf16.gmra.mxu0 %v2402
      %v2502 = vpop.f32.mrf.mxu0
      %v2503 = vadd.f32 0.0, %v2502
      %v2504 = vpop.f32.mrf.mxu0
      %2505 = vdwg.mxu0
      %2506 = vmatpush.bf16.msra.mxu0 0
      %2507 = vmatpush.bf16.msra.mxu0 0
      %2508 = vmatpush.bf16.msra.mxu0 0
      %2509 = vmatpush.bf16.msra.mxu0 0
      %2510 = vmatpush.bf16.msra.mxu0 0
      %2511 = vmatpush.bf16.msra.mxu0 0
      %2512 = vmatpush.bf16.msra.mxu0 0
      %2513 = vmatpush.bf16.msra.mxu0 %v2423
      %2514 = vmatmul.bf16.gmra.mxu0 %v2402
      %v2515 = vpop.f32.mrf.mxu0
      %v2516 = vadd.f32 0.0, %v2515
      %v2517 = vpop.f32.mrf.mxu0
      %2518 = vdwg.mxu0
      %2519 = vmatpush.bf16.msra.mxu0 0
      %2520 = vmatpush.bf16.msra.mxu0 0
      %2521 = vmatpush.bf16.msra.mxu0 0
      %2522 = vmatpush.bf16.msra.mxu0 0
      %2523 = vmatpush.bf16.msra.mxu0 0
      %2524 = vmatpush.bf16.msra.mxu0 0
      %2525 = vmatpush.bf16.msra.mxu0 0
      %2526 = vmatpush.bf16.msra.mxu0 %v2426
      %2527 = vmatmul.bf16.gmra.mxu0 %v2402
      %v2528 = vpop.f32.mrf.mxu0
      %v2529 = vadd.f32 0.0, %v2528
      %v2530 = vpop.f32.mrf.mxu0
      %2531 = vdwg.mxu0
      %v2532 = vadd.f32 %v2364, %v2438
      %v2533 = vadd.f32 %v2365, %v2451
      %v2534 = vadd.f32 %v2366, %v2464
      %v2535 = vadd.f32 %v2367, %v2477
      %v2536 = vadd.f32 %v2368, %v2490
      %v2537 = vadd.f32 %v2369, %v2503
      %v2538 = vadd.f32 %v2370, %v2516
      %v2539 = vadd.f32 %v2371, %v2529
      %s2540 = scalar_lea.vmem %s1, 56
      %v2541 = vld [vmem:[%s2540] sm:$0xf]
      %2542 = vrot.lane.b32.xlu0 %v246, 16
      %v2543 = vpop.permute.xlu0 %2542
      %2544 = vrot.lane.b32.xlu0 %v247, 16
      %v2545 = vpop.permute.xlu0 %2544
      %2546 = vrot.lane.b32.xlu0 %v248, 16
      %v2547 = vpop.permute.xlu0 %2546
      %2548 = vrot.lane.b32.xlu0 %v249, 16
      %v2549 = vpop.permute.xlu0 %2548
      %2550 = vrot.lane.b32.xlu0 %v250, 16
      %v2551 = vpop.permute.xlu0 %2550
      %2552 = vrot.lane.b32.xlu0 %v251, 16
      %v2553 = vpop.permute.xlu0 %2552
      %2554 = vrot.lane.b32.xlu0 %v252, 16
      %v2555 = vpop.permute.xlu0 %2554
      %2556 = vrot.lane.b32.xlu0 %v253, 16
      %v2557 = vpop.permute.xlu0 %2556
      %2558 = vrot.lane.b32.xlu0 %v1701, 16
      %v2559 = vpop.permute.xlu0 %2558
      %vm2560 = vcmask 130048
      %v2561 = vsel %vm2560, %v2543, %v2545
      %v2562 = vsel %vm2560, %v2545, %v2547
      %v2563 = vsel %vm2560, %v2547, %v2549
      %v2564 = vsel %vm2560, %v2549, %v2551
      %v2565 = vsel %vm2560, %v2551, %v2553
      %v2566 = vsel %vm2560, %v2553, %v2555
      %v2567 = vsel %vm2560, %v2555, %v2557
      %v2568 = vsel %vm2560, %v2557, %v2559
      %v2570 = vsel %vm278, %v2541, 0
      %v2573 = vsel %vm282, %v2561, 0
      %v2576 = vsel %vm282, %v2562, 0
      %v2579 = vsel %vm282, %v2563, 0
      %v2582 = vsel %vm282, %v2564, 0
      %v2585 = vsel %vm282, %v2565, 0
      %v2588 = vsel %vm282, %v2566, 0
      %v2591 = vsel %vm282, %v2567, 0
      %v2594 = vsel %vm282, %v2568, 0
      %2596 = vmatpush.bf16.msra.mxu0 0
      %2597 = vmatpush.bf16.msra.mxu0 0
      %2598 = vmatpush.bf16.msra.mxu0 0
      %2599 = vmatpush.bf16.msra.mxu0 0
      %2600 = vmatpush.bf16.msra.mxu0 0
      %2601 = vmatpush.bf16.msra.mxu0 0
      %2602 = vmatpush.bf16.msra.mxu0 0
      %2603 = vmatpush.bf16.msra.mxu0 %v2573
      %2604 = vmatmul.bf16.gmra.mxu0 %v2570
      %v2605 = vpop.f32.mrf.mxu0
      %v2606 = vadd.f32 0.0, %v2605
      %v2607 = vpop.f32.mrf.mxu0
      %2608 = vdwg.mxu0
      %2609 = vmatpush.bf16.msra.mxu0 0
      %2610 = vmatpush.bf16.msra.mxu0 0
      %2611 = vmatpush.bf16.msra.mxu0 0
      %2612 = vmatpush.bf16.msra.mxu0 0
      %2613 = vmatpush.bf16.msra.mxu0 0
      %2614 = vmatpush.bf16.msra.mxu0 0
      %2615 = vmatpush.bf16.msra.mxu0 0
      %2616 = vmatpush.bf16.msra.mxu0 %v2576
      %2617 = vmatmul.bf16.gmra.mxu0 %v2570
      %v2618 = vpop.f32.mrf.mxu0
      %v2619 = vadd.f32 0.0, %v2618
      %v2620 = vpop.f32.mrf.mxu0
      %2621 = vdwg.mxu0
      %2622 = vmatpush.bf16.msra.mxu0 0
      %2623 = vmatpush.bf16.msra.mxu0 0
      %2624 = vmatpush.bf16.msra.mxu0 0
      %2625 = vmatpush.bf16.msra.mxu0 0
      %2626 = vmatpush.bf16.msra.mxu0 0
      %2627 = vmatpush.bf16.msra.mxu0 0
      %2628 = vmatpush.bf16.msra.mxu0 0
      %2629 = vmatpush.bf16.msra.mxu0 %v2579
      %2630 = vmatmul.bf16.gmra.mxu0 %v2570
      %v2631 = vpop.f32.mrf.mxu0
      %v2632 = vadd.f32 0.0, %v2631
      %v2633 = vpop.f32.mrf.mxu0
      %2634 = vdwg.mxu0
      %2635 = vmatpush.bf16.msra.mxu0 0
      %2636 = vmatpush.bf16.msra.mxu0 0
      %2637 = vmatpush.bf16.msra.mxu0 0
      %2638 = vmatpush.bf16.msra.mxu0 0
      %2639 = vmatpush.bf16.msra.mxu0 0
      %2640 = vmatpush.bf16.msra.mxu0 0
      %2641 = vmatpush.bf16.msra.mxu0 0
      %2642 = vmatpush.bf16.msra.mxu0 %v2582
      %2643 = vmatmul.bf16.gmra.mxu0 %v2570
      %v2644 = vpop.f32.mrf.mxu0
      %v2645 = vadd.f32 0.0, %v2644
      %v2646 = vpop.f32.mrf.mxu0
      %2647 = vdwg.mxu0
      %2648 = vmatpush.bf16.msra.mxu0 0
      %2649 = vmatpush.bf16.msra.mxu0 0
      %2650 = vmatpush.bf16.msra.mxu0 0
      %2651 = vmatpush.bf16.msra.mxu0 0
      %2652 = vmatpush.bf16.msra.mxu0 0
      %2653 = vmatpush.bf16.msra.mxu0 0
      %2654 = vmatpush.bf16.msra.mxu0 0
      %2655 = vmatpush.bf16.msra.mxu0 %v2585
      %2656 = vmatmul.bf16.gmra.mxu0 %v2570
      %v2657 = vpop.f32.mrf.mxu0
      %v2658 = vadd.f32 0.0, %v2657
      %v2659 = vpop.f32.mrf.mxu0
      %2660 = vdwg.mxu0
      %2661 = vmatpush.bf16.msra.mxu0 0
      %2662 = vmatpush.bf16.msra.mxu0 0
      %2663 = vmatpush.bf16.msra.mxu0 0
      %2664 = vmatpush.bf16.msra.mxu0 0
      %2665 = vmatpush.bf16.msra.mxu0 0
      %2666 = vmatpush.bf16.msra.mxu0 0
      %2667 = vmatpush.bf16.msra.mxu0 0
      %2668 = vmatpush.bf16.msra.mxu0 %v2588
      %2669 = vmatmul.bf16.gmra.mxu0 %v2570
      %v2670 = vpop.f32.mrf.mxu0
      %v2671 = vadd.f32 0.0, %v2670
      %v2672 = vpop.f32.mrf.mxu0
      %2673 = vdwg.mxu0
      %2674 = vmatpush.bf16.msra.mxu0 0
      %2675 = vmatpush.bf16.msra.mxu0 0
      %2676 = vmatpush.bf16.msra.mxu0 0
      %2677 = vmatpush.bf16.msra.mxu0 0
      %2678 = vmatpush.bf16.msra.mxu0 0
      %2679 = vmatpush.bf16.msra.mxu0 0
      %2680 = vmatpush.bf16.msra.mxu0 0
      %2681 = vmatpush.bf16.msra.mxu0 %v2591
      %2682 = vmatmul.bf16.gmra.mxu0 %v2570
      %v2683 = vpop.f32.mrf.mxu0
      %v2684 = vadd.f32 0.0, %v2683
      %v2685 = vpop.f32.mrf.mxu0
      %2686 = vdwg.mxu0
      %2687 = vmatpush.bf16.msra.mxu0 0
      %2688 = vmatpush.bf16.msra.mxu0 0
      %2689 = vmatpush.bf16.msra.mxu0 0
      %2690 = vmatpush.bf16.msra.mxu0 0
      %2691 = vmatpush.bf16.msra.mxu0 0
      %2692 = vmatpush.bf16.msra.mxu0 0
      %2693 = vmatpush.bf16.msra.mxu0 0
      %2694 = vmatpush.bf16.msra.mxu0 %v2594
      %2695 = vmatmul.bf16.gmra.mxu0 %v2570
      %v2696 = vpop.f32.mrf.mxu0
      %v2697 = vadd.f32 0.0, %v2696
      %v2698 = vpop.f32.mrf.mxu0
      %2699 = vdwg.mxu0
      %v2700 = vadd.f32 %v2532, %v2606
      %v2701 = vadd.f32 %v2533, %v2619
      %v2702 = vadd.f32 %v2534, %v2632
      %v2703 = vadd.f32 %v2535, %v2645
      %v2704 = vadd.f32 %v2536, %v2658
      %v2705 = vadd.f32 %v2537, %v2671
      %v2706 = vadd.f32 %v2538, %v2684
      %v2707 = vadd.f32 %v2539, %v2697
      %s2708 = scalar_lea.vmem %s1, 60
      %v2709 = vld [vmem:[%s2708] sm:$0xf]
      %2710 = vrot.lane.b32.xlu0 %v246, 8
      %v2711 = vpop.permute.xlu0 %2710
      %2712 = vrot.lane.b32.xlu0 %v247, 8
      %v2713 = vpop.permute.xlu0 %2712
      %2714 = vrot.lane.b32.xlu0 %v248, 8
      %v2715 = vpop.permute.xlu0 %2714
      %2716 = vrot.lane.b32.xlu0 %v249, 8
      %v2717 = vpop.permute.xlu0 %2716
      %2718 = vrot.lane.b32.xlu0 %v250, 8
      %v2719 = vpop.permute.xlu0 %2718
      %2720 = vrot.lane.b32.xlu0 %v251, 8
      %v2721 = vpop.permute.xlu0 %2720
      %2722 = vrot.lane.b32.xlu0 %v252, 8
      %v2723 = vpop.permute.xlu0 %2722
      %2724 = vrot.lane.b32.xlu0 %v253, 8
      %v2725 = vpop.permute.xlu0 %2724
      %2726 = vrot.lane.b32.xlu0 %v1701, 8
      %v2727 = vpop.permute.xlu0 %2726
      %vm2728 = vcmask 64512
      %v2729 = vsel %vm2728, %v2711, %v2713
      %v2730 = vsel %vm2728, %v2713, %v2715
      %v2731 = vsel %vm2728, %v2715, %v2717
      %v2732 = vsel %vm2728, %v2717, %v2719
      %v2733 = vsel %vm2728, %v2719, %v2721
      %v2734 = vsel %vm2728, %v2721, %v2723
      %v2735 = vsel %vm2728, %v2723, %v2725
      %v2736 = vsel %vm2728, %v2725, %v2727
      %v2738 = vsel %vm278, %v2709, 0
      %v2741 = vsel %vm282, %v2729, 0
      %v2744 = vsel %vm282, %v2730, 0
      %v2747 = vsel %vm282, %v2731, 0
      %v2750 = vsel %vm282, %v2732, 0
      %v2753 = vsel %vm282, %v2733, 0
      %v2756 = vsel %vm282, %v2734, 0
      %v2759 = vsel %vm282, %v2735, 0
      %v2762 = vsel %vm282, %v2736, 0
      %2764 = vmatpush.bf16.msra.mxu0 0
      %2765 = vmatpush.bf16.msra.mxu0 0
      %2766 = vmatpush.bf16.msra.mxu0 0
      %2767 = vmatpush.bf16.msra.mxu0 0
      %2768 = vmatpush.bf16.msra.mxu0 0
      %2769 = vmatpush.bf16.msra.mxu0 0
      %2770 = vmatpush.bf16.msra.mxu0 0
      %2771 = vmatpush.bf16.msra.mxu0 %v2741
      %2772 = vmatmul.bf16.gmra.mxu0 %v2738
      %v2773 = vpop.f32.mrf.mxu0
      %v2774 = vadd.f32 0.0, %v2773
      %v2775 = vpop.f32.mrf.mxu0
      %2776 = vdwg.mxu0
      %2777 = vmatpush.bf16.msra.mxu0 0
      %2778 = vmatpush.bf16.msra.mxu0 0
      %2779 = vmatpush.bf16.msra.mxu0 0
      %2780 = vmatpush.bf16.msra.mxu0 0
      %2781 = vmatpush.bf16.msra.mxu0 0
      %2782 = vmatpush.bf16.msra.mxu0 0
      %2783 = vmatpush.bf16.msra.mxu0 0
      %2784 = vmatpush.bf16.msra.mxu0 %v2744
      %2785 = vmatmul.bf16.gmra.mxu0 %v2738
      %v2786 = vpop.f32.mrf.mxu0
      %v2787 = vadd.f32 0.0, %v2786
      %v2788 = vpop.f32.mrf.mxu0
      %2789 = vdwg.mxu0
      %2790 = vmatpush.bf16.msra.mxu0 0
      %2791 = vmatpush.bf16.msra.mxu0 0
      %2792 = vmatpush.bf16.msra.mxu0 0
      %2793 = vmatpush.bf16.msra.mxu0 0
      %2794 = vmatpush.bf16.msra.mxu0 0
      %2795 = vmatpush.bf16.msra.mxu0 0
      %2796 = vmatpush.bf16.msra.mxu0 0
      %2797 = vmatpush.bf16.msra.mxu0 %v2747
      %2798 = vmatmul.bf16.gmra.mxu0 %v2738
      %v2799 = vpop.f32.mrf.mxu0
      %v2800 = vadd.f32 0.0, %v2799
      %v2801 = vpop.f32.mrf.mxu0
      %2802 = vdwg.mxu0
      %2803 = vmatpush.bf16.msra.mxu0 0
      %2804 = vmatpush.bf16.msra.mxu0 0
      %2805 = vmatpush.bf16.msra.mxu0 0
      %2806 = vmatpush.bf16.msra.mxu0 0
      %2807 = vmatpush.bf16.msra.mxu0 0
      %2808 = vmatpush.bf16.msra.mxu0 0
      %2809 = vmatpush.bf16.msra.mxu0 0
      %2810 = vmatpush.bf16.msra.mxu0 %v2750
      %2811 = vmatmul.bf16.gmra.mxu0 %v2738
      %v2812 = vpop.f32.mrf.mxu0
      %v2813 = vadd.f32 0.0, %v2812
      %v2814 = vpop.f32.mrf.mxu0
      %2815 = vdwg.mxu0
      %2816 = vmatpush.bf16.msra.mxu0 0
      %2817 = vmatpush.bf16.msra.mxu0 0
      %2818 = vmatpush.bf16.msra.mxu0 0
      %2819 = vmatpush.bf16.msra.mxu0 0
      %2820 = vmatpush.bf16.msra.mxu0 0
      %2821 = vmatpush.bf16.msra.mxu0 0
      %2822 = vmatpush.bf16.msra.mxu0 0
      %2823 = vmatpush.bf16.msra.mxu0 %v2753
      %2824 = vmatmul.bf16.gmra.mxu0 %v2738
      %v2825 = vpop.f32.mrf.mxu0
      %v2826 = vadd.f32 0.0, %v2825
      %v2827 = vpop.f32.mrf.mxu0
      %2828 = vdwg.mxu0
      %2829 = vmatpush.bf16.msra.mxu0 0
      %2830 = vmatpush.bf16.msra.mxu0 0
      %2831 = vmatpush.bf16.msra.mxu0 0
      %2832 = vmatpush.bf16.msra.mxu0 0
      %2833 = vmatpush.bf16.msra.mxu0 0
      %2834 = vmatpush.bf16.msra.mxu0 0
      %2835 = vmatpush.bf16.msra.mxu0 0
      %2836 = vmatpush.bf16.msra.mxu0 %v2756
      %2837 = vmatmul.bf16.gmra.mxu0 %v2738
      %v2838 = vpop.f32.mrf.mxu0
      %v2839 = vadd.f32 0.0, %v2838
      %v2840 = vpop.f32.mrf.mxu0
      %2841 = vdwg.mxu0
      %2842 = vmatpush.bf16.msra.mxu0 0
      %2843 = vmatpush.bf16.msra.mxu0 0
      %2844 = vmatpush.bf16.msra.mxu0 0
      %2845 = vmatpush.bf16.msra.mxu0 0
      %2846 = vmatpush.bf16.msra.mxu0 0
      %2847 = vmatpush.bf16.msra.mxu0 0
      %2848 = vmatpush.bf16.msra.mxu0 0
      %2849 = vmatpush.bf16.msra.mxu0 %v2759
      %2850 = vmatmul.bf16.gmra.mxu0 %v2738
      %v2851 = vpop.f32.mrf.mxu0
      %v2852 = vadd.f32 0.0, %v2851
      %v2853 = vpop.f32.mrf.mxu0
      %2854 = vdwg.mxu0
      %2855 = vmatpush.bf16.msra.mxu0 0
      %2856 = vmatpush.bf16.msra.mxu0 0
      %2857 = vmatpush.bf16.msra.mxu0 0
      %2858 = vmatpush.bf16.msra.mxu0 0
      %2859 = vmatpush.bf16.msra.mxu0 0
      %2860 = vmatpush.bf16.msra.mxu0 0
      %2861 = vmatpush.bf16.msra.mxu0 0
      %2862 = vmatpush.bf16.msra.mxu0 %v2762
      %2863 = vmatmul.bf16.gmra.mxu0 %v2738
      %v2864 = vpop.f32.mrf.mxu0
      %v2865 = vadd.f32 0.0, %v2864
      %v2866 = vpop.f32.mrf.mxu0
      %2867 = vdwg.mxu0
      %v2868 = vadd.f32 %v2700, %v2774
      %v2869 = vadd.f32 %v2701, %v2787
      %v2870 = vadd.f32 %v2702, %v2800
      %v2871 = vadd.f32 %v2703, %v2813
      %v2872 = vadd.f32 %v2704, %v2826
      %v2873 = vadd.f32 %v2705, %v2839
      %v2874 = vadd.f32 %v2706, %v2852
      %v2875 = vadd.f32 %v2707, %v2865
      %s2876 = scalar_lea.vmem %s1, 64
      %v2877 = vld [vmem:[%s2876] sm:$0xf]
      %2878 = vrot.lane.b32.xlu0 %v246, 7
      %v2879 = vpop.permute.xlu0 %2878
      %2880 = vrot.lane.b32.xlu0 %v247, 7
      %v2881 = vpop.permute.xlu0 %2880
      %2882 = vrot.lane.b32.xlu0 %v248, 7
      %v2883 = vpop.permute.xlu0 %2882
      %2884 = vrot.lane.b32.xlu0 %v249, 7
      %v2885 = vpop.permute.xlu0 %2884
      %2886 = vrot.lane.b32.xlu0 %v250, 7
      %v2887 = vpop.permute.xlu0 %2886
      %2888 = vrot.lane.b32.xlu0 %v251, 7
      %v2889 = vpop.permute.xlu0 %2888
      %2890 = vrot.lane.b32.xlu0 %v252, 7
      %v2891 = vpop.permute.xlu0 %2890
      %2892 = vrot.lane.b32.xlu0 %v253, 7
      %v2893 = vpop.permute.xlu0 %2892
      %2894 = vrot.lane.b32.xlu0 %v1701, 7
      %v2895 = vpop.permute.xlu0 %2894
      %vm2896 = vcmask 56320
      %v2897 = vsel %vm2896, %v2879, %v2881
      %v2898 = vsel %vm2896, %v2881, %v2883
      %v2899 = vsel %vm2896, %v2883, %v2885
      %v2900 = vsel %vm2896, %v2885, %v2887
      %v2901 = vsel %vm2896, %v2887, %v2889
      %v2902 = vsel %vm2896, %v2889, %v2891
      %v2903 = vsel %vm2896, %v2891, %v2893
      %v2904 = vsel %vm2896, %v2893, %v2895
      %v2906 = vsel %vm278, %v2877, 0
      %v2909 = vsel %vm282, %v2897, 0
      %v2912 = vsel %vm282, %v2898, 0
      %v2915 = vsel %vm282, %v2899, 0
      %v2918 = vsel %vm282, %v2900, 0
      %v2921 = vsel %vm282, %v2901, 0
      %v2924 = vsel %vm282, %v2902, 0
      %v2927 = vsel %vm282, %v2903, 0
      %v2930 = vsel %vm282, %v2904, 0
      %2932 = vmatpush.bf16.msra.mxu0 0
      %2933 = vmatpush.bf16.msra.mxu0 0
      %2934 = vmatpush.bf16.msra.mxu0 0
      %2935 = vmatpush.bf16.msra.mxu0 0
      %2936 = vmatpush.bf16.msra.mxu0 0
      %2937 = vmatpush.bf16.msra.mxu0 0
      %2938 = vmatpush.bf16.msra.mxu0 0
      %2939 = vmatpush.bf16.msra.mxu0 %v2909
      %2940 = vmatmul.bf16.gmra.mxu0 %v2906
      %v2941 = vpop.f32.mrf.mxu0
      %v2942 = vadd.f32 0.0, %v2941
      %v2943 = vpop.f32.mrf.mxu0
      %2944 = vdwg.mxu0
      %2945 = vmatpush.bf16.msra.mxu0 0
      %2946 = vmatpush.bf16.msra.mxu0 0
      %2947 = vmatpush.bf16.msra.mxu0 0
      %2948 = vmatpush.bf16.msra.mxu0 0
      %2949 = vmatpush.bf16.msra.mxu0 0
      %2950 = vmatpush.bf16.msra.mxu0 0
      %2951 = vmatpush.bf16.msra.mxu0 0
      %2952 = vmatpush.bf16.msra.mxu0 %v2912
      %2953 = vmatmul.bf16.gmra.mxu0 %v2906
      %v2954 = vpop.f32.mrf.mxu0
      %v2955 = vadd.f32 0.0, %v2954
      %v2956 = vpop.f32.mrf.mxu0
      %2957 = vdwg.mxu0
      %2958 = vmatpush.bf16.msra.mxu0 0
      %2959 = vmatpush.bf16.msra.mxu0 0
      %2960 = vmatpush.bf16.msra.mxu0 0
      %2961 = vmatpush.bf16.msra.mxu0 0
      %2962 = vmatpush.bf16.msra.mxu0 0
      %2963 = vmatpush.bf16.msra.mxu0 0
      %2964 = vmatpush.bf16.msra.mxu0 0
      %2965 = vmatpush.bf16.msra.mxu0 %v2915
      %2966 = vmatmul.bf16.gmra.mxu0 %v2906
      %v2967 = vpop.f32.mrf.mxu0
      %v2968 = vadd.f32 0.0, %v2967
      %v2969 = vpop.f32.mrf.mxu0
      %2970 = vdwg.mxu0
      %2971 = vmatpush.bf16.msra.mxu0 0
      %2972 = vmatpush.bf16.msra.mxu0 0
      %2973 = vmatpush.bf16.msra.mxu0 0
      %2974 = vmatpush.bf16.msra.mxu0 0
      %2975 = vmatpush.bf16.msra.mxu0 0
      %2976 = vmatpush.bf16.msra.mxu0 0
      %2977 = vmatpush.bf16.msra.mxu0 0
      %2978 = vmatpush.bf16.msra.mxu0 %v2918
      %2979 = vmatmul.bf16.gmra.mxu0 %v2906
      %v2980 = vpop.f32.mrf.mxu0
      %v2981 = vadd.f32 0.0, %v2980
      %v2982 = vpop.f32.mrf.mxu0
      %2983 = vdwg.mxu0
      %2984 = vmatpush.bf16.msra.mxu0 0
      %2985 = vmatpush.bf16.msra.mxu0 0
      %2986 = vmatpush.bf16.msra.mxu0 0
      %2987 = vmatpush.bf16.msra.mxu0 0
      %2988 = vmatpush.bf16.msra.mxu0 0
      %2989 = vmatpush.bf16.msra.mxu0 0
      %2990 = vmatpush.bf16.msra.mxu0 0
      %2991 = vmatpush.bf16.msra.mxu0 %v2921
      %2992 = vmatmul.bf16.gmra.mxu0 %v2906
      %v2993 = vpop.f32.mrf.mxu0
      %v2994 = vadd.f32 0.0, %v2993
      %v2995 = vpop.f32.mrf.mxu0
      %2996 = vdwg.mxu0
      %2997 = vmatpush.bf16.msra.mxu0 0
      %2998 = vmatpush.bf16.msra.mxu0 0
      %2999 = vmatpush.bf16.msra.mxu0 0
      %3000 = vmatpush.bf16.msra.mxu0 0
      %3001 = vmatpush.bf16.msra.mxu0 0
      %3002 = vmatpush.bf16.msra.mxu0 0
      %3003 = vmatpush.bf16.msra.mxu0 0
      %3004 = vmatpush.bf16.msra.mxu0 %v2924
      %3005 = vmatmul.bf16.gmra.mxu0 %v2906
      %v3006 = vpop.f32.mrf.mxu0
      %v3007 = vadd.f32 0.0, %v3006
      %v3008 = vpop.f32.mrf.mxu0
      %3009 = vdwg.mxu0
      %3010 = vmatpush.bf16.msra.mxu0 0
      %3011 = vmatpush.bf16.msra.mxu0 0
      %3012 = vmatpush.bf16.msra.mxu0 0
      %3013 = vmatpush.bf16.msra.mxu0 0
      %3014 = vmatpush.bf16.msra.mxu0 0
      %3015 = vmatpush.bf16.msra.mxu0 0
      %3016 = vmatpush.bf16.msra.mxu0 0
      %3017 = vmatpush.bf16.msra.mxu0 %v2927
      %3018 = vmatmul.bf16.gmra.mxu0 %v2906
      %v3019 = vpop.f32.mrf.mxu0
      %v3020 = vadd.f32 0.0, %v3019
      %v3021 = vpop.f32.mrf.mxu0
      %3022 = vdwg.mxu0
      %3023 = vmatpush.bf16.msra.mxu0 0
      %3024 = vmatpush.bf16.msra.mxu0 0
      %3025 = vmatpush.bf16.msra.mxu0 0
      %3026 = vmatpush.bf16.msra.mxu0 0
      %3027 = vmatpush.bf16.msra.mxu0 0
      %3028 = vmatpush.bf16.msra.mxu0 0
      %3029 = vmatpush.bf16.msra.mxu0 0
      %3030 = vmatpush.bf16.msra.mxu0 %v2930
      %3031 = vmatmul.bf16.gmra.mxu0 %v2906
      %v3032 = vpop.f32.mrf.mxu0
      %v3033 = vadd.f32 0.0, %v3032
      %v3034 = vpop.f32.mrf.mxu0
      %3035 = vdwg.mxu0
      %v3036 = vadd.f32 %v2868, %v2942
      %v3037 = vadd.f32 %v2869, %v2955
      %v3038 = vadd.f32 %v2870, %v2968
      %v3039 = vadd.f32 %v2871, %v2981
      %v3040 = vadd.f32 %v2872, %v2994
      %v3041 = vadd.f32 %v2873, %v3007
      %v3042 = vadd.f32 %v2874, %v3020
      %v3043 = vadd.f32 %v2875, %v3033
      %s3044 = scalar_lea.vmem %s1, 68
      %v3045 = vld [vmem:[%s3044] sm:$0xf]
      %3046 = vrot.lane.b32.xlu0 %v246, 6
      %v3047 = vpop.permute.xlu0 %3046
      %3048 = vrot.lane.b32.xlu0 %v247, 6
      %v3049 = vpop.permute.xlu0 %3048
      %3050 = vrot.lane.b32.xlu0 %v248, 6
      %v3051 = vpop.permute.xlu0 %3050
      %3052 = vrot.lane.b32.xlu0 %v249, 6
      %v3053 = vpop.permute.xlu0 %3052
      %3054 = vrot.lane.b32.xlu0 %v250, 6
      %v3055 = vpop.permute.xlu0 %3054
      %3056 = vrot.lane.b32.xlu0 %v251, 6
      %v3057 = vpop.permute.xlu0 %3056
      %3058 = vrot.lane.b32.xlu0 %v252, 6
      %v3059 = vpop.permute.xlu0 %3058
      %3060 = vrot.lane.b32.xlu0 %v253, 6
      %v3061 = vpop.permute.xlu0 %3060
      %3062 = vrot.lane.b32.xlu0 %v1701, 6
      %v3063 = vpop.permute.xlu0 %3062
      %vm3064 = vcmask 48128
      %v3065 = vsel %vm3064, %v3047, %v3049
      %v3066 = vsel %vm3064, %v3049, %v3051
      %v3067 = vsel %vm3064, %v3051, %v3053
      %v3068 = vsel %vm3064, %v3053, %v3055
      %v3069 = vsel %vm3064, %v3055, %v3057
      %v3070 = vsel %vm3064, %v3057, %v3059
      %v3071 = vsel %vm3064, %v3059, %v3061
      %v3072 = vsel %vm3064, %v3061, %v3063
      %v3074 = vsel %vm278, %v3045, 0
      %v3077 = vsel %vm282, %v3065, 0
      %v3080 = vsel %vm282, %v3066, 0
      %v3083 = vsel %vm282, %v3067, 0
      %v3086 = vsel %vm282, %v3068, 0
      %v3089 = vsel %vm282, %v3069, 0
      %v3092 = vsel %vm282, %v3070, 0
      %v3095 = vsel %vm282, %v3071, 0
      %v3098 = vsel %vm282, %v3072, 0
      %3100 = vmatpush.bf16.msra.mxu0 0
      %3101 = vmatpush.bf16.msra.mxu0 0
      %3102 = vmatpush.bf16.msra.mxu0 0
      %3103 = vmatpush.bf16.msra.mxu0 0
      %3104 = vmatpush.bf16.msra.mxu0 0
      %3105 = vmatpush.bf16.msra.mxu0 0
      %3106 = vmatpush.bf16.msra.mxu0 0
      %3107 = vmatpush.bf16.msra.mxu0 %v3077
      %3108 = vmatmul.bf16.gmra.mxu0 %v3074
      %v3109 = vpop.f32.mrf.mxu0
      %v3110 = vadd.f32 0.0, %v3109
      %v3111 = vpop.f32.mrf.mxu0
      %3112 = vdwg.mxu0
      %3113 = vmatpush.bf16.msra.mxu0 0
      %3114 = vmatpush.bf16.msra.mxu0 0
      %3115 = vmatpush.bf16.msra.mxu0 0
      %3116 = vmatpush.bf16.msra.mxu0 0
      %3117 = vmatpush.bf16.msra.mxu0 0
      %3118 = vmatpush.bf16.msra.mxu0 0
      %3119 = vmatpush.bf16.msra.mxu0 0
      %3120 = vmatpush.bf16.msra.mxu0 %v3080
      %3121 = vmatmul.bf16.gmra.mxu0 %v3074
      %v3122 = vpop.f32.mrf.mxu0
      %v3123 = vadd.f32 0.0, %v3122
      %v3124 = vpop.f32.mrf.mxu0
      %3125 = vdwg.mxu0
      %3126 = vmatpush.bf16.msra.mxu0 0
      %3127 = vmatpush.bf16.msra.mxu0 0
      %3128 = vmatpush.bf16.msra.mxu0 0
      %3129 = vmatpush.bf16.msra.mxu0 0
      %3130 = vmatpush.bf16.msra.mxu0 0
      %3131 = vmatpush.bf16.msra.mxu0 0
      %3132 = vmatpush.bf16.msra.mxu0 0
      %3133 = vmatpush.bf16.msra.mxu0 %v3083
      %3134 = vmatmul.bf16.gmra.mxu0 %v3074
      %v3135 = vpop.f32.mrf.mxu0
      %v3136 = vadd.f32 0.0, %v3135
      %v3137 = vpop.f32.mrf.mxu0
      %3138 = vdwg.mxu0
      %3139 = vmatpush.bf16.msra.mxu0 0
      %3140 = vmatpush.bf16.msra.mxu0 0
      %3141 = vmatpush.bf16.msra.mxu0 0
      %3142 = vmatpush.bf16.msra.mxu0 0
      %3143 = vmatpush.bf16.msra.mxu0 0
      %3144 = vmatpush.bf16.msra.mxu0 0
      %3145 = vmatpush.bf16.msra.mxu0 0
      %3146 = vmatpush.bf16.msra.mxu0 %v3086
      %3147 = vmatmul.bf16.gmra.mxu0 %v3074
      %v3148 = vpop.f32.mrf.mxu0
      %v3149 = vadd.f32 0.0, %v3148
      %v3150 = vpop.f32.mrf.mxu0
      %3151 = vdwg.mxu0
      %3152 = vmatpush.bf16.msra.mxu0 0
      %3153 = vmatpush.bf16.msra.mxu0 0
      %3154 = vmatpush.bf16.msra.mxu0 0
      %3155 = vmatpush.bf16.msra.mxu0 0
      %3156 = vmatpush.bf16.msra.mxu0 0
      %3157 = vmatpush.bf16.msra.mxu0 0
      %3158 = vmatpush.bf16.msra.mxu0 0
      %3159 = vmatpush.bf16.msra.mxu0 %v3089
      %3160 = vmatmul.bf16.gmra.mxu0 %v3074
      %v3161 = vpop.f32.mrf.mxu0
      %v3162 = vadd.f32 0.0, %v3161
      %v3163 = vpop.f32.mrf.mxu0
      %3164 = vdwg.mxu0
      %3165 = vmatpush.bf16.msra.mxu0 0
      %3166 = vmatpush.bf16.msra.mxu0 0
      %3167 = vmatpush.bf16.msra.mxu0 0
      %3168 = vmatpush.bf16.msra.mxu0 0
      %3169 = vmatpush.bf16.msra.mxu0 0
      %3170 = vmatpush.bf16.msra.mxu0 0
      %3171 = vmatpush.bf16.msra.mxu0 0
      %3172 = vmatpush.bf16.msra.mxu0 %v3092
      %3173 = vmatmul.bf16.gmra.mxu0 %v3074
      %v3174 = vpop.f32.mrf.mxu0
      %v3175 = vadd.f32 0.0, %v3174
      %v3176 = vpop.f32.mrf.mxu0
      %3177 = vdwg.mxu0
      %3178 = vmatpush.bf16.msra.mxu0 0
      %3179 = vmatpush.bf16.msra.mxu0 0
      %3180 = vmatpush.bf16.msra.mxu0 0
      %3181 = vmatpush.bf16.msra.mxu0 0
      %3182 = vmatpush.bf16.msra.mxu0 0
      %3183 = vmatpush.bf16.msra.mxu0 0
      %3184 = vmatpush.bf16.msra.mxu0 0
      %3185 = vmatpush.bf16.msra.mxu0 %v3095
      %3186 = vmatmul.bf16.gmra.mxu0 %v3074
      %v3187 = vpop.f32.mrf.mxu0
      %v3188 = vadd.f32 0.0, %v3187
      %v3189 = vpop.f32.mrf.mxu0
      %3190 = vdwg.mxu0
      %3191 = vmatpush.bf16.msra.mxu0 0
      %3192 = vmatpush.bf16.msra.mxu0 0
      %3193 = vmatpush.bf16.msra.mxu0 0
      %3194 = vmatpush.bf16.msra.mxu0 0
      %3195 = vmatpush.bf16.msra.mxu0 0
      %3196 = vmatpush.bf16.msra.mxu0 0
      %3197 = vmatpush.bf16.msra.mxu0 0
      %3198 = vmatpush.bf16.msra.mxu0 %v3098
      %3199 = vmatmul.bf16.gmra.mxu0 %v3074
      %v3200 = vpop.f32.mrf.mxu0
      %v3201 = vadd.f32 0.0, %v3200
      %v3202 = vpop.f32.mrf.mxu0
      %3203 = vdwg.mxu0
      %v3204 = vadd.f32 %v3036, %v3110
      %v3205 = vadd.f32 %v3037, %v3123
      %v3206 = vadd.f32 %v3038, %v3136
      %v3207 = vadd.f32 %v3039, %v3149
      %v3208 = vadd.f32 %v3040, %v3162
      %v3209 = vadd.f32 %v3041, %v3175
      %v3210 = vadd.f32 %v3042, %v3188
      %v3211 = vadd.f32 %v3043, %v3201
      %s3212 = scalar_lea.vmem %s1, 72
      %v3213 = vld [vmem:[%s3212] sm:$0xf]
      %v3214 = vunpack.c.h.b16 %v230
      %v3215 = vpack.c.b16 %v3214, %v3214
      %3216 = vrot.lane.b32.xlu0 %v247, 56
      %v3217 = vpop.permute.xlu0 %3216
      %3218 = vrot.lane.b32.xlu0 %v248, 56
      %v3219 = vpop.permute.xlu0 %3218
      %3220 = vrot.lane.b32.xlu0 %v249, 56
      %v3221 = vpop.permute.xlu0 %3220
      %3222 = vrot.lane.b32.xlu0 %v250, 56
      %v3223 = vpop.permute.xlu0 %3222
      %3224 = vrot.lane.b32.xlu0 %v251, 56
      %v3225 = vpop.permute.xlu0 %3224
      %3226 = vrot.lane.b32.xlu0 %v252, 56
      %v3227 = vpop.permute.xlu0 %3226
      %3228 = vrot.lane.b32.xlu0 %v253, 56
      %v3229 = vpop.permute.xlu0 %3228
      %3230 = vrot.lane.b32.xlu0 %v1701, 56
      %v3231 = vpop.permute.xlu0 %3230
      %3232 = vrot.lane.b32.xlu0 %v3215, 56
      %v3233 = vpop.permute.xlu0 %3232
      %vm3234 = vcmask 457728
      %v3235 = vsel %vm3234, %v3217, %v3219
      %v3236 = vsel %vm3234, %v3219, %v3221
      %v3237 = vsel %vm3234, %v3221, %v3223
      %v3238 = vsel %vm3234, %v3223, %v3225
      %v3239 = vsel %vm3234, %v3225, %v3227
      %v3240 = vsel %vm3234, %v3227, %v3229
      %v3241 = vsel %vm3234, %v3229, %v3231
      %v3242 = vsel %vm3234, %v3231, %v3233
      %v3244 = vsel %vm278, %v3213, 0
      %v3247 = vsel %vm282, %v3235, 0
      %v3250 = vsel %vm282, %v3236, 0
      %v3253 = vsel %vm282, %v3237, 0
      %v3256 = vsel %vm282, %v3238, 0
      %v3259 = vsel %vm282, %v3239, 0
      %v3262 = vsel %vm282, %v3240, 0
      %v3265 = vsel %vm282, %v3241, 0
      %v3268 = vsel %vm282, %v3242, 0
      %3270 = vmatpush.bf16.msra.mxu0 0
      %3271 = vmatpush.bf16.msra.mxu0 0
      %3272 = vmatpush.bf16.msra.mxu0 0
      %3273 = vmatpush.bf16.msra.mxu0 0
      %3274 = vmatpush.bf16.msra.mxu0 0
      %3275 = vmatpush.bf16.msra.mxu0 0
      %3276 = vmatpush.bf16.msra.mxu0 0
      %3277 = vmatpush.bf16.msra.mxu0 %v3247
      %3278 = vmatmul.bf16.gmra.mxu0 %v3244
      %v3279 = vpop.f32.mrf.mxu0
      %v3280 = vadd.f32 0.0, %v3279
      %v3281 = vpop.f32.mrf.mxu0
      %3282 = vdwg.mxu0
      %3283 = vmatpush.bf16.msra.mxu0 0
      %3284 = vmatpush.bf16.msra.mxu0 0
      %3285 = vmatpush.bf16.msra.mxu0 0
      %3286 = vmatpush.bf16.msra.mxu0 0
      %3287 = vmatpush.bf16.msra.mxu0 0
      %3288 = vmatpush.bf16.msra.mxu0 0
      %3289 = vmatpush.bf16.msra.mxu0 0
      %3290 = vmatpush.bf16.msra.mxu0 %v3250
      %3291 = vmatmul.bf16.gmra.mxu0 %v3244
      %v3292 = vpop.f32.mrf.mxu0
      %v3293 = vadd.f32 0.0, %v3292
      %v3294 = vpop.f32.mrf.mxu0
      %3295 = vdwg.mxu0
      %3296 = vmatpush.bf16.msra.mxu0 0
      %3297 = vmatpush.bf16.msra.mxu0 0
      %3298 = vmatpush.bf16.msra.mxu0 0
      %3299 = vmatpush.bf16.msra.mxu0 0
      %3300 = vmatpush.bf16.msra.mxu0 0
      %3301 = vmatpush.bf16.msra.mxu0 0
      %3302 = vmatpush.bf16.msra.mxu0 0
      %3303 = vmatpush.bf16.msra.mxu0 %v3253
      %3304 = vmatmul.bf16.gmra.mxu0 %v3244
      %v3305 = vpop.f32.mrf.mxu0
      %v3306 = vadd.f32 0.0, %v3305
      %v3307 = vpop.f32.mrf.mxu0
      %3308 = vdwg.mxu0
      %3309 = vmatpush.bf16.msra.mxu0 0
      %3310 = vmatpush.bf16.msra.mxu0 0
      %3311 = vmatpush.bf16.msra.mxu0 0
      %3312 = vmatpush.bf16.msra.mxu0 0
      %3313 = vmatpush.bf16.msra.mxu0 0
      %3314 = vmatpush.bf16.msra.mxu0 0
      %3315 = vmatpush.bf16.msra.mxu0 0
      %3316 = vmatpush.bf16.msra.mxu0 %v3256
      %3317 = vmatmul.bf16.gmra.mxu0 %v3244
      %v3318 = vpop.f32.mrf.mxu0
      %v3319 = vadd.f32 0.0, %v3318
      %v3320 = vpop.f32.mrf.mxu0
      %3321 = vdwg.mxu0
      %3322 = vmatpush.bf16.msra.mxu0 0
      %3323 = vmatpush.bf16.msra.mxu0 0
      %3324 = vmatpush.bf16.msra.mxu0 0
      %3325 = vmatpush.bf16.msra.mxu0 0
      %3326 = vmatpush.bf16.msra.mxu0 0
      %3327 = vmatpush.bf16.msra.mxu0 0
      %3328 = vmatpush.bf16.msra.mxu0 0
      %3329 = vmatpush.bf16.msra.mxu0 %v3259
      %3330 = vmatmul.bf16.gmra.mxu0 %v3244
      %v3331 = vpop.f32.mrf.mxu0
      %v3332 = vadd.f32 0.0, %v3331
      %v3333 = vpop.f32.mrf.mxu0
      %3334 = vdwg.mxu0
      %3335 = vmatpush.bf16.msra.mxu0 0
      %3336 = vmatpush.bf16.msra.mxu0 0
      %3337 = vmatpush.bf16.msra.mxu0 0
      %3338 = vmatpush.bf16.msra.mxu0 0
      %3339 = vmatpush.bf16.msra.mxu0 0
      %3340 = vmatpush.bf16.msra.mxu0 0
      %3341 = vmatpush.bf16.msra.mxu0 0
      %3342 = vmatpush.bf16.msra.mxu0 %v3262
      %3343 = vmatmul.bf16.gmra.mxu0 %v3244
      %v3344 = vpop.f32.mrf.mxu0
      %v3345 = vadd.f32 0.0, %v3344
      %v3346 = vpop.f32.mrf.mxu0
      %3347 = vdwg.mxu0
      %3348 = vmatpush.bf16.msra.mxu0 0
      %3349 = vmatpush.bf16.msra.mxu0 0
      %3350 = vmatpush.bf16.msra.mxu0 0
      %3351 = vmatpush.bf16.msra.mxu0 0
      %3352 = vmatpush.bf16.msra.mxu0 0
      %3353 = vmatpush.bf16.msra.mxu0 0
      %3354 = vmatpush.bf16.msra.mxu0 0
      %3355 = vmatpush.bf16.msra.mxu0 %v3265
      %3356 = vmatmul.bf16.gmra.mxu0 %v3244
      %v3357 = vpop.f32.mrf.mxu0
      %v3358 = vadd.f32 0.0, %v3357
      %v3359 = vpop.f32.mrf.mxu0
      %3360 = vdwg.mxu0
      %3361 = vmatpush.bf16.msra.mxu0 0
      %3362 = vmatpush.bf16.msra.mxu0 0
      %3363 = vmatpush.bf16.msra.mxu0 0
      %3364 = vmatpush.bf16.msra.mxu0 0
      %3365 = vmatpush.bf16.msra.mxu0 0
      %3366 = vmatpush.bf16.msra.mxu0 0
      %3367 = vmatpush.bf16.msra.mxu0 0
      %3368 = vmatpush.bf16.msra.mxu0 %v3268
      %3369 = vmatmul.bf16.gmra.mxu0 %v3244
      %v3370 = vpop.f32.mrf.mxu0
      %v3371 = vadd.f32 0.0, %v3370
      %v3372 = vpop.f32.mrf.mxu0
      %3373 = vdwg.mxu0
      %v3374 = vadd.f32 %v3204, %v3280
      %v3375 = vadd.f32 %v3205, %v3293
      %v3376 = vadd.f32 %v3206, %v3306
      %v3377 = vadd.f32 %v3207, %v3319
      %v3378 = vadd.f32 %v3208, %v3332
      %v3379 = vadd.f32 %v3209, %v3345
      %v3380 = vadd.f32 %v3210, %v3358
      %v3381 = vadd.f32 %v3211, %v3371
      %s3382 = scalar_lea.vmem %s1, 76
      %v3383 = vld [vmem:[%s3382] sm:$0xf]
      %3384 = vrot.lane.b32.xlu0 %v247, 55
      %v3385 = vpop.permute.xlu0 %3384
      %3386 = vrot.lane.b32.xlu0 %v248, 55
      %v3387 = vpop.permute.xlu0 %3386
      %3388 = vrot.lane.b32.xlu0 %v249, 55
      %v3389 = vpop.permute.xlu0 %3388
      %3390 = vrot.lane.b32.xlu0 %v250, 55
      %v3391 = vpop.permute.xlu0 %3390
      %3392 = vrot.lane.b32.xlu0 %v251, 55
      %v3393 = vpop.permute.xlu0 %3392
      %3394 = vrot.lane.b32.xlu0 %v252, 55
      %v3395 = vpop.permute.xlu0 %3394
      %3396 = vrot.lane.b32.xlu0 %v253, 55
      %v3397 = vpop.permute.xlu0 %3396
      %3398 = vrot.lane.b32.xlu0 %v1701, 55
      %v3399 = vpop.permute.xlu0 %3398
      %3400 = vrot.lane.b32.xlu0 %v3215, 55
      %v3401 = vpop.permute.xlu0 %3400
      %vm3402 = vcmask 449536
      %v3403 = vsel %vm3402, %v3385, %v3387
      %v3404 = vsel %vm3402, %v3387, %v3389
      %v3405 = vsel %vm3402, %v3389, %v3391
      %v3406 = vsel %vm3402, %v3391, %v3393
      %v3407 = vsel %vm3402, %v3393, %v3395
      %v3408 = vsel %vm3402, %v3395, %v3397
      %v3409 = vsel %vm3402, %v3397, %v3399
      %v3410 = vsel %vm3402, %v3399, %v3401
      %v3412 = vsel %vm278, %v3383, 0
      %v3415 = vsel %vm282, %v3403, 0
      %v3418 = vsel %vm282, %v3404, 0
      %v3421 = vsel %vm282, %v3405, 0
      %v3424 = vsel %vm282, %v3406, 0
      %v3427 = vsel %vm282, %v3407, 0
      %v3430 = vsel %vm282, %v3408, 0
      %v3433 = vsel %vm282, %v3409, 0
      %v3436 = vsel %vm282, %v3410, 0
      %3438 = vmatpush.bf16.msra.mxu0 0
      %3439 = vmatpush.bf16.msra.mxu0 0
      %3440 = vmatpush.bf16.msra.mxu0 0
      %3441 = vmatpush.bf16.msra.mxu0 0
      %3442 = vmatpush.bf16.msra.mxu0 0
      %3443 = vmatpush.bf16.msra.mxu0 0
      %3444 = vmatpush.bf16.msra.mxu0 0
      %3445 = vmatpush.bf16.msra.mxu0 %v3415
      %3446 = vmatmul.bf16.gmra.mxu0 %v3412
      %v3447 = vpop.f32.mrf.mxu0
      %v3448 = vadd.f32 0.0, %v3447
      %v3449 = vpop.f32.mrf.mxu0
      %3450 = vdwg.mxu0
      %3451 = vmatpush.bf16.msra.mxu0 0
      %3452 = vmatpush.bf16.msra.mxu0 0
      %3453 = vmatpush.bf16.msra.mxu0 0
      %3454 = vmatpush.bf16.msra.mxu0 0
      %3455 = vmatpush.bf16.msra.mxu0 0
      %3456 = vmatpush.bf16.msra.mxu0 0
      %3457 = vmatpush.bf16.msra.mxu0 0
      %3458 = vmatpush.bf16.msra.mxu0 %v3418
      %3459 = vmatmul.bf16.gmra.mxu0 %v3412
      %v3460 = vpop.f32.mrf.mxu0
      %v3461 = vadd.f32 0.0, %v3460
      %v3462 = vpop.f32.mrf.mxu0
      %3463 = vdwg.mxu0
      %3464 = vmatpush.bf16.msra.mxu0 0
      %3465 = vmatpush.bf16.msra.mxu0 0
      %3466 = vmatpush.bf16.msra.mxu0 0
      %3467 = vmatpush.bf16.msra.mxu0 0
      %3468 = vmatpush.bf16.msra.mxu0 0
      %3469 = vmatpush.bf16.msra.mxu0 0
      %3470 = vmatpush.bf16.msra.mxu0 0
      %3471 = vmatpush.bf16.msra.mxu0 %v3421
      %3472 = vmatmul.bf16.gmra.mxu0 %v3412
      %v3473 = vpop.f32.mrf.mxu0
      %v3474 = vadd.f32 0.0, %v3473
      %v3475 = vpop.f32.mrf.mxu0
      %3476 = vdwg.mxu0
      %3477 = vmatpush.bf16.msra.mxu0 0
      %3478 = vmatpush.bf16.msra.mxu0 0
      %3479 = vmatpush.bf16.msra.mxu0 0
      %3480 = vmatpush.bf16.msra.mxu0 0
      %3481 = vmatpush.bf16.msra.mxu0 0
      %3482 = vmatpush.bf16.msra.mxu0 0
      %3483 = vmatpush.bf16.msra.mxu0 0
      %3484 = vmatpush.bf16.msra.mxu0 %v3424
      %3485 = vmatmul.bf16.gmra.mxu0 %v3412
      %v3486 = vpop.f32.mrf.mxu0
      %v3487 = vadd.f32 0.0, %v3486
      %v3488 = vpop.f32.mrf.mxu0
      %3489 = vdwg.mxu0
      %3490 = vmatpush.bf16.msra.mxu0 0
      %3491 = vmatpush.bf16.msra.mxu0 0
      %3492 = vmatpush.bf16.msra.mxu0 0
      %3493 = vmatpush.bf16.msra.mxu0 0
      %3494 = vmatpush.bf16.msra.mxu0 0
      %3495 = vmatpush.bf16.msra.mxu0 0
      %3496 = vmatpush.bf16.msra.mxu0 0
      %3497 = vmatpush.bf16.msra.mxu0 %v3427
      %3498 = vmatmul.bf16.gmra.mxu0 %v3412
      %v3499 = vpop.f32.mrf.mxu0
      %v3500 = vadd.f32 0.0, %v3499
      %v3501 = vpop.f32.mrf.mxu0
      %3502 = vdwg.mxu0
      %3503 = vmatpush.bf16.msra.mxu0 0
      %3504 = vmatpush.bf16.msra.mxu0 0
      %3505 = vmatpush.bf16.msra.mxu0 0
      %3506 = vmatpush.bf16.msra.mxu0 0
      %3507 = vmatpush.bf16.msra.mxu0 0
      %3508 = vmatpush.bf16.msra.mxu0 0
      %3509 = vmatpush.bf16.msra.mxu0 0
      %3510 = vmatpush.bf16.msra.mxu0 %v3430
      %3511 = vmatmul.bf16.gmra.mxu0 %v3412
      %v3512 = vpop.f32.mrf.mxu0
      %v3513 = vadd.f32 0.0, %v3512
      %v3514 = vpop.f32.mrf.mxu0
      %3515 = vdwg.mxu0
      %3516 = vmatpush.bf16.msra.mxu0 0
      %3517 = vmatpush.bf16.msra.mxu0 0
      %3518 = vmatpush.bf16.msra.mxu0 0
      %3519 = vmatpush.bf16.msra.mxu0 0
      %3520 = vmatpush.bf16.msra.mxu0 0
      %3521 = vmatpush.bf16.msra.mxu0 0
      %3522 = vmatpush.bf16.msra.mxu0 0
      %3523 = vmatpush.bf16.msra.mxu0 %v3433
      %3524 = vmatmul.bf16.gmra.mxu0 %v3412
      %v3525 = vpop.f32.mrf.mxu0
      %v3526 = vadd.f32 0.0, %v3525
      %v3527 = vpop.f32.mrf.mxu0
      %3528 = vdwg.mxu0
      %3529 = vmatpush.bf16.msra.mxu0 0
      %3530 = vmatpush.bf16.msra.mxu0 0
      %3531 = vmatpush.bf16.msra.mxu0 0
      %3532 = vmatpush.bf16.msra.mxu0 0
      %3533 = vmatpush.bf16.msra.mxu0 0
      %3534 = vmatpush.bf16.msra.mxu0 0
      %3535 = vmatpush.bf16.msra.mxu0 0
      %3536 = vmatpush.bf16.msra.mxu0 %v3436
      %3537 = vmatmul.bf16.gmra.mxu0 %v3412
      %v3538 = vpop.f32.mrf.mxu0
      %v3539 = vadd.f32 0.0, %v3538
      %v3540 = vpop.f32.mrf.mxu0
      %3541 = vdwg.mxu0
      %v3542 = vadd.f32 %v3374, %v3448
      %v3543 = vadd.f32 %v3375, %v3461
      %v3544 = vadd.f32 %v3376, %v3474
      %v3545 = vadd.f32 %v3377, %v3487
      %v3546 = vadd.f32 %v3378, %v3500
      %v3547 = vadd.f32 %v3379, %v3513
      %v3548 = vadd.f32 %v3380, %v3526
      %v3549 = vadd.f32 %v3381, %v3539
      %s3550 = scalar_lea.vmem %s1, 80
      %v3551 = vld [vmem:[%s3550] sm:$0xf]
      %3552 = vrot.lane.b32.xlu0 %v247, 54
      %v3553 = vpop.permute.xlu0 %3552
      %3554 = vrot.lane.b32.xlu0 %v248, 54
      %v3555 = vpop.permute.xlu0 %3554
      %3556 = vrot.lane.b32.xlu0 %v249, 54
      %v3557 = vpop.permute.xlu0 %3556
      %3558 = vrot.lane.b32.xlu0 %v250, 54
      %v3559 = vpop.permute.xlu0 %3558
      %3560 = vrot.lane.b32.xlu0 %v251, 54
      %v3561 = vpop.permute.xlu0 %3560
      %3562 = vrot.lane.b32.xlu0 %v252, 54
      %v3563 = vpop.permute.xlu0 %3562
      %3564 = vrot.lane.b32.xlu0 %v253, 54
      %v3565 = vpop.permute.xlu0 %3564
      %3566 = vrot.lane.b32.xlu0 %v1701, 54
      %v3567 = vpop.permute.xlu0 %3566
      %3568 = vrot.lane.b32.xlu0 %v3215, 54
      %v3569 = vpop.permute.xlu0 %3568
      %vm3570 = vcmask 441344
      %v3571 = vsel %vm3570, %v3553, %v3555
      %v3572 = vsel %vm3570, %v3555, %v3557
      %v3573 = vsel %vm3570, %v3557, %v3559
      %v3574 = vsel %vm3570, %v3559, %v3561
      %v3575 = vsel %vm3570, %v3561, %v3563
      %v3576 = vsel %vm3570, %v3563, %v3565
      %v3577 = vsel %vm3570, %v3565, %v3567
      %v3578 = vsel %vm3570, %v3567, %v3569
      %v3580 = vsel %vm278, %v3551, 0
      %v3583 = vsel %vm282, %v3571, 0
      %v3586 = vsel %vm282, %v3572, 0
      %v3589 = vsel %vm282, %v3573, 0
      %v3592 = vsel %vm282, %v3574, 0
      %v3595 = vsel %vm282, %v3575, 0
      %v3598 = vsel %vm282, %v3576, 0
      %v3601 = vsel %vm282, %v3577, 0
      %v3604 = vsel %vm282, %v3578, 0
      %3606 = vmatpush.bf16.msra.mxu0 0
      %3607 = vmatpush.bf16.msra.mxu0 0
      %3608 = vmatpush.bf16.msra.mxu0 0
      %3609 = vmatpush.bf16.msra.mxu0 0
      %3610 = vmatpush.bf16.msra.mxu0 0
      %3611 = vmatpush.bf16.msra.mxu0 0
      %3612 = vmatpush.bf16.msra.mxu0 0
      %3613 = vmatpush.bf16.msra.mxu0 %v3583
      %3614 = vmatmul.bf16.gmra.mxu0 %v3580
      %v3615 = vpop.f32.mrf.mxu0
      %v3616 = vadd.f32 0.0, %v3615
      %v3617 = vpop.f32.mrf.mxu0
      %3618 = vdwg.mxu0
      %3619 = vmatpush.bf16.msra.mxu0 0
      %3620 = vmatpush.bf16.msra.mxu0 0
      %3621 = vmatpush.bf16.msra.mxu0 0
      %3622 = vmatpush.bf16.msra.mxu0 0
      %3623 = vmatpush.bf16.msra.mxu0 0
      %3624 = vmatpush.bf16.msra.mxu0 0
      %3625 = vmatpush.bf16.msra.mxu0 0
      %3626 = vmatpush.bf16.msra.mxu0 %v3586
      %3627 = vmatmul.bf16.gmra.mxu0 %v3580
      %v3628 = vpop.f32.mrf.mxu0
      %v3629 = vadd.f32 0.0, %v3628
      %v3630 = vpop.f32.mrf.mxu0
      %3631 = vdwg.mxu0
      %3632 = vmatpush.bf16.msra.mxu0 0
      %3633 = vmatpush.bf16.msra.mxu0 0
      %3634 = vmatpush.bf16.msra.mxu0 0
      %3635 = vmatpush.bf16.msra.mxu0 0
      %3636 = vmatpush.bf16.msra.mxu0 0
      %3637 = vmatpush.bf16.msra.mxu0 0
      %3638 = vmatpush.bf16.msra.mxu0 0
      %3639 = vmatpush.bf16.msra.mxu0 %v3589
      %3640 = vmatmul.bf16.gmra.mxu0 %v3580
      %v3641 = vpop.f32.mrf.mxu0
      %v3642 = vadd.f32 0.0, %v3641
      %v3643 = vpop.f32.mrf.mxu0
      %3644 = vdwg.mxu0
      %3645 = vmatpush.bf16.msra.mxu0 0
      %3646 = vmatpush.bf16.msra.mxu0 0
      %3647 = vmatpush.bf16.msra.mxu0 0
      %3648 = vmatpush.bf16.msra.mxu0 0
      %3649 = vmatpush.bf16.msra.mxu0 0
      %3650 = vmatpush.bf16.msra.mxu0 0
      %3651 = vmatpush.bf16.msra.mxu0 0
      %3652 = vmatpush.bf16.msra.mxu0 %v3592
      %3653 = vmatmul.bf16.gmra.mxu0 %v3580
      %v3654 = vpop.f32.mrf.mxu0
      %v3655 = vadd.f32 0.0, %v3654
      %v3656 = vpop.f32.mrf.mxu0
      %3657 = vdwg.mxu0
      %3658 = vmatpush.bf16.msra.mxu0 0
      %3659 = vmatpush.bf16.msra.mxu0 0
      %3660 = vmatpush.bf16.msra.mxu0 0
      %3661 = vmatpush.bf16.msra.mxu0 0
      %3662 = vmatpush.bf16.msra.mxu0 0
      %3663 = vmatpush.bf16.msra.mxu0 0
      %3664 = vmatpush.bf16.msra.mxu0 0
      %3665 = vmatpush.bf16.msra.mxu0 %v3595
      %3666 = vmatmul.bf16.gmra.mxu0 %v3580
      %v3667 = vpop.f32.mrf.mxu0
      %v3668 = vadd.f32 0.0, %v3667
      %v3669 = vpop.f32.mrf.mxu0
      %3670 = vdwg.mxu0
      %3671 = vmatpush.bf16.msra.mxu0 0
      %3672 = vmatpush.bf16.msra.mxu0 0
      %3673 = vmatpush.bf16.msra.mxu0 0
      %3674 = vmatpush.bf16.msra.mxu0 0
      %3675 = vmatpush.bf16.msra.mxu0 0
      %3676 = vmatpush.bf16.msra.mxu0 0
      %3677 = vmatpush.bf16.msra.mxu0 0
      %3678 = vmatpush.bf16.msra.mxu0 %v3598
      %3679 = vmatmul.bf16.gmra.mxu0 %v3580
      %v3680 = vpop.f32.mrf.mxu0
      %v3681 = vadd.f32 0.0, %v3680
      %v3682 = vpop.f32.mrf.mxu0
      %3683 = vdwg.mxu0
      %3684 = vmatpush.bf16.msra.mxu0 0
      %3685 = vmatpush.bf16.msra.mxu0 0
      %3686 = vmatpush.bf16.msra.mxu0 0
      %3687 = vmatpush.bf16.msra.mxu0 0
      %3688 = vmatpush.bf16.msra.mxu0 0
      %3689 = vmatpush.bf16.msra.mxu0 0
      %3690 = vmatpush.bf16.msra.mxu0 0
      %3691 = vmatpush.bf16.msra.mxu0 %v3601
      %3692 = vmatmul.bf16.gmra.mxu0 %v3580
      %v3693 = vpop.f32.mrf.mxu0
      %v3694 = vadd.f32 0.0, %v3693
      %v3695 = vpop.f32.mrf.mxu0
      %3696 = vdwg.mxu0
      %3697 = vmatpush.bf16.msra.mxu0 0
      %3698 = vmatpush.bf16.msra.mxu0 0
      %3699 = vmatpush.bf16.msra.mxu0 0
      %3700 = vmatpush.bf16.msra.mxu0 0
      %3701 = vmatpush.bf16.msra.mxu0 0
      %3702 = vmatpush.bf16.msra.mxu0 0
      %3703 = vmatpush.bf16.msra.mxu0 0
      %3704 = vmatpush.bf16.msra.mxu0 %v3604
      %3705 = vmatmul.bf16.gmra.mxu0 %v3580
      %v3706 = vpop.f32.mrf.mxu0
      %v3707 = vadd.f32 0.0, %v3706
      %v3708 = vpop.f32.mrf.mxu0
      %3709 = vdwg.mxu0
      %v3710 = vadd.f32 %v3542, %v3616
      %v3711 = vadd.f32 %v3543, %v3629
      %v3712 = vadd.f32 %v3544, %v3642
      %v3713 = vadd.f32 %v3545, %v3655
      %v3714 = vadd.f32 %v3546, %v3668
      %v3715 = vadd.f32 %v3547, %v3681
      %v3716 = vadd.f32 %v3548, %v3694
      %v3717 = vadd.f32 %v3549, %v3707
      %s3718 = scalar_lea.vmem %s1, 84
      %v3719 = vld [vmem:[%s3718] sm:$0xf]
      %3720 = vrot.lane.b32.xlu0 %v247, 46
      %v3721 = vpop.permute.xlu0 %3720
      %3722 = vrot.lane.b32.xlu0 %v248, 46
      %v3723 = vpop.permute.xlu0 %3722
      %3724 = vrot.lane.b32.xlu0 %v249, 46
      %v3725 = vpop.permute.xlu0 %3724
      %3726 = vrot.lane.b32.xlu0 %v250, 46
      %v3727 = vpop.permute.xlu0 %3726
      %3728 = vrot.lane.b32.xlu0 %v251, 46
      %v3729 = vpop.permute.xlu0 %3728
      %3730 = vrot.lane.b32.xlu0 %v252, 46
      %v3731 = vpop.permute.xlu0 %3730
      %3732 = vrot.lane.b32.xlu0 %v253, 46
      %v3733 = vpop.permute.xlu0 %3732
      %3734 = vrot.lane.b32.xlu0 %v1701, 46
      %v3735 = vpop.permute.xlu0 %3734
      %3736 = vrot.lane.b32.xlu0 %v3215, 46
      %v3737 = vpop.permute.xlu0 %3736
      %vm3738 = vcmask 375808
      %v3739 = vsel %vm3738, %v3721, %v3723
      %v3740 = vsel %vm3738, %v3723, %v3725
      %v3741 = vsel %vm3738, %v3725, %v3727
      %v3742 = vsel %vm3738, %v3727, %v3729
      %v3743 = vsel %vm3738, %v3729, %v3731
      %v3744 = vsel %vm3738, %v3731, %v3733
      %v3745 = vsel %vm3738, %v3733, %v3735
      %v3746 = vsel %vm3738, %v3735, %v3737
      %v3748 = vsel %vm278, %v3719, 0
      %v3751 = vsel %vm282, %v3739, 0
      %v3754 = vsel %vm282, %v3740, 0
      %v3757 = vsel %vm282, %v3741, 0
      %v3760 = vsel %vm282, %v3742, 0
      %v3763 = vsel %vm282, %v3743, 0
      %v3766 = vsel %vm282, %v3744, 0
      %v3769 = vsel %vm282, %v3745, 0
      %v3772 = vsel %vm282, %v3746, 0
      %3774 = vmatpush.bf16.msra.mxu0 0
      %3775 = vmatpush.bf16.msra.mxu0 0
      %3776 = vmatpush.bf16.msra.mxu0 0
      %3777 = vmatpush.bf16.msra.mxu0 0
      %3778 = vmatpush.bf16.msra.mxu0 0
      %3779 = vmatpush.bf16.msra.mxu0 0
      %3780 = vmatpush.bf16.msra.mxu0 0
      %3781 = vmatpush.bf16.msra.mxu0 %v3751
      %3782 = vmatmul.bf16.gmra.mxu0 %v3748
      %v3783 = vpop.f32.mrf.mxu0
      %v3784 = vadd.f32 0.0, %v3783
      %v3785 = vpop.f32.mrf.mxu0
      %3786 = vdwg.mxu0
      %3787 = vmatpush.bf16.msra.mxu0 0
      %3788 = vmatpush.bf16.msra.mxu0 0
      %3789 = vmatpush.bf16.msra.mxu0 0
      %3790 = vmatpush.bf16.msra.mxu0 0
      %3791 = vmatpush.bf16.msra.mxu0 0
      %3792 = vmatpush.bf16.msra.mxu0 0
      %3793 = vmatpush.bf16.msra.mxu0 0
      %3794 = vmatpush.bf16.msra.mxu0 %v3754
      %3795 = vmatmul.bf16.gmra.mxu0 %v3748
      %v3796 = vpop.f32.mrf.mxu0
      %v3797 = vadd.f32 0.0, %v3796
      %v3798 = vpop.f32.mrf.mxu0
      %3799 = vdwg.mxu0
      %3800 = vmatpush.bf16.msra.mxu0 0
      %3801 = vmatpush.bf16.msra.mxu0 0
      %3802 = vmatpush.bf16.msra.mxu0 0
      %3803 = vmatpush.bf16.msra.mxu0 0
      %3804 = vmatpush.bf16.msra.mxu0 0
      %3805 = vmatpush.bf16.msra.mxu0 0
      %3806 = vmatpush.bf16.msra.mxu0 0
      %3807 = vmatpush.bf16.msra.mxu0 %v3757
      %3808 = vmatmul.bf16.gmra.mxu0 %v3748
      %v3809 = vpop.f32.mrf.mxu0
      %v3810 = vadd.f32 0.0, %v3809
      %v3811 = vpop.f32.mrf.mxu0
      %3812 = vdwg.mxu0
      %3813 = vmatpush.bf16.msra.mxu0 0
      %3814 = vmatpush.bf16.msra.mxu0 0
      %3815 = vmatpush.bf16.msra.mxu0 0
      %3816 = vmatpush.bf16.msra.mxu0 0
      %3817 = vmatpush.bf16.msra.mxu0 0
      %3818 = vmatpush.bf16.msra.mxu0 0
      %3819 = vmatpush.bf16.msra.mxu0 0
      %3820 = vmatpush.bf16.msra.mxu0 %v3760
      %3821 = vmatmul.bf16.gmra.mxu0 %v3748
      %v3822 = vpop.f32.mrf.mxu0
      %v3823 = vadd.f32 0.0, %v3822
      %v3824 = vpop.f32.mrf.mxu0
      %3825 = vdwg.mxu0
      %3826 = vmatpush.bf16.msra.mxu0 0
      %3827 = vmatpush.bf16.msra.mxu0 0
      %3828 = vmatpush.bf16.msra.mxu0 0
      %3829 = vmatpush.bf16.msra.mxu0 0
      %3830 = vmatpush.bf16.msra.mxu0 0
      %3831 = vmatpush.bf16.msra.mxu0 0
      %3832 = vmatpush.bf16.msra.mxu0 0
      %3833 = vmatpush.bf16.msra.mxu0 %v3763
      %3834 = vmatmul.bf16.gmra.mxu0 %v3748
      %v3835 = vpop.f32.mrf.mxu0
      %v3836 = vadd.f32 0.0, %v3835
      %v3837 = vpop.f32.mrf.mxu0
      %3838 = vdwg.mxu0
      %3839 = vmatpush.bf16.msra.mxu0 0
      %3840 = vmatpush.bf16.msra.mxu0 0
      %3841 = vmatpush.bf16.msra.mxu0 0
      %3842 = vmatpush.bf16.msra.mxu0 0
      %3843 = vmatpush.bf16.msra.mxu0 0
      %3844 = vmatpush.bf16.msra.mxu0 0
      %3845 = vmatpush.bf16.msra.mxu0 0
      %3846 = vmatpush.bf16.msra.mxu0 %v3766
      %3847 = vmatmul.bf16.gmra.mxu0 %v3748
      %v3848 = vpop.f32.mrf.mxu0
      %v3849 = vadd.f32 0.0, %v3848
      %v3850 = vpop.f32.mrf.mxu0
      %3851 = vdwg.mxu0
      %3852 = vmatpush.bf16.msra.mxu0 0
      %3853 = vmatpush.bf16.msra.mxu0 0
      %3854 = vmatpush.bf16.msra.mxu0 0
      %3855 = vmatpush.bf16.msra.mxu0 0
      %3856 = vmatpush.bf16.msra.mxu0 0
      %3857 = vmatpush.bf16.msra.mxu0 0
      %3858 = vmatpush.bf16.msra.mxu0 0
      %3859 = vmatpush.bf16.msra.mxu0 %v3769
      %3860 = vmatmul.bf16.gmra.mxu0 %v3748
      %v3861 = vpop.f32.mrf.mxu0
      %v3862 = vadd.f32 0.0, %v3861
      %v3863 = vpop.f32.mrf.mxu0
      %3864 = vdwg.mxu0
      %3865 = vmatpush.bf16.msra.mxu0 0
      %3866 = vmatpush.bf16.msra.mxu0 0
      %3867 = vmatpush.bf16.msra.mxu0 0
      %3868 = vmatpush.bf16.msra.mxu0 0
      %3869 = vmatpush.bf16.msra.mxu0 0
      %3870 = vmatpush.bf16.msra.mxu0 0
      %3871 = vmatpush.bf16.msra.mxu0 0
      %3872 = vmatpush.bf16.msra.mxu0 %v3772
      %3873 = vmatmul.bf16.gmra.mxu0 %v3748
      %v3874 = vpop.f32.mrf.mxu0
      %v3875 = vadd.f32 0.0, %v3874
      %v3876 = vpop.f32.mrf.mxu0
      %3877 = vdwg.mxu0
      %v3878 = vadd.f32 %v3710, %v3784
      %v3879 = vadd.f32 %v3711, %v3797
      %v3880 = vadd.f32 %v3712, %v3810
      %v3881 = vadd.f32 %v3713, %v3823
      %v3882 = vadd.f32 %v3714, %v3836
      %v3883 = vadd.f32 %v3715, %v3849
      %v3884 = vadd.f32 %v3716, %v3862
      %v3885 = vadd.f32 %v3717, %v3875
      %s3886 = scalar_lea.vmem %s1, 88
      %v3887 = vld [vmem:[%s3886] sm:$0xf]
      %3888 = vrot.lane.b32.xlu0 %v247, 45
      %v3889 = vpop.permute.xlu0 %3888
      %3890 = vrot.lane.b32.xlu0 %v248, 45
      %v3891 = vpop.permute.xlu0 %3890
      %3892 = vrot.lane.b32.xlu0 %v249, 45
      %v3893 = vpop.permute.xlu0 %3892
      %3894 = vrot.lane.b32.xlu0 %v250, 45
      %v3895 = vpop.permute.xlu0 %3894
      %3896 = vrot.lane.b32.xlu0 %v251, 45
      %v3897 = vpop.permute.xlu0 %3896
      %3898 = vrot.lane.b32.xlu0 %v252, 45
      %v3899 = vpop.permute.xlu0 %3898
      %3900 = vrot.lane.b32.xlu0 %v253, 45
      %v3901 = vpop.permute.xlu0 %3900
      %3902 = vrot.lane.b32.xlu0 %v1701, 45
      %v3903 = vpop.permute.xlu0 %3902
      %3904 = vrot.lane.b32.xlu0 %v3215, 45
      %v3905 = vpop.permute.xlu0 %3904
      %vm3906 = vcmask 367616
      %v3907 = vsel %vm3906, %v3889, %v3891
      %v3908 = vsel %vm3906, %v3891, %v3893
      %v3909 = vsel %vm3906, %v3893, %v3895
      %v3910 = vsel %vm3906, %v3895, %v3897
      %v3911 = vsel %vm3906, %v3897, %v3899
      %v3912 = vsel %vm3906, %v3899, %v3901
      %v3913 = vsel %vm3906, %v3901, %v3903
      %v3914 = vsel %vm3906, %v3903, %v3905
      %v3916 = vsel %vm278, %v3887, 0
      %v3919 = vsel %vm282, %v3907, 0
      %v3922 = vsel %vm282, %v3908, 0
      %v3925 = vsel %vm282, %v3909, 0
      %v3928 = vsel %vm282, %v3910, 0
      %v3931 = vsel %vm282, %v3911, 0
      %v3934 = vsel %vm282, %v3912, 0
      %v3937 = vsel %vm282, %v3913, 0
      %v3940 = vsel %vm282, %v3914, 0
      %3942 = vmatpush.bf16.msra.mxu0 0
      %3943 = vmatpush.bf16.msra.mxu0 0
      %3944 = vmatpush.bf16.msra.mxu0 0
      %3945 = vmatpush.bf16.msra.mxu0 0
      %3946 = vmatpush.bf16.msra.mxu0 0
      %3947 = vmatpush.bf16.msra.mxu0 0
      %3948 = vmatpush.bf16.msra.mxu0 0
      %3949 = vmatpush.bf16.msra.mxu0 %v3919
      %3950 = vmatmul.bf16.gmra.mxu0 %v3916
      %v3951 = vpop.f32.mrf.mxu0
      %v3952 = vadd.f32 0.0, %v3951
      %v3953 = vpop.f32.mrf.mxu0
      %3954 = vdwg.mxu0
      %3955 = vmatpush.bf16.msra.mxu0 0
      %3956 = vmatpush.bf16.msra.mxu0 0
      %3957 = vmatpush.bf16.msra.mxu0 0
      %3958 = vmatpush.bf16.msra.mxu0 0
      %3959 = vmatpush.bf16.msra.mxu0 0
      %3960 = vmatpush.bf16.msra.mxu0 0
      %3961 = vmatpush.bf16.msra.mxu0 0
      %3962 = vmatpush.bf16.msra.mxu0 %v3922
      %3963 = vmatmul.bf16.gmra.mxu0 %v3916
      %v3964 = vpop.f32.mrf.mxu0
      %v3965 = vadd.f32 0.0, %v3964
      %v3966 = vpop.f32.mrf.mxu0
      %3967 = vdwg.mxu0
      %3968 = vmatpush.bf16.msra.mxu0 0
      %3969 = vmatpush.bf16.msra.mxu0 0
      %3970 = vmatpush.bf16.msra.mxu0 0
      %3971 = vmatpush.bf16.msra.mxu0 0
      %3972 = vmatpush.bf16.msra.mxu0 0
      %3973 = vmatpush.bf16.msra.mxu0 0
      %3974 = vmatpush.bf16.msra.mxu0 0
      %3975 = vmatpush.bf16.msra.mxu0 %v3925
      %3976 = vmatmul.bf16.gmra.mxu0 %v3916
      %v3977 = vpop.f32.mrf.mxu0
      %v3978 = vadd.f32 0.0, %v3977
      %v3979 = vpop.f32.mrf.mxu0
      %3980 = vdwg.mxu0
      %3981 = vmatpush.bf16.msra.mxu0 0
      %3982 = vmatpush.bf16.msra.mxu0 0
      %3983 = vmatpush.bf16.msra.mxu0 0
      %3984 = vmatpush.bf16.msra.mxu0 0
      %3985 = vmatpush.bf16.msra.mxu0 0
      %3986 = vmatpush.bf16.msra.mxu0 0
      %3987 = vmatpush.bf16.msra.mxu0 0
      %3988 = vmatpush.bf16.msra.mxu0 %v3928
      %3989 = vmatmul.bf16.gmra.mxu0 %v3916
      %v3990 = vpop.f32.mrf.mxu0
      %v3991 = vadd.f32 0.0, %v3990
      %v3992 = vpop.f32.mrf.mxu0
      %3993 = vdwg.mxu0
      %3994 = vmatpush.bf16.msra.mxu0 0
      %3995 = vmatpush.bf16.msra.mxu0 0
      %3996 = vmatpush.bf16.msra.mxu0 0
      %3997 = vmatpush.bf16.msra.mxu0 0
      %3998 = vmatpush.bf16.msra.mxu0 0
      %3999 = vmatpush.bf16.msra.mxu0 0
      %4000 = vmatpush.bf16.msra.mxu0 0
      %4001 = vmatpush.bf16.msra.mxu0 %v3931
      %4002 = vmatmul.bf16.gmra.mxu0 %v3916
      %v4003 = vpop.f32.mrf.mxu0
      %v4004 = vadd.f32 0.0, %v4003
      %v4005 = vpop.f32.mrf.mxu0
      %4006 = vdwg.mxu0
      %4007 = vmatpush.bf16.msra.mxu0 0
      %4008 = vmatpush.bf16.msra.mxu0 0
      %4009 = vmatpush.bf16.msra.mxu0 0
      %4010 = vmatpush.bf16.msra.mxu0 0
      %4011 = vmatpush.bf16.msra.mxu0 0
      %4012 = vmatpush.bf16.msra.mxu0 0
      %4013 = vmatpush.bf16.msra.mxu0 0
      %4014 = vmatpush.bf16.msra.mxu0 %v3934
      %4015 = vmatmul.bf16.gmra.mxu0 %v3916
      %v4016 = vpop.f32.mrf.mxu0
      %v4017 = vadd.f32 0.0, %v4016
      %v4018 = vpop.f32.mrf.mxu0
      %4019 = vdwg.mxu0
      %4020 = vmatpush.bf16.msra.mxu0 0
      %4021 = vmatpush.bf16.msra.mxu0 0
      %4022 = vmatpush.bf16.msra.mxu0 0
      %4023 = vmatpush.bf16.msra.mxu0 0
      %4024 = vmatpush.bf16.msra.mxu0 0
      %4025 = vmatpush.bf16.msra.mxu0 0
      %4026 = vmatpush.bf16.msra.mxu0 0
      %4027 = vmatpush.bf16.msra.mxu0 %v3937
      %4028 = vmatmul.bf16.gmra.mxu0 %v3916
      %v4029 = vpop.f32.mrf.mxu0
      %v4030 = vadd.f32 0.0, %v4029
      %v4031 = vpop.f32.mrf.mxu0
      %4032 = vdwg.mxu0
      %4033 = vmatpush.bf16.msra.mxu0 0
      %4034 = vmatpush.bf16.msra.mxu0 0
      %4035 = vmatpush.bf16.msra.mxu0 0
      %4036 = vmatpush.bf16.msra.mxu0 0
      %4037 = vmatpush.bf16.msra.mxu0 0
      %4038 = vmatpush.bf16.msra.mxu0 0
      %4039 = vmatpush.bf16.msra.mxu0 0
      %4040 = vmatpush.bf16.msra.mxu0 %v3940
      %4041 = vmatmul.bf16.gmra.mxu0 %v3916
      %v4042 = vpop.f32.mrf.mxu0
      %v4043 = vadd.f32 0.0, %v4042
      %v4044 = vpop.f32.mrf.mxu0
      %4045 = vdwg.mxu0
      %v4046 = vadd.f32 %v3878, %v3952
      %v4047 = vadd.f32 %v3879, %v3965
      %v4048 = vadd.f32 %v3880, %v3978
      %v4049 = vadd.f32 %v3881, %v3991
      %v4050 = vadd.f32 %v3882, %v4004
      %v4051 = vadd.f32 %v3883, %v4017
      %v4052 = vadd.f32 %v3884, %v4030
      %v4053 = vadd.f32 %v3885, %v4043
      %s4054 = scalar_lea.vmem %s1, 92
      %v4055 = vld [vmem:[%s4054] sm:$0xf]
      %4056 = vrot.lane.b32.xlu0 %v247, 44
      %v4057 = vpop.permute.xlu0 %4056
      %4058 = vrot.lane.b32.xlu0 %v248, 44
      %v4059 = vpop.permute.xlu0 %4058
      %4060 = vrot.lane.b32.xlu0 %v249, 44
      %v4061 = vpop.permute.xlu0 %4060
      %4062 = vrot.lane.b32.xlu0 %v250, 44
      %v4063 = vpop.permute.xlu0 %4062
      %4064 = vrot.lane.b32.xlu0 %v251, 44
      %v4065 = vpop.permute.xlu0 %4064
      %4066 = vrot.lane.b32.xlu0 %v252, 44
      %v4067 = vpop.permute.xlu0 %4066
      %4068 = vrot.lane.b32.xlu0 %v253, 44
      %v4069 = vpop.permute.xlu0 %4068
      %4070 = vrot.lane.b32.xlu0 %v1701, 44
      %v4071 = vpop.permute.xlu0 %4070
      %4072 = vrot.lane.b32.xlu0 %v3215, 44
      %v4073 = vpop.permute.xlu0 %4072
      %vm4074 = vcmask 359424
      %v4075 = vsel %vm4074, %v4057, %v4059
      %v4076 = vsel %vm4074, %v4059, %v4061
      %v4077 = vsel %vm4074, %v4061, %v4063
      %v4078 = vsel %vm4074, %v4063, %v4065
      %v4079 = vsel %vm4074, %v4065, %v4067
      %v4080 = vsel %vm4074, %v4067, %v4069
      %v4081 = vsel %vm4074, %v4069, %v4071
      %v4082 = vsel %vm4074, %v4071, %v4073
      %v4084 = vsel %vm278, %v4055, 0
      %v4087 = vsel %vm282, %v4075, 0
      %v4090 = vsel %vm282, %v4076, 0
      %v4093 = vsel %vm282, %v4077, 0
      %v4096 = vsel %vm282, %v4078, 0
      %v4099 = vsel %vm282, %v4079, 0
      %v4102 = vsel %vm282, %v4080, 0
      %v4105 = vsel %vm282, %v4081, 0
      %v4108 = vsel %vm282, %v4082, 0
      %4110 = vmatpush.bf16.msra.mxu0 0
      %4111 = vmatpush.bf16.msra.mxu0 0
      %4112 = vmatpush.bf16.msra.mxu0 0
      %4113 = vmatpush.bf16.msra.mxu0 0
      %4114 = vmatpush.bf16.msra.mxu0 0
      %4115 = vmatpush.bf16.msra.mxu0 0
      %4116 = vmatpush.bf16.msra.mxu0 0
      %4117 = vmatpush.bf16.msra.mxu0 %v4087
      %4118 = vmatmul.bf16.gmra.mxu0 %v4084
      %v4119 = vpop.f32.mrf.mxu0
      %v4120 = vadd.f32 0.0, %v4119
      %v4121 = vpop.f32.mrf.mxu0
      %4122 = vdwg.mxu0
      %4123 = vmatpush.bf16.msra.mxu0 0
      %4124 = vmatpush.bf16.msra.mxu0 0
      %4125 = vmatpush.bf16.msra.mxu0 0
      %4126 = vmatpush.bf16.msra.mxu0 0
      %4127 = vmatpush.bf16.msra.mxu0 0
      %4128 = vmatpush.bf16.msra.mxu0 0
      %4129 = vmatpush.bf16.msra.mxu0 0
      %4130 = vmatpush.bf16.msra.mxu0 %v4090
      %4131 = vmatmul.bf16.gmra.mxu0 %v4084
      %v4132 = vpop.f32.mrf.mxu0
      %v4133 = vadd.f32 0.0, %v4132
      %v4134 = vpop.f32.mrf.mxu0
      %4135 = vdwg.mxu0
      %4136 = vmatpush.bf16.msra.mxu0 0
      %4137 = vmatpush.bf16.msra.mxu0 0
      %4138 = vmatpush.bf16.msra.mxu0 0
      %4139 = vmatpush.bf16.msra.mxu0 0
      %4140 = vmatpush.bf16.msra.mxu0 0
      %4141 = vmatpush.bf16.msra.mxu0 0
      %4142 = vmatpush.bf16.msra.mxu0 0
      %4143 = vmatpush.bf16.msra.mxu0 %v4093
      %4144 = vmatmul.bf16.gmra.mxu0 %v4084
      %v4145 = vpop.f32.mrf.mxu0
      %v4146 = vadd.f32 0.0, %v4145
      %v4147 = vpop.f32.mrf.mxu0
      %4148 = vdwg.mxu0
      %4149 = vmatpush.bf16.msra.mxu0 0
      %4150 = vmatpush.bf16.msra.mxu0 0
      %4151 = vmatpush.bf16.msra.mxu0 0
      %4152 = vmatpush.bf16.msra.mxu0 0
      %4153 = vmatpush.bf16.msra.mxu0 0
      %4154 = vmatpush.bf16.msra.mxu0 0
      %4155 = vmatpush.bf16.msra.mxu0 0
      %4156 = vmatpush.bf16.msra.mxu0 %v4096
      %4157 = vmatmul.bf16.gmra.mxu0 %v4084
      %v4158 = vpop.f32.mrf.mxu0
      %v4159 = vadd.f32 0.0, %v4158
      %v4160 = vpop.f32.mrf.mxu0
      %4161 = vdwg.mxu0
      %4162 = vmatpush.bf16.msra.mxu0 0
      %4163 = vmatpush.bf16.msra.mxu0 0
      %4164 = vmatpush.bf16.msra.mxu0 0
      %4165 = vmatpush.bf16.msra.mxu0 0
      %4166 = vmatpush.bf16.msra.mxu0 0
      %4167 = vmatpush.bf16.msra.mxu0 0
      %4168 = vmatpush.bf16.msra.mxu0 0
      %4169 = vmatpush.bf16.msra.mxu0 %v4099
      %4170 = vmatmul.bf16.gmra.mxu0 %v4084
      %v4171 = vpop.f32.mrf.mxu0
      %v4172 = vadd.f32 0.0, %v4171
      %v4173 = vpop.f32.mrf.mxu0
      %4174 = vdwg.mxu0
      %4175 = vmatpush.bf16.msra.mxu0 0
      %4176 = vmatpush.bf16.msra.mxu0 0
      %4177 = vmatpush.bf16.msra.mxu0 0
      %4178 = vmatpush.bf16.msra.mxu0 0
      %4179 = vmatpush.bf16.msra.mxu0 0
      %4180 = vmatpush.bf16.msra.mxu0 0
      %4181 = vmatpush.bf16.msra.mxu0 0
      %4182 = vmatpush.bf16.msra.mxu0 %v4102
      %4183 = vmatmul.bf16.gmra.mxu0 %v4084
      %v4184 = vpop.f32.mrf.mxu0
      %v4185 = vadd.f32 0.0, %v4184
      %v4186 = vpop.f32.mrf.mxu0
      %4187 = vdwg.mxu0
      %4188 = vmatpush.bf16.msra.mxu0 0
      %4189 = vmatpush.bf16.msra.mxu0 0
      %4190 = vmatpush.bf16.msra.mxu0 0
      %4191 = vmatpush.bf16.msra.mxu0 0
      %4192 = vmatpush.bf16.msra.mxu0 0
      %4193 = vmatpush.bf16.msra.mxu0 0
      %4194 = vmatpush.bf16.msra.mxu0 0
      %4195 = vmatpush.bf16.msra.mxu0 %v4105
      %4196 = vmatmul.bf16.gmra.mxu0 %v4084
      %v4197 = vpop.f32.mrf.mxu0
      %v4198 = vadd.f32 0.0, %v4197
      %v4199 = vpop.f32.mrf.mxu0
      %4200 = vdwg.mxu0
      %4201 = vmatpush.bf16.msra.mxu0 0
      %4202 = vmatpush.bf16.msra.mxu0 0
      %4203 = vmatpush.bf16.msra.mxu0 0
      %4204 = vmatpush.bf16.msra.mxu0 0
      %4205 = vmatpush.bf16.msra.mxu0 0
      %4206 = vmatpush.bf16.msra.mxu0 0
      %4207 = vmatpush.bf16.msra.mxu0 0
      %4208 = vmatpush.bf16.msra.mxu0 %v4108
      %4209 = vmatmul.bf16.gmra.mxu0 %v4084
      %v4210 = vpop.f32.mrf.mxu0
      %v4211 = vadd.f32 0.0, %v4210
      %v4212 = vpop.f32.mrf.mxu0
      %4213 = vdwg.mxu0
      %v4214 = vadd.f32 %v4046, %v4120
      %v4215 = vadd.f32 %v4047, %v4133
      %v4216 = vadd.f32 %v4048, %v4146
      %v4217 = vadd.f32 %v4049, %v4159
      %v4218 = vadd.f32 %v4050, %v4172
      %v4219 = vadd.f32 %v4051, %v4185
      %v4220 = vadd.f32 %v4052, %v4198
      %v4221 = vadd.f32 %v4053, %v4211
      %s4222 = scalar_lea.vmem %s1, 96
      %v4223 = vld [vmem:[%s4222] sm:$0xf]
      %4224 = vrot.lane.b32.xlu0 %v247, 36
      %v4225 = vpop.permute.xlu0 %4224
      %4226 = vrot.lane.b32.xlu0 %v248, 36
      %v4227 = vpop.permute.xlu0 %4226
      %4228 = vrot.lane.b32.xlu0 %v249, 36
      %v4229 = vpop.permute.xlu0 %4228
      %4230 = vrot.lane.b32.xlu0 %v250, 36
      %v4231 = vpop.permute.xlu0 %4230
      %4232 = vrot.lane.b32.xlu0 %v251, 36
      %v4233 = vpop.permute.xlu0 %4232
      %4234 = vrot.lane.b32.xlu0 %v252, 36
      %v4235 = vpop.permute.xlu0 %4234
      %4236 = vrot.lane.b32.xlu0 %v253, 36
      %v4237 = vpop.permute.xlu0 %4236
      %4238 = vrot.lane.b32.xlu0 %v1701, 36
      %v4239 = vpop.permute.xlu0 %4238
      %4240 = vrot.lane.b32.xlu0 %v3215, 36
      %v4241 = vpop.permute.xlu0 %4240
      %vm4242 = vcmask 293888
      %v4243 = vsel %vm4242, %v4225, %v4227
      %v4244 = vsel %vm4242, %v4227, %v4229
      %v4245 = vsel %vm4242, %v4229, %v4231
      %v4246 = vsel %vm4242, %v4231, %v4233
      %v4247 = vsel %vm4242, %v4233, %v4235
      %v4248 = vsel %vm4242, %v4235, %v4237
      %v4249 = vsel %vm4242, %v4237, %v4239
      %v4250 = vsel %vm4242, %v4239, %v4241
      %v4252 = vsel %vm278, %v4223, 0
      %v4255 = vsel %vm282, %v4243, 0
      %v4258 = vsel %vm282, %v4244, 0
      %v4261 = vsel %vm282, %v4245, 0
      %v4264 = vsel %vm282, %v4246, 0
      %v4267 = vsel %vm282, %v4247, 0
      %v4270 = vsel %vm282, %v4248, 0
      %v4273 = vsel %vm282, %v4249, 0
      %v4276 = vsel %vm282, %v4250, 0
      %4278 = vmatpush.bf16.msra.mxu0 0
      %4279 = vmatpush.bf16.msra.mxu0 0
      %4280 = vmatpush.bf16.msra.mxu0 0
      %4281 = vmatpush.bf16.msra.mxu0 0
      %4282 = vmatpush.bf16.msra.mxu0 0
      %4283 = vmatpush.bf16.msra.mxu0 0
      %4284 = vmatpush.bf16.msra.mxu0 0
      %4285 = vmatpush.bf16.msra.mxu0 %v4255
      %4286 = vmatmul.bf16.gmra.mxu0 %v4252
      %v4287 = vpop.f32.mrf.mxu0
      %v4288 = vadd.f32 0.0, %v4287
      %v4289 = vpop.f32.mrf.mxu0
      %4290 = vdwg.mxu0
      %4291 = vmatpush.bf16.msra.mxu0 0
      %4292 = vmatpush.bf16.msra.mxu0 0
      %4293 = vmatpush.bf16.msra.mxu0 0
      %4294 = vmatpush.bf16.msra.mxu0 0
      %4295 = vmatpush.bf16.msra.mxu0 0
      %4296 = vmatpush.bf16.msra.mxu0 0
      %4297 = vmatpush.bf16.msra.mxu0 0
      %4298 = vmatpush.bf16.msra.mxu0 %v4258
      %4299 = vmatmul.bf16.gmra.mxu0 %v4252
      %v4300 = vpop.f32.mrf.mxu0
      %v4301 = vadd.f32 0.0, %v4300
      %v4302 = vpop.f32.mrf.mxu0
      %4303 = vdwg.mxu0
      %4304 = vmatpush.bf16.msra.mxu0 0
      %4305 = vmatpush.bf16.msra.mxu0 0
      %4306 = vmatpush.bf16.msra.mxu0 0
      %4307 = vmatpush.bf16.msra.mxu0 0
      %4308 = vmatpush.bf16.msra.mxu0 0
      %4309 = vmatpush.bf16.msra.mxu0 0
      %4310 = vmatpush.bf16.msra.mxu0 0
      %4311 = vmatpush.bf16.msra.mxu0 %v4261
      %4312 = vmatmul.bf16.gmra.mxu0 %v4252
      %v4313 = vpop.f32.mrf.mxu0
      %v4314 = vadd.f32 0.0, %v4313
      %v4315 = vpop.f32.mrf.mxu0
      %4316 = vdwg.mxu0
      %4317 = vmatpush.bf16.msra.mxu0 0
      %4318 = vmatpush.bf16.msra.mxu0 0
      %4319 = vmatpush.bf16.msra.mxu0 0
      %4320 = vmatpush.bf16.msra.mxu0 0
      %4321 = vmatpush.bf16.msra.mxu0 0
      %4322 = vmatpush.bf16.msra.mxu0 0
      %4323 = vmatpush.bf16.msra.mxu0 0
      %4324 = vmatpush.bf16.msra.mxu0 %v4264
      %4325 = vmatmul.bf16.gmra.mxu0 %v4252
      %v4326 = vpop.f32.mrf.mxu0
      %v4327 = vadd.f32 0.0, %v4326
      %v4328 = vpop.f32.mrf.mxu0
      %4329 = vdwg.mxu0
      %4330 = vmatpush.bf16.msra.mxu0 0
      %4331 = vmatpush.bf16.msra.mxu0 0
      %4332 = vmatpush.bf16.msra.mxu0 0
      %4333 = vmatpush.bf16.msra.mxu0 0
      %4334 = vmatpush.bf16.msra.mxu0 0
      %4335 = vmatpush.bf16.msra.mxu0 0
      %4336 = vmatpush.bf16.msra.mxu0 0
      %4337 = vmatpush.bf16.msra.mxu0 %v4267
      %4338 = vmatmul.bf16.gmra.mxu0 %v4252
      %v4339 = vpop.f32.mrf.mxu0
      %v4340 = vadd.f32 0.0, %v4339
      %v4341 = vpop.f32.mrf.mxu0
      %4342 = vdwg.mxu0
      %4343 = vmatpush.bf16.msra.mxu0 0
      %4344 = vmatpush.bf16.msra.mxu0 0
      %4345 = vmatpush.bf16.msra.mxu0 0
      %4346 = vmatpush.bf16.msra.mxu0 0
      %4347 = vmatpush.bf16.msra.mxu0 0
      %4348 = vmatpush.bf16.msra.mxu0 0
      %4349 = vmatpush.bf16.msra.mxu0 0
      %4350 = vmatpush.bf16.msra.mxu0 %v4270
      %4351 = vmatmul.bf16.gmra.mxu0 %v4252
      %v4352 = vpop.f32.mrf.mxu0
      %v4353 = vadd.f32 0.0, %v4352
      %v4354 = vpop.f32.mrf.mxu0
      %4355 = vdwg.mxu0
      %4356 = vmatpush.bf16.msra.mxu0 0
      %4357 = vmatpush.bf16.msra.mxu0 0
      %4358 = vmatpush.bf16.msra.mxu0 0
      %4359 = vmatpush.bf16.msra.mxu0 0
      %4360 = vmatpush.bf16.msra.mxu0 0
      %4361 = vmatpush.bf16.msra.mxu0 0
      %4362 = vmatpush.bf16.msra.mxu0 0
      %4363 = vmatpush.bf16.msra.mxu0 %v4273
      %4364 = vmatmul.bf16.gmra.mxu0 %v4252
      %v4365 = vpop.f32.mrf.mxu0
      %v4366 = vadd.f32 0.0, %v4365
      %v4367 = vpop.f32.mrf.mxu0
      %4368 = vdwg.mxu0
      %4369 = vmatpush.bf16.msra.mxu0 0
      %4370 = vmatpush.bf16.msra.mxu0 0
      %4371 = vmatpush.bf16.msra.mxu0 0
      %4372 = vmatpush.bf16.msra.mxu0 0
      %4373 = vmatpush.bf16.msra.mxu0 0
      %4374 = vmatpush.bf16.msra.mxu0 0
      %4375 = vmatpush.bf16.msra.mxu0 0
      %4376 = vmatpush.bf16.msra.mxu0 %v4276
      %4377 = vmatmul.bf16.gmra.mxu0 %v4252
      %v4378 = vpop.f32.mrf.mxu0
      %v4379 = vadd.f32 0.0, %v4378
      %v4380 = vpop.f32.mrf.mxu0
      %4381 = vdwg.mxu0
      %v4382 = vadd.f32 %v4214, %v4288
      %v4383 = vadd.f32 %v4215, %v4301
      %v4384 = vadd.f32 %v4216, %v4314
      %v4385 = vadd.f32 %v4217, %v4327
      %v4386 = vadd.f32 %v4218, %v4340
      %v4387 = vadd.f32 %v4219, %v4353
      %v4388 = vadd.f32 %v4220, %v4366
      %v4389 = vadd.f32 %v4221, %v4379
      %s4390 = scalar_lea.vmem %s1, 100
      %v4391 = vld [vmem:[%s4390] sm:$0xf]
      %4392 = vrot.lane.b32.xlu0 %v247, 35
      %v4393 = vpop.permute.xlu0 %4392
      %4394 = vrot.lane.b32.xlu0 %v248, 35
      %v4395 = vpop.permute.xlu0 %4394
      %4396 = vrot.lane.b32.xlu0 %v249, 35
      %v4397 = vpop.permute.xlu0 %4396
      %4398 = vrot.lane.b32.xlu0 %v250, 35
      %v4399 = vpop.permute.xlu0 %4398
      %4400 = vrot.lane.b32.xlu0 %v251, 35
      %v4401 = vpop.permute.xlu0 %4400
      %4402 = vrot.lane.b32.xlu0 %v252, 35
      %v4403 = vpop.permute.xlu0 %4402
      %4404 = vrot.lane.b32.xlu0 %v253, 35
      %v4405 = vpop.permute.xlu0 %4404
      %4406 = vrot.lane.b32.xlu0 %v1701, 35
      %v4407 = vpop.permute.xlu0 %4406
      %4408 = vrot.lane.b32.xlu0 %v3215, 35
      %v4409 = vpop.permute.xlu0 %4408
      %vm4410 = vcmask 285696
      %v4411 = vsel %vm4410, %v4393, %v4395
      %v4412 = vsel %vm4410, %v4395, %v4397
      %v4413 = vsel %vm4410, %v4397, %v4399
      %v4414 = vsel %vm4410, %v4399, %v4401
      %v4415 = vsel %vm4410, %v4401, %v4403
      %v4416 = vsel %vm4410, %v4403, %v4405
      %v4417 = vsel %vm4410, %v4405, %v4407
      %v4418 = vsel %vm4410, %v4407, %v4409
      %v4420 = vsel %vm278, %v4391, 0
      %v4423 = vsel %vm282, %v4411, 0
      %v4426 = vsel %vm282, %v4412, 0
      %v4429 = vsel %vm282, %v4413, 0
      %v4432 = vsel %vm282, %v4414, 0
      %v4435 = vsel %vm282, %v4415, 0
      %v4438 = vsel %vm282, %v4416, 0
      %v4441 = vsel %vm282, %v4417, 0
      %v4444 = vsel %vm282, %v4418, 0
      %4446 = vmatpush.bf16.msra.mxu0 0
      %4447 = vmatpush.bf16.msra.mxu0 0
      %4448 = vmatpush.bf16.msra.mxu0 0
      %4449 = vmatpush.bf16.msra.mxu0 0
      %4450 = vmatpush.bf16.msra.mxu0 0
      %4451 = vmatpush.bf16.msra.mxu0 0
      %4452 = vmatpush.bf16.msra.mxu0 0
      %4453 = vmatpush.bf16.msra.mxu0 %v4423
      %4454 = vmatmul.bf16.gmra.mxu0 %v4420
      %v4455 = vpop.f32.mrf.mxu0
      %v4456 = vadd.f32 0.0, %v4455
      %v4457 = vpop.f32.mrf.mxu0
      %4458 = vdwg.mxu0
      %4459 = vmatpush.bf16.msra.mxu0 0
      %4460 = vmatpush.bf16.msra.mxu0 0
      %4461 = vmatpush.bf16.msra.mxu0 0
      %4462 = vmatpush.bf16.msra.mxu0 0
      %4463 = vmatpush.bf16.msra.mxu0 0
      %4464 = vmatpush.bf16.msra.mxu0 0
      %4465 = vmatpush.bf16.msra.mxu0 0
      %4466 = vmatpush.bf16.msra.mxu0 %v4426
      %4467 = vmatmul.bf16.gmra.mxu0 %v4420
      %v4468 = vpop.f32.mrf.mxu0
      %v4469 = vadd.f32 0.0, %v4468
      %v4470 = vpop.f32.mrf.mxu0
      %4471 = vdwg.mxu0
      %4472 = vmatpush.bf16.msra.mxu0 0
      %4473 = vmatpush.bf16.msra.mxu0 0
      %4474 = vmatpush.bf16.msra.mxu0 0
      %4475 = vmatpush.bf16.msra.mxu0 0
      %4476 = vmatpush.bf16.msra.mxu0 0
      %4477 = vmatpush.bf16.msra.mxu0 0
      %4478 = vmatpush.bf16.msra.mxu0 0
      %4479 = vmatpush.bf16.msra.mxu0 %v4429
      %4480 = vmatmul.bf16.gmra.mxu0 %v4420
      %v4481 = vpop.f32.mrf.mxu0
      %v4482 = vadd.f32 0.0, %v4481
      %v4483 = vpop.f32.mrf.mxu0
      %4484 = vdwg.mxu0
      %4485 = vmatpush.bf16.msra.mxu0 0
      %4486 = vmatpush.bf16.msra.mxu0 0
      %4487 = vmatpush.bf16.msra.mxu0 0
      %4488 = vmatpush.bf16.msra.mxu0 0
      %4489 = vmatpush.bf16.msra.mxu0 0
      %4490 = vmatpush.bf16.msra.mxu0 0
      %4491 = vmatpush.bf16.msra.mxu0 0
      %4492 = vmatpush.bf16.msra.mxu0 %v4432
      %4493 = vmatmul.bf16.gmra.mxu0 %v4420
      %v4494 = vpop.f32.mrf.mxu0
      %v4495 = vadd.f32 0.0, %v4494
      %v4496 = vpop.f32.mrf.mxu0
      %4497 = vdwg.mxu0
      %4498 = vmatpush.bf16.msra.mxu0 0
      %4499 = vmatpush.bf16.msra.mxu0 0
      %4500 = vmatpush.bf16.msra.mxu0 0
      %4501 = vmatpush.bf16.msra.mxu0 0
      %4502 = vmatpush.bf16.msra.mxu0 0
      %4503 = vmatpush.bf16.msra.mxu0 0
      %4504 = vmatpush.bf16.msra.mxu0 0
      %4505 = vmatpush.bf16.msra.mxu0 %v4435
      %4506 = vmatmul.bf16.gmra.mxu0 %v4420
      %v4507 = vpop.f32.mrf.mxu0
      %v4508 = vadd.f32 0.0, %v4507
      %v4509 = vpop.f32.mrf.mxu0
      %4510 = vdwg.mxu0
      %4511 = vmatpush.bf16.msra.mxu0 0
      %4512 = vmatpush.bf16.msra.mxu0 0
      %4513 = vmatpush.bf16.msra.mxu0 0
      %4514 = vmatpush.bf16.msra.mxu0 0
      %4515 = vmatpush.bf16.msra.mxu0 0
      %4516 = vmatpush.bf16.msra.mxu0 0
      %4517 = vmatpush.bf16.msra.mxu0 0
      %4518 = vmatpush.bf16.msra.mxu0 %v4438
      %4519 = vmatmul.bf16.gmra.mxu0 %v4420
      %v4520 = vpop.f32.mrf.mxu0
      %v4521 = vadd.f32 0.0, %v4520
      %v4522 = vpop.f32.mrf.mxu0
      %4523 = vdwg.mxu0
      %4524 = vmatpush.bf16.msra.mxu0 0
      %4525 = vmatpush.bf16.msra.mxu0 0
      %4526 = vmatpush.bf16.msra.mxu0 0
      %4527 = vmatpush.bf16.msra.mxu0 0
      %4528 = vmatpush.bf16.msra.mxu0 0
      %4529 = vmatpush.bf16.msra.mxu0 0
      %4530 = vmatpush.bf16.msra.mxu0 0
      %4531 = vmatpush.bf16.msra.mxu0 %v4441
      %4532 = vmatmul.bf16.gmra.mxu0 %v4420
      %v4533 = vpop.f32.mrf.mxu0
      %v4534 = vadd.f32 0.0, %v4533
      %v4535 = vpop.f32.mrf.mxu0
      %4536 = vdwg.mxu0
      %4537 = vmatpush.bf16.msra.mxu0 0
      %4538 = vmatpush.bf16.msra.mxu0 0
      %4539 = vmatpush.bf16.msra.mxu0 0
      %4540 = vmatpush.bf16.msra.mxu0 0
      %4541 = vmatpush.bf16.msra.mxu0 0
      %4542 = vmatpush.bf16.msra.mxu0 0
      %4543 = vmatpush.bf16.msra.mxu0 0
      %4544 = vmatpush.bf16.msra.mxu0 %v4444
      %4545 = vmatmul.bf16.gmra.mxu0 %v4420
      %v4546 = vpop.f32.mrf.mxu0
      %v4547 = vadd.f32 0.0, %v4546
      %v4548 = vpop.f32.mrf.mxu0
      %4549 = vdwg.mxu0
      %v4550 = vadd.f32 %v4382, %v4456
      %v4551 = vadd.f32 %v4383, %v4469
      %v4552 = vadd.f32 %v4384, %v4482
      %v4553 = vadd.f32 %v4385, %v4495
      %v4554 = vadd.f32 %v4386, %v4508
      %v4555 = vadd.f32 %v4387, %v4521
      %v4556 = vadd.f32 %v4388, %v4534
      %v4557 = vadd.f32 %v4389, %v4547
      %s4558 = scalar_lea.vmem %s1, 104
      %v4559 = vld [vmem:[%s4558] sm:$0xf]
      %4560 = vrot.lane.b32.xlu0 %v247, 34
      %v4561 = vpop.permute.xlu0 %4560
      %4562 = vrot.lane.b32.xlu0 %v248, 34
      %v4563 = vpop.permute.xlu0 %4562
      %4564 = vrot.lane.b32.xlu0 %v249, 34
      %v4565 = vpop.permute.xlu0 %4564
      %4566 = vrot.lane.b32.xlu0 %v250, 34
      %v4567 = vpop.permute.xlu0 %4566
      %4568 = vrot.lane.b32.xlu0 %v251, 34
      %v4569 = vpop.permute.xlu0 %4568
      %4570 = vrot.lane.b32.xlu0 %v252, 34
      %v4571 = vpop.permute.xlu0 %4570
      %4572 = vrot.lane.b32.xlu0 %v253, 34
      %v4573 = vpop.permute.xlu0 %4572
      %4574 = vrot.lane.b32.xlu0 %v1701, 34
      %v4575 = vpop.permute.xlu0 %4574
      %4576 = vrot.lane.b32.xlu0 %v3215, 34
      %v4577 = vpop.permute.xlu0 %4576
      %vm4578 = vcmask 277504
      %v4579 = vsel %vm4578, %v4561, %v4563
      %v4580 = vsel %vm4578, %v4563, %v4565
      %v4581 = vsel %vm4578, %v4565, %v4567
      %v4582 = vsel %vm4578, %v4567, %v4569
      %v4583 = vsel %vm4578, %v4569, %v4571
      %v4584 = vsel %vm4578, %v4571, %v4573
      %v4585 = vsel %vm4578, %v4573, %v4575
      %v4586 = vsel %vm4578, %v4575, %v4577
      %v4588 = vsel %vm278, %v4559, 0
      %v4591 = vsel %vm282, %v4579, 0
      %v4594 = vsel %vm282, %v4580, 0
      %v4597 = vsel %vm282, %v4581, 0
      %v4600 = vsel %vm282, %v4582, 0
      %v4603 = vsel %vm282, %v4583, 0
      %v4606 = vsel %vm282, %v4584, 0
      %v4609 = vsel %vm282, %v4585, 0
      %v4612 = vsel %vm282, %v4586, 0
      %4614 = vmatpush.bf16.msra.mxu0 0
      %4615 = vmatpush.bf16.msra.mxu0 0
      %4616 = vmatpush.bf16.msra.mxu0 0
      %4617 = vmatpush.bf16.msra.mxu0 0
      %4618 = vmatpush.bf16.msra.mxu0 0
      %4619 = vmatpush.bf16.msra.mxu0 0
      %4620 = vmatpush.bf16.msra.mxu0 0
      %4621 = vmatpush.bf16.msra.mxu0 %v4591
      %4622 = vmatmul.bf16.gmra.mxu0 %v4588
      %v4623 = vpop.f32.mrf.mxu0
      %v4624 = vadd.f32 0.0, %v4623
      %v4625 = vpop.f32.mrf.mxu0
      %4626 = vdwg.mxu0
      %4627 = vmatpush.bf16.msra.mxu0 0
      %4628 = vmatpush.bf16.msra.mxu0 0
      %4629 = vmatpush.bf16.msra.mxu0 0
      %4630 = vmatpush.bf16.msra.mxu0 0
      %4631 = vmatpush.bf16.msra.mxu0 0
      %4632 = vmatpush.bf16.msra.mxu0 0
      %4633 = vmatpush.bf16.msra.mxu0 0
      %4634 = vmatpush.bf16.msra.mxu0 %v4594
      %4635 = vmatmul.bf16.gmra.mxu0 %v4588
      %v4636 = vpop.f32.mrf.mxu0
      %v4637 = vadd.f32 0.0, %v4636
      %v4638 = vpop.f32.mrf.mxu0
      %4639 = vdwg.mxu0
      %4640 = vmatpush.bf16.msra.mxu0 0
      %4641 = vmatpush.bf16.msra.mxu0 0
      %4642 = vmatpush.bf16.msra.mxu0 0
      %4643 = vmatpush.bf16.msra.mxu0 0
      %4644 = vmatpush.bf16.msra.mxu0 0
      %4645 = vmatpush.bf16.msra.mxu0 0
      %4646 = vmatpush.bf16.msra.mxu0 0
      %4647 = vmatpush.bf16.msra.mxu0 %v4597
      %4648 = vmatmul.bf16.gmra.mxu0 %v4588
      %v4649 = vpop.f32.mrf.mxu0
      %v4650 = vadd.f32 0.0, %v4649
      %v4651 = vpop.f32.mrf.mxu0
      %4652 = vdwg.mxu0
      %4653 = vmatpush.bf16.msra.mxu0 0
      %4654 = vmatpush.bf16.msra.mxu0 0
      %4655 = vmatpush.bf16.msra.mxu0 0
      %4656 = vmatpush.bf16.msra.mxu0 0
      %4657 = vmatpush.bf16.msra.mxu0 0
      %4658 = vmatpush.bf16.msra.mxu0 0
      %4659 = vmatpush.bf16.msra.mxu0 0
      %4660 = vmatpush.bf16.msra.mxu0 %v4600
      %4661 = vmatmul.bf16.gmra.mxu0 %v4588
      %v4662 = vpop.f32.mrf.mxu0
      %v4663 = vadd.f32 0.0, %v4662
      %v4664 = vpop.f32.mrf.mxu0
      %4665 = vdwg.mxu0
      %4666 = vmatpush.bf16.msra.mxu0 0
      %4667 = vmatpush.bf16.msra.mxu0 0
      %4668 = vmatpush.bf16.msra.mxu0 0
      %4669 = vmatpush.bf16.msra.mxu0 0
      %4670 = vmatpush.bf16.msra.mxu0 0
      %4671 = vmatpush.bf16.msra.mxu0 0
      %4672 = vmatpush.bf16.msra.mxu0 0
      %4673 = vmatpush.bf16.msra.mxu0 %v4603
      %4674 = vmatmul.bf16.gmra.mxu0 %v4588
      %v4675 = vpop.f32.mrf.mxu0
      %v4676 = vadd.f32 0.0, %v4675
      %v4677 = vpop.f32.mrf.mxu0
      %4678 = vdwg.mxu0
      %4679 = vmatpush.bf16.msra.mxu0 0
      %4680 = vmatpush.bf16.msra.mxu0 0
      %4681 = vmatpush.bf16.msra.mxu0 0
      %4682 = vmatpush.bf16.msra.mxu0 0
      %4683 = vmatpush.bf16.msra.mxu0 0
      %4684 = vmatpush.bf16.msra.mxu0 0
      %4685 = vmatpush.bf16.msra.mxu0 0
      %4686 = vmatpush.bf16.msra.mxu0 %v4606
      %4687 = vmatmul.bf16.gmra.mxu0 %v4588
      %v4688 = vpop.f32.mrf.mxu0
      %v4689 = vadd.f32 0.0, %v4688
      %v4690 = vpop.f32.mrf.mxu0
      %4691 = vdwg.mxu0
      %4692 = vmatpush.bf16.msra.mxu0 0
      %4693 = vmatpush.bf16.msra.mxu0 0
      %4694 = vmatpush.bf16.msra.mxu0 0
      %4695 = vmatpush.bf16.msra.mxu0 0
      %4696 = vmatpush.bf16.msra.mxu0 0
      %4697 = vmatpush.bf16.msra.mxu0 0
      %4698 = vmatpush.bf16.msra.mxu0 0
      %4699 = vmatpush.bf16.msra.mxu0 %v4609
      %4700 = vmatmul.bf16.gmra.mxu0 %v4588
      %v4701 = vpop.f32.mrf.mxu0
      %v4702 = vadd.f32 0.0, %v4701
      %v4703 = vpop.f32.mrf.mxu0
      %4704 = vdwg.mxu0
      %4705 = vmatpush.bf16.msra.mxu0 0
      %4706 = vmatpush.bf16.msra.mxu0 0
      %4707 = vmatpush.bf16.msra.mxu0 0
      %4708 = vmatpush.bf16.msra.mxu0 0
      %4709 = vmatpush.bf16.msra.mxu0 0
      %4710 = vmatpush.bf16.msra.mxu0 0
      %4711 = vmatpush.bf16.msra.mxu0 0
      %4712 = vmatpush.bf16.msra.mxu0 %v4612
      %4713 = vmatmul.bf16.gmra.mxu0 %v4588
      %v4714 = vpop.f32.mrf.mxu0
      %v4715 = vadd.f32 0.0, %v4714
      %v4716 = vpop.f32.mrf.mxu0
      %4717 = vdwg.mxu0
      %v4718 = vadd.f32 %v4550, %v4624
      %v4719 = vadd.f32 %v4551, %v4637
      %v4720 = vadd.f32 %v4552, %v4650
      %v4721 = vadd.f32 %v4553, %v4663
      %v4722 = vadd.f32 %v4554, %v4676
      %v4723 = vadd.f32 %v4555, %v4689
      %v4724 = vadd.f32 %v4556, %v4702
      %v4725 = vadd.f32 %v4557, %v4715
      %v4726 = vld [vmem:[%s2] sm:$0xff]
      %4728 = vset.pattern.permute.xlu0 0
      %4729 = vperm.xlu0 %4728, %v4726
      %v4730 = vpop.permute.xlu0 %4729
      %v4732 = vmul.f32 %v4718, %v4730
      %v4733 = vmul.f32 %v4719, %v4730
      %v4734 = vmul.f32 %v4720, %v4730
      %v4735 = vmul.f32 %v4721, %v4730
      %v4736 = vmul.f32 %v4722, %v4730
      %v4737 = vmul.f32 %v4723, %v4730
      %v4738 = vmul.f32 %v4724, %v4730
      %v4739 = vmul.f32 %v4725, %v4730
      %v4740 = vld [vmem:[%s3] sm:$0xff]
      %4742 = vset.pattern.permute.xlu0 0
      %4743 = vperm.xlu0 %4742, %v4740
      %v4744 = vpop.permute.xlu0 %4743
      %v4746 = vadd.f32 %v4732, %v4744
      %v4747 = vadd.f32 %v4733, %v4744
      %v4748 = vadd.f32 %v4734, %v4744
      %v4749 = vadd.f32 %v4735, %v4744
      %v4750 = vadd.f32 %v4736, %v4744
      %v4751 = vadd.f32 %v4737, %v4744
      %v4752 = vadd.f32 %v4738, %v4744
      %v4753 = vadd.f32 %v4739, %v4744
      %v4754 = vmax.f32 %v4746, 0.0
      %v4755 = vmax.f32 %v4747, 0.0
      %v4756 = vmax.f32 %v4748, 0.0
      %v4757 = vmax.f32 %v4749, 0.0
      %v4758 = vmax.f32 %v4750, 0.0
      %v4759 = vmax.f32 %v4751, 0.0
      %v4760 = vmax.f32 %v4752, 0.0
      %v4761 = vmax.f32 %v4753, 0.0
      %v4762 = vld [vmem:[%s4] sm:$0x3]
      %v4763 = vpack.c.bf16 %v4754, %v4754
      %v4764 = vpack.c.bf16 %v4755, %v4755
      %v4765 = vpack.c.bf16 %v4756, %v4756
      %v4766 = vpack.c.bf16 %v4757, %v4757
      %v4767 = vpack.c.bf16 %v4758, %v4758
      %v4768 = vpack.c.bf16 %v4759, %v4759
      %v4769 = vpack.c.bf16 %v4760, %v4760
      %v4770 = vpack.c.bf16 %v4761, %v4761
      %v4772 = vsel %vm278, %v4762, 0
      %v4775 = vsel %vm282, %v4763, 0
      %v4778 = vsel %vm282, %v4764, 0
      %v4781 = vsel %vm282, %v4765, 0
      %v4784 = vsel %vm282, %v4766, 0
      %v4787 = vsel %vm282, %v4767, 0
      %v4790 = vsel %vm282, %v4768, 0
      %v4793 = vsel %vm282, %v4769, 0
      %v4796 = vsel %vm282, %v4770, 0
      %4798 = vmatpush.bf16.msra.mxu0 0
      %4799 = vmatpush.bf16.msra.mxu0 0
      %4800 = vmatpush.bf16.msra.mxu0 0
      %4801 = vmatpush.bf16.msra.mxu0 0
      %4802 = vmatpush.bf16.msra.mxu0 0
      %4803 = vmatpush.bf16.msra.mxu0 0
      %4804 = vmatpush.bf16.msra.mxu0 0
      %4805 = vmatpush.bf16.msra.mxu0 %v4775
      %4806 = vmatmul.bf16.gmra.mxu0 %v4772
      %v4807 = vpop.f32.mrf.mxu0
      %v4808 = vadd.f32 0.0, %v4807
      %v4809 = vpop.f32.mrf.mxu0
      %4810 = vdwg.mxu0
      %4811 = vmatpush.bf16.msra.mxu0 0
      %4812 = vmatpush.bf16.msra.mxu0 0
      %4813 = vmatpush.bf16.msra.mxu0 0
      %4814 = vmatpush.bf16.msra.mxu0 0
      %4815 = vmatpush.bf16.msra.mxu0 0
      %4816 = vmatpush.bf16.msra.mxu0 0
      %4817 = vmatpush.bf16.msra.mxu0 0
      %4818 = vmatpush.bf16.msra.mxu0 %v4778
      %4819 = vmatmul.bf16.gmra.mxu0 %v4772
      %v4820 = vpop.f32.mrf.mxu0
      %v4821 = vadd.f32 0.0, %v4820
      %v4822 = vpop.f32.mrf.mxu0
      %4823 = vdwg.mxu0
      %4824 = vmatpush.bf16.msra.mxu0 0
      %4825 = vmatpush.bf16.msra.mxu0 0
      %4826 = vmatpush.bf16.msra.mxu0 0
      %4827 = vmatpush.bf16.msra.mxu0 0
      %4828 = vmatpush.bf16.msra.mxu0 0
      %4829 = vmatpush.bf16.msra.mxu0 0
      %4830 = vmatpush.bf16.msra.mxu0 0
      %4831 = vmatpush.bf16.msra.mxu0 %v4781
      %4832 = vmatmul.bf16.gmra.mxu0 %v4772
      %v4833 = vpop.f32.mrf.mxu0
      %v4834 = vadd.f32 0.0, %v4833
      %v4835 = vpop.f32.mrf.mxu0
      %4836 = vdwg.mxu0
      %4837 = vmatpush.bf16.msra.mxu0 0
      %4838 = vmatpush.bf16.msra.mxu0 0
      %4839 = vmatpush.bf16.msra.mxu0 0
      %4840 = vmatpush.bf16.msra.mxu0 0
      %4841 = vmatpush.bf16.msra.mxu0 0
      %4842 = vmatpush.bf16.msra.mxu0 0
      %4843 = vmatpush.bf16.msra.mxu0 0
      %4844 = vmatpush.bf16.msra.mxu0 %v4784
      %4845 = vmatmul.bf16.gmra.mxu0 %v4772
      %v4846 = vpop.f32.mrf.mxu0
      %v4847 = vadd.f32 0.0, %v4846
      %v4848 = vpop.f32.mrf.mxu0
      %4849 = vdwg.mxu0
      %4850 = vmatpush.bf16.msra.mxu0 0
      %4851 = vmatpush.bf16.msra.mxu0 0
      %4852 = vmatpush.bf16.msra.mxu0 0
      %4853 = vmatpush.bf16.msra.mxu0 0
      %4854 = vmatpush.bf16.msra.mxu0 0
      %4855 = vmatpush.bf16.msra.mxu0 0
      %4856 = vmatpush.bf16.msra.mxu0 0
      %4857 = vmatpush.bf16.msra.mxu0 %v4787
      %4858 = vmatmul.bf16.gmra.mxu0 %v4772
      %v4859 = vpop.f32.mrf.mxu0
      %v4860 = vadd.f32 0.0, %v4859
      %v4861 = vpop.f32.mrf.mxu0
      %4862 = vdwg.mxu0
      %4863 = vmatpush.bf16.msra.mxu0 0
      %4864 = vmatpush.bf16.msra.mxu0 0
      %4865 = vmatpush.bf16.msra.mxu0 0
      %4866 = vmatpush.bf16.msra.mxu0 0
      %4867 = vmatpush.bf16.msra.mxu0 0
      %4868 = vmatpush.bf16.msra.mxu0 0
      %4869 = vmatpush.bf16.msra.mxu0 0
      %4870 = vmatpush.bf16.msra.mxu0 %v4790
      %4871 = vmatmul.bf16.gmra.mxu0 %v4772
      %v4872 = vpop.f32.mrf.mxu0
      %v4873 = vadd.f32 0.0, %v4872
      %v4874 = vpop.f32.mrf.mxu0
      %4875 = vdwg.mxu0
      %4876 = vmatpush.bf16.msra.mxu0 0
      %4877 = vmatpush.bf16.msra.mxu0 0
      %4878 = vmatpush.bf16.msra.mxu0 0
      %4879 = vmatpush.bf16.msra.mxu0 0
      %4880 = vmatpush.bf16.msra.mxu0 0
      %4881 = vmatpush.bf16.msra.mxu0 0
      %4882 = vmatpush.bf16.msra.mxu0 0
      %4883 = vmatpush.bf16.msra.mxu0 %v4793
      %4884 = vmatmul.bf16.gmra.mxu0 %v4772
      %v4885 = vpop.f32.mrf.mxu0
      %v4886 = vadd.f32 0.0, %v4885
      %v4887 = vpop.f32.mrf.mxu0
      %4888 = vdwg.mxu0
      %4889 = vmatpush.bf16.msra.mxu0 0
      %4890 = vmatpush.bf16.msra.mxu0 0
      %4891 = vmatpush.bf16.msra.mxu0 0
      %4892 = vmatpush.bf16.msra.mxu0 0
      %4893 = vmatpush.bf16.msra.mxu0 0
      %4894 = vmatpush.bf16.msra.mxu0 0
      %4895 = vmatpush.bf16.msra.mxu0 0
      %4896 = vmatpush.bf16.msra.mxu0 %v4796
      %4897 = vmatmul.bf16.gmra.mxu0 %v4772
      %v4898 = vpop.f32.mrf.mxu0
      %v4899 = vadd.f32 0.0, %v4898
      %v4900 = vpop.f32.mrf.mxu0
      %4901 = vdwg.mxu0
      %v4910 = vrot.slane %v4821, 4
      %v4911 = vrot.slane %v4847, 4
      %v4912 = vrot.slane %v4873, 4
      %v4913 = vrot.slane %v4899, 4
      %v4914 = vsel %vm282, %v4808, %v4910
      %v4915 = vsel %vm282, %v4834, %v4911
      %v4916 = vsel %vm282, %v4860, %v4912
      %v4917 = vsel %vm282, %v4886, %v4913
      %4922 = vst [vmem:[%s224] sm:$0x77] %v4914
      %4923 = vst [vmem:[%s224 + $0x8] sm:$0x77] %v4915
      %4924 = vst [vmem:[%s224 + $0x10] sm:$0x77] %v4916
      %vm4925 = vcmask 1042432
      %vm4926 = vcmask 849924
      %vm4927 = vmor %vm4926, %vm4925
      %4928 = vst.msk [vmem:[%s224 + $0x18] sm:$0x77] %vm4927, %v4917
      %p4929 = scmp.lt.s32.totalorder %s16, 1
      %s4930 = scalar_select %p4929, %s16, 1
      %s4931 = smul.addr %s4930, 8
      %s4932 = smul.addr %s4931, 4
      %s4933 = scalar_lea.vmem %s5, %s4932
      // Predicated region
      $region41: #{sba_forward.11} parent=39 // pred_check
        %p4934 = pneg %p144
      $region42: #{sba_forward.11} parent=39 // pred_check_branch
        %4936 = sbr.rel (%p4934) target = $region44
      $region43: #{sba_forward.11} parent=39 // pred_region
        _
      $region44: #{sba_forward.11} parent=39 // pred_fallthru
        _
    $region40: #{sba_forward.11} parent=5 // pred_fallthru
      _
    %p4937 = scmp.le.s32.totalorder 2, %s11
    // Predicated region
    $region45: #{sba_forward.11} parent=5 // pred_check
      %p4938 = pneg %p4937
    $region46: #{sba_forward.11} parent=5 // pred_check_branch
      %4940 = sbr.rel (%p4938) target = $region48
    $region47: #{sba_forward.11} parent=5 // pred_region
      %s4941 = ssub.s32 %s11, 2
      // Predicated region
      $region49: #{sba_forward.11} parent=47 // pred_check
        %p4942 = pneg %p150
      $region50: #{sba_forward.11} parent=47 // pred_check_branch
        %4944 = sbr.rel (%p4942) target = $region52
      $region51: #{sba_forward.11} parent=47 // pred_region
        %p4945 = scmp.lt.s32.totalorder %s17, 1
        %s4946 = scalar_select %p4945, %s17, 1
        %s4947 = smul.addr %s4946, 8
        %s4948 = smul.addr %s4947, 4
        %s4949 = scalar_lea.vmem %s5, %s4948
      $region52: #{sba_forward.11} parent=47 // pred_fallthru
        _
    $region48: #{sba_forward.11} parent=5 // pred_fallthru
      _
  $region6: #{sba_forward.11} parent=0 // loop_footer
    %s15 = sadd.s32 1, %s11
  $region7: #{sba_forward.11} parent=0 // loop_footer_branch
    %10 = sbr.rel target = $region3
  $region8: #{sba_forward.11} parent=0 // loop_exit
    _

</llo_original>
